<compile_context>
chip_gen: v7x
topology: tpu7x:2x2x1
jax: 0.10.0
libtpu: 0.0.40
codegen_flags: <defaults>
</compile_context>

<pallas_src>
import jax
import jax.numpy as jnp
from jax.experimental import pallas as pl
from jax.experimental.pallas import tpu as pltpu


# ----------------------------------------------------------------------------
# Fused kernel: conv1 -> conv2 -> conv3 for a tile of Bt images
# ----------------------------------------------------------------------------
def nature_conv_kernel(x1_ref, w1_ref, b1_ref, w2_ref, b2_ref, w3_ref, b3_ref,
                       o_ref, act1_ref, act2_ref):
    f32 = jnp.float32
    bf16 = jnp.bfloat16
    bt = x1_ref.shape[0]

    # ---- conv1 (8x8 stride 4) + stride-2 phase split, as ONE K=576 GEMM ----
    # x1 rows: u*10 + v (+12 zero pad rows), cols: s*48 + t*4 + c over the
    # 12x12x4 window at (8u, 8v).  Output columns: (p*2+q)*32 + out_channel.
    p1 = x1_ref[...].reshape(bt * 112, 576)                       # free re-view
    a1 = jnp.dot(p1, w1_ref[...], preferred_element_type=f32)     # (bt*112, 128)
    a1 = jnp.maximum(a1 + b1_ref[...], 0.0)
    act1_ref[...] = a1.reshape(bt, 112, 128)                      # free re-view

    # ---- conv2 (4x4 stride 2): 4 accumulated K=128 GEMMs ----
    # One GEMM per in-phase tap offset (ai, bj); K=128 covers all 4 phases.
    # Output rows: r2 = oy2*10 + ox2 (width-10 flat layout, junk rows unused).
    acc2 = jnp.zeros((bt * 96, 64), f32)
    for ai in range(2):
        for bj in range(2):
            off = ai * 10 + bj
            patch = act1_ref[:, off:off + 96, :].reshape(bt * 96, 128)
            acc2 = acc2 + jnp.dot(patch.astype(bf16), w2_ref[ai * 2 + bj],
                                  preferred_element_type=f32)
    a2 = jnp.maximum(acc2 + b2_ref[...], 0.0)
    act2_ref[...] = a2.reshape(bt, 96, 64)                        # free re-view

    # ---- conv3 (3x3 stride 1): 9 accumulated K=64 GEMMs ----
    # Taps are contiguous row-offset slices in the same width-10 layout.
    acc3 = jnp.zeros((bt * 72, 64), f32)
    for di in range(3):
        for dj in range(3):
            off = di * 10 + dj
            patch = act2_ref[:, off:off + 72, :].reshape(bt * 72, 64)
            acc3 = acc3 + jnp.dot(patch.astype(bf16), w3_ref[di * 3 + dj],
                                  preferred_element_type=f32)
    a3 = jnp.maximum(acc3 + b3_ref[...], 0.0)
    o_ref[...] = a3.reshape(bt, 72, 64).astype(o_ref.dtype)       # rows oy3*10+ox3


# ----------------------------------------------------------------------------
# fc4: one whole-block GEMM (M = B) with bias + ReLU
# ----------------------------------------------------------------------------
def fc4_kernel(a_ref, w_ref, b_ref, o_ref):
    y = jnp.dot(a_ref[...], w_ref[...], preferred_element_type=jnp.float32)
    o_ref[...] = jnp.maximum(y + b_ref[...], 0.0)


# ----------------------------------------------------------------------------
# Wrapper-side conv1 patch extraction (layout glue on a ~56KB/image input)
# ----------------------------------------------------------------------------
def _conv1_patches(x_nchw):
    """(B,4,84,84) f32 -> (B,112,576) bf16 conv1 patch matrix.

    Row u*10+v holds the 12x12x4 window at (8u, 8v) flattened as s*48+t*4+c;
    rows 100..111 are zero padding so the per-image row count is a multiple of 8.
    """
    B = x_nchw.shape[0]
    x = jnp.transpose(x_nchw, (0, 2, 3, 1)).astype(jnp.bfloat16)          # (B,84,84,4)
    rows = jnp.stack([x[:, s:s + 73:8, :, :] for s in range(12)], axis=2)  # (B,u,s,84,4)
    pat = jnp.stack([rows[..., t:t + 73:8, :] for t in range(12)], axis=4)  # (B,u,s,v,t,4)
    pat = jnp.transpose(pat, (0, 1, 3, 2, 4, 5))                           # (B,u,v,s,t,c)
    pat = pat.reshape(B, 100, 576)
    return jnp.pad(pat, ((0, 0), (0, 12), (0, 0)))


# ----------------------------------------------------------------------------
# One-time parameter preparation (torch layouts -> kernel layouts, bf16)
# ----------------------------------------------------------------------------
def prepare_params(params):
    f32, bf16 = jnp.float32, jnp.bfloat16

    # conv1 (32,4,8,8) -> phase-embedded (576,128): the 8x8 kernel of output
    # phase (p,q) is placed at offset (4p,4q) inside the 12x12 patch window,
    # zeros elsewhere; output column = (p*2+q)*32 + out_channel.
    w1 = jnp.transpose(params["w1"], (2, 3, 1, 0))            # (8,8,4,32) [ky,kx,c,o]
    w1big = jnp.zeros((12, 12, 4, 4, 32), f32)                # [s,t,c,phase,o]
    for p in range(2):
        for q in range(2):
            w1big = w1big.at[4 * p:4 * p + 8, 4 * q:4 * q + 8, :, 2 * p + q, :].set(w1)
    w1big = w1big.reshape(576, 128).astype(bf16)
    b1 = jnp.tile(params["b1"], 4).reshape(1, 128).astype(f32)

    # conv2 (64,32,4,4) -> 4 x (128,64): group taps sharing the in-phase offset
    # (ai,bj) = (i//2, j//2); rows = (pi*2+qj)*32 + c so K=128 spans all phases.
    w2 = params["w2"]
    w2c = jnp.zeros((2, 2, 2, 2, 32, 64), f32)                # [ai,bj,pi,qj,c,o]
    for i in range(4):
        for j in range(4):
            w2c = w2c.at[i // 2, j // 2, i % 2, j % 2].set(
                jnp.transpose(w2[:, :, i, j], (1, 0)))
    w2c = w2c.reshape(4, 128, 64).astype(bf16)
    b2 = params["b2"].reshape(1, 64).astype(f32)

    # conv3 (64,64,3,3) -> (9,64,64), tap-major.
    w3 = jnp.transpose(params["w3"], (2, 3, 1, 0)).reshape(9, 64, 64).astype(bf16)
    b3 = params["b3"].reshape(1, 64).astype(f32)

    # fc4 torch (512,3136) with col = c*49 + h*7 + w -> rows (h*7+w)*64 + c.
    w4 = jnp.transpose(params["w4"].reshape(512, 64, 7, 7), (2, 3, 1, 0))
    w4 = w4.reshape(3136, 512).astype(bf16)
    b4 = params["b4"].reshape(1, 512).astype(f32)

    return {"w1": w1big, "b1": b1, "w2": w2c, "b2": b2,
            "w3": w3, "b3": b3, "w4": w4, "b4": b4}


# ----------------------------------------------------------------------------
# Forward pass
# ----------------------------------------------------------------------------
def nature_conv_body_forward(x_nchw, kp):
    B = x_nchw.shape[0]
    Bt = min(B, 8)                                   # batch tile per grid step
    Bpad = ((B + Bt - 1) // Bt) * Bt

    pat = _conv1_patches(x_nchw)                     # (B, 112, 576) bf16
    if Bpad != B:
        pat = jnp.pad(pat, ((0, Bpad - B), (0, 0), (0, 0)))

    conv_flops = 2 * Bpad * (112 * 576 * 128 + 4 * 96 * 128 * 64 + 9 * 72 * 64 * 64)
    conv_bytes = 2 * (Bpad * 112 * 576 + 576 * 128 + 4 * 128 * 64 + 9 * 64 * 64
                      + Bpad * 72 * 64) + 4 * (128 + 64 + 64)

    conv_out = pl.pallas_call(
        nature_conv_kernel,
        out_shape=jax.ShapeDtypeStruct((Bpad, 72, 64), jnp.bfloat16),
        grid=(Bpad // Bt,),
        in_specs=[
            pl.BlockSpec((Bt, 112, 576), lambda g: (g, 0, 0)),   # conv1 patches
            pl.BlockSpec((576, 128), lambda g: (0, 0)),          # w1 (phase-embedded)
            pl.BlockSpec((1, 128), lambda g: (0, 0)),            # b1 (tiled x4)
            pl.BlockSpec((4, 128, 64), lambda g: (0, 0, 0)),     # w2 (K=128 groups)
            pl.BlockSpec((1, 64), lambda g: (0, 0)),             # b2
            pl.BlockSpec((9, 64, 64), lambda g: (0, 0, 0)),      # w3 (tap-major)
            pl.BlockSpec((1, 64), lambda g: (0, 0)),             # b3
        ],
        out_specs=pl.BlockSpec((Bt, 72, 64), lambda g: (g, 0, 0)),
        scratch_shapes=[
            pltpu.VMEM((Bt, 112, 128), jnp.float32),   # conv1 activations (phase-as-ch)
            pltpu.VMEM((Bt, 96, 64), jnp.float32),     # conv2 activations (width-10 rows)
        ],
        compiler_params=pltpu.CompilerParams(
            dimension_semantics=("parallel",),
        ),
        cost_estimate=pl.CostEstimate(flops=conv_flops, transcendentals=0,
                                      bytes_accessed=conv_bytes),
    )(pat, kp["w1"], kp["b1"], kp["w2"], kp["b2"], kp["w3"], kp["b3"])

    # Valid conv3 rows are r3 = oy3*10 + ox3 (oy3, ox3 < 7); re-pack to the
    # (h, w, c) flatten order that the pre-permuted fc4 weight expects (tiny glue).
    y = conv_out[:B, :70, :].reshape(B, 7, 10, 64)[:, :, :7, :].reshape(B, 3136)

    fc_flops = 2 * B * 3136 * 512
    fc_bytes = 2 * (3136 * 512 + B * 3136) + 4 * (B * 512 + 512)
    # TODO(synk): tile the fc4 GEMM over batch for very large B (whole-array VMEM here).
    return pl.pallas_call(
        fc4_kernel,
        out_shape=jax.ShapeDtypeStruct((B, 512), jnp.float32),
        cost_estimate=pl.CostEstimate(flops=fc_flops, transcendentals=0,
                                      bytes_accessed=fc_bytes),
    )(y, kp["w4"], kp["b4"])


# ----------------------------------------------------------------------------
# Pure-JAX reference for a numerical sanity check
# ----------------------------------------------------------------------------
def reference_forward(x_nchw, params):
    dn = ("NCHW", "OIHW", "NCHW")

    def conv(x, w, b, s):
        y = jax.lax.conv_general_dilated(x, w, (s, s), "VALID", dimension_numbers=dn)
        return jax.nn.relu(y + b[None, :, None, None])

    y = conv(x_nchw, params["w1"], params["b1"], 4)
    y = conv(y, params["w2"], params["b2"], 2)
    y = conv(y, params["w3"], params["b3"], 1)
    y = y.reshape(y.shape[0], -1)
    y = jax.nn.relu(jnp.dot(y, params["w4"].T) + params["b4"])
    return y


# ----------------------------------------------------------------------------
# Deterministic synthetic parameters (torch layouts, scaled ~1/sqrt(fan_in))
# ----------------------------------------------------------------------------
def init_params(key):
    ks = jax.random.split(key, 8)

    def w_init(k, shape):
        fan_in = 1
        for d in shape[1:]:
            fan_in *= d
        return jax.random.normal(k, shape, jnp.float32) / jnp.sqrt(float(fan_in))

    return {
        "w1": w_init(ks[0], (32, 4, 8, 8)),
        "b1": 0.01 * jax.random.normal(ks[1], (32,), jnp.float32),
        "w2": w_init(ks[2], (64, 32, 4, 4)),
        "b2": 0.01 * jax.random.normal(ks[3], (64,), jnp.float32),
        "w3": w_init(ks[4], (64, 64, 3, 3)),
        "b3": 0.01 * jax.random.normal(ks[5], (64,), jnp.float32),
        "w4": w_init(ks[6], (512, 7 * 7 * 64)),
        "b4": 0.01 * jax.random.normal(ks[7], (512,), jnp.float32),
    }


if __name__ == "__main__":
    key = jax.random.PRNGKey(0)
    kx, kparam = jax.random.split(key)

    # Input shape implied by the module: 84x84 Atari frames, in_channels=4. Batch = 2.
    x = jax.random.normal(kx, (2, 4, 84, 84), jnp.float32)
    params = init_params(kparam)
    kparams = prepare_params(params)     # one-time weight re-layout + bf16 cast

    fwd = jax.jit(nature_conv_body_forward)
    out = fwd(x, kparams)
    jax.block_until_ready(out)
    assert out.shape == (2, 512), out.shape

    ref = reference_forward(x, params)
    err = float(jnp.max(jnp.abs(out - ref)))
    rel = err / (float(jnp.max(jnp.abs(ref))) + 1e-6)
    # Kernel runs bf16 MXU passes with f32 accumulation (same as default TPU precision).
    assert err < 5e-2 or rel < 2e-2, f"mismatch vs reference: max abs err {err}, rel {rel}"

    print("KERNEL_OK")
</pallas_src>

<mosaic_0001>
module attributes {stable_mosaic.version = 11 : i64} {
  func.func @nature_conv_kernel(%arg0: i32, %arg1: memref<2x112x576xbf16, #tpu.memory_space<vmem>>, %arg2: memref<576x128xbf16, #tpu.memory_space<vmem>>, %arg3: memref<1x128xf32, #tpu.memory_space<vmem>>, %arg4: memref<4x128x64xbf16, #tpu.memory_space<vmem>>, %arg5: memref<1x64xf32, #tpu.memory_space<vmem>>, %arg6: memref<9x64x64xbf16, #tpu.memory_space<vmem>>, %arg7: memref<1x64xf32, #tpu.memory_space<vmem>>, %arg8: memref<2x72x64xbf16, #tpu.memory_space<vmem>>, %arg9: memref<2x112x128xf32, #tpu.memory_space<vmem>>, %arg10: memref<2x96x64xf32, #tpu.memory_space<vmem>>) attributes {dimension_semantics = [#tpu.dimension_semantics<parallel>], iteration_bounds = array<i64: 1>, scalar_prefetch = 0 : i64, scratch_operands = 2 : i64, tpu.core_type = #tpu.core_type<tc>, window_params = [{transform_indices = @transform_0, window_bounds = array<i64: 2, 112, 576>}, {pipeline_mode = #tpu.pipeline_mode<synchronous>, transform_indices = @transform_1, window_bounds = array<i64: 576, 128>}, {pipeline_mode = #tpu.pipeline_mode<synchronous>, transform_indices = @transform_2, window_bounds = array<i64: 1, 128>}, {pipeline_mode = #tpu.pipeline_mode<synchronous>, transform_indices = @transform_3, window_bounds = array<i64: 4, 128, 64>}, {pipeline_mode = #tpu.pipeline_mode<synchronous>, transform_indices = @transform_4, window_bounds = array<i64: 1, 64>}, {pipeline_mode = #tpu.pipeline_mode<synchronous>, transform_indices = @transform_5, window_bounds = array<i64: 9, 64, 64>}, {pipeline_mode = #tpu.pipeline_mode<synchronous>, transform_indices = @transform_6, window_bounds = array<i64: 1, 64>}, {transform_indices = @transform_7, window_bounds = array<i64: 2, 72, 64>}]} {
    %c0 = arith.constant 0 : index
    %c0_0 = arith.constant 0 : index
    %c0_1 = arith.constant 0 : index
    %0 = vector.load %arg1[%c0, %c0_0, %c0_1] : memref<2x112x576xbf16, #tpu.memory_space<vmem>>, vector<2x112x576xbf16>
    %1 = vector.shape_cast %0 : vector<2x112x576xbf16> to vector<224x576xbf16>
    %c0_2 = arith.constant 0 : index
    %c0_3 = arith.constant 0 : index
    %2 = vector.load %arg2[%c0_2, %c0_3] : memref<576x128xbf16, #tpu.memory_space<vmem>>, vector<576x128xbf16>
    %cst = arith.constant dense<0.000000e+00> : vector<224x128xf32>
    %3 = tpu.matmul %1, %2, %cst {dimension_numbers = #tpu.dot_dimension_numbers<[1], [0], [0], [1], [0, 0, 1, 1], [], []>} : vector<224x576xbf16>, vector<576x128xbf16>, vector<224x128xf32> -> vector<224x128xf32>
    %c0_4 = arith.constant 0 : index
    %c0_5 = arith.constant 0 : index
    %4 = vector.load %arg3[%c0_4, %c0_5] : memref<1x128xf32, #tpu.memory_space<vmem>>, vector<1x128xf32>
    %5 = vector.broadcast %4 : vector<1x128xf32> to vector<224x128xf32>
    %6 = arith.addf %3, %5 : vector<224x128xf32>
    %cst_6 = arith.constant 0.000000e+00 : f32
    %7 = vector.broadcast %cst_6 : f32 to vector<224x128xf32>
    %8 = arith.maximumf %6, %7 : vector<224x128xf32>
    %9 = vector.shape_cast %8 : vector<224x128xf32> to vector<2x112x128xf32>
    %c0_7 = arith.constant 0 : index
    %c0_8 = arith.constant 0 : index
    %c0_9 = arith.constant 0 : index
    %10 = vector.load %arg9[%c0_7, %c0_8, %c0_9] : memref<2x112x128xf32, #tpu.memory_space<vmem>>, vector<2x112x128xf32>
    tpu.vector_store %arg9[%c0_7, %c0_8, %c0_9], %9 {strides = array<i32>} : memref<2x112x128xf32, #tpu.memory_space<vmem>>, vector<2x112x128xf32>,
    %cst_10 = arith.constant 0.000000e+00 : f32
    %11 = vector.broadcast %cst_10 : f32 to vector<192x64xf32>
    %c0_11 = arith.constant 0 : index
    %c0_12 = arith.constant 0 : index
    %c0_13 = arith.constant 0 : index
    %12 = vector.load %arg9[%c0_11, %c0_12, %c0_13] : memref<2x112x128xf32, #tpu.memory_space<vmem>>, vector<2x96x128xf32>
    %13 = vector.shape_cast %12 : vector<2x96x128xf32> to vector<192x128xf32>
    %14 = arith.truncf %13 : vector<192x128xf32> to vector<192x128xbf16>
    %c0_14 = arith.constant 0 : index
    %c0_15 = arith.constant 0 : index
    %c0_16 = arith.constant 0 : index
    %15 = vector.load %arg4[%c0_14, %c0_15, %c0_16] : memref<4x128x64xbf16, #tpu.memory_space<vmem>>, vector<1x128x64xbf16>
    %16 = vector.shape_cast %15 : vector<1x128x64xbf16> to vector<128x64xbf16>
    %cst_17 = arith.constant dense<0.000000e+00> : vector<192x64xf32>
    %17 = tpu.matmul %14, %16, %cst_17 {dimension_numbers = #tpu.dot_dimension_numbers<[1], [0], [0], [1], [0, 0, 1, 1], [], []>} : vector<192x128xbf16>, vector<128x64xbf16>, vector<192x64xf32> -> vector<192x64xf32>
    %18 = arith.addf %11, %17 : vector<192x64xf32>
    %c0_18 = arith.constant 0 : index
    %c1 = arith.constant 1 : index
    %c0_19 = arith.constant 0 : index
    %19 = vector.load %arg9[%c0_18, %c1, %c0_19] : memref<2x112x128xf32, #tpu.memory_space<vmem>>, vector<2x96x128xf32>
    %20 = vector.shape_cast %19 : vector<2x96x128xf32> to vector<192x128xf32>
    %21 = arith.truncf %20 : vector<192x128xf32> to vector<192x128xbf16>
    %c1_20 = arith.constant 1 : index
    %c0_21 = arith.constant 0 : index
    %c0_22 = arith.constant 0 : index
    %22 = vector.load %arg4[%c1_20, %c0_21, %c0_22] : memref<4x128x64xbf16, #tpu.memory_space<vmem>>, vector<1x128x64xbf16>
    %23 = vector.shape_cast %22 : vector<1x128x64xbf16> to vector<128x64xbf16>
    %cst_23 = arith.constant dense<0.000000e+00> : vector<192x64xf32>
    %24 = tpu.matmul %21, %23, %cst_23 {dimension_numbers = #tpu.dot_dimension_numbers<[1], [0], [0], [1], [0, 0, 1, 1], [], []>} : vector<192x128xbf16>, vector<128x64xbf16>, vector<192x64xf32> -> vector<192x64xf32>
    %25 = arith.addf %18, %24 : vector<192x64xf32>
    %c0_24 = arith.constant 0 : index
    %c10 = arith.constant 10 : index
    %c0_25 = arith.constant 0 : index
    %26 = vector.load %arg9[%c0_24, %c10, %c0_25] : memref<2x112x128xf32, #tpu.memory_space<vmem>>, vector<2x96x128xf32>
    %27 = vector.shape_cast %26 : vector<2x96x128xf32> to vector<192x128xf32>
    %28 = arith.truncf %27 : vector<192x128xf32> to vector<192x128xbf16>
    %c2 = arith.constant 2 : index
    %c0_26 = arith.constant 0 : index
    %c0_27 = arith.constant 0 : index
    %29 = vector.load %arg4[%c2, %c0_26, %c0_27] : memref<4x128x64xbf16, #tpu.memory_space<vmem>>, vector<1x128x64xbf16>
    %30 = vector.shape_cast %29 : vector<1x128x64xbf16> to vector<128x64xbf16>
    %cst_28 = arith.constant dense<0.000000e+00> : vector<192x64xf32>
    %31 = tpu.matmul %28, %30, %cst_28 {dimension_numbers = #tpu.dot_dimension_numbers<[1], [0], [0], [1], [0, 0, 1, 1], [], []>} : vector<192x128xbf16>, vector<128x64xbf16>, vector<192x64xf32> -> vector<192x64xf32>
    %32 = arith.addf %25, %31 : vector<192x64xf32>
    %c0_29 = arith.constant 0 : index
    %c11 = arith.constant 11 : index
    %c0_30 = arith.constant 0 : index
    %33 = vector.load %arg9[%c0_29, %c11, %c0_30] : memref<2x112x128xf32, #tpu.memory_space<vmem>>, vector<2x96x128xf32>
    %34 = vector.shape_cast %33 : vector<2x96x128xf32> to vector<192x128xf32>
    %35 = arith.truncf %34 : vector<192x128xf32> to vector<192x128xbf16>
    %c3 = arith.constant 3 : index
    %c0_31 = arith.constant 0 : index
    %c0_32 = arith.constant 0 : index
    %36 = vector.load %arg4[%c3, %c0_31, %c0_32] : memref<4x128x64xbf16, #tpu.memory_space<vmem>>, vector<1x128x64xbf16>
    %37 = vector.shape_cast %36 : vector<1x128x64xbf16> to vector<128x64xbf16>
    %cst_33 = arith.constant dense<0.000000e+00> : vector<192x64xf32>
    %38 = tpu.matmul %35, %37, %cst_33 {dimension_numbers = #tpu.dot_dimension_numbers<[1], [0], [0], [1], [0, 0, 1, 1], [], []>} : vector<192x128xbf16>, vector<128x64xbf16>, vector<192x64xf32> -> vector<192x64xf32>
    %39 = arith.addf %32, %38 : vector<192x64xf32>
    %c0_34 = arith.constant 0 : index
    %c0_35 = arith.constant 0 : index
    %40 = vector.load %arg5[%c0_34, %c0_35] : memref<1x64xf32, #tpu.memory_space<vmem>>, vector<1x64xf32>
    %41 = vector.broadcast %40 : vector<1x64xf32> to vector<192x64xf32>
    %42 = arith.addf %39, %41 : vector<192x64xf32>
    %cst_36 = arith.constant 0.000000e+00 : f32
    %43 = vector.broadcast %cst_36 : f32 to vector<192x64xf32>
    %44 = arith.maximumf %42, %43 : vector<192x64xf32>
    %45 = vector.shape_cast %44 : vector<192x64xf32> to vector<2x96x64xf32>
    %c0_37 = arith.constant 0 : index
    %c0_38 = arith.constant 0 : index
    %c0_39 = arith.constant 0 : index
    %46 = vector.load %arg10[%c0_37, %c0_38, %c0_39] : memref<2x96x64xf32, #tpu.memory_space<vmem>>, vector<2x96x64xf32>
    tpu.vector_store %arg10[%c0_37, %c0_38, %c0_39], %45 {strides = array<i32>} : memref<2x96x64xf32, #tpu.memory_space<vmem>>, vector<2x96x64xf32>,
    %cst_40 = arith.constant 0.000000e+00 : f32
    %47 = vector.broadcast %cst_40 : f32 to vector<144x64xf32>
    %c0_41 = arith.constant 0 : index
    %c0_42 = arith.constant 0 : index
    %c0_43 = arith.constant 0 : index
    %48 = vector.load %arg10[%c0_41, %c0_42, %c0_43] : memref<2x96x64xf32, #tpu.memory_space<vmem>>, vector<2x72x64xf32>
    %49 = vector.shape_cast %48 : vector<2x72x64xf32> to vector<144x64xf32>
    %50 = arith.truncf %49 : vector<144x64xf32> to vector<144x64xbf16>
    %c0_44 = arith.constant 0 : index
    %c0_45 = arith.constant 0 : index
    %c0_46 = arith.constant 0 : index
    %51 = vector.load %arg6[%c0_44, %c0_45, %c0_46] : memref<9x64x64xbf16, #tpu.memory_space<vmem>>, vector<1x64x64xbf16>
    %52 = vector.shape_cast %51 : vector<1x64x64xbf16> to vector<64x64xbf16>
    %cst_47 = arith.constant dense<0.000000e+00> : vector<144x64xf32>
    %53 = tpu.matmul %50, %52, %cst_47 {dimension_numbers = #tpu.dot_dimension_numbers<[1], [0], [0], [1], [0, 0, 1, 1], [], []>} : vector<144x64xbf16>, vector<64x64xbf16>, vector<144x64xf32> -> vector<144x64xf32>
    %54 = arith.addf %47, %53 : vector<144x64xf32>
    %c0_48 = arith.constant 0 : index
    %c1_49 = arith.constant 1 : index
    %c0_50 = arith.constant 0 : index
    %55 = vector.load %arg10[%c0_48, %c1_49, %c0_50] : memref<2x96x64xf32, #tpu.memory_space<vmem>>, vector<2x72x64xf32>
    %56 = vector.shape_cast %55 : vector<2x72x64xf32> to vector<144x64xf32>
    %57 = arith.truncf %56 : vector<144x64xf32> to vector<144x64xbf16>
    %c1_51 = arith.constant 1 : index
    %c0_52 = arith.constant 0 : index
    %c0_53 = arith.constant 0 : index
    %58 = vector.load %arg6[%c1_51, %c0_52, %c0_53] : memref<9x64x64xbf16, #tpu.memory_space<vmem>>, vector<1x64x64xbf16>
    %59 = vector.shape_cast %58 : vector<1x64x64xbf16> to vector<64x64xbf16>
    %cst_54 = arith.constant dense<0.000000e+00> : vector<144x64xf32>
    %60 = tpu.matmul %57, %59, %cst_54 {dimension_numbers = #tpu.dot_dimension_numbers<[1], [0], [0], [1], [0, 0, 1, 1], [], []>} : vector<144x64xbf16>, vector<64x64xbf16>, vector<144x64xf32> -> vector<144x64xf32>
    %61 = arith.addf %54, %60 : vector<144x64xf32>
    %c0_55 = arith.constant 0 : index
    %c2_56 = arith.constant 2 : index
    %c0_57 = arith.constant 0 : index
    %62 = vector.load %arg10[%c0_55, %c2_56, %c0_57] : memref<2x96x64xf32, #tpu.memory_space<vmem>>, vector<2x72x64xf32>
    %63 = vector.shape_cast %62 : vector<2x72x64xf32> to vector<144x64xf32>
    %64 = arith.truncf %63 : vector<144x64xf32> to vector<144x64xbf16>
    %c2_58 = arith.constant 2 : index
    %c0_59 = arith.constant 0 : index
    %c0_60 = arith.constant 0 : index
    %65 = vector.load %arg6[%c2_58, %c0_59, %c0_60] : memref<9x64x64xbf16, #tpu.memory_space<vmem>>, vector<1x64x64xbf16>
    %66 = vector.shape_cast %65 : vector<1x64x64xbf16> to vector<64x64xbf16>
    %cst_61 = arith.constant dense<0.000000e+00> : vector<144x64xf32>
    %67 = tpu.matmul %64, %66, %cst_61 {dimension_numbers = #tpu.dot_dimension_numbers<[1], [0], [0], [1], [0, 0, 1, 1], [], []>} : vector<144x64xbf16>, vector<64x64xbf16>, vector<144x64xf32> -> vector<144x64xf32>
    %68 = arith.addf %61, %67 : vector<144x64xf32>
    %c0_62 = arith.constant 0 : index
    %c10_63 = arith.constant 10 : index
    %c0_64 = arith.constant 0 : index
    %69 = vector.load %arg10[%c0_62, %c10_63, %c0_64] : memref<2x96x64xf32, #tpu.memory_space<vmem>>, vector<2x72x64xf32>
    %70 = vector.shape_cast %69 : vector<2x72x64xf32> to vector<144x64xf32>
    %71 = arith.truncf %70 : vector<144x64xf32> to vector<144x64xbf16>
    %c3_65 = arith.constant 3 : index
    %c0_66 = arith.constant 0 : index
    %c0_67 = arith.constant 0 : index
    %72 = vector.load %arg6[%c3_65, %c0_66, %c0_67] : memref<9x64x64xbf16, #tpu.memory_space<vmem>>, vector<1x64x64xbf16>
    %73 = vector.shape_cast %72 : vector<1x64x64xbf16> to vector<64x64xbf16>
    %cst_68 = arith.constant dense<0.000000e+00> : vector<144x64xf32>
    %74 = tpu.matmul %71, %73, %cst_68 {dimension_numbers = #tpu.dot_dimension_numbers<[1], [0], [0], [1], [0, 0, 1, 1], [], []>} : vector<144x64xbf16>, vector<64x64xbf16>, vector<144x64xf32> -> vector<144x64xf32>
    %75 = arith.addf %68, %74 : vector<144x64xf32>
    %c0_69 = arith.constant 0 : index
    %c11_70 = arith.constant 11 : index
    %c0_71 = arith.constant 0 : index
    %76 = vector.load %arg10[%c0_69, %c11_70, %c0_71] : memref<2x96x64xf32, #tpu.memory_space<vmem>>, vector<2x72x64xf32>
    %77 = vector.shape_cast %76 : vector<2x72x64xf32> to vector<144x64xf32>
    %78 = arith.truncf %77 : vector<144x64xf32> to vector<144x64xbf16>
    %c4 = arith.constant 4 : index
    %c0_72 = arith.constant 0 : index
    %c0_73 = arith.constant 0 : index
    %79 = vector.load %arg6[%c4, %c0_72, %c0_73] : memref<9x64x64xbf16, #tpu.memory_space<vmem>>, vector<1x64x64xbf16>
    %80 = vector.shape_cast %79 : vector<1x64x64xbf16> to vector<64x64xbf16>
    %cst_74 = arith.constant dense<0.000000e+00> : vector<144x64xf32>
    %81 = tpu.matmul %78, %80, %cst_74 {dimension_numbers = #tpu.dot_dimension_numbers<[1], [0], [0], [1], [0, 0, 1, 1], [], []>} : vector<144x64xbf16>, vector<64x64xbf16>, vector<144x64xf32> -> vector<144x64xf32>
    %82 = arith.addf %75, %81 : vector<144x64xf32>
    %c0_75 = arith.constant 0 : index
    %c12 = arith.constant 12 : index
    %c0_76 = arith.constant 0 : index
    %83 = vector.load %arg10[%c0_75, %c12, %c0_76] : memref<2x96x64xf32, #tpu.memory_space<vmem>>, vector<2x72x64xf32>
    %84 = vector.shape_cast %83 : vector<2x72x64xf32> to vector<144x64xf32>
    %85 = arith.truncf %84 : vector<144x64xf32> to vector<144x64xbf16>
    %c5 = arith.constant 5 : index
    %c0_77 = arith.constant 0 : index
    %c0_78 = arith.constant 0 : index
    %86 = vector.load %arg6[%c5, %c0_77, %c0_78] : memref<9x64x64xbf16, #tpu.memory_space<vmem>>, vector<1x64x64xbf16>
    %87 = vector.shape_cast %86 : vector<1x64x64xbf16> to vector<64x64xbf16>
    %cst_79 = arith.constant dense<0.000000e+00> : vector<144x64xf32>
    %88 = tpu.matmul %85, %87, %cst_79 {dimension_numbers = #tpu.dot_dimension_numbers<[1], [0], [0], [1], [0, 0, 1, 1], [], []>} : vector<144x64xbf16>, vector<64x64xbf16>, vector<144x64xf32> -> vector<144x64xf32>
    %89 = arith.addf %82, %88 : vector<144x64xf32>
    %c0_80 = arith.constant 0 : index
    %c20 = arith.constant 20 : index
    %c0_81 = arith.constant 0 : index
    %90 = vector.load %arg10[%c0_80, %c20, %c0_81] : memref<2x96x64xf32, #tpu.memory_space<vmem>>, vector<2x72x64xf32>
    %91 = vector.shape_cast %90 : vector<2x72x64xf32> to vector<144x64xf32>
    %92 = arith.truncf %91 : vector<144x64xf32> to vector<144x64xbf16>
    %c6 = arith.constant 6 : index
    %c0_82 = arith.constant 0 : index
    %c0_83 = arith.constant 0 : index
    %93 = vector.load %arg6[%c6, %c0_82, %c0_83] : memref<9x64x64xbf16, #tpu.memory_space<vmem>>, vector<1x64x64xbf16>
    %94 = vector.shape_cast %93 : vector<1x64x64xbf16> to vector<64x64xbf16>
    %cst_84 = arith.constant dense<0.000000e+00> : vector<144x64xf32>
    %95 = tpu.matmul %92, %94, %cst_84 {dimension_numbers = #tpu.dot_dimension_numbers<[1], [0], [0], [1], [0, 0, 1, 1], [], []>} : vector<144x64xbf16>, vector<64x64xbf16>, vector<144x64xf32> -> vector<144x64xf32>
    %96 = arith.addf %89, %95 : vector<144x64xf32>
    %c0_85 = arith.constant 0 : index
    %c21 = arith.constant 21 : index
    %c0_86 = arith.constant 0 : index
    %97 = vector.load %arg10[%c0_85, %c21, %c0_86] : memref<2x96x64xf32, #tpu.memory_space<vmem>>, vector<2x72x64xf32>
    %98 = vector.shape_cast %97 : vector<2x72x64xf32> to vector<144x64xf32>
    %99 = arith.truncf %98 : vector<144x64xf32> to vector<144x64xbf16>
    %c7 = arith.constant 7 : index
    %c0_87 = arith.constant 0 : index
    %c0_88 = arith.constant 0 : index
    %100 = vector.load %arg6[%c7, %c0_87, %c0_88] : memref<9x64x64xbf16, #tpu.memory_space<vmem>>, vector<1x64x64xbf16>
    %101 = vector.shape_cast %100 : vector<1x64x64xbf16> to vector<64x64xbf16>
    %cst_89 = arith.constant dense<0.000000e+00> : vector<144x64xf32>
    %102 = tpu.matmul %99, %101, %cst_89 {dimension_numbers = #tpu.dot_dimension_numbers<[1], [0], [0], [1], [0, 0, 1, 1], [], []>} : vector<144x64xbf16>, vector<64x64xbf16>, vector<144x64xf32> -> vector<144x64xf32>
    %103 = arith.addf %96, %102 : vector<144x64xf32>
    %c0_90 = arith.constant 0 : index
    %c22 = arith.constant 22 : index
    %c0_91 = arith.constant 0 : index
    %104 = vector.load %arg10[%c0_90, %c22, %c0_91] : memref<2x96x64xf32, #tpu.memory_space<vmem>>, vector<2x72x64xf32>
    %105 = vector.shape_cast %104 : vector<2x72x64xf32> to vector<144x64xf32>
    %106 = arith.truncf %105 : vector<144x64xf32> to vector<144x64xbf16>
    %c8 = arith.constant 8 : index
    %c0_92 = arith.constant 0 : index
    %c0_93 = arith.constant 0 : index
    %107 = vector.load %arg6[%c8, %c0_92, %c0_93] : memref<9x64x64xbf16, #tpu.memory_space<vmem>>, vector<1x64x64xbf16>
    %108 = vector.shape_cast %107 : vector<1x64x64xbf16> to vector<64x64xbf16>
    %cst_94 = arith.constant dense<0.000000e+00> : vector<144x64xf32>
    %109 = tpu.matmul %106, %108, %cst_94 {dimension_numbers = #tpu.dot_dimension_numbers<[1], [0], [0], [1], [0, 0, 1, 1], [], []>} : vector<144x64xbf16>, vector<64x64xbf16>, vector<144x64xf32> -> vector<144x64xf32>
    %110 = arith.addf %103, %109 : vector<144x64xf32>
    %c0_95 = arith.constant 0 : index
    %c0_96 = arith.constant 0 : index
    %111 = vector.load %arg7[%c0_95, %c0_96] : memref<1x64xf32, #tpu.memory_space<vmem>>, vector<1x64xf32>
    %112 = vector.broadcast %111 : vector<1x64xf32> to vector<144x64xf32>
    %113 = arith.addf %110, %112 : vector<144x64xf32>
    %cst_97 = arith.constant 0.000000e+00 : f32
    %114 = vector.broadcast %cst_97 : f32 to vector<144x64xf32>
    %115 = arith.maximumf %113, %114 : vector<144x64xf32>
    %116 = vector.shape_cast %115 : vector<144x64xf32> to vector<2x72x64xf32>
    %117 = arith.truncf %116 : vector<2x72x64xf32> to vector<2x72x64xbf16>
    %c0_98 = arith.constant 0 : index
    %c0_99 = arith.constant 0 : index
    %c0_100 = arith.constant 0 : index
    %118 = vector.load %arg8[%c0_98, %c0_99, %c0_100] : memref<2x72x64xbf16, #tpu.memory_space<vmem>>, vector<2x72x64xbf16>
    tpu.vector_store %arg8[%c0_98, %c0_99, %c0_100], %117 {strides = array<i32>} : memref<2x72x64xbf16, #tpu.memory_space<vmem>>, vector<2x72x64xbf16>,
    return
  }
  func.func @transform_0(%arg0: i32) -> (i32, i32, i32) {
    %c0_i32 = arith.constant 0 : i32
    %c0_i32_0 = arith.constant 0 : i32
    %c0_i32_1 = arith.constant 0 : i32
    return %arg0, %c0_i32, %c0_i32_0 : i32, i32, i32
  }
  func.func @transform_1(%arg0: i32) -> (i32, i32) {
    %c0_i32 = arith.constant 0 : i32
    %c0_i32_0 = arith.constant 0 : i32
    %c0_i32_1 = arith.constant 0 : i32
    return %c0_i32, %c0_i32_0 : i32, i32
  }
  func.func @transform_2(%arg0: i32) -> (i32, i32) {
    %c0_i32 = arith.constant 0 : i32
    %c0_i32_0 = arith.constant 0 : i32
    %c0_i32_1 = arith.constant 0 : i32
    return %c0_i32, %c0_i32_0 : i32, i32
  }
  func.func @transform_3(%arg0: i32) -> (i32, i32, i32) {
    %c0_i32 = arith.constant 0 : i32
    %c0_i32_0 = arith.constant 0 : i32
    %c0_i32_1 = arith.constant 0 : i32
    %c0_i32_2 = arith.constant 0 : i32
    return %c0_i32, %c0_i32_0, %c0_i32_1 : i32, i32, i32
  }
  func.func @transform_4(%arg0: i32) -> (i32, i32) {
    %c0_i32 = arith.constant 0 : i32
    %c0_i32_0 = arith.constant 0 : i32
    %c0_i32_1 = arith.constant 0 : i32
    return %c0_i32, %c0_i32_0 : i32, i32
  }
  func.func @transform_5(%arg0: i32) -> (i32, i32, i32) {
    %c0_i32 = arith.constant 0 : i32
    %c0_i32_0 = arith.constant 0 : i32
    %c0_i32_1 = arith.constant 0 : i32
    %c0_i32_2 = arith.constant 0 : i32
    return %c0_i32, %c0_i32_0, %c0_i32_1 : i32, i32, i32
  }
  func.func @transform_6(%arg0: i32) -> (i32, i32) {
    %c0_i32 = arith.constant 0 : i32
    %c0_i32_0 = arith.constant 0 : i32
    %c0_i32_1 = arith.constant 0 : i32
    return %c0_i32, %c0_i32_0 : i32, i32
  }
  func.func @transform_7(%arg0: i32) -> (i32, i32, i32) {
    %c0_i32 = arith.constant 0 : i32
    %c0_i32_0 = arith.constant 0 : i32
    %c0_i32_1 = arith.constant 0 : i32
    return %arg0, %c0_i32, %c0_i32_0 : i32, i32, i32
  }
}

module attributes {stable_mosaic.version = 11 : i64} {
  func.func @fc4_kernel(%arg0: memref<2x3136xbf16, #tpu.memory_space<vmem>>, %arg1: memref<3136x512xbf16, #tpu.memory_space<vmem>>, %arg2: memref<1x512xf32, #tpu.memory_space<vmem>>, %arg3: memref<2x512xf32, #tpu.memory_space<vmem>>) attributes {dimension_semantics = [], scalar_prefetch = 0 : i64, scratch_operands = 0 : i64, tpu.core_type = #tpu.core_type<tc>} {
    %c0 = arith.constant 0 : index
    %c0_0 = arith.constant 0 : index
    %0 = vector.load %arg0[%c0, %c0_0] : memref<2x3136xbf16, #tpu.memory_space<vmem>>, vector<2x3136xbf16>
    %c0_1 = arith.constant 0 : index
    %c0_2 = arith.constant 0 : index
    %1 = vector.load %arg1[%c0_1, %c0_2] : memref<3136x512xbf16, #tpu.memory_space<vmem>>, vector<3136x512xbf16>
    %cst = arith.constant dense<0.000000e+00> : vector<2x512xf32>
    %2 = tpu.matmul %0, %1, %cst {dimension_numbers = #tpu.dot_dimension_numbers<[1], [0], [0], [1], [0, 0, 1, 1], [], []>} : vector<2x3136xbf16>, vector<3136x512xbf16>, vector<2x512xf32> -> vector<2x512xf32>
    %c0_3 = arith.constant 0 : index
    %c0_4 = arith.constant 0 : index
    %3 = vector.load %arg2[%c0_3, %c0_4] : memref<1x512xf32, #tpu.memory_space<vmem>>, vector<1x512xf32>
    %4 = vector.broadcast %3 : vector<1x512xf32> to vector<2x512xf32>
    %5 = arith.addf %2, %4 : vector<2x512xf32>
    %cst_5 = arith.constant 0.000000e+00 : f32
    %6 = vector.broadcast %cst_5 : f32 to vector<2x512xf32>
    %7 = arith.maximumf %5, %6 : vector<2x512xf32>
    %c0_6 = arith.constant 0 : index
    %c0_7 = arith.constant 0 : index
    %8 = vector.load %arg3[%c0_6, %c0_7] : memref<2x512xf32, #tpu.memory_space<vmem>>, vector<2x512xf32>
    tpu.vector_store %arg3[%c0_6, %c0_7], %7 {strides = array<i32>} : memref<2x512xf32, #tpu.memory_space<vmem>>, vector<2x512xf32>,
    return
  }
}

</mosaic_0001>

<llo_original>
// kernel: nature_conv_body_forward.2
$region0: #{nature_conv_body_forward.2}
  #allocation0 [shape = 'u32[]', space=smem, size = 0x4, offset = 0x4, fixed_abs, tag = 'smem constant byte address 0x4 - core index']
  #allocation1 [shape = 'u32[144,128]{1,0:T(1,128)}', space=vmem, size = 0x12000, scoped, tag = 'internal scratch']
  #allocation2 [shape = 'f32[2,112,128]{2,1,0:T(8,128)}', space=vmem, size = 0x1c000, scoped, tag = 'scratch operand']
  #allocation3 [shape = 'f32[2,96,64]{2,1,0:T(8,128)}', space=vmem, size = 0x18000, scoped, tag = 'scratch operand']
  %s0 = inlined_call_operand.vmem [shape: bf16[2,112,576], index: 0, kind: input, shape index: {}]
  %s1 = inlined_call_operand.vmem [shape: bf16[576,128], index: 1, kind: input, shape index: {}]
  %s2 = inlined_call_operand.vmem [shape: f32[1,128], index: 2, kind: input, shape index: {}]
  %s3 = inlined_call_operand.vmem [shape: bf16[4,128,64], index: 3, kind: input, shape index: {}]
  %s4 = inlined_call_operand.vmem [shape: f32[1,64], index: 4, kind: input, shape index: {}]
  %s5 = inlined_call_operand.vmem [shape: bf16[9,64,64], index: 5, kind: input, shape index: {}]
  %s6 = inlined_call_operand.vmem [shape: f32[1,64], index: 6, kind: input, shape index: {}]
  %s7 = inlined_call_operand.vmem [shape: bf16[2,72,64], index: 7, kind: output, shape index: {}]
  %s8 = sld [smem:[#allocation0]]
  $region38: #{nature_conv_body_forward.2} parent=0
    _
  %s10 = ssub.s32 1, %s8
  %s11 = scalar_select 0, %s10, %s8
  // Predicated region
  $region2: #{nature_conv_body_forward.2} parent=0 // pred_check
    _
  $region3: #{nature_conv_body_forward.2} parent=0 // pred_check_branch
    %13 = sbr.rel (0) target = $region5
  $region4: #{nature_conv_body_forward.2} parent=0 // pred_region
    _
  $region5: #{nature_conv_body_forward.2} parent=0 // pred_fallthru
    _
  // Predicated region
  $region6: #{nature_conv_body_forward.2} parent=0 // pred_check
    _
  $region7: #{nature_conv_body_forward.2} parent=0 // pred_check_branch
    %15 = sbr.rel (0) target = $region9
  $region8: #{nature_conv_body_forward.2} parent=0 // pred_region
    _
  $region9: #{nature_conv_body_forward.2} parent=0 // pred_fallthru
    _
  // Predicated region
  $region10: #{nature_conv_body_forward.2} parent=0 // pred_check
    _
  $region11: #{nature_conv_body_forward.2} parent=0 // pred_check_branch
    %17 = sbr.rel (0) target = $region13
  $region12: #{nature_conv_body_forward.2} parent=0 // pred_region
    _
  $region13: #{nature_conv_body_forward.2} parent=0 // pred_fallthru
    _
  // Predicated region
  $region14: #{nature_conv_body_forward.2} parent=0 // pred_check
    _
  $region15: #{nature_conv_body_forward.2} parent=0 // pred_check_branch
    %19 = sbr.rel (0) target = $region17
  $region16: #{nature_conv_body_forward.2} parent=0 // pred_region
    _
  $region17: #{nature_conv_body_forward.2} parent=0 // pred_fallthru
    _
  // Predicated region
  $region18: #{nature_conv_body_forward.2} parent=0 // pred_check
    _
  $region19: #{nature_conv_body_forward.2} parent=0 // pred_check_branch
    %21 = sbr.rel (0) target = $region21
  $region20: #{nature_conv_body_forward.2} parent=0 // pred_region
    _
  $region21: #{nature_conv_body_forward.2} parent=0 // pred_fallthru
    _
  // Predicated region
  $region22: #{nature_conv_body_forward.2} parent=0 // pred_check
    _
  $region23: #{nature_conv_body_forward.2} parent=0 // pred_check_branch
    %23 = sbr.rel (0) target = $region25
  $region24: #{nature_conv_body_forward.2} parent=0 // pred_region
    _
  $region25: #{nature_conv_body_forward.2} parent=0 // pred_fallthru
    _
  // Predicated region
  $region26: #{nature_conv_body_forward.2} parent=0 // pred_check
    _
  $region27: #{nature_conv_body_forward.2} parent=0 // pred_check_branch
    %25 = sbr.rel (0) target = $region29
  $region28: #{nature_conv_body_forward.2} parent=0 // pred_region
    _
  $region29: #{nature_conv_body_forward.2} parent=0 // pred_fallthru
    _
  %v27 = vld [vmem:[%s0] sm:$0xff]
  %v28 = vld [vmem:[%s0 + $0x8] sm:$0xff]
  %v29 = vld [vmem:[%s0 + $0x10] sm:$0xf]
  %v30 = vld [vmem:[%s0 + $0x14] sm:$0xff]
  %v31 = vld [vmem:[%s0 + $0x1c] sm:$0xff]
  %v32 = vld [vmem:[%s0 + $0x24] sm:$0xf]
  %v33 = vld [vmem:[%s0 + $0x28] sm:$0xff]
  %v34 = vld [vmem:[%s0 + $0x30] sm:$0xff]
  %v35 = vld [vmem:[%s0 + $0x38] sm:$0xf]
  %v36 = vld [vmem:[%s0 + $0x3c] sm:$0xff]
  %v37 = vld [vmem:[%s0 + $0x44] sm:$0xff]
  %v38 = vld [vmem:[%s0 + $0x4c] sm:$0xf]
  %v39 = vld [vmem:[%s0 + $0x50] sm:$0xff]
  %v40 = vld [vmem:[%s0 + $0x58] sm:$0xff]
  %v41 = vld [vmem:[%s0 + $0x60] sm:$0xf]
  %v42 = vld [vmem:[%s0 + $0x64] sm:$0xff]
  %v43 = vld [vmem:[%s0 + $0x6c] sm:$0xff]
  %v44 = vld [vmem:[%s0 + $0x74] sm:$0xf]
  %v45 = vld [vmem:[%s0 + $0x78] sm:$0xff]
  %v46 = vld [vmem:[%s0 + $0x80] sm:$0xff]
  %v47 = vld [vmem:[%s0 + $0x88] sm:$0xf]
  %v48 = vld [vmem:[%s0 + $0x8c] sm:$0xff]
  %v49 = vld [vmem:[%s0 + $0x94] sm:$0xff]
  %v50 = vld [vmem:[%s0 + $0x9c] sm:$0xf]
  %v51 = vld [vmem:[%s0 + $0xa0] sm:$0xff]
  %v52 = vld [vmem:[%s0 + $0xa8] sm:$0xff]
  %v53 = vld [vmem:[%s0 + $0xb0] sm:$0xf]
  %v54 = vld [vmem:[%s0 + $0xb4] sm:$0xff]
  %v55 = vld [vmem:[%s0 + $0xbc] sm:$0xff]
  %v56 = vld [vmem:[%s0 + $0xc4] sm:$0xf]
  %v57 = vld [vmem:[%s0 + $0xc8] sm:$0xff]
  %v58 = vld [vmem:[%s0 + $0xd0] sm:$0xff]
  %v59 = vld [vmem:[%s0 + $0xd8] sm:$0xf]
  %v60 = vld [vmem:[%s0 + $0xdc] sm:$0xff]
  %v61 = vld [vmem:[%s0 + $0xe4] sm:$0xff]
  %v62 = vld [vmem:[%s0 + $0xec] sm:$0xf]
  %v63 = vld [vmem:[%s0 + $0xf0] sm:$0xff]
  %v64 = vld [vmem:[%s0 + $0xf8] sm:$0xff]
  %v65 = vld [vmem:[%s0 + $0x100] sm:$0xf]
  %v66 = vld [vmem:[%s0 + $0x104] sm:$0xff]
  %v67 = vld [vmem:[%s0 + $0x10c] sm:$0xff]
  %v68 = vld [vmem:[%s0 + $0x114] sm:$0xf]
  %v69 = vld [vmem:[%s0 + $0x118] sm:$0xff]
  %v70 = vld [vmem:[%s0 + $0x120] sm:$0xff]
  %v71 = vld [vmem:[%s0 + $0x128] sm:$0xf]
  %v72 = vld [vmem:[%s0 + $0x12c] sm:$0xff]
  %v73 = vld [vmem:[%s0 + $0x134] sm:$0xff]
  %v74 = vld [vmem:[%s0 + $0x13c] sm:$0xf]
  %v75 = vld [vmem:[%s0 + $0x140] sm:$0xff]
  %v76 = vld [vmem:[%s0 + $0x148] sm:$0xff]
  %v77 = vld [vmem:[%s0 + $0x150] sm:$0xf]
  %v78 = vld [vmem:[%s0 + $0x154] sm:$0xff]
  %v79 = vld [vmem:[%s0 + $0x15c] sm:$0xff]
  %v80 = vld [vmem:[%s0 + $0x164] sm:$0xf]
  %v81 = vld [vmem:[%s0 + $0x168] sm:$0xff]
  %v82 = vld [vmem:[%s0 + $0x170] sm:$0xff]
  %v83 = vld [vmem:[%s0 + $0x178] sm:$0xf]
  %v84 = vld [vmem:[%s0 + $0x17c] sm:$0xff]
  %v85 = vld [vmem:[%s0 + $0x184] sm:$0xff]
  %v86 = vld [vmem:[%s0 + $0x18c] sm:$0xf]
  %v87 = vld [vmem:[%s0 + $0x190] sm:$0xff]
  %v88 = vld [vmem:[%s0 + $0x198] sm:$0xff]
  %v89 = vld [vmem:[%s0 + $0x1a0] sm:$0xf]
  %v90 = vld [vmem:[%s0 + $0x1a4] sm:$0xff]
  %v91 = vld [vmem:[%s0 + $0x1ac] sm:$0xff]
  %v92 = vld [vmem:[%s0 + $0x1b4] sm:$0xf]
  %v93 = vld [vmem:[%s0 + $0x1b8] sm:$0xff]
  %v94 = vld [vmem:[%s0 + $0x1c0] sm:$0xff]
  %v95 = vld [vmem:[%s0 + $0x1c8] sm:$0xf]
  %v96 = vld [vmem:[%s0 + $0x1cc] sm:$0xff]
  %v97 = vld [vmem:[%s0 + $0x1d4] sm:$0xff]
  %v98 = vld [vmem:[%s0 + $0x1dc] sm:$0xf]
  %v99 = vld [vmem:[%s0 + $0x1e0] sm:$0xff]
  %v100 = vld [vmem:[%s0 + $0x1e8] sm:$0xff]
  %v101 = vld [vmem:[%s0 + $0x1f0] sm:$0xf]
  %v102 = vld [vmem:[%s0 + $0x1f4] sm:$0xff]
  %v103 = vld [vmem:[%s0 + $0x1fc] sm:$0xff]
  %v104 = vld [vmem:[%s0 + $0x204] sm:$0xf]
  %v105 = vld [vmem:[%s0 + $0x208] sm:$0xff]
  %v106 = vld [vmem:[%s0 + $0x210] sm:$0xff]
  %v107 = vld [vmem:[%s0 + $0x218] sm:$0xf]
  %v108 = vld [vmem:[%s0 + $0x21c] sm:$0xff]
  %v109 = vld [vmem:[%s0 + $0x224] sm:$0xff]
  %v110 = vld [vmem:[%s0 + $0x22c] sm:$0xf]
  %v111 = vld [vmem:[%s1] sm:$0xf]
  %v112 = vld [vmem:[%s1 + $0x4] sm:$0xf]
  %v113 = vld [vmem:[%s1 + $0x8] sm:$0xf]
  %v114 = vld [vmem:[%s1 + $0xc] sm:$0xf]
  %v115 = vld [vmem:[%s1 + $0x10] sm:$0xf]
  %v116 = vld [vmem:[%s1 + $0x14] sm:$0xf]
  %v117 = vld [vmem:[%s1 + $0x18] sm:$0xf]
  %v118 = vld [vmem:[%s1 + $0x1c] sm:$0xf]
  %v119 = vld [vmem:[%s1 + $0x20] sm:$0xf]
  %v120 = vld [vmem:[%s1 + $0x24] sm:$0xf]
  %v121 = vld [vmem:[%s1 + $0x28] sm:$0xf]
  %v122 = vld [vmem:[%s1 + $0x2c] sm:$0xf]
  %v123 = vld [vmem:[%s1 + $0x30] sm:$0xf]
  %v124 = vld [vmem:[%s1 + $0x34] sm:$0xf]
  %v125 = vld [vmem:[%s1 + $0x38] sm:$0xf]
  %v126 = vld [vmem:[%s1 + $0x3c] sm:$0xf]
  %v127 = vld [vmem:[%s1 + $0x40] sm:$0xf]
  %v128 = vld [vmem:[%s1 + $0x44] sm:$0xf]
  %v129 = vld [vmem:[%s1 + $0x48] sm:$0xf]
  %v130 = vld [vmem:[%s1 + $0x4c] sm:$0xf]
  %v131 = vld [vmem:[%s1 + $0x50] sm:$0xf]
  %v132 = vld [vmem:[%s1 + $0x54] sm:$0xf]
  %v133 = vld [vmem:[%s1 + $0x58] sm:$0xf]
  %v134 = vld [vmem:[%s1 + $0x5c] sm:$0xf]
  %v135 = vld [vmem:[%s1 + $0x60] sm:$0xf]
  %v136 = vld [vmem:[%s1 + $0x64] sm:$0xf]
  %v137 = vld [vmem:[%s1 + $0x68] sm:$0xf]
  %v138 = vld [vmem:[%s1 + $0x6c] sm:$0xf]
  %v139 = vld [vmem:[%s1 + $0x70] sm:$0xf]
  %v140 = vld [vmem:[%s1 + $0x74] sm:$0xf]
  %v141 = vld [vmem:[%s1 + $0x78] sm:$0xf]
  %v142 = vld [vmem:[%s1 + $0x7c] sm:$0xf]
  %v143 = vld [vmem:[%s1 + $0x80] sm:$0xf]
  %v144 = vld [vmem:[%s1 + $0x84] sm:$0xf]
  %v145 = vld [vmem:[%s1 + $0x88] sm:$0xf]
  %v146 = vld [vmem:[%s1 + $0x8c] sm:$0xf]
  %v147 = vld [vmem:[%s1 + $0x90] sm:$0xf]
  %v148 = vld [vmem:[%s1 + $0x94] sm:$0xf]
  %v149 = vld [vmem:[%s1 + $0x98] sm:$0xf]
  %v150 = vld [vmem:[%s1 + $0x9c] sm:$0xf]
  %v151 = vld [vmem:[%s1 + $0xa0] sm:$0xf]
  %v152 = vld [vmem:[%s1 + $0xa4] sm:$0xf]
  %v153 = vld [vmem:[%s1 + $0xa8] sm:$0xf]
  %v154 = vld [vmem:[%s1 + $0xac] sm:$0xf]
  %v155 = vld [vmem:[%s1 + $0xb0] sm:$0xf]
  %v156 = vld [vmem:[%s1 + $0xb4] sm:$0xf]
  %v157 = vld [vmem:[%s1 + $0xb8] sm:$0xf]
  %v158 = vld [vmem:[%s1 + $0xbc] sm:$0xf]
  %v159 = vld [vmem:[%s1 + $0xc0] sm:$0xf]
  %v160 = vld [vmem:[%s1 + $0xc4] sm:$0xf]
  %v161 = vld [vmem:[%s1 + $0xc8] sm:$0xf]
  %v162 = vld [vmem:[%s1 + $0xcc] sm:$0xf]
  %v163 = vld [vmem:[%s1 + $0xd0] sm:$0xf]
  %v164 = vld [vmem:[%s1 + $0xd4] sm:$0xf]
  %v165 = vld [vmem:[%s1 + $0xd8] sm:$0xf]
  %v166 = vld [vmem:[%s1 + $0xdc] sm:$0xf]
  %v167 = vld [vmem:[%s1 + $0xe0] sm:$0xf]
  %v168 = vld [vmem:[%s1 + $0xe4] sm:$0xf]
  %v169 = vld [vmem:[%s1 + $0xe8] sm:$0xf]
  %v170 = vld [vmem:[%s1 + $0xec] sm:$0xf]
  %v171 = vld [vmem:[%s1 + $0xf0] sm:$0xf]
  %v172 = vld [vmem:[%s1 + $0xf4] sm:$0xf]
  %v173 = vld [vmem:[%s1 + $0xf8] sm:$0xf]
  %v174 = vld [vmem:[%s1 + $0xfc] sm:$0xf]
  %v175 = vld [vmem:[%s1 + $0x100] sm:$0xf]
  %v176 = vld [vmem:[%s1 + $0x104] sm:$0xf]
  %v177 = vld [vmem:[%s1 + $0x108] sm:$0xf]
  %v178 = vld [vmem:[%s1 + $0x10c] sm:$0xf]
  %v179 = vld [vmem:[%s1 + $0x110] sm:$0xf]
  %v180 = vld [vmem:[%s1 + $0x114] sm:$0xf]
  %v181 = vld [vmem:[%s1 + $0x118] sm:$0xf]
  %v182 = vld [vmem:[%s1 + $0x11c] sm:$0xf]
  %v183 = vld [vmem:[%s2] sm:$0x1]
  %v185 = vlaneseq
  %v186 = vshrl.u32 %v185, 7
  %v187 = vsub.s32 0, %v186
  %v188 = vrot.slane %v183, %v187
  %v274 = vunpack.c.l.b16 %v27
  %v275 = vunpack.c.h.b16 %v27
  %v276 = vunpack.c.l.b16 %v28
  %v277 = vunpack.c.h.b16 %v28
  %v278 = vunpack.c.l.b16 %v29
  %v279 = vunpack.c.l.b16 %v30
  %v280 = vunpack.c.h.b16 %v30
  %v281 = vunpack.c.l.b16 %v31
  %v282 = vunpack.c.h.b16 %v31
  %v283 = vunpack.c.l.b16 %v32
  %v284 = vunpack.c.l.b16 %v33
  %v285 = vunpack.c.h.b16 %v33
  %v286 = vunpack.c.l.b16 %v34
  %v287 = vunpack.c.h.b16 %v34
  %v288 = vunpack.c.l.b16 %v35
  %v289 = vunpack.c.l.b16 %v36
  %v290 = vunpack.c.h.b16 %v36
  %v291 = vunpack.c.l.b16 %v37
  %v292 = vunpack.c.h.b16 %v37
  %v293 = vunpack.c.l.b16 %v38
  %v294 = vunpack.c.l.b16 %v39
  %v295 = vunpack.c.h.b16 %v39
  %v296 = vunpack.c.l.b16 %v40
  %v297 = vunpack.c.h.b16 %v40
  %v298 = vunpack.c.l.b16 %v41
  %v299 = vunpack.c.l.b16 %v42
  %v300 = vunpack.c.h.b16 %v42
  %v301 = vunpack.c.l.b16 %v43
  %v302 = vunpack.c.h.b16 %v43
  %v303 = vunpack.c.l.b16 %v44
  %v304 = vunpack.c.l.b16 %v45
  %v305 = vunpack.c.h.b16 %v45
  %v306 = vunpack.c.l.b16 %v46
  %v307 = vunpack.c.h.b16 %v46
  %v308 = vunpack.c.l.b16 %v47
  %v309 = vunpack.c.l.b16 %v48
  %v310 = vunpack.c.h.b16 %v48
  %v311 = vunpack.c.l.b16 %v49
  %v312 = vunpack.c.h.b16 %v49
  %v313 = vunpack.c.l.b16 %v50
  %v314 = vunpack.c.l.b16 %v51
  %v315 = vunpack.c.h.b16 %v51
  %v316 = vunpack.c.l.b16 %v52
  %v317 = vunpack.c.h.b16 %v52
  %v318 = vunpack.c.l.b16 %v53
  %v319 = vunpack.c.l.b16 %v54
  %v320 = vunpack.c.h.b16 %v54
  %v321 = vunpack.c.l.b16 %v55
  %v322 = vunpack.c.h.b16 %v55
  %v323 = vunpack.c.l.b16 %v56
  %v324 = vunpack.c.l.b16 %v57
  %v325 = vunpack.c.h.b16 %v57
  %v326 = vunpack.c.l.b16 %v58
  %v327 = vunpack.c.h.b16 %v58
  %v328 = vunpack.c.l.b16 %v59
  %v329 = vunpack.c.l.b16 %v60
  %v330 = vunpack.c.h.b16 %v60
  %v331 = vunpack.c.l.b16 %v61
  %v332 = vunpack.c.h.b16 %v61
  %v333 = vunpack.c.l.b16 %v62
  %v334 = vunpack.c.l.b16 %v63
  %v335 = vunpack.c.h.b16 %v63
  %v336 = vunpack.c.l.b16 %v64
  %v337 = vunpack.c.h.b16 %v64
  %v338 = vunpack.c.l.b16 %v65
  %v339 = vunpack.c.l.b16 %v66
  %v340 = vunpack.c.h.b16 %v66
  %v341 = vunpack.c.l.b16 %v67
  %v342 = vunpack.c.h.b16 %v67
  %v343 = vunpack.c.l.b16 %v68
  %v344 = vunpack.c.l.b16 %v69
  %v345 = vunpack.c.h.b16 %v69
  %v346 = vunpack.c.l.b16 %v70
  %v347 = vunpack.c.h.b16 %v70
  %v348 = vunpack.c.l.b16 %v71
  %v349 = vunpack.c.l.b16 %v72
  %v350 = vunpack.c.h.b16 %v72
  %v351 = vunpack.c.l.b16 %v73
  %v352 = vunpack.c.h.b16 %v73
  %v353 = vunpack.c.l.b16 %v74
  %v354 = vunpack.c.l.b16 %v75
  %v355 = vunpack.c.h.b16 %v75
  %v356 = vunpack.c.l.b16 %v76
  %v357 = vunpack.c.h.b16 %v76
  %v358 = vunpack.c.l.b16 %v77
  %v359 = vunpack.c.l.b16 %v78
  %v360 = vunpack.c.h.b16 %v78
  %v361 = vunpack.c.l.b16 %v79
  %v362 = vunpack.c.h.b16 %v79
  %v363 = vunpack.c.l.b16 %v80
  %v364 = vunpack.c.l.b16 %v81
  %v365 = vunpack.c.h.b16 %v81
  %v366 = vunpack.c.l.b16 %v82
  %v367 = vunpack.c.h.b16 %v82
  %v368 = vunpack.c.l.b16 %v83
  %v369 = vunpack.c.l.b16 %v84
  %v370 = vunpack.c.h.b16 %v84
  %v371 = vunpack.c.l.b16 %v85
  %v372 = vunpack.c.h.b16 %v85
  %v373 = vunpack.c.l.b16 %v86
  %v374 = vunpack.c.l.b16 %v87
  %v375 = vunpack.c.h.b16 %v87
  %v376 = vunpack.c.l.b16 %v88
  %v377 = vunpack.c.h.b16 %v88
  %v378 = vunpack.c.l.b16 %v89
  %v379 = vunpack.c.l.b16 %v90
  %v380 = vunpack.c.h.b16 %v90
  %v381 = vunpack.c.l.b16 %v91
  %v382 = vunpack.c.h.b16 %v91
  %v383 = vunpack.c.l.b16 %v92
  %v384 = vunpack.c.l.b16 %v93
  %v385 = vunpack.c.h.b16 %v93
  %v386 = vunpack.c.l.b16 %v94
  %v387 = vunpack.c.h.b16 %v94
  %v388 = vunpack.c.l.b16 %v95
  %v389 = vunpack.c.l.b16 %v96
  %v390 = vunpack.c.h.b16 %v96
  %v391 = vunpack.c.l.b16 %v97
  %v392 = vunpack.c.h.b16 %v97
  %v393 = vunpack.c.l.b16 %v98
  %v394 = vunpack.c.l.b16 %v99
  %v395 = vunpack.c.h.b16 %v99
  %v396 = vunpack.c.l.b16 %v100
  %v397 = vunpack.c.h.b16 %v100
  %v398 = vunpack.c.l.b16 %v101
  %v399 = vunpack.c.l.b16 %v102
  %v400 = vunpack.c.h.b16 %v102
  %v401 = vunpack.c.l.b16 %v103
  %v402 = vunpack.c.h.b16 %v103
  %v403 = vunpack.c.l.b16 %v104
  %v404 = vunpack.c.l.b16 %v105
  %v405 = vunpack.c.h.b16 %v105
  %v406 = vunpack.c.l.b16 %v106
  %v407 = vunpack.c.h.b16 %v106
  %v408 = vunpack.c.l.b16 %v107
  %v409 = vunpack.c.l.b16 %v108
  %v410 = vunpack.c.h.b16 %v108
  %v411 = vunpack.c.l.b16 %v109
  %v412 = vunpack.c.h.b16 %v109
  %v413 = vunpack.c.l.b16 %v110
  %v414 = vpack.c.b16 %v279, %v274
  %v415 = vpack.c.b16 %v280, %v275
  %v416 = vpack.c.b16 %v281, %v276
  %v417 = vpack.c.b16 %v282, %v277
  %v418 = vpack.c.b16 %v283, %v278
  %v419 = vpack.c.b16 %v289, %v284
  %v420 = vpack.c.b16 %v290, %v285
  %v421 = vpack.c.b16 %v291, %v286
  %v422 = vpack.c.b16 %v292, %v287
  %v423 = vpack.c.b16 %v293, %v288
  %v424 = vpack.c.b16 %v299, %v294
  %v425 = vpack.c.b16 %v300, %v295
  %v426 = vpack.c.b16 %v301, %v296
  %v427 = vpack.c.b16 %v302, %v297
  %v428 = vpack.c.b16 %v303, %v298
  %v429 = vpack.c.b16 %v309, %v304
  %v430 = vpack.c.b16 %v310, %v305
  %v431 = vpack.c.b16 %v311, %v306
  %v432 = vpack.c.b16 %v312, %v307
  %v433 = vpack.c.b16 %v313, %v308
  %v434 = vpack.c.b16 %v319, %v314
  %v435 = vpack.c.b16 %v320, %v315
  %v436 = vpack.c.b16 %v321, %v316
  %v437 = vpack.c.b16 %v322, %v317
  %v438 = vpack.c.b16 %v323, %v318
  %v439 = vpack.c.b16 %v329, %v324
  %v440 = vpack.c.b16 %v330, %v325
  %v441 = vpack.c.b16 %v331, %v326
  %v442 = vpack.c.b16 %v332, %v327
  %v443 = vpack.c.b16 %v333, %v328
  %v444 = vpack.c.b16 %v339, %v334
  %v445 = vpack.c.b16 %v340, %v335
  %v446 = vpack.c.b16 %v341, %v336
  %v447 = vpack.c.b16 %v342, %v337
  %v448 = vpack.c.b16 %v343, %v338
  %v449 = vpack.c.b16 %v349, %v344
  %v450 = vpack.c.b16 %v350, %v345
  %v451 = vpack.c.b16 %v351, %v346
  %v452 = vpack.c.b16 %v352, %v347
  %v453 = vpack.c.b16 %v353, %v348
  %v454 = vpack.c.b16 %v359, %v354
  %v455 = vpack.c.b16 %v360, %v355
  %v456 = vpack.c.b16 %v361, %v356
  %v457 = vpack.c.b16 %v362, %v357
  %v458 = vpack.c.b16 %v363, %v358
  %v459 = vpack.c.b16 %v369, %v364
  %v460 = vpack.c.b16 %v370, %v365
  %v461 = vpack.c.b16 %v371, %v366
  %v462 = vpack.c.b16 %v372, %v367
  %v463 = vpack.c.b16 %v373, %v368
  %v464 = vpack.c.b16 %v379, %v374
  %v465 = vpack.c.b16 %v380, %v375
  %v466 = vpack.c.b16 %v381, %v376
  %v467 = vpack.c.b16 %v382, %v377
  %v468 = vpack.c.b16 %v383, %v378
  %v469 = vpack.c.b16 %v389, %v384
  %v470 = vpack.c.b16 %v390, %v385
  %v471 = vpack.c.b16 %v391, %v386
  %v472 = vpack.c.b16 %v392, %v387
  %v473 = vpack.c.b16 %v393, %v388
  %v474 = vpack.c.b16 %v399, %v394
  %v475 = vpack.c.b16 %v400, %v395
  %v476 = vpack.c.b16 %v401, %v396
  %v477 = vpack.c.b16 %v402, %v397
  %v478 = vpack.c.b16 %v403, %v398
  %v479 = vpack.c.b16 %v409, %v404
  %v480 = vpack.c.b16 %v410, %v405
  %v481 = vpack.c.b16 %v411, %v406
  %v482 = vpack.c.b16 %v412, %v407
  %v483 = vpack.c.b16 %v413, %v408
  %v612 = vunpack.c.l.b16 %v111
  %v613 = vunpack.c.l.b16 %v112
  %v614 = vunpack.c.l.b16 %v113
  %v615 = vunpack.c.l.b16 %v114
  %v616 = vunpack.c.l.b16 %v115
  %v617 = vunpack.c.l.b16 %v116
  %v618 = vunpack.c.l.b16 %v117
  %v619 = vunpack.c.l.b16 %v118
  %v620 = vunpack.c.l.b16 %v119
  %v621 = vunpack.c.l.b16 %v120
  %v622 = vunpack.c.l.b16 %v121
  %v623 = vunpack.c.l.b16 %v122
  %v624 = vunpack.c.l.b16 %v123
  %v625 = vunpack.c.l.b16 %v124
  %v626 = vunpack.c.l.b16 %v125
  %v627 = vunpack.c.l.b16 %v126
  %v628 = vunpack.c.l.b16 %v127
  %v629 = vunpack.c.l.b16 %v128
  %v630 = vunpack.c.l.b16 %v129
  %v631 = vunpack.c.l.b16 %v130
  %v632 = vunpack.c.l.b16 %v131
  %v633 = vunpack.c.l.b16 %v132
  %v634 = vunpack.c.l.b16 %v133
  %v635 = vunpack.c.l.b16 %v134
  %v636 = vunpack.c.l.b16 %v135
  %v637 = vunpack.c.l.b16 %v136
  %v638 = vunpack.c.l.b16 %v137
  %v639 = vunpack.c.l.b16 %v138
  %v640 = vunpack.c.l.b16 %v139
  %v641 = vunpack.c.l.b16 %v140
  %v642 = vunpack.c.l.b16 %v141
  %v643 = vunpack.c.l.b16 %v142
  %v644 = vunpack.c.l.b16 %v143
  %v645 = vunpack.c.l.b16 %v144
  %v646 = vunpack.c.l.b16 %v145
  %v647 = vunpack.c.l.b16 %v146
  %v648 = vunpack.c.l.b16 %v147
  %v649 = vunpack.c.l.b16 %v148
  %v650 = vunpack.c.l.b16 %v149
  %v651 = vunpack.c.l.b16 %v150
  %v652 = vunpack.c.l.b16 %v151
  %v653 = vunpack.c.l.b16 %v152
  %v654 = vunpack.c.l.b16 %v153
  %v655 = vunpack.c.l.b16 %v154
  %v656 = vunpack.c.l.b16 %v155
  %v657 = vunpack.c.l.b16 %v156
  %v658 = vunpack.c.l.b16 %v157
  %v659 = vunpack.c.l.b16 %v158
  %v660 = vunpack.c.l.b16 %v159
  %v661 = vunpack.c.l.b16 %v160
  %v662 = vunpack.c.l.b16 %v161
  %v663 = vunpack.c.l.b16 %v162
  %v664 = vunpack.c.l.b16 %v163
  %v665 = vunpack.c.l.b16 %v164
  %v666 = vunpack.c.l.b16 %v165
  %v667 = vunpack.c.l.b16 %v166
  %v668 = vunpack.c.l.b16 %v167
  %v669 = vunpack.c.l.b16 %v168
  %v670 = vunpack.c.l.b16 %v169
  %v671 = vunpack.c.l.b16 %v170
  %v672 = vunpack.c.l.b16 %v171
  %v673 = vunpack.c.l.b16 %v172
  %v674 = vunpack.c.l.b16 %v173
  %v675 = vunpack.c.l.b16 %v174
  %v676 = vunpack.c.l.b16 %v175
  %v677 = vunpack.c.l.b16 %v176
  %v678 = vunpack.c.l.b16 %v177
  %v679 = vunpack.c.l.b16 %v178
  %v680 = vunpack.c.l.b16 %v179
  %v681 = vunpack.c.l.b16 %v180
  %v682 = vunpack.c.l.b16 %v181
  %v683 = vunpack.c.l.b16 %v182
  %v684 = vpack.c.b16 %v613, %v612
  %v685 = vpack.c.b16 %v615, %v614
  %v686 = vpack.c.b16 %v617, %v616
  %v687 = vpack.c.b16 %v619, %v618
  %v688 = vpack.c.b16 %v621, %v620
  %v689 = vpack.c.b16 %v623, %v622
  %v690 = vpack.c.b16 %v625, %v624
  %v691 = vpack.c.b16 %v627, %v626
  %v692 = vpack.c.b16 %v629, %v628
  %v693 = vpack.c.b16 %v631, %v630
  %v694 = vpack.c.b16 %v633, %v632
  %v695 = vpack.c.b16 %v635, %v634
  %v696 = vpack.c.b16 %v637, %v636
  %v697 = vpack.c.b16 %v639, %v638
  %v698 = vpack.c.b16 %v641, %v640
  %v699 = vpack.c.b16 %v643, %v642
  %v700 = vpack.c.b16 %v645, %v644
  %v701 = vpack.c.b16 %v647, %v646
  %v702 = vpack.c.b16 %v649, %v648
  %v703 = vpack.c.b16 %v651, %v650
  %v704 = vpack.c.b16 %v653, %v652
  %v705 = vpack.c.b16 %v655, %v654
  %v706 = vpack.c.b16 %v657, %v656
  %v707 = vpack.c.b16 %v659, %v658
  %v708 = vpack.c.b16 %v661, %v660
  %v709 = vpack.c.b16 %v663, %v662
  %v710 = vpack.c.b16 %v665, %v664
  %v711 = vpack.c.b16 %v667, %v666
  %v712 = vpack.c.b16 %v669, %v668
  %v713 = vpack.c.b16 %v671, %v670
  %v714 = vpack.c.b16 %v673, %v672
  %v715 = vpack.c.b16 %v675, %v674
  %v716 = vpack.c.b16 %v677, %v676
  %v717 = vpack.c.b16 %v679, %v678
  %v718 = vpack.c.b16 %v681, %v680
  %v719 = vpack.c.b16 %v683, %v682
  %vm756 = vcmask 523264
  %v758 = vsel %vm756, %v418, 0
  %v761 = vsel %vm756, %v423, 0
  %v764 = vsel %vm756, %v428, 0
  %v767 = vsel %vm756, %v433, 0
  %v770 = vsel %vm756, %v438, 0
  %v773 = vsel %vm756, %v443, 0
  %v776 = vsel %vm756, %v448, 0
  %v779 = vsel %vm756, %v453, 0
  %v782 = vsel %vm756, %v458, 0
  %v785 = vsel %vm756, %v463, 0
  %v788 = vsel %vm756, %v468, 0
  %v791 = vsel %vm756, %v473, 0
  %v794 = vsel %vm756, %v478, 0
  %v797 = vsel %vm756, %v483, 0
  %799 = vmatprep.subr.bf16.mxu0 0
  %800 = vmatpush1.bf16.msra.mxu0 %v684
  %801 = vmatprep.subr.bf16.mxu0 0
  %802 = vmatpush1.bf16.msra.mxu0 %v685
  %803 = vmatprep.subr.bf16.mxu0 0
  %804 = vmatpush1.bf16.msra.mxu0 %v686
  %805 = vmatprep.subr.bf16.mxu0 0
  %806 = vmatpush1.bf16.msra.mxu0 %v687
  %807 = vmatprep.subr.bf16.mxu0 0
  %808 = vmatpush1.bf16.msra.mxu0 %v688
  %809 = vmatprep.subr.bf16.mxu0 0
  %810 = vmatpush1.bf16.msra.mxu0 %v689
  %811 = vmatprep.subr.bf16.mxu0 0
  %812 = vmatpush1.bf16.msra.mxu0 %v690
  %813 = vmatprep.subr.bf16.mxu0 0
  %814 = vmatpush1.bf16.msra.mxu0 %v691
  %815 = vmatprep.subr.bf16.mxu0 0
  %816 = vmatpush1.bf16.msra.mxu0 %v692
  %817 = vmatprep.subr.bf16.mxu0 0
  %818 = vmatpush1.bf16.msra.mxu0 %v693
  %819 = vmatprep.subr.bf16.mxu0 0
  %820 = vmatpush1.bf16.msra.mxu0 %v694
  %821 = vmatprep.subr.bf16.mxu0 0
  %822 = vmatpush1.bf16.msra.mxu0 %v695
  %823 = vmatprep.subr.bf16.mxu0 0
  %824 = vmatpush1.bf16.msra.mxu0 %v696
  %825 = vmatprep.subr.bf16.mxu0 0
  %826 = vmatpush1.bf16.msra.mxu0 %v697
  %827 = vmatprep.subr.bf16.mxu0 0
  %828 = vmatpush1.bf16.msra.mxu0 %v698
  %829 = vmatprep.subr.bf16.mxu0 0
  %830 = vmatpush1.bf16.msra.mxu0 %v699
  %831 = vmatprep.mubr.bf16.mxu0 %v415
  %832 = vmatmul.mubr.bf16.gmra.mrb[0].mxu0 %v414
  %v833 = vpop.f32.mrb[0].mxu0
  %v834 = vadd.f32 %v188, %v833
  %v835 = vpop.f32.mrb[0].mxu0
  %v836 = vpop.f32.mrb[0].mxu0
  %v837 = vadd.f32 %v188, %v836
  %v838 = vpop.f32.mrb[0].mxu0
  %839 = vmatprep.mubr.bf16.mxu0 %v420
  %840 = vmatmul.mubr.bf16.gmra.mrb[0].mxu0 %v419
  %v841 = vpop.f32.mrb[0].mxu0
  %v842 = vadd.f32 %v188, %v841
  %v843 = vpop.f32.mrb[0].mxu0
  %v844 = vpop.f32.mrb[0].mxu0
  %v845 = vadd.f32 %v188, %v844
  %v846 = vpop.f32.mrb[0].mxu0
  %847 = vmatprep.mubr.bf16.mxu0 %v425
  %848 = vmatmul.mubr.bf16.gmra.mrb[0].mxu0 %v424
  %v849 = vpop.f32.mrb[0].mxu0
  %v850 = vadd.f32 %v188, %v849
  %v851 = vpop.f32.mrb[0].mxu0
  %v852 = vpop.f32.mrb[0].mxu0
  %v853 = vadd.f32 %v188, %v852
  %v854 = vpop.f32.mrb[0].mxu0
  %855 = vmatprep.mubr.bf16.mxu0 %v430
  %856 = vmatmul.mubr.bf16.gmra.mrb[0].mxu0 %v429
  %v857 = vpop.f32.mrb[0].mxu0
  %v858 = vadd.f32 %v188, %v857
  %v859 = vpop.f32.mrb[0].mxu0
  %v860 = vpop.f32.mrb[0].mxu0
  %v861 = vadd.f32 %v188, %v860
  %v862 = vpop.f32.mrb[0].mxu0
  %863 = vmatprep.mubr.bf16.mxu0 %v435
  %864 = vmatmul.mubr.bf16.gmra.mrb[0].mxu0 %v434
  %v865 = vpop.f32.mrb[0].mxu0
  %v866 = vadd.f32 %v188, %v865
  %v867 = vpop.f32.mrb[0].mxu0
  %v868 = vpop.f32.mrb[0].mxu0
  %v869 = vadd.f32 %v188, %v868
  %v870 = vpop.f32.mrb[0].mxu0
  %871 = vmatprep.mubr.bf16.mxu0 %v440
  %872 = vmatmul.mubr.bf16.gmra.mrb[0].mxu0 %v439
  %v873 = vpop.f32.mrb[0].mxu0
  %v874 = vadd.f32 %v188, %v873
  %v875 = vpop.f32.mrb[0].mxu0
  %v876 = vpop.f32.mrb[0].mxu0
  %v877 = vadd.f32 %v188, %v876
  %v878 = vpop.f32.mrb[0].mxu0
  %879 = vmatprep.mubr.bf16.mxu0 %v445
  %880 = vmatmul.mubr.bf16.gmra.mrb[0].mxu0 %v444
  %v881 = vpop.f32.mrb[0].mxu0
  %v882 = vadd.f32 %v188, %v881
  %v883 = vpop.f32.mrb[0].mxu0
  %v884 = vpop.f32.mrb[0].mxu0
  %v885 = vadd.f32 %v188, %v884
  %v886 = vpop.f32.mrb[0].mxu0
  %887 = vmatprep.mubr.bf16.mxu0 %v450
  %888 = vmatmul.mubr.bf16.gmra.mrb[0].mxu0 %v449
  %v889 = vpop.f32.mrb[0].mxu0
  %v890 = vadd.f32 %v188, %v889
  %v891 = vpop.f32.mrb[0].mxu0
  %v892 = vpop.f32.mrb[0].mxu0
  %v893 = vadd.f32 %v188, %v892
  %v894 = vpop.f32.mrb[0].mxu0
  %895 = vmatprep.mubr.bf16.mxu0 %v455
  %896 = vmatmul.mubr.bf16.gmra.mrb[0].mxu0 %v454
  %v897 = vpop.f32.mrb[0].mxu0
  %v898 = vadd.f32 %v188, %v897
  %v899 = vpop.f32.mrb[0].mxu0
  %v900 = vpop.f32.mrb[0].mxu0
  %v901 = vadd.f32 %v188, %v900
  %v902 = vpop.f32.mrb[0].mxu0
  %903 = vmatprep.mubr.bf16.mxu0 %v460
  %904 = vmatmul.mubr.bf16.gmra.mrb[0].mxu0 %v459
  %v905 = vpop.f32.mrb[0].mxu0
  %v906 = vadd.f32 %v188, %v905
  %v907 = vpop.f32.mrb[0].mxu0
  %v908 = vpop.f32.mrb[0].mxu0
  %v909 = vadd.f32 %v188, %v908
  %v910 = vpop.f32.mrb[0].mxu0
  %911 = vmatprep.mubr.bf16.mxu0 %v465
  %912 = vmatmul.mubr.bf16.gmra.mrb[0].mxu0 %v464
  %v913 = vpop.f32.mrb[0].mxu0
  %v914 = vadd.f32 %v188, %v913
  %v915 = vpop.f32.mrb[0].mxu0
  %v916 = vpop.f32.mrb[0].mxu0
  %v917 = vadd.f32 %v188, %v916
  %v918 = vpop.f32.mrb[0].mxu0
  %919 = vmatprep.mubr.bf16.mxu0 %v470
  %920 = vmatmul.mubr.bf16.gmra.mrb[0].mxu0 %v469
  %v921 = vpop.f32.mrb[0].mxu0
  %v922 = vadd.f32 %v188, %v921
  %v923 = vpop.f32.mrb[0].mxu0
  %v924 = vpop.f32.mrb[0].mxu0
  %v925 = vadd.f32 %v188, %v924
  %v926 = vpop.f32.mrb[0].mxu0
  %927 = vmatprep.mubr.bf16.mxu0 %v475
  %928 = vmatmul.mubr.bf16.gmra.mrb[0].mxu0 %v474
  %v929 = vpop.f32.mrb[0].mxu0
  %v930 = vadd.f32 %v188, %v929
  %v931 = vpop.f32.mrb[0].mxu0
  %v932 = vpop.f32.mrb[0].mxu0
  %v933 = vadd.f32 %v188, %v932
  %v934 = vpop.f32.mrb[0].mxu0
  %935 = vmatprep.mubr.bf16.mxu0 %v480
  %936 = vmatmul.mubr.bf16.gmra.mrb[0].mxu0 %v479
  %v937 = vpop.f32.mrb[0].mxu0
  %v938 = vadd.f32 %v188, %v937
  %v939 = vpop.f32.mrb[0].mxu0
  %v940 = vpop.f32.mrb[0].mxu0
  %v941 = vadd.f32 %v188, %v940
  %v942 = vpop.f32.mrb[0].mxu0
  %943 = vdwg.mxu0
  %944 = vmatprep.subr.bf16.mxu0 0
  %945 = vmatpush1.bf16.msra.mxu0 %v700
  %946 = vmatprep.subr.bf16.mxu0 0
  %947 = vmatpush1.bf16.msra.mxu0 %v701
  %948 = vmatprep.subr.bf16.mxu0 0
  %949 = vmatpush1.bf16.msra.mxu0 %v702
  %950 = vmatprep.subr.bf16.mxu0 0
  %951 = vmatpush1.bf16.msra.mxu0 %v703
  %952 = vmatprep.subr.bf16.mxu0 0
  %953 = vmatpush1.bf16.msra.mxu0 %v704
  %954 = vmatprep.subr.bf16.mxu0 0
  %955 = vmatpush1.bf16.msra.mxu0 %v705
  %956 = vmatprep.subr.bf16.mxu0 0
  %957 = vmatpush1.bf16.msra.mxu0 %v706
  %958 = vmatprep.subr.bf16.mxu0 0
  %959 = vmatpush1.bf16.msra.mxu0 %v707
  %960 = vmatprep.subr.bf16.mxu0 0
  %961 = vmatpush1.bf16.msra.mxu0 %v708
  %962 = vmatprep.subr.bf16.mxu0 0
  %963 = vmatpush1.bf16.msra.mxu0 %v709
  %964 = vmatprep.subr.bf16.mxu0 0
  %965 = vmatpush1.bf16.msra.mxu0 %v710
  %966 = vmatprep.subr.bf16.mxu0 0
  %967 = vmatpush1.bf16.msra.mxu0 %v711
  %968 = vmatprep.subr.bf16.mxu0 0
  %969 = vmatpush1.bf16.msra.mxu0 %v712
  %970 = vmatprep.subr.bf16.mxu0 0
  %971 = vmatpush1.bf16.msra.mxu0 %v713
  %972 = vmatprep.subr.bf16.mxu0 0
  %973 = vmatpush1.bf16.msra.mxu0 %v714
  %974 = vmatprep.subr.bf16.mxu0 0
  %975 = vmatpush1.bf16.msra.mxu0 %v715
  %976 = vmatprep.mubr.bf16.mxu0 %v417
  %977 = vmatmul.mubr.bf16.gmra.mrb[0].mxu0 %v416
  %v978 = vpop.f32.mrb[0].mxu0
  %v979 = vadd.f32 %v834, %v978
  %v980 = vpop.f32.mrb[0].mxu0
  %v981 = vpop.f32.mrb[0].mxu0
  %v982 = vadd.f32 %v837, %v981
  %v983 = vpop.f32.mrb[0].mxu0
  %984 = vmatprep.mubr.bf16.mxu0 %v422
  %985 = vmatmul.mubr.bf16.gmra.mrb[0].mxu0 %v421
  %v986 = vpop.f32.mrb[0].mxu0
  %v987 = vadd.f32 %v842, %v986
  %v988 = vpop.f32.mrb[0].mxu0
  %v989 = vpop.f32.mrb[0].mxu0
  %v990 = vadd.f32 %v845, %v989
  %v991 = vpop.f32.mrb[0].mxu0
  %992 = vmatprep.mubr.bf16.mxu0 %v427
  %993 = vmatmul.mubr.bf16.gmra.mrb[0].mxu0 %v426
  %v994 = vpop.f32.mrb[0].mxu0
  %v995 = vadd.f32 %v850, %v994
  %v996 = vpop.f32.mrb[0].mxu0
  %v997 = vpop.f32.mrb[0].mxu0
  %v998 = vadd.f32 %v853, %v997
  %v999 = vpop.f32.mrb[0].mxu0
  %1000 = vmatprep.mubr.bf16.mxu0 %v432
  %1001 = vmatmul.mubr.bf16.gmra.mrb[0].mxu0 %v431
  %v1002 = vpop.f32.mrb[0].mxu0
  %v1003 = vadd.f32 %v858, %v1002
  %v1004 = vpop.f32.mrb[0].mxu0
  %v1005 = vpop.f32.mrb[0].mxu0
  %v1006 = vadd.f32 %v861, %v1005
  %v1007 = vpop.f32.mrb[0].mxu0
  %1008 = vmatprep.mubr.bf16.mxu0 %v437
  %1009 = vmatmul.mubr.bf16.gmra.mrb[0].mxu0 %v436
  %v1010 = vpop.f32.mrb[0].mxu0
  %v1011 = vadd.f32 %v866, %v1010
  %v1012 = vpop.f32.mrb[0].mxu0
  %v1013 = vpop.f32.mrb[0].mxu0
  %v1014 = vadd.f32 %v869, %v1013
  %v1015 = vpop.f32.mrb[0].mxu0
  %1016 = vmatprep.mubr.bf16.mxu0 %v442
  %1017 = vmatmul.mubr.bf16.gmra.mrb[0].mxu0 %v441
  %v1018 = vpop.f32.mrb[0].mxu0
  %v1019 = vadd.f32 %v874, %v1018
  %v1020 = vpop.f32.mrb[0].mxu0
  %v1021 = vpop.f32.mrb[0].mxu0
  %v1022 = vadd.f32 %v877, %v1021
  %v1023 = vpop.f32.mrb[0].mxu0
  %1024 = vmatprep.mubr.bf16.mxu0 %v447
  %1025 = vmatmul.mubr.bf16.gmra.mrb[0].mxu0 %v446
  %v1026 = vpop.f32.mrb[0].mxu0
  %v1027 = vadd.f32 %v882, %v1026
  %v1028 = vpop.f32.mrb[0].mxu0
  %v1029 = vpop.f32.mrb[0].mxu0
  %v1030 = vadd.f32 %v885, %v1029
  %v1031 = vpop.f32.mrb[0].mxu0
  %1032 = vmatprep.mubr.bf16.mxu0 %v452
  %1033 = vmatmul.mubr.bf16.gmra.mrb[0].mxu0 %v451
  %v1034 = vpop.f32.mrb[0].mxu0
  %v1035 = vadd.f32 %v890, %v1034
  %v1036 = vpop.f32.mrb[0].mxu0
  %v1037 = vpop.f32.mrb[0].mxu0
  %v1038 = vadd.f32 %v893, %v1037
  %v1039 = vpop.f32.mrb[0].mxu0
  %1040 = vmatprep.mubr.bf16.mxu0 %v457
  %1041 = vmatmul.mubr.bf16.gmra.mrb[0].mxu0 %v456
  %v1042 = vpop.f32.mrb[0].mxu0
  %v1043 = vadd.f32 %v898, %v1042
  %v1044 = vpop.f32.mrb[0].mxu0
  %v1045 = vpop.f32.mrb[0].mxu0
  %v1046 = vadd.f32 %v901, %v1045
  %v1047 = vpop.f32.mrb[0].mxu0
  %1048 = vmatprep.mubr.bf16.mxu0 %v462
  %1049 = vmatmul.mubr.bf16.gmra.mrb[0].mxu0 %v461
  %v1050 = vpop.f32.mrb[0].mxu0
  %v1051 = vadd.f32 %v906, %v1050
  %v1052 = vpop.f32.mrb[0].mxu0
  %v1053 = vpop.f32.mrb[0].mxu0
  %v1054 = vadd.f32 %v909, %v1053
  %v1055 = vpop.f32.mrb[0].mxu0
  %1056 = vmatprep.mubr.bf16.mxu0 %v467
  %1057 = vmatmul.mubr.bf16.gmra.mrb[0].mxu0 %v466
  %v1058 = vpop.f32.mrb[0].mxu0
  %v1059 = vadd.f32 %v914, %v1058
  %v1060 = vpop.f32.mrb[0].mxu0
  %v1061 = vpop.f32.mrb[0].mxu0
  %v1062 = vadd.f32 %v917, %v1061
  %v1063 = vpop.f32.mrb[0].mxu0
  %1064 = vmatprep.mubr.bf16.mxu0 %v472
  %1065 = vmatmul.mubr.bf16.gmra.mrb[0].mxu0 %v471
  %v1066 = vpop.f32.mrb[0].mxu0
  %v1067 = vadd.f32 %v922, %v1066
  %v1068 = vpop.f32.mrb[0].mxu0
  %v1069 = vpop.f32.mrb[0].mxu0
  %v1070 = vadd.f32 %v925, %v1069
  %v1071 = vpop.f32.mrb[0].mxu0
  %1072 = vmatprep.mubr.bf16.mxu0 %v477
  %1073 = vmatmul.mubr.bf16.gmra.mrb[0].mxu0 %v476
  %v1074 = vpop.f32.mrb[0].mxu0
  %v1075 = vadd.f32 %v930, %v1074
  %v1076 = vpop.f32.mrb[0].mxu0
  %v1077 = vpop.f32.mrb[0].mxu0
  %v1078 = vadd.f32 %v933, %v1077
  %v1079 = vpop.f32.mrb[0].mxu0
  %1080 = vmatprep.mubr.bf16.mxu0 %v482
  %1081 = vmatmul.mubr.bf16.gmra.mrb[0].mxu0 %v481
  %v1082 = vpop.f32.mrb[0].mxu0
  %v1083 = vadd.f32 %v938, %v1082
  %v1084 = vpop.f32.mrb[0].mxu0
  %v1085 = vpop.f32.mrb[0].mxu0
  %v1086 = vadd.f32 %v941, %v1085
  %v1087 = vpop.f32.mrb[0].mxu0
  %1088 = vdwg.mxu0
  %1089 = vmatprep.subr.bf16.mxu0 0
  %1090 = vmatpush1.bf16.msra.mxu0 %v716
  %1091 = vmatprep.subr.bf16.mxu0 0
  %1092 = vmatpush1.bf16.msra.mxu0 %v717
  %1093 = vmatprep.subr.bf16.mxu0 0
  %1094 = vmatpush1.bf16.msra.mxu0 %v718
  %1095 = vmatprep.subr.bf16.mxu0 0
  %1096 = vmatpush1.bf16.msra.mxu0 %v719
  %1097 = vmatprep.subr.bf16.mxu0 0
  %1098 = vmatpush1.bf16.msra.mxu0 0
  %1099 = vmatprep.subr.bf16.mxu0 0
  %1100 = vmatpush1.bf16.msra.mxu0 0
  %1101 = vmatprep.subr.bf16.mxu0 0
  %1102 = vmatpush1.bf16.msra.mxu0 0
  %1103 = vmatprep.subr.bf16.mxu0 0
  %1104 = vmatpush1.bf16.msra.mxu0 0
  %1105 = vmatprep.subr.bf16.mxu0 0
  %1106 = vmatpush1.bf16.msra.mxu0 0
  %1107 = vmatprep.subr.bf16.mxu0 0
  %1108 = vmatpush1.bf16.msra.mxu0 0
  %1109 = vmatprep.subr.bf16.mxu0 0
  %1110 = vmatpush1.bf16.msra.mxu0 0
  %1111 = vmatprep.subr.bf16.mxu0 0
  %1112 = vmatpush1.bf16.msra.mxu0 0
  %1113 = vmatprep.subr.bf16.mxu0 0
  %1114 = vmatpush1.bf16.msra.mxu0 0
  %1115 = vmatprep.subr.bf16.mxu0 0
  %1116 = vmatpush1.bf16.msra.mxu0 0
  %1117 = vmatprep.subr.bf16.mxu0 0
  %1118 = vmatpush1.bf16.msra.mxu0 0
  %1119 = vmatprep.subr.bf16.mxu0 0
  %1120 = vmatpush1.bf16.msra.mxu0 0
  %1121 = vmatprep.mubr.bf16.mxu0 0
  %1122 = vmatmul.mubr.bf16.gmra.mrb[0].mxu0 %v758
  %v1123 = vpop.f32.mrb[0].mxu0
  %v1124 = vadd.f32 %v979, %v1123
  %v1125 = vpop.f32.mrb[0].mxu0
  %v1126 = vpop.f32.mrb[0].mxu0
  %v1127 = vadd.f32 %v982, %v1126
  %v1128 = vpop.f32.mrb[0].mxu0
  %1129 = vmatprep.mubr.bf16.mxu0 0
  %1130 = vmatmul.mubr.bf16.gmra.mrb[0].mxu0 %v761
  %v1131 = vpop.f32.mrb[0].mxu0
  %v1132 = vadd.f32 %v987, %v1131
  %v1133 = vpop.f32.mrb[0].mxu0
  %v1134 = vpop.f32.mrb[0].mxu0
  %v1135 = vadd.f32 %v990, %v1134
  %v1136 = vpop.f32.mrb[0].mxu0
  %1137 = vmatprep.mubr.bf16.mxu0 0
  %1138 = vmatmul.mubr.bf16.gmra.mrb[0].mxu0 %v764
  %v1139 = vpop.f32.mrb[0].mxu0
  %v1140 = vadd.f32 %v995, %v1139
  %v1141 = vpop.f32.mrb[0].mxu0
  %v1142 = vpop.f32.mrb[0].mxu0
  %v1143 = vadd.f32 %v998, %v1142
  %v1144 = vpop.f32.mrb[0].mxu0
  %1145 = vmatprep.mubr.bf16.mxu0 0
  %1146 = vmatmul.mubr.bf16.gmra.mrb[0].mxu0 %v767
  %v1147 = vpop.f32.mrb[0].mxu0
  %v1148 = vadd.f32 %v1003, %v1147
  %v1149 = vpop.f32.mrb[0].mxu0
  %v1150 = vpop.f32.mrb[0].mxu0
  %v1151 = vadd.f32 %v1006, %v1150
  %v1152 = vpop.f32.mrb[0].mxu0
  %1153 = vmatprep.mubr.bf16.mxu0 0
  %1154 = vmatmul.mubr.bf16.gmra.mrb[0].mxu0 %v770
  %v1155 = vpop.f32.mrb[0].mxu0
  %v1156 = vadd.f32 %v1011, %v1155
  %v1157 = vpop.f32.mrb[0].mxu0
  %v1158 = vpop.f32.mrb[0].mxu0
  %v1159 = vadd.f32 %v1014, %v1158
  %v1160 = vpop.f32.mrb[0].mxu0
  %1161 = vmatprep.mubr.bf16.mxu0 0
  %1162 = vmatmul.mubr.bf16.gmra.mrb[0].mxu0 %v773
  %v1163 = vpop.f32.mrb[0].mxu0
  %v1164 = vadd.f32 %v1019, %v1163
  %v1165 = vpop.f32.mrb[0].mxu0
  %v1166 = vpop.f32.mrb[0].mxu0
  %v1167 = vadd.f32 %v1022, %v1166
  %v1168 = vpop.f32.mrb[0].mxu0
  %1169 = vmatprep.mubr.bf16.mxu0 0
  %1170 = vmatmul.mubr.bf16.gmra.mrb[0].mxu0 %v776
  %v1171 = vpop.f32.mrb[0].mxu0
  %v1172 = vadd.f32 %v1027, %v1171
  %v1173 = vpop.f32.mrb[0].mxu0
  %v1174 = vpop.f32.mrb[0].mxu0
  %v1175 = vadd.f32 %v1030, %v1174
  %v1176 = vpop.f32.mrb[0].mxu0
  %1177 = vmatprep.mubr.bf16.mxu0 0
  %1178 = vmatmul.mubr.bf16.gmra.mrb[0].mxu0 %v779
  %v1179 = vpop.f32.mrb[0].mxu0
  %v1180 = vadd.f32 %v1035, %v1179
  %v1181 = vpop.f32.mrb[0].mxu0
  %v1182 = vpop.f32.mrb[0].mxu0
  %v1183 = vadd.f32 %v1038, %v1182
  %v1184 = vpop.f32.mrb[0].mxu0
  %1185 = vmatprep.mubr.bf16.mxu0 0
  %1186 = vmatmul.mubr.bf16.gmra.mrb[0].mxu0 %v782
  %v1187 = vpop.f32.mrb[0].mxu0
  %v1188 = vadd.f32 %v1043, %v1187
  %v1189 = vpop.f32.mrb[0].mxu0
  %v1190 = vpop.f32.mrb[0].mxu0
  %v1191 = vadd.f32 %v1046, %v1190
  %v1192 = vpop.f32.mrb[0].mxu0
  %1193 = vmatprep.mubr.bf16.mxu0 0
  %1194 = vmatmul.mubr.bf16.gmra.mrb[0].mxu0 %v785
  %v1195 = vpop.f32.mrb[0].mxu0
  %v1196 = vadd.f32 %v1051, %v1195
  %v1197 = vpop.f32.mrb[0].mxu0
  %v1198 = vpop.f32.mrb[0].mxu0
  %v1199 = vadd.f32 %v1054, %v1198
  %v1200 = vpop.f32.mrb[0].mxu0
  %1201 = vmatprep.mubr.bf16.mxu0 0
  %1202 = vmatmul.mubr.bf16.gmra.mrb[0].mxu0 %v788
  %v1203 = vpop.f32.mrb[0].mxu0
  %v1204 = vadd.f32 %v1059, %v1203
  %v1205 = vpop.f32.mrb[0].mxu0
  %v1206 = vpop.f32.mrb[0].mxu0
  %v1207 = vadd.f32 %v1062, %v1206
  %v1208 = vpop.f32.mrb[0].mxu0
  %1209 = vmatprep.mubr.bf16.mxu0 0
  %1210 = vmatmul.mubr.bf16.gmra.mrb[0].mxu0 %v791
  %v1211 = vpop.f32.mrb[0].mxu0
  %v1212 = vadd.f32 %v1067, %v1211
  %v1213 = vpop.f32.mrb[0].mxu0
  %v1214 = vpop.f32.mrb[0].mxu0
  %v1215 = vadd.f32 %v1070, %v1214
  %v1216 = vpop.f32.mrb[0].mxu0
  %1217 = vmatprep.mubr.bf16.mxu0 0
  %1218 = vmatmul.mubr.bf16.gmra.mrb[0].mxu0 %v794
  %v1219 = vpop.f32.mrb[0].mxu0
  %v1220 = vadd.f32 %v1075, %v1219
  %v1221 = vpop.f32.mrb[0].mxu0
  %v1222 = vpop.f32.mrb[0].mxu0
  %v1223 = vadd.f32 %v1078, %v1222
  %v1224 = vpop.f32.mrb[0].mxu0
  %1225 = vmatprep.mubr.bf16.mxu0 0
  %1226 = vmatmul.mubr.bf16.gmra.mrb[0].mxu0 %v797
  %v1227 = vpop.f32.mrb[0].mxu0
  %v1228 = vadd.f32 %v1083, %v1227
  %v1229 = vpop.f32.mrb[0].mxu0
  %v1230 = vpop.f32.mrb[0].mxu0
  %v1231 = vadd.f32 %v1086, %v1230
  %v1232 = vpop.f32.mrb[0].mxu0
  %1233 = vdwg.mxu0
  %v1234 = vmax.f32 %v1124, 0.0
  %v1235 = vmax.f32 %v1127, 0.0
  %v1236 = vmax.f32 %v1132, 0.0
  %v1237 = vmax.f32 %v1135, 0.0
  %v1238 = vmax.f32 %v1140, 0.0
  %v1239 = vmax.f32 %v1143, 0.0
  %v1240 = vmax.f32 %v1148, 0.0
  %v1241 = vmax.f32 %v1151, 0.0
  %v1242 = vmax.f32 %v1156, 0.0
  %v1243 = vmax.f32 %v1159, 0.0
  %v1244 = vmax.f32 %v1164, 0.0
  %v1245 = vmax.f32 %v1167, 0.0
  %v1246 = vmax.f32 %v1172, 0.0
  %v1247 = vmax.f32 %v1175, 0.0
  %v1248 = vmax.f32 %v1180, 0.0
  %v1249 = vmax.f32 %v1183, 0.0
  %v1250 = vmax.f32 %v1188, 0.0
  %v1251 = vmax.f32 %v1191, 0.0
  %v1252 = vmax.f32 %v1196, 0.0
  %v1253 = vmax.f32 %v1199, 0.0
  %v1254 = vmax.f32 %v1204, 0.0
  %v1255 = vmax.f32 %v1207, 0.0
  %v1256 = vmax.f32 %v1212, 0.0
  %v1257 = vmax.f32 %v1215, 0.0
  %v1258 = vmax.f32 %v1220, 0.0
  %v1259 = vmax.f32 %v1223, 0.0
  %v1260 = vmax.f32 %v1228, 0.0
  %v1261 = vmax.f32 %v1231, 0.0
  %1262 = vst [vmem:[#allocation2] sm:$0xff] %v1234
  %1263 = vst [vmem:[#allocation2 + $0x8] sm:$0xff] %v1235
  %1264 = vst [vmem:[#allocation2 + $0x10] sm:$0xff] %v1236
  %1265 = vst [vmem:[#allocation2 + $0x18] sm:$0xff] %v1237
  %1266 = vst [vmem:[#allocation2 + $0x20] sm:$0xff] %v1238
  %1267 = vst [vmem:[#allocation2 + $0x28] sm:$0xff] %v1239
  %1268 = vst [vmem:[#allocation2 + $0x30] sm:$0xff] %v1240
  %1269 = vst [vmem:[#allocation2 + $0x38] sm:$0xff] %v1241
  %1270 = vst [vmem:[#allocation2 + $0x40] sm:$0xff] %v1242
  %1271 = vst [vmem:[#allocation2 + $0x48] sm:$0xff] %v1243
  %1272 = vst [vmem:[#allocation2 + $0x50] sm:$0xff] %v1244
  %1273 = vst [vmem:[#allocation2 + $0x58] sm:$0xff] %v1245
  %1274 = vst [vmem:[#allocation2 + $0x60] sm:$0xff] %v1246
  %1275 = vst [vmem:[#allocation2 + $0x68] sm:$0xff] %v1247
  %1276 = vst [vmem:[#allocation2 + $0x70] sm:$0xff] %v1248
  %1277 = vst [vmem:[#allocation2 + $0x78] sm:$0xff] %v1249
  %1278 = vst [vmem:[#allocation2 + $0x80] sm:$0xff] %v1250
  %1279 = vst [vmem:[#allocation2 + $0x88] sm:$0xff] %v1251
  %1280 = vst [vmem:[#allocation2 + $0x90] sm:$0xff] %v1252
  %1281 = vst [vmem:[#allocation2 + $0x98] sm:$0xff] %v1253
  %1282 = vst [vmem:[#allocation2 + $0xa0] sm:$0xff] %v1254
  %1283 = vst [vmem:[#allocation2 + $0xa8] sm:$0xff] %v1255
  %1284 = vst [vmem:[#allocation2 + $0xb0] sm:$0xff] %v1256
  %1285 = vst [vmem:[#allocation2 + $0xb8] sm:$0xff] %v1257
  %1286 = vst [vmem:[#allocation2 + $0xc0] sm:$0xff] %v1258
  %1287 = vst [vmem:[#allocation2 + $0xc8] sm:$0xff] %v1259
  %1288 = vst [vmem:[#allocation2 + $0xd0] sm:$0xff] %v1260
  %1289 = vst [vmem:[#allocation2 + $0xd8] sm:$0xff] %v1261
  %v1290 = vld [vmem:[#allocation2] sm:$0xff]
  %v1291 = vld [vmem:[#allocation2 + $0x8] sm:$0xff]
  %v1292 = vld [vmem:[#allocation2 + $0x10] sm:$0xff]
  %v1293 = vld [vmem:[#allocation2 + $0x18] sm:$0xff]
  %v1294 = vld [vmem:[#allocation2 + $0x20] sm:$0xff]
  %v1295 = vld [vmem:[#allocation2 + $0x28] sm:$0xff]
  %v1296 = vld [vmem:[#allocation2 + $0x30] sm:$0xff]
  %v1297 = vld [vmem:[#allocation2 + $0x38] sm:$0xff]
  %v1298 = vld [vmem:[#allocation2 + $0x40] sm:$0xff]
  %v1299 = vld [vmem:[#allocation2 + $0x48] sm:$0xff]
  %v1300 = vld [vmem:[#allocation2 + $0x50] sm:$0xff]
  %v1301 = vld [vmem:[#allocation2 + $0x58] sm:$0xff]
  %v1302 = vld [vmem:[#allocation2 + $0x70] sm:$0xff]
  %v1303 = vld [vmem:[#allocation2 + $0x78] sm:$0xff]
  %v1304 = vld [vmem:[#allocation2 + $0x80] sm:$0xff]
  %v1305 = vld [vmem:[#allocation2 + $0x88] sm:$0xff]
  %v1306 = vld [vmem:[#allocation2 + $0x90] sm:$0xff]
  %v1307 = vld [vmem:[#allocation2 + $0x98] sm:$0xff]
  %v1308 = vld [vmem:[#allocation2 + $0xa0] sm:$0xff]
  %v1309 = vld [vmem:[#allocation2 + $0xa8] sm:$0xff]
  %v1310 = vld [vmem:[#allocation2 + $0xb0] sm:$0xff]
  %v1311 = vld [vmem:[#allocation2 + $0xb8] sm:$0xff]
  %v1312 = vld [vmem:[#allocation2 + $0xc0] sm:$0xff]
  %v1313 = vld [vmem:[#allocation2 + $0xc8] sm:$0xff]
  %v1314 = vpack.c.bf16 %v1291, %v1290
  %v1315 = vpack.c.bf16 %v1293, %v1292
  %v1316 = vpack.c.bf16 %v1295, %v1294
  %v1317 = vpack.c.bf16 %v1297, %v1296
  %v1318 = vpack.c.bf16 %v1299, %v1298
  %v1319 = vpack.c.bf16 %v1301, %v1300
  %v1320 = vpack.c.bf16 %v1303, %v1302
  %v1321 = vpack.c.bf16 %v1305, %v1304
  %v1322 = vpack.c.bf16 %v1307, %v1306
  %v1323 = vpack.c.bf16 %v1309, %v1308
  %v1324 = vpack.c.bf16 %v1311, %v1310
  %v1325 = vpack.c.bf16 %v1313, %v1312
  %v1326 = vld [vmem:[%s3] sm:$0xf]
  %v1327 = vld [vmem:[%s3 + $0x4] sm:$0xf]
  %v1328 = vld [vmem:[%s3 + $0x8] sm:$0xf]
  %v1329 = vld [vmem:[%s3 + $0xc] sm:$0xf]
  %v1330 = vld [vmem:[%s3 + $0x10] sm:$0xf]
  %v1331 = vld [vmem:[%s3 + $0x14] sm:$0xf]
  %v1332 = vld [vmem:[%s3 + $0x18] sm:$0xf]
  %v1333 = vld [vmem:[%s3 + $0x1c] sm:$0xf]
  %v1334 = vld [vmem:[%s3 + $0x20] sm:$0xf]
  %v1335 = vld [vmem:[%s3 + $0x24] sm:$0xf]
  %v1336 = vld [vmem:[%s3 + $0x28] sm:$0xf]
  %v1337 = vld [vmem:[%s3 + $0x2c] sm:$0xf]
  %v1338 = vld [vmem:[%s3 + $0x30] sm:$0xf]
  %v1339 = vld [vmem:[%s3 + $0x34] sm:$0xf]
  %v1340 = vld [vmem:[%s3 + $0x38] sm:$0xf]
  %v1341 = vld [vmem:[%s3 + $0x3c] sm:$0xf]
  %v1342 = vld [vmem:[#allocation2 + $0x1] sm:$0xff]
  %v1343 = vld [vmem:[#allocation2 + $0x9] sm:$0xff]
  %v1344 = vld [vmem:[#allocation2 + $0x11] sm:$0xff]
  %v1345 = vld [vmem:[#allocation2 + $0x19] sm:$0xff]
  %v1346 = vld [vmem:[#allocation2 + $0x21] sm:$0xff]
  %v1347 = vld [vmem:[#allocation2 + $0x29] sm:$0xff]
  %v1348 = vld [vmem:[#allocation2 + $0x31] sm:$0xff]
  %v1349 = vld [vmem:[#allocation2 + $0x39] sm:$0xff]
  %v1350 = vld [vmem:[#allocation2 + $0x41] sm:$0xff]
  %v1351 = vld [vmem:[#allocation2 + $0x49] sm:$0xff]
  %v1352 = vld [vmem:[#allocation2 + $0x51] sm:$0xff]
  %v1353 = vld [vmem:[#allocation2 + $0x59] sm:$0xff]
  %v1354 = vld [vmem:[#allocation2 + $0x71] sm:$0xff]
  %v1355 = vld [vmem:[#allocation2 + $0x79] sm:$0xff]
  %v1356 = vld [vmem:[#allocation2 + $0x81] sm:$0xff]
  %v1357 = vld [vmem:[#allocation2 + $0x89] sm:$0xff]
  %v1358 = vld [vmem:[#allocation2 + $0x91] sm:$0xff]
  %v1359 = vld [vmem:[#allocation2 + $0x99] sm:$0xff]
  %v1360 = vld [vmem:[#allocation2 + $0xa1] sm:$0xff]
  %v1361 = vld [vmem:[#allocation2 + $0xa9] sm:$0xff]
  %v1362 = vld [vmem:[#allocation2 + $0xb1] sm:$0xff]
  %v1363 = vld [vmem:[#allocation2 + $0xb9] sm:$0xff]
  %v1364 = vld [vmem:[#allocation2 + $0xc1] sm:$0xff]
  %v1365 = vld [vmem:[#allocation2 + $0xc9] sm:$0xff]
  %v1366 = vpack.c.bf16 %v1343, %v1342
  %v1367 = vpack.c.bf16 %v1345, %v1344
  %v1368 = vpack.c.bf16 %v1347, %v1346
  %v1369 = vpack.c.bf16 %v1349, %v1348
  %v1370 = vpack.c.bf16 %v1351, %v1350
  %v1371 = vpack.c.bf16 %v1353, %v1352
  %v1372 = vpack.c.bf16 %v1355, %v1354
  %v1373 = vpack.c.bf16 %v1357, %v1356
  %v1374 = vpack.c.bf16 %v1359, %v1358
  %v1375 = vpack.c.bf16 %v1361, %v1360
  %v1376 = vpack.c.bf16 %v1363, %v1362
  %v1377 = vpack.c.bf16 %v1365, %v1364
  %s1378 = scalar_lea.vmem %s3, 64
  %v1379 = vld [vmem:[%s1378] sm:$0xf]
  %v1380 = vld [vmem:[%s1378 + $0x4] sm:$0xf]
  %v1381 = vld [vmem:[%s1378 + $0x8] sm:$0xf]
  %v1382 = vld [vmem:[%s1378 + $0xc] sm:$0xf]
  %v1383 = vld [vmem:[%s1378 + $0x10] sm:$0xf]
  %v1384 = vld [vmem:[%s1378 + $0x14] sm:$0xf]
  %v1385 = vld [vmem:[%s1378 + $0x18] sm:$0xf]
  %v1386 = vld [vmem:[%s1378 + $0x1c] sm:$0xf]
  %v1387 = vld [vmem:[%s1378 + $0x20] sm:$0xf]
  %v1388 = vld [vmem:[%s1378 + $0x24] sm:$0xf]
  %v1389 = vld [vmem:[%s1378 + $0x28] sm:$0xf]
  %v1390 = vld [vmem:[%s1378 + $0x2c] sm:$0xf]
  %v1391 = vld [vmem:[%s1378 + $0x30] sm:$0xf]
  %v1392 = vld [vmem:[%s1378 + $0x34] sm:$0xf]
  %v1393 = vld [vmem:[%s1378 + $0x38] sm:$0xf]
  %v1394 = vld [vmem:[%s1378 + $0x3c] sm:$0xf]
  %v1411 = vunpack.c.l.b16 %v1379
  %v1412 = vunpack.c.l.b16 %v1380
  %v1413 = vunpack.c.l.b16 %v1381
  %v1414 = vunpack.c.l.b16 %v1382
  %v1415 = vunpack.c.l.b16 %v1383
  %v1416 = vunpack.c.l.b16 %v1384
  %v1417 = vunpack.c.l.b16 %v1385
  %v1418 = vunpack.c.l.b16 %v1386
  %v1419 = vunpack.c.l.b16 %v1387
  %v1420 = vunpack.c.l.b16 %v1388
  %v1421 = vunpack.c.l.b16 %v1389
  %v1422 = vunpack.c.l.b16 %v1390
  %v1423 = vunpack.c.l.b16 %v1391
  %v1424 = vunpack.c.l.b16 %v1392
  %v1425 = vunpack.c.l.b16 %v1393
  %v1426 = vunpack.c.l.b16 %v1394
  %v1427 = vpack.c.b16 %v1412, %v1411
  %v1428 = vpack.c.b16 %v1414, %v1413
  %v1429 = vpack.c.b16 %v1416, %v1415
  %v1430 = vpack.c.b16 %v1418, %v1417
  %v1431 = vpack.c.b16 %v1420, %v1419
  %v1432 = vpack.c.b16 %v1422, %v1421
  %v1433 = vpack.c.b16 %v1424, %v1423
  %v1434 = vpack.c.b16 %v1426, %v1425
  %1443 = vmatprep.subr.bf16.mxu0 0
  %1444 = vmatpush1.bf16.msra.mxu0 %v1427
  %1445 = vmatprep.subr.bf16.mxu0 0
  %1446 = vmatpush1.bf16.msra.mxu0 %v1428
  %1447 = vmatprep.subr.bf16.mxu0 0
  %1448 = vmatpush1.bf16.msra.mxu0 %v1429
  %1449 = vmatprep.subr.bf16.mxu0 0
  %1450 = vmatpush1.bf16.msra.mxu0 %v1430
  %1451 = vmatprep.subr.bf16.mxu0 0
  %1452 = vmatpush1.bf16.msra.mxu0 %v1431
  %1453 = vmatprep.subr.bf16.mxu0 0
  %1454 = vmatpush1.bf16.msra.mxu0 %v1432
  %1455 = vmatprep.subr.bf16.mxu0 0
  %1456 = vmatpush1.bf16.msra.mxu0 %v1433
  %1457 = vmatprep.subr.bf16.mxu0 0
  %1458 = vmatpush1.bf16.msra.mxu0 %v1434
  %1459 = vmatprep.subr.bf16.mxu0 0
  %1460 = vmatpush1.bf16.msra.mxu0 0
  %1461 = vmatprep.subr.bf16.mxu0 0
  %1462 = vmatpush1.bf16.msra.mxu0 0
  %1463 = vmatprep.subr.bf16.mxu0 0
  %1464 = vmatpush1.bf16.msra.mxu0 0
  %1465 = vmatprep.subr.bf16.mxu0 0
  %1466 = vmatpush1.bf16.msra.mxu0 0
  %1467 = vmatprep.subr.bf16.mxu0 0
  %1468 = vmatpush1.bf16.msra.mxu0 0
  %1469 = vmatprep.subr.bf16.mxu0 0
  %1470 = vmatpush1.bf16.msra.mxu0 0
  %1471 = vmatprep.subr.bf16.mxu0 0
  %1472 = vmatpush1.bf16.msra.mxu0 0
  %1473 = vmatprep.subr.bf16.mxu0 0
  %1474 = vmatpush1.bf16.msra.mxu0 0
  %1475 = vmatprep.mubr.bf16.mxu0 0
  %1476 = vmatmul.mubr.bf16.gmra.mrb[0].mxu0 %v1366
  %v1477 = vpop.f32.mrb[0].mxu0
  %v1478 = vadd.f32 0.0, %v1477
  %v1479 = vpop.f32.mrb[0].mxu0
  %v1480 = vpop.f32.mrb[0].mxu0
  %v1481 = vadd.f32 0.0, %v1480
  %v1482 = vpop.f32.mrb[0].mxu0
  %1483 = vmatprep.mubr.bf16.mxu0 0
  %1484 = vmatmul.mubr.bf16.gmra.mrb[0].mxu0 %v1367
  %v1485 = vpop.f32.mrb[0].mxu0
  %v1486 = vadd.f32 0.0, %v1485
  %v1487 = vpop.f32.mrb[0].mxu0
  %v1488 = vpop.f32.mrb[0].mxu0
  %v1489 = vadd.f32 0.0, %v1488
  %v1490 = vpop.f32.mrb[0].mxu0
  %1491 = vmatprep.mubr.bf16.mxu0 0
  %1492 = vmatmul.mubr.bf16.gmra.mrb[0].mxu0 %v1368
  %v1493 = vpop.f32.mrb[0].mxu0
  %v1494 = vadd.f32 0.0, %v1493
  %v1495 = vpop.f32.mrb[0].mxu0
  %v1496 = vpop.f32.mrb[0].mxu0
  %v1497 = vadd.f32 0.0, %v1496
  %v1498 = vpop.f32.mrb[0].mxu0
  %1499 = vmatprep.mubr.bf16.mxu0 0
  %1500 = vmatmul.mubr.bf16.gmra.mrb[0].mxu0 %v1369
  %v1501 = vpop.f32.mrb[0].mxu0
  %v1502 = vadd.f32 0.0, %v1501
  %v1503 = vpop.f32.mrb[0].mxu0
  %v1504 = vpop.f32.mrb[0].mxu0
  %v1505 = vadd.f32 0.0, %v1504
  %v1506 = vpop.f32.mrb[0].mxu0
  %1507 = vmatprep.mubr.bf16.mxu0 0
  %1508 = vmatmul.mubr.bf16.gmra.mrb[0].mxu0 %v1370
  %v1509 = vpop.f32.mrb[0].mxu0
  %v1510 = vadd.f32 0.0, %v1509
  %v1511 = vpop.f32.mrb[0].mxu0
  %v1512 = vpop.f32.mrb[0].mxu0
  %v1513 = vadd.f32 0.0, %v1512
  %v1514 = vpop.f32.mrb[0].mxu0
  %1515 = vmatprep.mubr.bf16.mxu0 0
  %1516 = vmatmul.mubr.bf16.gmra.mrb[0].mxu0 %v1371
  %v1517 = vpop.f32.mrb[0].mxu0
  %v1518 = vadd.f32 0.0, %v1517
  %v1519 = vpop.f32.mrb[0].mxu0
  %v1520 = vpop.f32.mrb[0].mxu0
  %v1521 = vadd.f32 0.0, %v1520
  %v1522 = vpop.f32.mrb[0].mxu0
  %1523 = vmatprep.mubr.bf16.mxu0 0
  %1524 = vmatmul.mubr.bf16.gmra.mrb[0].mxu0 %v1372
  %v1525 = vpop.f32.mrb[0].mxu0
  %v1526 = vadd.f32 0.0, %v1525
  %v1527 = vpop.f32.mrb[0].mxu0
  %v1528 = vpop.f32.mrb[0].mxu0
  %v1529 = vadd.f32 0.0, %v1528
  %v1530 = vpop.f32.mrb[0].mxu0
  %1531 = vmatprep.mubr.bf16.mxu0 0
  %1532 = vmatmul.mubr.bf16.gmra.mrb[0].mxu0 %v1373
  %v1533 = vpop.f32.mrb[0].mxu0
  %v1534 = vadd.f32 0.0, %v1533
  %v1535 = vpop.f32.mrb[0].mxu0
  %v1536 = vpop.f32.mrb[0].mxu0
  %v1537 = vadd.f32 0.0, %v1536
  %v1538 = vpop.f32.mrb[0].mxu0
  %1539 = vmatprep.mubr.bf16.mxu0 0
  %1540 = vmatmul.mubr.bf16.gmra.mrb[0].mxu0 %v1374
  %v1541 = vpop.f32.mrb[0].mxu0
  %v1542 = vadd.f32 0.0, %v1541
  %v1543 = vpop.f32.mrb[0].mxu0
  %v1544 = vpop.f32.mrb[0].mxu0
  %v1545 = vadd.f32 0.0, %v1544
  %v1546 = vpop.f32.mrb[0].mxu0
  %1547 = vmatprep.mubr.bf16.mxu0 0
  %1548 = vmatmul.mubr.bf16.gmra.mrb[0].mxu0 %v1375
  %v1549 = vpop.f32.mrb[0].mxu0
  %v1550 = vadd.f32 0.0, %v1549
  %v1551 = vpop.f32.mrb[0].mxu0
  %v1552 = vpop.f32.mrb[0].mxu0
  %v1553 = vadd.f32 0.0, %v1552
  %v1554 = vpop.f32.mrb[0].mxu0
  %1555 = vmatprep.mubr.bf16.mxu0 0
  %1556 = vmatmul.mubr.bf16.gmra.mrb[0].mxu0 %v1376
  %v1557 = vpop.f32.mrb[0].mxu0
  %v1558 = vadd.f32 0.0, %v1557
  %v1559 = vpop.f32.mrb[0].mxu0
  %v1560 = vpop.f32.mrb[0].mxu0
  %v1561 = vadd.f32 0.0, %v1560
  %v1562 = vpop.f32.mrb[0].mxu0
  %1563 = vmatprep.mubr.bf16.mxu0 0
  %1564 = vmatmul.mubr.bf16.gmra.mrb[0].mxu0 %v1377
  %v1565 = vpop.f32.mrb[0].mxu0
  %v1566 = vadd.f32 0.0, %v1565
  %v1567 = vpop.f32.mrb[0].mxu0
  %v1568 = vpop.f32.mrb[0].mxu0
  %v1569 = vadd.f32 0.0, %v1568
  %v1570 = vpop.f32.mrb[0].mxu0
  %1571 = vdwg.mxu0
  %v1588 = vunpack.c.l.b16 %v1326
  %v1589 = vunpack.c.l.b16 %v1327
  %v1590 = vunpack.c.l.b16 %v1328
  %v1591 = vunpack.c.l.b16 %v1329
  %v1592 = vunpack.c.l.b16 %v1330
  %v1593 = vunpack.c.l.b16 %v1331
  %v1594 = vunpack.c.l.b16 %v1332
  %v1595 = vunpack.c.l.b16 %v1333
  %v1596 = vunpack.c.l.b16 %v1334
  %v1597 = vunpack.c.l.b16 %v1335
  %v1598 = vunpack.c.l.b16 %v1336
  %v1599 = vunpack.c.l.b16 %v1337
  %v1600 = vunpack.c.l.b16 %v1338
  %v1601 = vunpack.c.l.b16 %v1339
  %v1602 = vunpack.c.l.b16 %v1340
  %v1603 = vunpack.c.l.b16 %v1341
  %v1604 = vpack.c.b16 %v1589, %v1588
  %v1605 = vpack.c.b16 %v1591, %v1590
  %v1606 = vpack.c.b16 %v1593, %v1592
  %v1607 = vpack.c.b16 %v1595, %v1594
  %v1608 = vpack.c.b16 %v1597, %v1596
  %v1609 = vpack.c.b16 %v1599, %v1598
  %v1610 = vpack.c.b16 %v1601, %v1600
  %v1611 = vpack.c.b16 %v1603, %v1602
  %1620 = vmatprep.subr.bf16.mxu0 0
  %1621 = vmatpush1.bf16.msra.mxu0 %v1604
  %1622 = vmatprep.subr.bf16.mxu0 0
  %1623 = vmatpush1.bf16.msra.mxu0 %v1605
  %1624 = vmatprep.subr.bf16.mxu0 0
  %1625 = vmatpush1.bf16.msra.mxu0 %v1606
  %1626 = vmatprep.subr.bf16.mxu0 0
  %1627 = vmatpush1.bf16.msra.mxu0 %v1607
  %1628 = vmatprep.subr.bf16.mxu0 0
  %1629 = vmatpush1.bf16.msra.mxu0 %v1608
  %1630 = vmatprep.subr.bf16.mxu0 0
  %1631 = vmatpush1.bf16.msra.mxu0 %v1609
  %1632 = vmatprep.subr.bf16.mxu0 0
  %1633 = vmatpush1.bf16.msra.mxu0 %v1610
  %1634 = vmatprep.subr.bf16.mxu0 0
  %1635 = vmatpush1.bf16.msra.mxu0 %v1611
  %1636 = vmatprep.subr.bf16.mxu0 0
  %1637 = vmatpush1.bf16.msra.mxu0 0
  %1638 = vmatprep.subr.bf16.mxu0 0
  %1639 = vmatpush1.bf16.msra.mxu0 0
  %1640 = vmatprep.subr.bf16.mxu0 0
  %1641 = vmatpush1.bf16.msra.mxu0 0
  %1642 = vmatprep.subr.bf16.mxu0 0
  %1643 = vmatpush1.bf16.msra.mxu0 0
  %1644 = vmatprep.subr.bf16.mxu0 0
  %1645 = vmatpush1.bf16.msra.mxu0 0
  %1646 = vmatprep.subr.bf16.mxu0 0
  %1647 = vmatpush1.bf16.msra.mxu0 0
  %1648 = vmatprep.subr.bf16.mxu0 0
  %1649 = vmatpush1.bf16.msra.mxu0 0
  %1650 = vmatprep.subr.bf16.mxu0 0
  %1651 = vmatpush1.bf16.msra.mxu0 0
  %1652 = vmatprep.mubr.bf16.mxu0 0
  %1653 = vmatmul.mubr.bf16.gmra.mrb[0].mxu0 %v1314
  %v1654 = vpop.f32.mrb[0].mxu0
  %v1655 = vadd.f32 %v1478, %v1654
  %v1656 = vpop.f32.mrb[0].mxu0
  %v1657 = vpop.f32.mrb[0].mxu0
  %v1658 = vadd.f32 %v1481, %v1657
  %v1659 = vpop.f32.mrb[0].mxu0
  %1660 = vmatprep.mubr.bf16.mxu0 0
  %1661 = vmatmul.mubr.bf16.gmra.mrb[0].mxu0 %v1315
  %v1662 = vpop.f32.mrb[0].mxu0
  %v1663 = vadd.f32 %v1486, %v1662
  %v1664 = vpop.f32.mrb[0].mxu0
  %v1665 = vpop.f32.mrb[0].mxu0
  %v1666 = vadd.f32 %v1489, %v1665
  %v1667 = vpop.f32.mrb[0].mxu0
  %1668 = vmatprep.mubr.bf16.mxu0 0
  %1669 = vmatmul.mubr.bf16.gmra.mrb[0].mxu0 %v1316
  %v1670 = vpop.f32.mrb[0].mxu0
  %v1671 = vadd.f32 %v1494, %v1670
  %v1672 = vpop.f32.mrb[0].mxu0
  %v1673 = vpop.f32.mrb[0].mxu0
  %v1674 = vadd.f32 %v1497, %v1673
  %v1675 = vpop.f32.mrb[0].mxu0
  %1676 = vmatprep.mubr.bf16.mxu0 0
  %1677 = vmatmul.mubr.bf16.gmra.mrb[0].mxu0 %v1317
  %v1678 = vpop.f32.mrb[0].mxu0
  %v1679 = vadd.f32 %v1502, %v1678
  %v1680 = vpop.f32.mrb[0].mxu0
  %v1681 = vpop.f32.mrb[0].mxu0
  %v1682 = vadd.f32 %v1505, %v1681
  %v1683 = vpop.f32.mrb[0].mxu0
  %1684 = vmatprep.mubr.bf16.mxu0 0
  %1685 = vmatmul.mubr.bf16.gmra.mrb[0].mxu0 %v1318
  %v1686 = vpop.f32.mrb[0].mxu0
  %v1687 = vadd.f32 %v1510, %v1686
  %v1688 = vpop.f32.mrb[0].mxu0
  %v1689 = vpop.f32.mrb[0].mxu0
  %v1690 = vadd.f32 %v1513, %v1689
  %v1691 = vpop.f32.mrb[0].mxu0
  %1692 = vmatprep.mubr.bf16.mxu0 0
  %1693 = vmatmul.mubr.bf16.gmra.mrb[0].mxu0 %v1319
  %v1694 = vpop.f32.mrb[0].mxu0
  %v1695 = vadd.f32 %v1518, %v1694
  %v1696 = vpop.f32.mrb[0].mxu0
  %v1697 = vpop.f32.mrb[0].mxu0
  %v1698 = vadd.f32 %v1521, %v1697
  %v1699 = vpop.f32.mrb[0].mxu0
  %1700 = vmatprep.mubr.bf16.mxu0 0
  %1701 = vmatmul.mubr.bf16.gmra.mrb[0].mxu0 %v1320
  %v1702 = vpop.f32.mrb[0].mxu0
  %v1703 = vadd.f32 %v1526, %v1702
  %v1704 = vpop.f32.mrb[0].mxu0
  %v1705 = vpop.f32.mrb[0].mxu0
  %v1706 = vadd.f32 %v1529, %v1705
  %v1707 = vpop.f32.mrb[0].mxu0
  %1708 = vmatprep.mubr.bf16.mxu0 0
  %1709 = vmatmul.mubr.bf16.gmra.mrb[0].mxu0 %v1321
  %v1710 = vpop.f32.mrb[0].mxu0
  %v1711 = vadd.f32 %v1534, %v1710
  %v1712 = vpop.f32.mrb[0].mxu0
  %v1713 = vpop.f32.mrb[0].mxu0
  %v1714 = vadd.f32 %v1537, %v1713
  %v1715 = vpop.f32.mrb[0].mxu0
  %1716 = vmatprep.mubr.bf16.mxu0 0
  %1717 = vmatmul.mubr.bf16.gmra.mrb[0].mxu0 %v1322
  %v1718 = vpop.f32.mrb[0].mxu0
  %v1719 = vadd.f32 %v1542, %v1718
  %v1720 = vpop.f32.mrb[0].mxu0
  %v1721 = vpop.f32.mrb[0].mxu0
  %v1722 = vadd.f32 %v1545, %v1721
  %v1723 = vpop.f32.mrb[0].mxu0
  %1724 = vmatprep.mubr.bf16.mxu0 0
  %1725 = vmatmul.mubr.bf16.gmra.mrb[0].mxu0 %v1323
  %v1726 = vpop.f32.mrb[0].mxu0
  %v1727 = vadd.f32 %v1550, %v1726
  %v1728 = vpop.f32.mrb[0].mxu0
  %v1729 = vpop.f32.mrb[0].mxu0
  %v1730 = vadd.f32 %v1553, %v1729
  %v1731 = vpop.f32.mrb[0].mxu0
  %1732 = vmatprep.mubr.bf16.mxu0 0
  %1733 = vmatmul.mubr.bf16.gmra.mrb[0].mxu0 %v1324
  %v1734 = vpop.f32.mrb[0].mxu0
  %v1735 = vadd.f32 %v1558, %v1734
  %v1736 = vpop.f32.mrb[0].mxu0
  %v1737 = vpop.f32.mrb[0].mxu0
  %v1738 = vadd.f32 %v1561, %v1737
  %v1739 = vpop.f32.mrb[0].mxu0
  %1740 = vmatprep.mubr.bf16.mxu0 0
  %1741 = vmatmul.mubr.bf16.gmra.mrb[0].mxu0 %v1325
  %v1742 = vpop.f32.mrb[0].mxu0
  %v1743 = vadd.f32 %v1566, %v1742
  %v1744 = vpop.f32.mrb[0].mxu0
  %v1745 = vpop.f32.mrb[0].mxu0
  %v1746 = vadd.f32 %v1569, %v1745
  %v1747 = vpop.f32.mrb[0].mxu0
  %1748 = vdwg.mxu0
  %v1749 = vld [vmem:[#allocation2 + $0xa] sm:$0xff]
  %v1750 = vld [vmem:[#allocation2 + $0x12] sm:$0xff]
  %v1751 = vld [vmem:[#allocation2 + $0x1a] sm:$0xff]
  %v1752 = vld [vmem:[#allocation2 + $0x22] sm:$0xff]
  %v1753 = vld [vmem:[#allocation2 + $0x2a] sm:$0xff]
  %v1754 = vld [vmem:[#allocation2 + $0x32] sm:$0xff]
  %v1755 = vld [vmem:[#allocation2 + $0x3a] sm:$0xff]
  %v1756 = vld [vmem:[#allocation2 + $0x42] sm:$0xff]
  %v1757 = vld [vmem:[#allocation2 + $0x4a] sm:$0xff]
  %v1758 = vld [vmem:[#allocation2 + $0x52] sm:$0xff]
  %v1759 = vld [vmem:[#allocation2 + $0x5a] sm:$0xff]
  %v1760 = vld [vmem:[#allocation2 + $0x62] sm:$0xff]
  %v1761 = vld [vmem:[#allocation2 + $0x7a] sm:$0xff]
  %v1762 = vld [vmem:[#allocation2 + $0x82] sm:$0xff]
  %v1763 = vld [vmem:[#allocation2 + $0x8a] sm:$0xff]
  %v1764 = vld [vmem:[#allocation2 + $0x92] sm:$0xff]
  %v1765 = vld [vmem:[#allocation2 + $0x9a] sm:$0xff]
  %v1766 = vld [vmem:[#allocation2 + $0xa2] sm:$0xff]
  %v1767 = vld [vmem:[#allocation2 + $0xaa] sm:$0xff]
  %v1768 = vld [vmem:[#allocation2 + $0xb2] sm:$0xff]
  %v1769 = vld [vmem:[#allocation2 + $0xba] sm:$0xff]
  %v1770 = vld [vmem:[#allocation2 + $0xc2] sm:$0xff]
  %v1771 = vld [vmem:[#allocation2 + $0xca] sm:$0xff]
  %v1772 = vld [vmem:[#allocation2 + $0xd2] sm:$0xff]
  %v1773 = vpack.c.bf16 %v1750, %v1749
  %v1774 = vpack.c.bf16 %v1752, %v1751
  %v1775 = vpack.c.bf16 %v1754, %v1753
  %v1776 = vpack.c.bf16 %v1756, %v1755
  %v1777 = vpack.c.bf16 %v1758, %v1757
  %v1778 = vpack.c.bf16 %v1760, %v1759
  %v1779 = vpack.c.bf16 %v1762, %v1761
  %v1780 = vpack.c.bf16 %v1764, %v1763
  %v1781 = vpack.c.bf16 %v1766, %v1765
  %v1782 = vpack.c.bf16 %v1768, %v1767
  %v1783 = vpack.c.bf16 %v1770, %v1769
  %v1784 = vpack.c.bf16 %v1772, %v1771
  %s1785 = scalar_lea.vmem %s3, 128
  %v1786 = vld [vmem:[%s1785] sm:$0xf]
  %v1787 = vld [vmem:[%s1785 + $0x4] sm:$0xf]
  %v1788 = vld [vmem:[%s1785 + $0x8] sm:$0xf]
  %v1789 = vld [vmem:[%s1785 + $0xc] sm:$0xf]
  %v1790 = vld [vmem:[%s1785 + $0x10] sm:$0xf]
  %v1791 = vld [vmem:[%s1785 + $0x14] sm:$0xf]
  %v1792 = vld [vmem:[%s1785 + $0x18] sm:$0xf]
  %v1793 = vld [vmem:[%s1785 + $0x1c] sm:$0xf]
  %v1794 = vld [vmem:[%s1785 + $0x20] sm:$0xf]
  %v1795 = vld [vmem:[%s1785 + $0x24] sm:$0xf]
  %v1796 = vld [vmem:[%s1785 + $0x28] sm:$0xf]
  %v1797 = vld [vmem:[%s1785 + $0x2c] sm:$0xf]
  %v1798 = vld [vmem:[%s1785 + $0x30] sm:$0xf]
  %v1799 = vld [vmem:[%s1785 + $0x34] sm:$0xf]
  %v1800 = vld [vmem:[%s1785 + $0x38] sm:$0xf]
  %v1801 = vld [vmem:[%s1785 + $0x3c] sm:$0xf]
  %v1818 = vunpack.c.l.b16 %v1786
  %v1819 = vunpack.c.l.b16 %v1787
  %v1820 = vunpack.c.l.b16 %v1788
  %v1821 = vunpack.c.l.b16 %v1789
  %v1822 = vunpack.c.l.b16 %v1790
  %v1823 = vunpack.c.l.b16 %v1791
  %v1824 = vunpack.c.l.b16 %v1792
  %v1825 = vunpack.c.l.b16 %v1793
  %v1826 = vunpack.c.l.b16 %v1794
  %v1827 = vunpack.c.l.b16 %v1795
  %v1828 = vunpack.c.l.b16 %v1796
  %v1829 = vunpack.c.l.b16 %v1797
  %v1830 = vunpack.c.l.b16 %v1798
  %v1831 = vunpack.c.l.b16 %v1799
  %v1832 = vunpack.c.l.b16 %v1800
  %v1833 = vunpack.c.l.b16 %v1801
  %v1834 = vpack.c.b16 %v1819, %v1818
  %v1835 = vpack.c.b16 %v1821, %v1820
  %v1836 = vpack.c.b16 %v1823, %v1822
  %v1837 = vpack.c.b16 %v1825, %v1824
  %v1838 = vpack.c.b16 %v1827, %v1826
  %v1839 = vpack.c.b16 %v1829, %v1828
  %v1840 = vpack.c.b16 %v1831, %v1830
  %v1841 = vpack.c.b16 %v1833, %v1832
  %1850 = vmatprep.subr.bf16.mxu0 0
  %1851 = vmatpush1.bf16.msra.mxu0 %v1834
  %1852 = vmatprep.subr.bf16.mxu0 0
  %1853 = vmatpush1.bf16.msra.mxu0 %v1835
  %1854 = vmatprep.subr.bf16.mxu0 0
  %1855 = vmatpush1.bf16.msra.mxu0 %v1836
  %1856 = vmatprep.subr.bf16.mxu0 0
  %1857 = vmatpush1.bf16.msra.mxu0 %v1837
  %1858 = vmatprep.subr.bf16.mxu0 0
  %1859 = vmatpush1.bf16.msra.mxu0 %v1838
  %1860 = vmatprep.subr.bf16.mxu0 0
  %1861 = vmatpush1.bf16.msra.mxu0 %v1839
  %1862 = vmatprep.subr.bf16.mxu0 0
  %1863 = vmatpush1.bf16.msra.mxu0 %v1840
  %1864 = vmatprep.subr.bf16.mxu0 0
  %1865 = vmatpush1.bf16.msra.mxu0 %v1841
  %1866 = vmatprep.subr.bf16.mxu0 0
  %1867 = vmatpush1.bf16.msra.mxu0 0
  %1868 = vmatprep.subr.bf16.mxu0 0
  %1869 = vmatpush1.bf16.msra.mxu0 0
  %1870 = vmatprep.subr.bf16.mxu0 0
  %1871 = vmatpush1.bf16.msra.mxu0 0
  %1872 = vmatprep.subr.bf16.mxu0 0
  %1873 = vmatpush1.bf16.msra.mxu0 0
  %1874 = vmatprep.subr.bf16.mxu0 0
  %1875 = vmatpush1.bf16.msra.mxu0 0
  %1876 = vmatprep.subr.bf16.mxu0 0
  %1877 = vmatpush1.bf16.msra.mxu0 0
  %1878 = vmatprep.subr.bf16.mxu0 0
  %1879 = vmatpush1.bf16.msra.mxu0 0
  %1880 = vmatprep.subr.bf16.mxu0 0
  %1881 = vmatpush1.bf16.msra.mxu0 0
  %1882 = vmatprep.mubr.bf16.mxu0 0
  %1883 = vmatmul.mubr.bf16.gmra.mrb[0].mxu0 %v1773
  %v1884 = vpop.f32.mrb[0].mxu0
  %v1885 = vadd.f32 0.0, %v1884
  %v1886 = vpop.f32.mrb[0].mxu0
  %v1887 = vpop.f32.mrb[0].mxu0
  %v1888 = vadd.f32 0.0, %v1887
  %v1889 = vpop.f32.mrb[0].mxu0
  %1890 = vmatprep.mubr.bf16.mxu0 0
  %1891 = vmatmul.mubr.bf16.gmra.mrb[0].mxu0 %v1774
  %v1892 = vpop.f32.mrb[0].mxu0
  %v1893 = vadd.f32 0.0, %v1892
  %v1894 = vpop.f32.mrb[0].mxu0
  %v1895 = vpop.f32.mrb[0].mxu0
  %v1896 = vadd.f32 0.0, %v1895
  %v1897 = vpop.f32.mrb[0].mxu0
  %1898 = vmatprep.mubr.bf16.mxu0 0
  %1899 = vmatmul.mubr.bf16.gmra.mrb[0].mxu0 %v1775
  %v1900 = vpop.f32.mrb[0].mxu0
  %v1901 = vadd.f32 0.0, %v1900
  %v1902 = vpop.f32.mrb[0].mxu0
  %v1903 = vpop.f32.mrb[0].mxu0
  %v1904 = vadd.f32 0.0, %v1903
  %v1905 = vpop.f32.mrb[0].mxu0
  %1906 = vmatprep.mubr.bf16.mxu0 0
  %1907 = vmatmul.mubr.bf16.gmra.mrb[0].mxu0 %v1776
  %v1908 = vpop.f32.mrb[0].mxu0
  %v1909 = vadd.f32 0.0, %v1908
  %v1910 = vpop.f32.mrb[0].mxu0
  %v1911 = vpop.f32.mrb[0].mxu0
  %v1912 = vadd.f32 0.0, %v1911
  %v1913 = vpop.f32.mrb[0].mxu0
  %1914 = vmatprep.mubr.bf16.mxu0 0
  %1915 = vmatmul.mubr.bf16.gmra.mrb[0].mxu0 %v1777
  %v1916 = vpop.f32.mrb[0].mxu0
  %v1917 = vadd.f32 0.0, %v1916
  %v1918 = vpop.f32.mrb[0].mxu0
  %v1919 = vpop.f32.mrb[0].mxu0
  %v1920 = vadd.f32 0.0, %v1919
  %v1921 = vpop.f32.mrb[0].mxu0
  %1922 = vmatprep.mubr.bf16.mxu0 0
  %1923 = vmatmul.mubr.bf16.gmra.mrb[0].mxu0 %v1778
  %v1924 = vpop.f32.mrb[0].mxu0
  %v1925 = vadd.f32 0.0, %v1924
  %v1926 = vpop.f32.mrb[0].mxu0
  %v1927 = vpop.f32.mrb[0].mxu0
  %v1928 = vadd.f32 0.0, %v1927
  %v1929 = vpop.f32.mrb[0].mxu0
  %1930 = vmatprep.mubr.bf16.mxu0 0
  %1931 = vmatmul.mubr.bf16.gmra.mrb[0].mxu0 %v1779
  %v1932 = vpop.f32.mrb[0].mxu0
  %v1933 = vadd.f32 0.0, %v1932
  %v1934 = vpop.f32.mrb[0].mxu0
  %v1935 = vpop.f32.mrb[0].mxu0
  %v1936 = vadd.f32 0.0, %v1935
  %v1937 = vpop.f32.mrb[0].mxu0
  %1938 = vmatprep.mubr.bf16.mxu0 0
  %1939 = vmatmul.mubr.bf16.gmra.mrb[0].mxu0 %v1780
  %v1940 = vpop.f32.mrb[0].mxu0
  %v1941 = vadd.f32 0.0, %v1940
  %v1942 = vpop.f32.mrb[0].mxu0
  %v1943 = vpop.f32.mrb[0].mxu0
  %v1944 = vadd.f32 0.0, %v1943
  %v1945 = vpop.f32.mrb[0].mxu0
  %1946 = vmatprep.mubr.bf16.mxu0 0
  %1947 = vmatmul.mubr.bf16.gmra.mrb[0].mxu0 %v1781
  %v1948 = vpop.f32.mrb[0].mxu0
  %v1949 = vadd.f32 0.0, %v1948
  %v1950 = vpop.f32.mrb[0].mxu0
  %v1951 = vpop.f32.mrb[0].mxu0
  %v1952 = vadd.f32 0.0, %v1951
  %v1953 = vpop.f32.mrb[0].mxu0
  %1954 = vmatprep.mubr.bf16.mxu0 0
  %1955 = vmatmul.mubr.bf16.gmra.mrb[0].mxu0 %v1782
  %v1956 = vpop.f32.mrb[0].mxu0
  %v1957 = vadd.f32 0.0, %v1956
  %v1958 = vpop.f32.mrb[0].mxu0
  %v1959 = vpop.f32.mrb[0].mxu0
  %v1960 = vadd.f32 0.0, %v1959
  %v1961 = vpop.f32.mrb[0].mxu0
  %1962 = vmatprep.mubr.bf16.mxu0 0
  %1963 = vmatmul.mubr.bf16.gmra.mrb[0].mxu0 %v1783
  %v1964 = vpop.f32.mrb[0].mxu0
  %v1965 = vadd.f32 0.0, %v1964
  %v1966 = vpop.f32.mrb[0].mxu0
  %v1967 = vpop.f32.mrb[0].mxu0
  %v1968 = vadd.f32 0.0, %v1967
  %v1969 = vpop.f32.mrb[0].mxu0
  %1970 = vmatprep.mubr.bf16.mxu0 0
  %1971 = vmatmul.mubr.bf16.gmra.mrb[0].mxu0 %v1784
  %v1972 = vpop.f32.mrb[0].mxu0
  %v1973 = vadd.f32 0.0, %v1972
  %v1974 = vpop.f32.mrb[0].mxu0
  %v1975 = vpop.f32.mrb[0].mxu0
  %v1976 = vadd.f32 0.0, %v1975
  %v1977 = vpop.f32.mrb[0].mxu0
  %1978 = vdwg.mxu0
  %v1979 = vadd.f32 %v1655, %v1885
  %v1980 = vadd.f32 %v1658, %v1888
  %v1981 = vadd.f32 %v1663, %v1893
  %v1982 = vadd.f32 %v1666, %v1896
  %v1983 = vadd.f32 %v1671, %v1901
  %v1984 = vadd.f32 %v1674, %v1904
  %v1985 = vadd.f32 %v1679, %v1909
  %v1986 = vadd.f32 %v1682, %v1912
  %v1987 = vadd.f32 %v1687, %v1917
  %v1988 = vadd.f32 %v1690, %v1920
  %v1989 = vadd.f32 %v1695, %v1925
  %v1990 = vadd.f32 %v1698, %v1928
  %v1991 = vadd.f32 %v1703, %v1933
  %v1992 = vadd.f32 %v1706, %v1936
  %v1993 = vadd.f32 %v1711, %v1941
  %v1994 = vadd.f32 %v1714, %v1944
  %v1995 = vadd.f32 %v1719, %v1949
  %v1996 = vadd.f32 %v1722, %v1952
  %v1997 = vadd.f32 %v1727, %v1957
  %v1998 = vadd.f32 %v1730, %v1960
  %v1999 = vadd.f32 %v1735, %v1965
  %v2000 = vadd.f32 %v1738, %v1968
  %v2001 = vadd.f32 %v1743, %v1973
  %v2002 = vadd.f32 %v1746, %v1976
  %v2003 = vld [vmem:[#allocation2 + $0xb] sm:$0xff]
  %v2004 = vld [vmem:[#allocation2 + $0x13] sm:$0xff]
  %v2005 = vld [vmem:[#allocation2 + $0x1b] sm:$0xff]
  %v2006 = vld [vmem:[#allocation2 + $0x23] sm:$0xff]
  %v2007 = vld [vmem:[#allocation2 + $0x2b] sm:$0xff]
  %v2008 = vld [vmem:[#allocation2 + $0x33] sm:$0xff]
  %v2009 = vld [vmem:[#allocation2 + $0x3b] sm:$0xff]
  %v2010 = vld [vmem:[#allocation2 + $0x43] sm:$0xff]
  %v2011 = vld [vmem:[#allocation2 + $0x4b] sm:$0xff]
  %v2012 = vld [vmem:[#allocation2 + $0x53] sm:$0xff]
  %v2013 = vld [vmem:[#allocation2 + $0x5b] sm:$0xff]
  %v2014 = vld [vmem:[#allocation2 + $0x63] sm:$0xff]
  %v2015 = vld [vmem:[#allocation2 + $0x7b] sm:$0xff]
  %v2016 = vld [vmem:[#allocation2 + $0x83] sm:$0xff]
  %v2017 = vld [vmem:[#allocation2 + $0x8b] sm:$0xff]
  %v2018 = vld [vmem:[#allocation2 + $0x93] sm:$0xff]
  %v2019 = vld [vmem:[#allocation2 + $0x9b] sm:$0xff]
  %v2020 = vld [vmem:[#allocation2 + $0xa3] sm:$0xff]
  %v2021 = vld [vmem:[#allocation2 + $0xab] sm:$0xff]
  %v2022 = vld [vmem:[#allocation2 + $0xb3] sm:$0xff]
  %v2023 = vld [vmem:[#allocation2 + $0xbb] sm:$0xff]
  %v2024 = vld [vmem:[#allocation2 + $0xc3] sm:$0xff]
  %v2025 = vld [vmem:[#allocation2 + $0xcb] sm:$0xff]
  %v2026 = vld [vmem:[#allocation2 + $0xd3] sm:$0xff]
  %v2027 = vpack.c.bf16 %v2004, %v2003
  %v2028 = vpack.c.bf16 %v2006, %v2005
  %v2029 = vpack.c.bf16 %v2008, %v2007
  %v2030 = vpack.c.bf16 %v2010, %v2009
  %v2031 = vpack.c.bf16 %v2012, %v2011
  %v2032 = vpack.c.bf16 %v2014, %v2013
  %v2033 = vpack.c.bf16 %v2016, %v2015
  %v2034 = vpack.c.bf16 %v2018, %v2017
  %v2035 = vpack.c.bf16 %v2020, %v2019
  %v2036 = vpack.c.bf16 %v2022, %v2021
  %v2037 = vpack.c.bf16 %v2024, %v2023
  %v2038 = vpack.c.bf16 %v2026, %v2025
  %s2039 = scalar_lea.vmem %s3, 192
  %v2040 = vld [vmem:[%s2039] sm:$0xf]
  %v2041 = vld [vmem:[%s2039 + $0x4] sm:$0xf]
  %v2042 = vld [vmem:[%s2039 + $0x8] sm:$0xf]
  %v2043 = vld [vmem:[%s2039 + $0xc] sm:$0xf]
  %v2044 = vld [vmem:[%s2039 + $0x10] sm:$0xf]
  %v2045 = vld [vmem:[%s2039 + $0x14] sm:$0xf]
  %v2046 = vld [vmem:[%s2039 + $0x18] sm:$0xf]
  %v2047 = vld [vmem:[%s2039 + $0x1c] sm:$0xf]
  %v2048 = vld [vmem:[%s2039 + $0x20] sm:$0xf]
  %v2049 = vld [vmem:[%s2039 + $0x24] sm:$0xf]
  %v2050 = vld [vmem:[%s2039 + $0x28] sm:$0xf]
  %v2051 = vld [vmem:[%s2039 + $0x2c] sm:$0xf]
  %v2052 = vld [vmem:[%s2039 + $0x30] sm:$0xf]
  %v2053 = vld [vmem:[%s2039 + $0x34] sm:$0xf]
  %v2054 = vld [vmem:[%s2039 + $0x38] sm:$0xf]
  %v2055 = vld [vmem:[%s2039 + $0x3c] sm:$0xf]
  %v2072 = vunpack.c.l.b16 %v2040
  %v2073 = vunpack.c.l.b16 %v2041
  %v2074 = vunpack.c.l.b16 %v2042
  %v2075 = vunpack.c.l.b16 %v2043
  %v2076 = vunpack.c.l.b16 %v2044
  %v2077 = vunpack.c.l.b16 %v2045
  %v2078 = vunpack.c.l.b16 %v2046
  %v2079 = vunpack.c.l.b16 %v2047
  %v2080 = vunpack.c.l.b16 %v2048
  %v2081 = vunpack.c.l.b16 %v2049
  %v2082 = vunpack.c.l.b16 %v2050
  %v2083 = vunpack.c.l.b16 %v2051
  %v2084 = vunpack.c.l.b16 %v2052
  %v2085 = vunpack.c.l.b16 %v2053
  %v2086 = vunpack.c.l.b16 %v2054
  %v2087 = vunpack.c.l.b16 %v2055
  %v2088 = vpack.c.b16 %v2073, %v2072
  %v2089 = vpack.c.b16 %v2075, %v2074
  %v2090 = vpack.c.b16 %v2077, %v2076
  %v2091 = vpack.c.b16 %v2079, %v2078
  %v2092 = vpack.c.b16 %v2081, %v2080
  %v2093 = vpack.c.b16 %v2083, %v2082
  %v2094 = vpack.c.b16 %v2085, %v2084
  %v2095 = vpack.c.b16 %v2087, %v2086
  %2104 = vmatprep.subr.bf16.mxu0 0
  %2105 = vmatpush1.bf16.msra.mxu0 %v2088
  %2106 = vmatprep.subr.bf16.mxu0 0
  %2107 = vmatpush1.bf16.msra.mxu0 %v2089
  %2108 = vmatprep.subr.bf16.mxu0 0
  %2109 = vmatpush1.bf16.msra.mxu0 %v2090
  %2110 = vmatprep.subr.bf16.mxu0 0
  %2111 = vmatpush1.bf16.msra.mxu0 %v2091
  %2112 = vmatprep.subr.bf16.mxu0 0
  %2113 = vmatpush1.bf16.msra.mxu0 %v2092
  %2114 = vmatprep.subr.bf16.mxu0 0
  %2115 = vmatpush1.bf16.msra.mxu0 %v2093
  %2116 = vmatprep.subr.bf16.mxu0 0
  %2117 = vmatpush1.bf16.msra.mxu0 %v2094
  %2118 = vmatprep.subr.bf16.mxu0 0
  %2119 = vmatpush1.bf16.msra.mxu0 %v2095
  %2120 = vmatprep.subr.bf16.mxu0 0
  %2121 = vmatpush1.bf16.msra.mxu0 0
  %2122 = vmatprep.subr.bf16.mxu0 0
  %2123 = vmatpush1.bf16.msra.mxu0 0
  %2124 = vmatprep.subr.bf16.mxu0 0
  %2125 = vmatpush1.bf16.msra.mxu0 0
  %2126 = vmatprep.subr.bf16.mxu0 0
  %2127 = vmatpush1.bf16.msra.mxu0 0
  %2128 = vmatprep.subr.bf16.mxu0 0
  %2129 = vmatpush1.bf16.msra.mxu0 0
  %2130 = vmatprep.subr.bf16.mxu0 0
  %2131 = vmatpush1.bf16.msra.mxu0 0
  %2132 = vmatprep.subr.bf16.mxu0 0
  %2133 = vmatpush1.bf16.msra.mxu0 0
  %2134 = vmatprep.subr.bf16.mxu0 0
  %2135 = vmatpush1.bf16.msra.mxu0 0
  %2136 = vmatprep.mubr.bf16.mxu0 0
  %2137 = vmatmul.mubr.bf16.gmra.mrb[0].mxu0 %v2027
  %v2138 = vpop.f32.mrb[0].mxu0
  %v2139 = vadd.f32 0.0, %v2138
  %v2140 = vpop.f32.mrb[0].mxu0
  %v2141 = vpop.f32.mrb[0].mxu0
  %v2142 = vadd.f32 0.0, %v2141
  %v2143 = vpop.f32.mrb[0].mxu0
  %2144 = vmatprep.mubr.bf16.mxu0 0
  %2145 = vmatmul.mubr.bf16.gmra.mrb[0].mxu0 %v2028
  %v2146 = vpop.f32.mrb[0].mxu0
  %v2147 = vadd.f32 0.0, %v2146
  %v2148 = vpop.f32.mrb[0].mxu0
  %v2149 = vpop.f32.mrb[0].mxu0
  %v2150 = vadd.f32 0.0, %v2149
  %v2151 = vpop.f32.mrb[0].mxu0
  %2152 = vmatprep.mubr.bf16.mxu0 0
  %2153 = vmatmul.mubr.bf16.gmra.mrb[0].mxu0 %v2029
  %v2154 = vpop.f32.mrb[0].mxu0
  %v2155 = vadd.f32 0.0, %v2154
  %v2156 = vpop.f32.mrb[0].mxu0
  %v2157 = vpop.f32.mrb[0].mxu0
  %v2158 = vadd.f32 0.0, %v2157
  %v2159 = vpop.f32.mrb[0].mxu0
  %2160 = vmatprep.mubr.bf16.mxu0 0
  %2161 = vmatmul.mubr.bf16.gmra.mrb[0].mxu0 %v2030
  %v2162 = vpop.f32.mrb[0].mxu0
  %v2163 = vadd.f32 0.0, %v2162
  %v2164 = vpop.f32.mrb[0].mxu0
  %v2165 = vpop.f32.mrb[0].mxu0
  %v2166 = vadd.f32 0.0, %v2165
  %v2167 = vpop.f32.mrb[0].mxu0
  %2168 = vmatprep.mubr.bf16.mxu0 0
  %2169 = vmatmul.mubr.bf16.gmra.mrb[0].mxu0 %v2031
  %v2170 = vpop.f32.mrb[0].mxu0
  %v2171 = vadd.f32 0.0, %v2170
  %v2172 = vpop.f32.mrb[0].mxu0
  %v2173 = vpop.f32.mrb[0].mxu0
  %v2174 = vadd.f32 0.0, %v2173
  %v2175 = vpop.f32.mrb[0].mxu0
  %2176 = vmatprep.mubr.bf16.mxu0 0
  %2177 = vmatmul.mubr.bf16.gmra.mrb[0].mxu0 %v2032
  %v2178 = vpop.f32.mrb[0].mxu0
  %v2179 = vadd.f32 0.0, %v2178
  %v2180 = vpop.f32.mrb[0].mxu0
  %v2181 = vpop.f32.mrb[0].mxu0
  %v2182 = vadd.f32 0.0, %v2181
  %v2183 = vpop.f32.mrb[0].mxu0
  %2184 = vmatprep.mubr.bf16.mxu0 0
  %2185 = vmatmul.mubr.bf16.gmra.mrb[0].mxu0 %v2033
  %v2186 = vpop.f32.mrb[0].mxu0
  %v2187 = vadd.f32 0.0, %v2186
  %v2188 = vpop.f32.mrb[0].mxu0
  %v2189 = vpop.f32.mrb[0].mxu0
  %v2190 = vadd.f32 0.0, %v2189
  %v2191 = vpop.f32.mrb[0].mxu0
  %2192 = vmatprep.mubr.bf16.mxu0 0
  %2193 = vmatmul.mubr.bf16.gmra.mrb[0].mxu0 %v2034
  %v2194 = vpop.f32.mrb[0].mxu0
  %v2195 = vadd.f32 0.0, %v2194
  %v2196 = vpop.f32.mrb[0].mxu0
  %v2197 = vpop.f32.mrb[0].mxu0
  %v2198 = vadd.f32 0.0, %v2197
  %v2199 = vpop.f32.mrb[0].mxu0
  %2200 = vmatprep.mubr.bf16.mxu0 0
  %2201 = vmatmul.mubr.bf16.gmra.mrb[0].mxu0 %v2035
  %v2202 = vpop.f32.mrb[0].mxu0
  %v2203 = vadd.f32 0.0, %v2202
  %v2204 = vpop.f32.mrb[0].mxu0
  %v2205 = vpop.f32.mrb[0].mxu0
  %v2206 = vadd.f32 0.0, %v2205
  %v2207 = vpop.f32.mrb[0].mxu0
  %2208 = vmatprep.mubr.bf16.mxu0 0
  %2209 = vmatmul.mubr.bf16.gmra.mrb[0].mxu0 %v2036
  %v2210 = vpop.f32.mrb[0].mxu0
  %v2211 = vadd.f32 0.0, %v2210
  %v2212 = vpop.f32.mrb[0].mxu0
  %v2213 = vpop.f32.mrb[0].mxu0
  %v2214 = vadd.f32 0.0, %v2213
  %v2215 = vpop.f32.mrb[0].mxu0
  %2216 = vmatprep.mubr.bf16.mxu0 0
  %2217 = vmatmul.mubr.bf16.gmra.mrb[0].mxu0 %v2037
  %v2218 = vpop.f32.mrb[0].mxu0
  %v2219 = vadd.f32 0.0, %v2218
  %v2220 = vpop.f32.mrb[0].mxu0
  %v2221 = vpop.f32.mrb[0].mxu0
  %v2222 = vadd.f32 0.0, %v2221
  %v2223 = vpop.f32.mrb[0].mxu0
  %2224 = vmatprep.mubr.bf16.mxu0 0
  %2225 = vmatmul.mubr.bf16.gmra.mrb[0].mxu0 %v2038
  %v2226 = vpop.f32.mrb[0].mxu0
  %v2227 = vadd.f32 0.0, %v2226
  %v2228 = vpop.f32.mrb[0].mxu0
  %v2229 = vpop.f32.mrb[0].mxu0
  %v2230 = vadd.f32 0.0, %v2229
  %v2231 = vpop.f32.mrb[0].mxu0
  %2232 = vdwg.mxu0
  %v2233 = vadd.f32 %v1979, %v2139
  %v2234 = vadd.f32 %v1980, %v2142
  %v2235 = vadd.f32 %v1981, %v2147
  %v2236 = vadd.f32 %v1982, %v2150
  %v2237 = vadd.f32 %v1983, %v2155
  %v2238 = vadd.f32 %v1984, %v2158
  %v2239 = vadd.f32 %v1985, %v2163
  %v2240 = vadd.f32 %v1986, %v2166
  %v2241 = vadd.f32 %v1987, %v2171
  %v2242 = vadd.f32 %v1988, %v2174
  %v2243 = vadd.f32 %v1989, %v2179
  %v2244 = vadd.f32 %v1990, %v2182
  %v2245 = vadd.f32 %v1991, %v2187
  %v2246 = vadd.f32 %v1992, %v2190
  %v2247 = vadd.f32 %v1993, %v2195
  %v2248 = vadd.f32 %v1994, %v2198
  %v2249 = vadd.f32 %v1995, %v2203
  %v2250 = vadd.f32 %v1996, %v2206
  %v2251 = vadd.f32 %v1997, %v2211
  %v2252 = vadd.f32 %v1998, %v2214
  %v2253 = vadd.f32 %v1999, %v2219
  %v2254 = vadd.f32 %v2000, %v2222
  %v2255 = vadd.f32 %v2001, %v2227
  %v2256 = vadd.f32 %v2002, %v2230
  %v2257 = vld [vmem:[%s4] sm:$0x1]
  %v2259 = vlaneseq
  %v2260 = vshrl.u32 %v2259, 7
  %v2261 = vsub.s32 0, %v2260
  %v2262 = vrot.slane %v2257, %v2261
  %v2264 = vadd.f32 %v2233, %v2262
  %v2265 = vadd.f32 %v2234, %v2262
  %v2266 = vadd.f32 %v2235, %v2262
  %v2267 = vadd.f32 %v2236, %v2262
  %v2268 = vadd.f32 %v2237, %v2262
  %v2269 = vadd.f32 %v2238, %v2262
  %v2270 = vadd.f32 %v2239, %v2262
  %v2271 = vadd.f32 %v2240, %v2262
  %v2272 = vadd.f32 %v2241, %v2262
  %v2273 = vadd.f32 %v2242, %v2262
  %v2274 = vadd.f32 %v2243, %v2262
  %v2275 = vadd.f32 %v2244, %v2262
  %v2276 = vadd.f32 %v2245, %v2262
  %v2277 = vadd.f32 %v2246, %v2262
  %v2278 = vadd.f32 %v2247, %v2262
  %v2279 = vadd.f32 %v2248, %v2262
  %v2280 = vadd.f32 %v2249, %v2262
  %v2281 = vadd.f32 %v2250, %v2262
  %v2282 = vadd.f32 %v2251, %v2262
  %v2283 = vadd.f32 %v2252, %v2262
  %v2284 = vadd.f32 %v2253, %v2262
  %v2285 = vadd.f32 %v2254, %v2262
  %v2286 = vadd.f32 %v2255, %v2262
  %v2287 = vadd.f32 %v2256, %v2262
  %v2288 = vmax.f32 %v2264, 0.0
  %v2289 = vmax.f32 %v2265, 0.0
  %v2290 = vmax.f32 %v2266, 0.0
  %v2291 = vmax.f32 %v2267, 0.0
  %v2292 = vmax.f32 %v2268, 0.0
  %v2293 = vmax.f32 %v2269, 0.0
  %v2294 = vmax.f32 %v2270, 0.0
  %v2295 = vmax.f32 %v2271, 0.0
  %v2296 = vmax.f32 %v2272, 0.0
  %v2297 = vmax.f32 %v2273, 0.0
  %v2298 = vmax.f32 %v2274, 0.0
  %v2299 = vmax.f32 %v2275, 0.0
  %v2300 = vmax.f32 %v2276, 0.0
  %v2301 = vmax.f32 %v2277, 0.0
  %v2302 = vmax.f32 %v2278, 0.0
  %v2303 = vmax.f32 %v2279, 0.0
  %v2304 = vmax.f32 %v2280, 0.0
  %v2305 = vmax.f32 %v2281, 0.0
  %v2306 = vmax.f32 %v2282, 0.0
  %v2307 = vmax.f32 %v2283, 0.0
  %v2308 = vmax.f32 %v2284, 0.0
  %v2309 = vmax.f32 %v2285, 0.0
  %v2310 = vmax.f32 %v2286, 0.0
  %v2311 = vmax.f32 %v2287, 0.0
  %2312 = vst.msk [vmem:[#allocation3] sm:$0xff] %vm756, %v2288
  %2313 = vst.msk [vmem:[#allocation3 + $0x8] sm:$0xff] %vm756, %v2289
  %2314 = vst.msk [vmem:[#allocation3 + $0x10] sm:$0xff] %vm756, %v2290
  %2315 = vst.msk [vmem:[#allocation3 + $0x18] sm:$0xff] %vm756, %v2291
  %2316 = vst.msk [vmem:[#allocation3 + $0x20] sm:$0xff] %vm756, %v2292
  %2317 = vst.msk [vmem:[#allocation3 + $0x28] sm:$0xff] %vm756, %v2293
  %2318 = vst.msk [vmem:[#allocation3 + $0x30] sm:$0xff] %vm756, %v2294
  %2319 = vst.msk [vmem:[#allocation3 + $0x38] sm:$0xff] %vm756, %v2295
  %2320 = vst.msk [vmem:[#allocation3 + $0x40] sm:$0xff] %vm756, %v2296
  %2321 = vst.msk [vmem:[#allocation3 + $0x48] sm:$0xff] %vm756, %v2297
  %2322 = vst.msk [vmem:[#allocation3 + $0x50] sm:$0xff] %vm756, %v2298
  %2323 = vst.msk [vmem:[#allocation3 + $0x58] sm:$0xff] %vm756, %v2299
  %2324 = vst.msk [vmem:[#allocation3 + $0x60] sm:$0xff] %vm756, %v2300
  %2325 = vst.msk [vmem:[#allocation3 + $0x68] sm:$0xff] %vm756, %v2301
  %2326 = vst.msk [vmem:[#allocation3 + $0x70] sm:$0xff] %vm756, %v2302
  %2327 = vst.msk [vmem:[#allocation3 + $0x78] sm:$0xff] %vm756, %v2303
  %2328 = vst.msk [vmem:[#allocation3 + $0x80] sm:$0xff] %vm756, %v2304
  %2329 = vst.msk [vmem:[#allocation3 + $0x88] sm:$0xff] %vm756, %v2305
  %2330 = vst.msk [vmem:[#allocation3 + $0x90] sm:$0xff] %vm756, %v2306
  %2331 = vst.msk [vmem:[#allocation3 + $0x98] sm:$0xff] %vm756, %v2307
  %2332 = vst.msk [vmem:[#allocation3 + $0xa0] sm:$0xff] %vm756, %v2308
  %2333 = vst.msk [vmem:[#allocation3 + $0xa8] sm:$0xff] %vm756, %v2309
  %2334 = vst.msk [vmem:[#allocation3 + $0xb0] sm:$0xff] %vm756, %v2310
  %2335 = vst.msk [vmem:[#allocation3 + $0xb8] sm:$0xff] %vm756, %v2311
  %v2336 = vld [vmem:[#allocation3] sm:$0xff]
  %v2337 = vld [vmem:[#allocation3 + $0x8] sm:$0xff]
  %v2338 = vld [vmem:[#allocation3 + $0x10] sm:$0xff]
  %v2339 = vld [vmem:[#allocation3 + $0x18] sm:$0xff]
  %v2340 = vld [vmem:[#allocation3 + $0x20] sm:$0xff]
  %v2341 = vld [vmem:[#allocation3 + $0x28] sm:$0xff]
  %v2342 = vld [vmem:[#allocation3 + $0x30] sm:$0xff]
  %v2343 = vld [vmem:[#allocation3 + $0x38] sm:$0xff]
  %v2344 = vld [vmem:[#allocation3 + $0x40] sm:$0xff]
  %v2345 = vld [vmem:[#allocation3 + $0x60] sm:$0xff]
  %v2346 = vld [vmem:[#allocation3 + $0x68] sm:$0xff]
  %v2347 = vld [vmem:[#allocation3 + $0x70] sm:$0xff]
  %v2348 = vld [vmem:[#allocation3 + $0x78] sm:$0xff]
  %v2349 = vld [vmem:[#allocation3 + $0x80] sm:$0xff]
  %v2350 = vld [vmem:[#allocation3 + $0x88] sm:$0xff]
  %v2351 = vld [vmem:[#allocation3 + $0x90] sm:$0xff]
  %v2352 = vld [vmem:[#allocation3 + $0x98] sm:$0xff]
  %v2353 = vld [vmem:[#allocation3 + $0xa0] sm:$0xff]
  %v2354 = vpack.c.bf16 %v2337, %v2336
  %v2355 = vpack.c.bf16 %v2339, %v2338
  %v2356 = vpack.c.bf16 %v2341, %v2340
  %v2357 = vpack.c.bf16 %v2343, %v2342
  %v2358 = vpack.c.bf16 %v2345, %v2344
  %v2359 = vpack.c.bf16 %v2347, %v2346
  %v2360 = vpack.c.bf16 %v2349, %v2348
  %v2361 = vpack.c.bf16 %v2351, %v2350
  %v2362 = vpack.c.bf16 %v2353, %v2352
  %v2363 = vld [vmem:[%s5] sm:$0xf]
  %v2364 = vld [vmem:[%s5 + $0x4] sm:$0xf]
  %v2365 = vld [vmem:[%s5 + $0x8] sm:$0xf]
  %v2366 = vld [vmem:[%s5 + $0xc] sm:$0xf]
  %v2367 = vld [vmem:[%s5 + $0x10] sm:$0xf]
  %v2368 = vld [vmem:[%s5 + $0x14] sm:$0xf]
  %v2369 = vld [vmem:[%s5 + $0x18] sm:$0xf]
  %v2370 = vld [vmem:[%s5 + $0x1c] sm:$0xf]
  %v2371 = vld [vmem:[#allocation3 + $0x1] sm:$0xff]
  %v2372 = vld [vmem:[#allocation3 + $0x9] sm:$0xff]
  %v2373 = vld [vmem:[#allocation3 + $0x11] sm:$0xff]
  %v2374 = vld [vmem:[#allocation3 + $0x19] sm:$0xff]
  %v2375 = vld [vmem:[#allocation3 + $0x21] sm:$0xff]
  %v2376 = vld [vmem:[#allocation3 + $0x29] sm:$0xff]
  %v2377 = vld [vmem:[#allocation3 + $0x31] sm:$0xff]
  %v2378 = vld [vmem:[#allocation3 + $0x39] sm:$0xff]
  %v2379 = vld [vmem:[#allocation3 + $0x41] sm:$0xff]
  %v2380 = vld [vmem:[#allocation3 + $0x61] sm:$0xff]
  %v2381 = vld [vmem:[#allocation3 + $0x69] sm:$0xff]
  %v2382 = vld [vmem:[#allocation3 + $0x71] sm:$0xff]
  %v2383 = vld [vmem:[#allocation3 + $0x79] sm:$0xff]
  %v2384 = vld [vmem:[#allocation3 + $0x81] sm:$0xff]
  %v2385 = vld [vmem:[#allocation3 + $0x89] sm:$0xff]
  %v2386 = vld [vmem:[#allocation3 + $0x91] sm:$0xff]
  %v2387 = vld [vmem:[#allocation3 + $0x99] sm:$0xff]
  %v2388 = vld [vmem:[#allocation3 + $0xa1] sm:$0xff]
  %v2389 = vpack.c.bf16 %v2372, %v2371
  %v2390 = vpack.c.bf16 %v2374, %v2373
  %v2391 = vpack.c.bf16 %v2376, %v2375
  %v2392 = vpack.c.bf16 %v2378, %v2377
  %v2393 = vpack.c.bf16 %v2380, %v2379
  %v2394 = vpack.c.bf16 %v2382, %v2381
  %v2395 = vpack.c.bf16 %v2384, %v2383
  %v2396 = vpack.c.bf16 %v2386, %v2385
  %v2397 = vpack.c.bf16 %v2388, %v2387
  %s2398 = scalar_lea.vmem %s5, 32
  %v2399 = vld [vmem:[%s2398] sm:$0xf]
  %v2400 = vld [vmem:[%s2398 + $0x4] sm:$0xf]
  %v2401 = vld [vmem:[%s2398 + $0x8] sm:$0xf]
  %v2402 = vld [vmem:[%s2398 + $0xc] sm:$0xf]
  %v2403 = vld [vmem:[%s2398 + $0x10] sm:$0xf]
  %v2404 = vld [vmem:[%s2398 + $0x14] sm:$0xf]
  %v2405 = vld [vmem:[%s2398 + $0x18] sm:$0xf]
  %v2406 = vld [vmem:[%s2398 + $0x1c] sm:$0xf]
  %v2415 = vunpack.c.l.b16 %v2399
  %v2416 = vunpack.c.l.b16 %v2400
  %v2417 = vunpack.c.l.b16 %v2401
  %v2418 = vunpack.c.l.b16 %v2402
  %v2419 = vunpack.c.l.b16 %v2403
  %v2420 = vunpack.c.l.b16 %v2404
  %v2421 = vunpack.c.l.b16 %v2405
  %v2422 = vunpack.c.l.b16 %v2406
  %v2423 = vpack.c.b16 %v2416, %v2415
  %v2424 = vpack.c.b16 %v2418, %v2417
  %v2425 = vpack.c.b16 %v2420, %v2419
  %v2426 = vpack.c.b16 %v2422, %v2421
  %v2432 = vsel %vm756, %v2389, 0
  %v2435 = vsel %vm756, %v2390, 0
  %v2438 = vsel %vm756, %v2391, 0
  %v2441 = vsel %vm756, %v2392, 0
  %v2444 = vsel %vm756, %v2393, 0
  %v2447 = vsel %vm756, %v2394, 0
  %v2450 = vsel %vm756, %v2395, 0
  %v2453 = vsel %vm756, %v2396, 0
  %v2456 = vsel %vm756, %v2397, 0
  %2458 = vmatprep.subr.bf16.mxu0 0
  %2459 = vmatpush1.bf16.msra.mxu0 %v2423
  %2460 = vmatprep.subr.bf16.mxu0 0
  %2461 = vmatpush1.bf16.msra.mxu0 %v2424
  %2462 = vmatprep.subr.bf16.mxu0 0
  %2463 = vmatpush1.bf16.msra.mxu0 %v2425
  %2464 = vmatprep.subr.bf16.mxu0 0
  %2465 = vmatpush1.bf16.msra.mxu0 %v2426
  %2466 = vmatprep.subr.bf16.mxu0 0
  %2467 = vmatpush1.bf16.msra.mxu0 0
  %2468 = vmatprep.subr.bf16.mxu0 0
  %2469 = vmatpush1.bf16.msra.mxu0 0
  %2470 = vmatprep.subr.bf16.mxu0 0
  %2471 = vmatpush1.bf16.msra.mxu0 0
  %2472 = vmatprep.subr.bf16.mxu0 0
  %2473 = vmatpush1.bf16.msra.mxu0 0
  %2474 = vmatprep.subr.bf16.mxu0 0
  %2475 = vmatpush1.bf16.msra.mxu0 0
  %2476 = vmatprep.subr.bf16.mxu0 0
  %2477 = vmatpush1.bf16.msra.mxu0 0
  %2478 = vmatprep.subr.bf16.mxu0 0
  %2479 = vmatpush1.bf16.msra.mxu0 0
  %2480 = vmatprep.subr.bf16.mxu0 0
  %2481 = vmatpush1.bf16.msra.mxu0 0
  %2482 = vmatprep.subr.bf16.mxu0 0
  %2483 = vmatpush1.bf16.msra.mxu0 0
  %2484 = vmatprep.subr.bf16.mxu0 0
  %2485 = vmatpush1.bf16.msra.mxu0 0
  %2486 = vmatprep.subr.bf16.mxu0 0
  %2487 = vmatpush1.bf16.msra.mxu0 0
  %2488 = vmatprep.subr.bf16.mxu0 0
  %2489 = vmatpush1.bf16.msra.mxu0 0
  %2490 = vmatprep.mubr.bf16.mxu0 0
  %2491 = vmatmul.mubr.bf16.gmra.mrb[0].mxu0 %v2432
  %v2492 = vpop.f32.mrb[0].mxu0
  %v2493 = vadd.f32 0.0, %v2492
  %v2494 = vpop.f32.mrb[0].mxu0
  %v2495 = vpop.f32.mrb[0].mxu0
  %v2496 = vadd.f32 0.0, %v2495
  %v2497 = vpop.f32.mrb[0].mxu0
  %2498 = vmatprep.mubr.bf16.mxu0 0
  %2499 = vmatmul.mubr.bf16.gmra.mrb[0].mxu0 %v2435
  %v2500 = vpop.f32.mrb[0].mxu0
  %v2501 = vadd.f32 0.0, %v2500
  %v2502 = vpop.f32.mrb[0].mxu0
  %v2503 = vpop.f32.mrb[0].mxu0
  %v2504 = vadd.f32 0.0, %v2503
  %v2505 = vpop.f32.mrb[0].mxu0
  %2506 = vmatprep.mubr.bf16.mxu0 0
  %2507 = vmatmul.mubr.bf16.gmra.mrb[0].mxu0 %v2438
  %v2508 = vpop.f32.mrb[0].mxu0
  %v2509 = vadd.f32 0.0, %v2508
  %v2510 = vpop.f32.mrb[0].mxu0
  %v2511 = vpop.f32.mrb[0].mxu0
  %v2512 = vadd.f32 0.0, %v2511
  %v2513 = vpop.f32.mrb[0].mxu0
  %2514 = vmatprep.mubr.bf16.mxu0 0
  %2515 = vmatmul.mubr.bf16.gmra.mrb[0].mxu0 %v2441
  %v2516 = vpop.f32.mrb[0].mxu0
  %v2517 = vadd.f32 0.0, %v2516
  %v2518 = vpop.f32.mrb[0].mxu0
  %v2519 = vpop.f32.mrb[0].mxu0
  %v2520 = vadd.f32 0.0, %v2519
  %v2521 = vpop.f32.mrb[0].mxu0
  %2522 = vmatprep.mubr.bf16.mxu0 0
  %2523 = vmatmul.mubr.bf16.gmra.mrb[0].mxu0 %v2444
  %v2524 = vpop.f32.mrb[0].mxu0
  %v2525 = vadd.f32 0.0, %v2524
  %v2526 = vpop.f32.mrb[0].mxu0
  %v2527 = vpop.f32.mrb[0].mxu0
  %v2528 = vadd.f32 0.0, %v2527
  %v2529 = vpop.f32.mrb[0].mxu0
  %2530 = vmatprep.mubr.bf16.mxu0 0
  %2531 = vmatmul.mubr.bf16.gmra.mrb[0].mxu0 %v2447
  %v2532 = vpop.f32.mrb[0].mxu0
  %v2533 = vadd.f32 0.0, %v2532
  %v2534 = vpop.f32.mrb[0].mxu0
  %v2535 = vpop.f32.mrb[0].mxu0
  %v2536 = vadd.f32 0.0, %v2535
  %v2537 = vpop.f32.mrb[0].mxu0
  %2538 = vmatprep.mubr.bf16.mxu0 0
  %2539 = vmatmul.mubr.bf16.gmra.mrb[0].mxu0 %v2450
  %v2540 = vpop.f32.mrb[0].mxu0
  %v2541 = vadd.f32 0.0, %v2540
  %v2542 = vpop.f32.mrb[0].mxu0
  %v2543 = vpop.f32.mrb[0].mxu0
  %v2544 = vadd.f32 0.0, %v2543
  %v2545 = vpop.f32.mrb[0].mxu0
  %2546 = vmatprep.mubr.bf16.mxu0 0
  %2547 = vmatmul.mubr.bf16.gmra.mrb[0].mxu0 %v2453
  %v2548 = vpop.f32.mrb[0].mxu0
  %v2549 = vadd.f32 0.0, %v2548
  %v2550 = vpop.f32.mrb[0].mxu0
  %v2551 = vpop.f32.mrb[0].mxu0
  %v2552 = vadd.f32 0.0, %v2551
  %v2553 = vpop.f32.mrb[0].mxu0
  %2554 = vmatprep.mubr.bf16.mxu0 0
  %2555 = vmatmul.mubr.bf16.gmra.mrb[0].mxu0 %v2456
  %v2556 = vpop.f32.mrb[0].mxu0
  %v2557 = vadd.f32 0.0, %v2556
  %v2558 = vpop.f32.mrb[0].mxu0
  %v2559 = vpop.f32.mrb[0].mxu0
  %v2560 = vadd.f32 0.0, %v2559
  %v2561 = vpop.f32.mrb[0].mxu0
  %2562 = vdwg.mxu0
  %v2571 = vunpack.c.l.b16 %v2363
  %v2572 = vunpack.c.l.b16 %v2364
  %v2573 = vunpack.c.l.b16 %v2365
  %v2574 = vunpack.c.l.b16 %v2366
  %v2575 = vunpack.c.l.b16 %v2367
  %v2576 = vunpack.c.l.b16 %v2368
  %v2577 = vunpack.c.l.b16 %v2369
  %v2578 = vunpack.c.l.b16 %v2370
  %v2579 = vpack.c.b16 %v2572, %v2571
  %v2580 = vpack.c.b16 %v2574, %v2573
  %v2581 = vpack.c.b16 %v2576, %v2575
  %v2582 = vpack.c.b16 %v2578, %v2577
  %v2588 = vsel %vm756, %v2354, 0
  %v2591 = vsel %vm756, %v2355, 0
  %v2594 = vsel %vm756, %v2356, 0
  %v2597 = vsel %vm756, %v2357, 0
  %v2600 = vsel %vm756, %v2358, 0
  %v2603 = vsel %vm756, %v2359, 0
  %v2606 = vsel %vm756, %v2360, 0
  %v2609 = vsel %vm756, %v2361, 0
  %v2612 = vsel %vm756, %v2362, 0
  %2614 = vmatprep.subr.bf16.mxu0 0
  %2615 = vmatpush1.bf16.msra.mxu0 %v2579
  %2616 = vmatprep.subr.bf16.mxu0 0
  %2617 = vmatpush1.bf16.msra.mxu0 %v2580
  %2618 = vmatprep.subr.bf16.mxu0 0
  %2619 = vmatpush1.bf16.msra.mxu0 %v2581
  %2620 = vmatprep.subr.bf16.mxu0 0
  %2621 = vmatpush1.bf16.msra.mxu0 %v2582
  %2622 = vmatprep.subr.bf16.mxu0 0
  %2623 = vmatpush1.bf16.msra.mxu0 0
  %2624 = vmatprep.subr.bf16.mxu0 0
  %2625 = vmatpush1.bf16.msra.mxu0 0
  %2626 = vmatprep.subr.bf16.mxu0 0
  %2627 = vmatpush1.bf16.msra.mxu0 0
  %2628 = vmatprep.subr.bf16.mxu0 0
  %2629 = vmatpush1.bf16.msra.mxu0 0
  %2630 = vmatprep.subr.bf16.mxu0 0
  %2631 = vmatpush1.bf16.msra.mxu0 0
  %2632 = vmatprep.subr.bf16.mxu0 0
  %2633 = vmatpush1.bf16.msra.mxu0 0
  %2634 = vmatprep.subr.bf16.mxu0 0
  %2635 = vmatpush1.bf16.msra.mxu0 0
  %2636 = vmatprep.subr.bf16.mxu0 0
  %2637 = vmatpush1.bf16.msra.mxu0 0
  %2638 = vmatprep.subr.bf16.mxu0 0
  %2639 = vmatpush1.bf16.msra.mxu0 0
  %2640 = vmatprep.subr.bf16.mxu0 0
  %2641 = vmatpush1.bf16.msra.mxu0 0
  %2642 = vmatprep.subr.bf16.mxu0 0
  %2643 = vmatpush1.bf16.msra.mxu0 0
  %2644 = vmatprep.subr.bf16.mxu0 0
  %2645 = vmatpush1.bf16.msra.mxu0 0
  %2646 = vmatprep.mubr.bf16.mxu0 0
  %2647 = vmatmul.mubr.bf16.gmra.mrb[0].mxu0 %v2588
  %v2648 = vpop.f32.mrb[0].mxu0
  %v2649 = vadd.f32 %v2493, %v2648
  %v2650 = vpop.f32.mrb[0].mxu0
  %v2651 = vpop.f32.mrb[0].mxu0
  %v2652 = vadd.f32 %v2496, %v2651
  %v2653 = vpop.f32.mrb[0].mxu0
  %2654 = vmatprep.mubr.bf16.mxu0 0
  %2655 = vmatmul.mubr.bf16.gmra.mrb[0].mxu0 %v2591
  %v2656 = vpop.f32.mrb[0].mxu0
  %v2657 = vadd.f32 %v2501, %v2656
  %v2658 = vpop.f32.mrb[0].mxu0
  %v2659 = vpop.f32.mrb[0].mxu0
  %v2660 = vadd.f32 %v2504, %v2659
  %v2661 = vpop.f32.mrb[0].mxu0
  %2662 = vmatprep.mubr.bf16.mxu0 0
  %2663 = vmatmul.mubr.bf16.gmra.mrb[0].mxu0 %v2594
  %v2664 = vpop.f32.mrb[0].mxu0
  %v2665 = vadd.f32 %v2509, %v2664
  %v2666 = vpop.f32.mrb[0].mxu0
  %v2667 = vpop.f32.mrb[0].mxu0
  %v2668 = vadd.f32 %v2512, %v2667
  %v2669 = vpop.f32.mrb[0].mxu0
  %2670 = vmatprep.mubr.bf16.mxu0 0
  %2671 = vmatmul.mubr.bf16.gmra.mrb[0].mxu0 %v2597
  %v2672 = vpop.f32.mrb[0].mxu0
  %v2673 = vadd.f32 %v2517, %v2672
  %v2674 = vpop.f32.mrb[0].mxu0
  %v2675 = vpop.f32.mrb[0].mxu0
  %v2676 = vadd.f32 %v2520, %v2675
  %v2677 = vpop.f32.mrb[0].mxu0
  %2678 = vmatprep.mubr.bf16.mxu0 0
  %2679 = vmatmul.mubr.bf16.gmra.mrb[0].mxu0 %v2600
  %v2680 = vpop.f32.mrb[0].mxu0
  %v2681 = vadd.f32 %v2525, %v2680
  %v2682 = vpop.f32.mrb[0].mxu0
  %v2683 = vpop.f32.mrb[0].mxu0
  %v2684 = vadd.f32 %v2528, %v2683
  %v2685 = vpop.f32.mrb[0].mxu0
  %2686 = vmatprep.mubr.bf16.mxu0 0
  %2687 = vmatmul.mubr.bf16.gmra.mrb[0].mxu0 %v2603
  %v2688 = vpop.f32.mrb[0].mxu0
  %v2689 = vadd.f32 %v2533, %v2688
  %v2690 = vpop.f32.mrb[0].mxu0
  %v2691 = vpop.f32.mrb[0].mxu0
  %v2692 = vadd.f32 %v2536, %v2691
  %v2693 = vpop.f32.mrb[0].mxu0
  %2694 = vmatprep.mubr.bf16.mxu0 0
  %2695 = vmatmul.mubr.bf16.gmra.mrb[0].mxu0 %v2606
  %v2696 = vpop.f32.mrb[0].mxu0
  %v2697 = vadd.f32 %v2541, %v2696
  %v2698 = vpop.f32.mrb[0].mxu0
  %v2699 = vpop.f32.mrb[0].mxu0
  %v2700 = vadd.f32 %v2544, %v2699
  %v2701 = vpop.f32.mrb[0].mxu0
  %2702 = vmatprep.mubr.bf16.mxu0 0
  %2703 = vmatmul.mubr.bf16.gmra.mrb[0].mxu0 %v2609
  %v2704 = vpop.f32.mrb[0].mxu0
  %v2705 = vadd.f32 %v2549, %v2704
  %v2706 = vpop.f32.mrb[0].mxu0
  %v2707 = vpop.f32.mrb[0].mxu0
  %v2708 = vadd.f32 %v2552, %v2707
  %v2709 = vpop.f32.mrb[0].mxu0
  %2710 = vmatprep.mubr.bf16.mxu0 0
  %2711 = vmatmul.mubr.bf16.gmra.mrb[0].mxu0 %v2612
  %v2712 = vpop.f32.mrb[0].mxu0
  %v2713 = vadd.f32 %v2557, %v2712
  %v2714 = vpop.f32.mrb[0].mxu0
  %v2715 = vpop.f32.mrb[0].mxu0
  %v2716 = vadd.f32 %v2560, %v2715
  %v2717 = vpop.f32.mrb[0].mxu0
  %2718 = vdwg.mxu0
  %v2719 = vld [vmem:[#allocation3 + $0x2] sm:$0xff]
  %v2720 = vld [vmem:[#allocation3 + $0xa] sm:$0xff]
  %v2721 = vld [vmem:[#allocation3 + $0x12] sm:$0xff]
  %v2722 = vld [vmem:[#allocation3 + $0x1a] sm:$0xff]
  %v2723 = vld [vmem:[#allocation3 + $0x22] sm:$0xff]
  %v2724 = vld [vmem:[#allocation3 + $0x2a] sm:$0xff]
  %v2725 = vld [vmem:[#allocation3 + $0x32] sm:$0xff]
  %v2726 = vld [vmem:[#allocation3 + $0x3a] sm:$0xff]
  %v2727 = vld [vmem:[#allocation3 + $0x42] sm:$0xff]
  %v2728 = vld [vmem:[#allocation3 + $0x62] sm:$0xff]
  %v2729 = vld [vmem:[#allocation3 + $0x6a] sm:$0xff]
  %v2730 = vld [vmem:[#allocation3 + $0x72] sm:$0xff]
  %v2731 = vld [vmem:[#allocation3 + $0x7a] sm:$0xff]
  %v2732 = vld [vmem:[#allocation3 + $0x82] sm:$0xff]
  %v2733 = vld [vmem:[#allocation3 + $0x8a] sm:$0xff]
  %v2734 = vld [vmem:[#allocation3 + $0x92] sm:$0xff]
  %v2735 = vld [vmem:[#allocation3 + $0x9a] sm:$0xff]
  %v2736 = vld [vmem:[#allocation3 + $0xa2] sm:$0xff]
  %v2737 = vpack.c.bf16 %v2720, %v2719
  %v2738 = vpack.c.bf16 %v2722, %v2721
  %v2739 = vpack.c.bf16 %v2724, %v2723
  %v2740 = vpack.c.bf16 %v2726, %v2725
  %v2741 = vpack.c.bf16 %v2728, %v2727
  %v2742 = vpack.c.bf16 %v2730, %v2729
  %v2743 = vpack.c.bf16 %v2732, %v2731
  %v2744 = vpack.c.bf16 %v2734, %v2733
  %v2745 = vpack.c.bf16 %v2736, %v2735
  %s2746 = scalar_lea.vmem %s5, 64
  %v2747 = vld [vmem:[%s2746] sm:$0xf]
  %v2748 = vld [vmem:[%s2746 + $0x4] sm:$0xf]
  %v2749 = vld [vmem:[%s2746 + $0x8] sm:$0xf]
  %v2750 = vld [vmem:[%s2746 + $0xc] sm:$0xf]
  %v2751 = vld [vmem:[%s2746 + $0x10] sm:$0xf]
  %v2752 = vld [vmem:[%s2746 + $0x14] sm:$0xf]
  %v2753 = vld [vmem:[%s2746 + $0x18] sm:$0xf]
  %v2754 = vld [vmem:[%s2746 + $0x1c] sm:$0xf]
  %v2763 = vunpack.c.l.b16 %v2747
  %v2764 = vunpack.c.l.b16 %v2748
  %v2765 = vunpack.c.l.b16 %v2749
  %v2766 = vunpack.c.l.b16 %v2750
  %v2767 = vunpack.c.l.b16 %v2751
  %v2768 = vunpack.c.l.b16 %v2752
  %v2769 = vunpack.c.l.b16 %v2753
  %v2770 = vunpack.c.l.b16 %v2754
  %v2771 = vpack.c.b16 %v2764, %v2763
  %v2772 = vpack.c.b16 %v2766, %v2765
  %v2773 = vpack.c.b16 %v2768, %v2767
  %v2774 = vpack.c.b16 %v2770, %v2769
  %v2780 = vsel %vm756, %v2737, 0
  %v2783 = vsel %vm756, %v2738, 0
  %v2786 = vsel %vm756, %v2739, 0
  %v2789 = vsel %vm756, %v2740, 0
  %v2792 = vsel %vm756, %v2741, 0
  %v2795 = vsel %vm756, %v2742, 0
  %v2798 = vsel %vm756, %v2743, 0
  %v2801 = vsel %vm756, %v2744, 0
  %v2804 = vsel %vm756, %v2745, 0
  %2806 = vmatprep.subr.bf16.mxu0 0
  %2807 = vmatpush1.bf16.msra.mxu0 %v2771
  %2808 = vmatprep.subr.bf16.mxu0 0
  %2809 = vmatpush1.bf16.msra.mxu0 %v2772
  %2810 = vmatprep.subr.bf16.mxu0 0
  %2811 = vmatpush1.bf16.msra.mxu0 %v2773
  %2812 = vmatprep.subr.bf16.mxu0 0
  %2813 = vmatpush1.bf16.msra.mxu0 %v2774
  %2814 = vmatprep.subr.bf16.mxu0 0
  %2815 = vmatpush1.bf16.msra.mxu0 0
  %2816 = vmatprep.subr.bf16.mxu0 0
  %2817 = vmatpush1.bf16.msra.mxu0 0
  %2818 = vmatprep.subr.bf16.mxu0 0
  %2819 = vmatpush1.bf16.msra.mxu0 0
  %2820 = vmatprep.subr.bf16.mxu0 0
  %2821 = vmatpush1.bf16.msra.mxu0 0
  %2822 = vmatprep.subr.bf16.mxu0 0
  %2823 = vmatpush1.bf16.msra.mxu0 0
  %2824 = vmatprep.subr.bf16.mxu0 0
  %2825 = vmatpush1.bf16.msra.mxu0 0
  %2826 = vmatprep.subr.bf16.mxu0 0
  %2827 = vmatpush1.bf16.msra.mxu0 0
  %2828 = vmatprep.subr.bf16.mxu0 0
  %2829 = vmatpush1.bf16.msra.mxu0 0
  %2830 = vmatprep.subr.bf16.mxu0 0
  %2831 = vmatpush1.bf16.msra.mxu0 0
  %2832 = vmatprep.subr.bf16.mxu0 0
  %2833 = vmatpush1.bf16.msra.mxu0 0
  %2834 = vmatprep.subr.bf16.mxu0 0
  %2835 = vmatpush1.bf16.msra.mxu0 0
  %2836 = vmatprep.subr.bf16.mxu0 0
  %2837 = vmatpush1.bf16.msra.mxu0 0
  %2838 = vmatprep.mubr.bf16.mxu0 0
  %2839 = vmatmul.mubr.bf16.gmra.mrb[0].mxu0 %v2780
  %v2840 = vpop.f32.mrb[0].mxu0
  %v2841 = vadd.f32 0.0, %v2840
  %v2842 = vpop.f32.mrb[0].mxu0
  %v2843 = vpop.f32.mrb[0].mxu0
  %v2844 = vadd.f32 0.0, %v2843
  %v2845 = vpop.f32.mrb[0].mxu0
  %2846 = vmatprep.mubr.bf16.mxu0 0
  %2847 = vmatmul.mubr.bf16.gmra.mrb[0].mxu0 %v2783
  %v2848 = vpop.f32.mrb[0].mxu0
  %v2849 = vadd.f32 0.0, %v2848
  %v2850 = vpop.f32.mrb[0].mxu0
  %v2851 = vpop.f32.mrb[0].mxu0
  %v2852 = vadd.f32 0.0, %v2851
  %v2853 = vpop.f32.mrb[0].mxu0
  %2854 = vmatprep.mubr.bf16.mxu0 0
  %2855 = vmatmul.mubr.bf16.gmra.mrb[0].mxu0 %v2786
  %v2856 = vpop.f32.mrb[0].mxu0
  %v2857 = vadd.f32 0.0, %v2856
  %v2858 = vpop.f32.mrb[0].mxu0
  %v2859 = vpop.f32.mrb[0].mxu0
  %v2860 = vadd.f32 0.0, %v2859
  %v2861 = vpop.f32.mrb[0].mxu0
  %2862 = vmatprep.mubr.bf16.mxu0 0
  %2863 = vmatmul.mubr.bf16.gmra.mrb[0].mxu0 %v2789
  %v2864 = vpop.f32.mrb[0].mxu0
  %v2865 = vadd.f32 0.0, %v2864
  %v2866 = vpop.f32.mrb[0].mxu0
  %v2867 = vpop.f32.mrb[0].mxu0
  %v2868 = vadd.f32 0.0, %v2867
  %v2869 = vpop.f32.mrb[0].mxu0
  %2870 = vmatprep.mubr.bf16.mxu0 0
  %2871 = vmatmul.mubr.bf16.gmra.mrb[0].mxu0 %v2792
  %v2872 = vpop.f32.mrb[0].mxu0
  %v2873 = vadd.f32 0.0, %v2872
  %v2874 = vpop.f32.mrb[0].mxu0
  %v2875 = vpop.f32.mrb[0].mxu0
  %v2876 = vadd.f32 0.0, %v2875
  %v2877 = vpop.f32.mrb[0].mxu0
  %2878 = vmatprep.mubr.bf16.mxu0 0
  %2879 = vmatmul.mubr.bf16.gmra.mrb[0].mxu0 %v2795
  %v2880 = vpop.f32.mrb[0].mxu0
  %v2881 = vadd.f32 0.0, %v2880
  %v2882 = vpop.f32.mrb[0].mxu0
  %v2883 = vpop.f32.mrb[0].mxu0
  %v2884 = vadd.f32 0.0, %v2883
  %v2885 = vpop.f32.mrb[0].mxu0
  %2886 = vmatprep.mubr.bf16.mxu0 0
  %2887 = vmatmul.mubr.bf16.gmra.mrb[0].mxu0 %v2798
  %v2888 = vpop.f32.mrb[0].mxu0
  %v2889 = vadd.f32 0.0, %v2888
  %v2890 = vpop.f32.mrb[0].mxu0
  %v2891 = vpop.f32.mrb[0].mxu0
  %v2892 = vadd.f32 0.0, %v2891
  %v2893 = vpop.f32.mrb[0].mxu0
  %2894 = vmatprep.mubr.bf16.mxu0 0
  %2895 = vmatmul.mubr.bf16.gmra.mrb[0].mxu0 %v2801
  %v2896 = vpop.f32.mrb[0].mxu0
  %v2897 = vadd.f32 0.0, %v2896
  %v2898 = vpop.f32.mrb[0].mxu0
  %v2899 = vpop.f32.mrb[0].mxu0
  %v2900 = vadd.f32 0.0, %v2899
  %v2901 = vpop.f32.mrb[0].mxu0
  %2902 = vmatprep.mubr.bf16.mxu0 0
  %2903 = vmatmul.mubr.bf16.gmra.mrb[0].mxu0 %v2804
  %v2904 = vpop.f32.mrb[0].mxu0
  %v2905 = vadd.f32 0.0, %v2904
  %v2906 = vpop.f32.mrb[0].mxu0
  %v2907 = vpop.f32.mrb[0].mxu0
  %v2908 = vadd.f32 0.0, %v2907
  %v2909 = vpop.f32.mrb[0].mxu0
  %2910 = vdwg.mxu0
  %v2911 = vadd.f32 %v2649, %v2841
  %v2912 = vadd.f32 %v2652, %v2844
  %v2913 = vadd.f32 %v2657, %v2849
  %v2914 = vadd.f32 %v2660, %v2852
  %v2915 = vadd.f32 %v2665, %v2857
  %v2916 = vadd.f32 %v2668, %v2860
  %v2917 = vadd.f32 %v2673, %v2865
  %v2918 = vadd.f32 %v2676, %v2868
  %v2919 = vadd.f32 %v2681, %v2873
  %v2920 = vadd.f32 %v2684, %v2876
  %v2921 = vadd.f32 %v2689, %v2881
  %v2922 = vadd.f32 %v2692, %v2884
  %v2923 = vadd.f32 %v2697, %v2889
  %v2924 = vadd.f32 %v2700, %v2892
  %v2925 = vadd.f32 %v2705, %v2897
  %v2926 = vadd.f32 %v2708, %v2900
  %v2927 = vadd.f32 %v2713, %v2905
  %v2928 = vadd.f32 %v2716, %v2908
  %v2929 = vld [vmem:[#allocation3 + $0xa] sm:$0xff]
  %v2930 = vld [vmem:[#allocation3 + $0x12] sm:$0xff]
  %v2931 = vld [vmem:[#allocation3 + $0x1a] sm:$0xff]
  %v2932 = vld [vmem:[#allocation3 + $0x22] sm:$0xff]
  %v2933 = vld [vmem:[#allocation3 + $0x2a] sm:$0xff]
  %v2934 = vld [vmem:[#allocation3 + $0x32] sm:$0xff]
  %v2935 = vld [vmem:[#allocation3 + $0x3a] sm:$0xff]
  %v2936 = vld [vmem:[#allocation3 + $0x42] sm:$0xff]
  %v2937 = vld [vmem:[#allocation3 + $0x4a] sm:$0xff]
  %v2938 = vld [vmem:[#allocation3 + $0x6a] sm:$0xff]
  %v2939 = vld [vmem:[#allocation3 + $0x72] sm:$0xff]
  %v2940 = vld [vmem:[#allocation3 + $0x7a] sm:$0xff]
  %v2941 = vld [vmem:[#allocation3 + $0x82] sm:$0xff]
  %v2942 = vld [vmem:[#allocation3 + $0x8a] sm:$0xff]
  %v2943 = vld [vmem:[#allocation3 + $0x92] sm:$0xff]
  %v2944 = vld [vmem:[#allocation3 + $0x9a] sm:$0xff]
  %v2945 = vld [vmem:[#allocation3 + $0xa2] sm:$0xff]
  %v2946 = vld [vmem:[#allocation3 + $0xaa] sm:$0xff]
  %v2947 = vpack.c.bf16 %v2930, %v2929
  %v2948 = vpack.c.bf16 %v2932, %v2931
  %v2949 = vpack.c.bf16 %v2934, %v2933
  %v2950 = vpack.c.bf16 %v2936, %v2935
  %v2951 = vpack.c.bf16 %v2938, %v2937
  %v2952 = vpack.c.bf16 %v2940, %v2939
  %v2953 = vpack.c.bf16 %v2942, %v2941
  %v2954 = vpack.c.bf16 %v2944, %v2943
  %v2955 = vpack.c.bf16 %v2946, %v2945
  %s2956 = scalar_lea.vmem %s5, 96
  %v2957 = vld [vmem:[%s2956] sm:$0xf]
  %v2958 = vld [vmem:[%s2956 + $0x4] sm:$0xf]
  %v2959 = vld [vmem:[%s2956 + $0x8] sm:$0xf]
  %v2960 = vld [vmem:[%s2956 + $0xc] sm:$0xf]
  %v2961 = vld [vmem:[%s2956 + $0x10] sm:$0xf]
  %v2962 = vld [vmem:[%s2956 + $0x14] sm:$0xf]
  %v2963 = vld [vmem:[%s2956 + $0x18] sm:$0xf]
  %v2964 = vld [vmem:[%s2956 + $0x1c] sm:$0xf]
  %v2973 = vunpack.c.l.b16 %v2957
  %v2974 = vunpack.c.l.b16 %v2958
  %v2975 = vunpack.c.l.b16 %v2959
  %v2976 = vunpack.c.l.b16 %v2960
  %v2977 = vunpack.c.l.b16 %v2961
  %v2978 = vunpack.c.l.b16 %v2962
  %v2979 = vunpack.c.l.b16 %v2963
  %v2980 = vunpack.c.l.b16 %v2964
  %v2981 = vpack.c.b16 %v2974, %v2973
  %v2982 = vpack.c.b16 %v2976, %v2975
  %v2983 = vpack.c.b16 %v2978, %v2977
  %v2984 = vpack.c.b16 %v2980, %v2979
  %v2990 = vsel %vm756, %v2947, 0
  %v2993 = vsel %vm756, %v2948, 0
  %v2996 = vsel %vm756, %v2949, 0
  %v2999 = vsel %vm756, %v2950, 0
  %v3002 = vsel %vm756, %v2951, 0
  %v3005 = vsel %vm756, %v2952, 0
  %v3008 = vsel %vm756, %v2953, 0
  %v3011 = vsel %vm756, %v2954, 0
  %v3014 = vsel %vm756, %v2955, 0
  %3016 = vmatprep.subr.bf16.mxu0 0
  %3017 = vmatpush1.bf16.msra.mxu0 %v2981
  %3018 = vmatprep.subr.bf16.mxu0 0
  %3019 = vmatpush1.bf16.msra.mxu0 %v2982
  %3020 = vmatprep.subr.bf16.mxu0 0
  %3021 = vmatpush1.bf16.msra.mxu0 %v2983
  %3022 = vmatprep.subr.bf16.mxu0 0
  %3023 = vmatpush1.bf16.msra.mxu0 %v2984
  %3024 = vmatprep.subr.bf16.mxu0 0
  %3025 = vmatpush1.bf16.msra.mxu0 0
  %3026 = vmatprep.subr.bf16.mxu0 0
  %3027 = vmatpush1.bf16.msra.mxu0 0
  %3028 = vmatprep.subr.bf16.mxu0 0
  %3029 = vmatpush1.bf16.msra.mxu0 0
  %3030 = vmatprep.subr.bf16.mxu0 0
  %3031 = vmatpush1.bf16.msra.mxu0 0
  %3032 = vmatprep.subr.bf16.mxu0 0
  %3033 = vmatpush1.bf16.msra.mxu0 0
  %3034 = vmatprep.subr.bf16.mxu0 0
  %3035 = vmatpush1.bf16.msra.mxu0 0
  %3036 = vmatprep.subr.bf16.mxu0 0
  %3037 = vmatpush1.bf16.msra.mxu0 0
  %3038 = vmatprep.subr.bf16.mxu0 0
  %3039 = vmatpush1.bf16.msra.mxu0 0
  %3040 = vmatprep.subr.bf16.mxu0 0
  %3041 = vmatpush1.bf16.msra.mxu0 0
  %3042 = vmatprep.subr.bf16.mxu0 0
  %3043 = vmatpush1.bf16.msra.mxu0 0
  %3044 = vmatprep.subr.bf16.mxu0 0
  %3045 = vmatpush1.bf16.msra.mxu0 0
  %3046 = vmatprep.subr.bf16.mxu0 0
  %3047 = vmatpush1.bf16.msra.mxu0 0
  %3048 = vmatprep.mubr.bf16.mxu0 0
  %3049 = vmatmul.mubr.bf16.gmra.mrb[0].mxu0 %v2990
  %v3050 = vpop.f32.mrb[0].mxu0
  %v3051 = vadd.f32 0.0, %v3050
  %v3052 = vpop.f32.mrb[0].mxu0
  %v3053 = vpop.f32.mrb[0].mxu0
  %v3054 = vadd.f32 0.0, %v3053
  %v3055 = vpop.f32.mrb[0].mxu0
  %3056 = vmatprep.mubr.bf16.mxu0 0
  %3057 = vmatmul.mubr.bf16.gmra.mrb[0].mxu0 %v2993
  %v3058 = vpop.f32.mrb[0].mxu0
  %v3059 = vadd.f32 0.0, %v3058
  %v3060 = vpop.f32.mrb[0].mxu0
  %v3061 = vpop.f32.mrb[0].mxu0
  %v3062 = vadd.f32 0.0, %v3061
  %v3063 = vpop.f32.mrb[0].mxu0
  %3064 = vmatprep.mubr.bf16.mxu0 0
  %3065 = vmatmul.mubr.bf16.gmra.mrb[0].mxu0 %v2996
  %v3066 = vpop.f32.mrb[0].mxu0
  %v3067 = vadd.f32 0.0, %v3066
  %v3068 = vpop.f32.mrb[0].mxu0
  %v3069 = vpop.f32.mrb[0].mxu0
  %v3070 = vadd.f32 0.0, %v3069
  %v3071 = vpop.f32.mrb[0].mxu0
  %3072 = vmatprep.mubr.bf16.mxu0 0
  %3073 = vmatmul.mubr.bf16.gmra.mrb[0].mxu0 %v2999
  %v3074 = vpop.f32.mrb[0].mxu0
  %v3075 = vadd.f32 0.0, %v3074
  %v3076 = vpop.f32.mrb[0].mxu0
  %v3077 = vpop.f32.mrb[0].mxu0
  %v3078 = vadd.f32 0.0, %v3077
  %v3079 = vpop.f32.mrb[0].mxu0
  %3080 = vmatprep.mubr.bf16.mxu0 0
  %3081 = vmatmul.mubr.bf16.gmra.mrb[0].mxu0 %v3002
  %v3082 = vpop.f32.mrb[0].mxu0
  %v3083 = vadd.f32 0.0, %v3082
  %v3084 = vpop.f32.mrb[0].mxu0
  %v3085 = vpop.f32.mrb[0].mxu0
  %v3086 = vadd.f32 0.0, %v3085
  %v3087 = vpop.f32.mrb[0].mxu0
  %3088 = vmatprep.mubr.bf16.mxu0 0
  %3089 = vmatmul.mubr.bf16.gmra.mrb[0].mxu0 %v3005
  %v3090 = vpop.f32.mrb[0].mxu0
  %v3091 = vadd.f32 0.0, %v3090
  %v3092 = vpop.f32.mrb[0].mxu0
  %v3093 = vpop.f32.mrb[0].mxu0
  %v3094 = vadd.f32 0.0, %v3093
  %v3095 = vpop.f32.mrb[0].mxu0
  %3096 = vmatprep.mubr.bf16.mxu0 0
  %3097 = vmatmul.mubr.bf16.gmra.mrb[0].mxu0 %v3008
  %v3098 = vpop.f32.mrb[0].mxu0
  %v3099 = vadd.f32 0.0, %v3098
  %v3100 = vpop.f32.mrb[0].mxu0
  %v3101 = vpop.f32.mrb[0].mxu0
  %v3102 = vadd.f32 0.0, %v3101
  %v3103 = vpop.f32.mrb[0].mxu0
  %3104 = vmatprep.mubr.bf16.mxu0 0
  %3105 = vmatmul.mubr.bf16.gmra.mrb[0].mxu0 %v3011
  %v3106 = vpop.f32.mrb[0].mxu0
  %v3107 = vadd.f32 0.0, %v3106
  %v3108 = vpop.f32.mrb[0].mxu0
  %v3109 = vpop.f32.mrb[0].mxu0
  %v3110 = vadd.f32 0.0, %v3109
  %v3111 = vpop.f32.mrb[0].mxu0
  %3112 = vmatprep.mubr.bf16.mxu0 0
  %3113 = vmatmul.mubr.bf16.gmra.mrb[0].mxu0 %v3014
  %v3114 = vpop.f32.mrb[0].mxu0
  %v3115 = vadd.f32 0.0, %v3114
  %v3116 = vpop.f32.mrb[0].mxu0
  %v3117 = vpop.f32.mrb[0].mxu0
  %v3118 = vadd.f32 0.0, %v3117
  %v3119 = vpop.f32.mrb[0].mxu0
  %3120 = vdwg.mxu0
  %v3121 = vadd.f32 %v2911, %v3051
  %v3122 = vadd.f32 %v2912, %v3054
  %v3123 = vadd.f32 %v2913, %v3059
  %v3124 = vadd.f32 %v2914, %v3062
  %v3125 = vadd.f32 %v2915, %v3067
  %v3126 = vadd.f32 %v2916, %v3070
  %v3127 = vadd.f32 %v2917, %v3075
  %v3128 = vadd.f32 %v2918, %v3078
  %v3129 = vadd.f32 %v2919, %v3083
  %v3130 = vadd.f32 %v2920, %v3086
  %v3131 = vadd.f32 %v2921, %v3091
  %v3132 = vadd.f32 %v2922, %v3094
  %v3133 = vadd.f32 %v2923, %v3099
  %v3134 = vadd.f32 %v2924, %v3102
  %v3135 = vadd.f32 %v2925, %v3107
  %v3136 = vadd.f32 %v2926, %v3110
  %v3137 = vadd.f32 %v2927, %v3115
  %v3138 = vadd.f32 %v2928, %v3118
  %v3139 = vld [vmem:[#allocation3 + $0xb] sm:$0xff]
  %v3140 = vld [vmem:[#allocation3 + $0x13] sm:$0xff]
  %v3141 = vld [vmem:[#allocation3 + $0x1b] sm:$0xff]
  %v3142 = vld [vmem:[#allocation3 + $0x23] sm:$0xff]
  %v3143 = vld [vmem:[#allocation3 + $0x2b] sm:$0xff]
  %v3144 = vld [vmem:[#allocation3 + $0x33] sm:$0xff]
  %v3145 = vld [vmem:[#allocation3 + $0x3b] sm:$0xff]
  %v3146 = vld [vmem:[#allocation3 + $0x43] sm:$0xff]
  %v3147 = vld [vmem:[#allocation3 + $0x4b] sm:$0xff]
  %v3148 = vld [vmem:[#allocation3 + $0x6b] sm:$0xff]
  %v3149 = vld [vmem:[#allocation3 + $0x73] sm:$0xff]
  %v3150 = vld [vmem:[#allocation3 + $0x7b] sm:$0xff]
  %v3151 = vld [vmem:[#allocation3 + $0x83] sm:$0xff]
  %v3152 = vld [vmem:[#allocation3 + $0x8b] sm:$0xff]
  %v3153 = vld [vmem:[#allocation3 + $0x93] sm:$0xff]
  %v3154 = vld [vmem:[#allocation3 + $0x9b] sm:$0xff]
  %v3155 = vld [vmem:[#allocation3 + $0xa3] sm:$0xff]
  %v3156 = vld [vmem:[#allocation3 + $0xab] sm:$0xff]
  %v3157 = vpack.c.bf16 %v3140, %v3139
  %v3158 = vpack.c.bf16 %v3142, %v3141
  %v3159 = vpack.c.bf16 %v3144, %v3143
  %v3160 = vpack.c.bf16 %v3146, %v3145
  %v3161 = vpack.c.bf16 %v3148, %v3147
  %v3162 = vpack.c.bf16 %v3150, %v3149
  %v3163 = vpack.c.bf16 %v3152, %v3151
  %v3164 = vpack.c.bf16 %v3154, %v3153
  %v3165 = vpack.c.bf16 %v3156, %v3155
  %s3166 = scalar_lea.vmem %s5, 128
  %v3167 = vld [vmem:[%s3166] sm:$0xf]
  %v3168 = vld [vmem:[%s3166 + $0x4] sm:$0xf]
  %v3169 = vld [vmem:[%s3166 + $0x8] sm:$0xf]
  %v3170 = vld [vmem:[%s3166 + $0xc] sm:$0xf]
  %v3171 = vld [vmem:[%s3166 + $0x10] sm:$0xf]
  %v3172 = vld [vmem:[%s3166 + $0x14] sm:$0xf]
  %v3173 = vld [vmem:[%s3166 + $0x18] sm:$0xf]
  %v3174 = vld [vmem:[%s3166 + $0x1c] sm:$0xf]
  %v3183 = vunpack.c.l.b16 %v3167
  %v3184 = vunpack.c.l.b16 %v3168
  %v3185 = vunpack.c.l.b16 %v3169
  %v3186 = vunpack.c.l.b16 %v3170
  %v3187 = vunpack.c.l.b16 %v3171
  %v3188 = vunpack.c.l.b16 %v3172
  %v3189 = vunpack.c.l.b16 %v3173
  %v3190 = vunpack.c.l.b16 %v3174
  %v3191 = vpack.c.b16 %v3184, %v3183
  %v3192 = vpack.c.b16 %v3186, %v3185
  %v3193 = vpack.c.b16 %v3188, %v3187
  %v3194 = vpack.c.b16 %v3190, %v3189
  %v3200 = vsel %vm756, %v3157, 0
  %v3203 = vsel %vm756, %v3158, 0
  %v3206 = vsel %vm756, %v3159, 0
  %v3209 = vsel %vm756, %v3160, 0
  %v3212 = vsel %vm756, %v3161, 0
  %v3215 = vsel %vm756, %v3162, 0
  %v3218 = vsel %vm756, %v3163, 0
  %v3221 = vsel %vm756, %v3164, 0
  %v3224 = vsel %vm756, %v3165, 0
  %3226 = vmatprep.subr.bf16.mxu0 0
  %3227 = vmatpush1.bf16.msra.mxu0 %v3191
  %3228 = vmatprep.subr.bf16.mxu0 0
  %3229 = vmatpush1.bf16.msra.mxu0 %v3192
  %3230 = vmatprep.subr.bf16.mxu0 0
  %3231 = vmatpush1.bf16.msra.mxu0 %v3193
  %3232 = vmatprep.subr.bf16.mxu0 0
  %3233 = vmatpush1.bf16.msra.mxu0 %v3194
  %3234 = vmatprep.subr.bf16.mxu0 0
  %3235 = vmatpush1.bf16.msra.mxu0 0
  %3236 = vmatprep.subr.bf16.mxu0 0
  %3237 = vmatpush1.bf16.msra.mxu0 0
  %3238 = vmatprep.subr.bf16.mxu0 0
  %3239 = vmatpush1.bf16.msra.mxu0 0
  %3240 = vmatprep.subr.bf16.mxu0 0
  %3241 = vmatpush1.bf16.msra.mxu0 0
  %3242 = vmatprep.subr.bf16.mxu0 0
  %3243 = vmatpush1.bf16.msra.mxu0 0
  %3244 = vmatprep.subr.bf16.mxu0 0
  %3245 = vmatpush1.bf16.msra.mxu0 0
  %3246 = vmatprep.subr.bf16.mxu0 0
  %3247 = vmatpush1.bf16.msra.mxu0 0
  %3248 = vmatprep.subr.bf16.mxu0 0
  %3249 = vmatpush1.bf16.msra.mxu0 0
  %3250 = vmatprep.subr.bf16.mxu0 0
  %3251 = vmatpush1.bf16.msra.mxu0 0
  %3252 = vmatprep.subr.bf16.mxu0 0
  %3253 = vmatpush1.bf16.msra.mxu0 0
  %3254 = vmatprep.subr.bf16.mxu0 0
  %3255 = vmatpush1.bf16.msra.mxu0 0
  %3256 = vmatprep.subr.bf16.mxu0 0
  %3257 = vmatpush1.bf16.msra.mxu0 0
  %3258 = vmatprep.mubr.bf16.mxu0 0
  %3259 = vmatmul.mubr.bf16.gmra.mrb[0].mxu0 %v3200
  %v3260 = vpop.f32.mrb[0].mxu0
  %v3261 = vadd.f32 0.0, %v3260
  %v3262 = vpop.f32.mrb[0].mxu0
  %v3263 = vpop.f32.mrb[0].mxu0
  %v3264 = vadd.f32 0.0, %v3263
  %v3265 = vpop.f32.mrb[0].mxu0
  %3266 = vmatprep.mubr.bf16.mxu0 0
  %3267 = vmatmul.mubr.bf16.gmra.mrb[0].mxu0 %v3203
  %v3268 = vpop.f32.mrb[0].mxu0
  %v3269 = vadd.f32 0.0, %v3268
  %v3270 = vpop.f32.mrb[0].mxu0
  %v3271 = vpop.f32.mrb[0].mxu0
  %v3272 = vadd.f32 0.0, %v3271
  %v3273 = vpop.f32.mrb[0].mxu0
  %3274 = vmatprep.mubr.bf16.mxu0 0
  %3275 = vmatmul.mubr.bf16.gmra.mrb[0].mxu0 %v3206
  %v3276 = vpop.f32.mrb[0].mxu0
  %v3277 = vadd.f32 0.0, %v3276
  %v3278 = vpop.f32.mrb[0].mxu0
  %v3279 = vpop.f32.mrb[0].mxu0
  %v3280 = vadd.f32 0.0, %v3279
  %v3281 = vpop.f32.mrb[0].mxu0
  %3282 = vmatprep.mubr.bf16.mxu0 0
  %3283 = vmatmul.mubr.bf16.gmra.mrb[0].mxu0 %v3209
  %v3284 = vpop.f32.mrb[0].mxu0
  %v3285 = vadd.f32 0.0, %v3284
  %v3286 = vpop.f32.mrb[0].mxu0
  %v3287 = vpop.f32.mrb[0].mxu0
  %v3288 = vadd.f32 0.0, %v3287
  %v3289 = vpop.f32.mrb[0].mxu0
  %3290 = vmatprep.mubr.bf16.mxu0 0
  %3291 = vmatmul.mubr.bf16.gmra.mrb[0].mxu0 %v3212
  %v3292 = vpop.f32.mrb[0].mxu0
  %v3293 = vadd.f32 0.0, %v3292
  %v3294 = vpop.f32.mrb[0].mxu0
  %v3295 = vpop.f32.mrb[0].mxu0
  %v3296 = vadd.f32 0.0, %v3295
  %v3297 = vpop.f32.mrb[0].mxu0
  %3298 = vmatprep.mubr.bf16.mxu0 0
  %3299 = vmatmul.mubr.bf16.gmra.mrb[0].mxu0 %v3215
  %v3300 = vpop.f32.mrb[0].mxu0
  %v3301 = vadd.f32 0.0, %v3300
  %v3302 = vpop.f32.mrb[0].mxu0
  %v3303 = vpop.f32.mrb[0].mxu0
  %v3304 = vadd.f32 0.0, %v3303
  %v3305 = vpop.f32.mrb[0].mxu0
  %3306 = vmatprep.mubr.bf16.mxu0 0
  %3307 = vmatmul.mubr.bf16.gmra.mrb[0].mxu0 %v3218
  %v3308 = vpop.f32.mrb[0].mxu0
  %v3309 = vadd.f32 0.0, %v3308
  %v3310 = vpop.f32.mrb[0].mxu0
  %v3311 = vpop.f32.mrb[0].mxu0
  %v3312 = vadd.f32 0.0, %v3311
  %v3313 = vpop.f32.mrb[0].mxu0
  %3314 = vmatprep.mubr.bf16.mxu0 0
  %3315 = vmatmul.mubr.bf16.gmra.mrb[0].mxu0 %v3221
  %v3316 = vpop.f32.mrb[0].mxu0
  %v3317 = vadd.f32 0.0, %v3316
  %v3318 = vpop.f32.mrb[0].mxu0
  %v3319 = vpop.f32.mrb[0].mxu0
  %v3320 = vadd.f32 0.0, %v3319
  %v3321 = vpop.f32.mrb[0].mxu0
  %3322 = vmatprep.mubr.bf16.mxu0 0
  %3323 = vmatmul.mubr.bf16.gmra.mrb[0].mxu0 %v3224
  %v3324 = vpop.f32.mrb[0].mxu0
  %v3325 = vadd.f32 0.0, %v3324
  %v3326 = vpop.f32.mrb[0].mxu0
  %v3327 = vpop.f32.mrb[0].mxu0
  %v3328 = vadd.f32 0.0, %v3327
  %v3329 = vpop.f32.mrb[0].mxu0
  %3330 = vdwg.mxu0
  %v3331 = vadd.f32 %v3121, %v3261
  %v3332 = vadd.f32 %v3122, %v3264
  %v3333 = vadd.f32 %v3123, %v3269
  %v3334 = vadd.f32 %v3124, %v3272
  %v3335 = vadd.f32 %v3125, %v3277
  %v3336 = vadd.f32 %v3126, %v3280
  %v3337 = vadd.f32 %v3127, %v3285
  %v3338 = vadd.f32 %v3128, %v3288
  %v3339 = vadd.f32 %v3129, %v3293
  %v3340 = vadd.f32 %v3130, %v3296
  %v3341 = vadd.f32 %v3131, %v3301
  %v3342 = vadd.f32 %v3132, %v3304
  %v3343 = vadd.f32 %v3133, %v3309
  %v3344 = vadd.f32 %v3134, %v3312
  %v3345 = vadd.f32 %v3135, %v3317
  %v3346 = vadd.f32 %v3136, %v3320
  %v3347 = vadd.f32 %v3137, %v3325
  %v3348 = vadd.f32 %v3138, %v3328
  %v3349 = vld [vmem:[#allocation3 + $0xc] sm:$0xff]
  %v3350 = vld [vmem:[#allocation3 + $0x14] sm:$0xff]
  %v3351 = vld [vmem:[#allocation3 + $0x1c] sm:$0xff]
  %v3352 = vld [vmem:[#allocation3 + $0x24] sm:$0xff]
  %v3353 = vld [vmem:[#allocation3 + $0x2c] sm:$0xff]
  %v3354 = vld [vmem:[#allocation3 + $0x34] sm:$0xff]
  %v3355 = vld [vmem:[#allocation3 + $0x3c] sm:$0xff]
  %v3356 = vld [vmem:[#allocation3 + $0x44] sm:$0xff]
  %v3357 = vld [vmem:[#allocation3 + $0x4c] sm:$0xff]
  %v3358 = vld [vmem:[#allocation3 + $0x6c] sm:$0xff]
  %v3359 = vld [vmem:[#allocation3 + $0x74] sm:$0xff]
  %v3360 = vld [vmem:[#allocation3 + $0x7c] sm:$0xff]
  %v3361 = vld [vmem:[#allocation3 + $0x84] sm:$0xff]
  %v3362 = vld [vmem:[#allocation3 + $0x8c] sm:$0xff]
  %v3363 = vld [vmem:[#allocation3 + $0x94] sm:$0xff]
  %v3364 = vld [vmem:[#allocation3 + $0x9c] sm:$0xff]
  %v3365 = vld [vmem:[#allocation3 + $0xa4] sm:$0xff]
  %v3366 = vld [vmem:[#allocation3 + $0xac] sm:$0xff]
  %v3367 = vpack.c.bf16 %v3350, %v3349
  %v3368 = vpack.c.bf16 %v3352, %v3351
  %v3369 = vpack.c.bf16 %v3354, %v3353
  %v3370 = vpack.c.bf16 %v3356, %v3355
  %v3371 = vpack.c.bf16 %v3358, %v3357
  %v3372 = vpack.c.bf16 %v3360, %v3359
  %v3373 = vpack.c.bf16 %v3362, %v3361
  %v3374 = vpack.c.bf16 %v3364, %v3363
  %v3375 = vpack.c.bf16 %v3366, %v3365
  %s3376 = scalar_lea.vmem %s5, 160
  %v3377 = vld [vmem:[%s3376] sm:$0xf]
  %v3378 = vld [vmem:[%s3376 + $0x4] sm:$0xf]
  %v3379 = vld [vmem:[%s3376 + $0x8] sm:$0xf]
  %v3380 = vld [vmem:[%s3376 + $0xc] sm:$0xf]
  %v3381 = vld [vmem:[%s3376 + $0x10] sm:$0xf]
  %v3382 = vld [vmem:[%s3376 + $0x14] sm:$0xf]
  %v3383 = vld [vmem:[%s3376 + $0x18] sm:$0xf]
  %v3384 = vld [vmem:[%s3376 + $0x1c] sm:$0xf]
  %v3393 = vunpack.c.l.b16 %v3377
  %v3394 = vunpack.c.l.b16 %v3378
  %v3395 = vunpack.c.l.b16 %v3379
  %v3396 = vunpack.c.l.b16 %v3380
  %v3397 = vunpack.c.l.b16 %v3381
  %v3398 = vunpack.c.l.b16 %v3382
  %v3399 = vunpack.c.l.b16 %v3383
  %v3400 = vunpack.c.l.b16 %v3384
  %v3401 = vpack.c.b16 %v3394, %v3393
  %v3402 = vpack.c.b16 %v3396, %v3395
  %v3403 = vpack.c.b16 %v3398, %v3397
  %v3404 = vpack.c.b16 %v3400, %v3399
  %v3410 = vsel %vm756, %v3367, 0
  %v3413 = vsel %vm756, %v3368, 0
  %v3416 = vsel %vm756, %v3369, 0
  %v3419 = vsel %vm756, %v3370, 0
  %v3422 = vsel %vm756, %v3371, 0
  %v3425 = vsel %vm756, %v3372, 0
  %v3428 = vsel %vm756, %v3373, 0
  %v3431 = vsel %vm756, %v3374, 0
  %v3434 = vsel %vm756, %v3375, 0
  %3436 = vmatprep.subr.bf16.mxu0 0
  %3437 = vmatpush1.bf16.msra.mxu0 %v3401
  %3438 = vmatprep.subr.bf16.mxu0 0
  %3439 = vmatpush1.bf16.msra.mxu0 %v3402
  %3440 = vmatprep.subr.bf16.mxu0 0
  %3441 = vmatpush1.bf16.msra.mxu0 %v3403
  %3442 = vmatprep.subr.bf16.mxu0 0
  %3443 = vmatpush1.bf16.msra.mxu0 %v3404
  %3444 = vmatprep.subr.bf16.mxu0 0
  %3445 = vmatpush1.bf16.msra.mxu0 0
  %3446 = vmatprep.subr.bf16.mxu0 0
  %3447 = vmatpush1.bf16.msra.mxu0 0
  %3448 = vmatprep.subr.bf16.mxu0 0
  %3449 = vmatpush1.bf16.msra.mxu0 0
  %3450 = vmatprep.subr.bf16.mxu0 0
  %3451 = vmatpush1.bf16.msra.mxu0 0
  %3452 = vmatprep.subr.bf16.mxu0 0
  %3453 = vmatpush1.bf16.msra.mxu0 0
  %3454 = vmatprep.subr.bf16.mxu0 0
  %3455 = vmatpush1.bf16.msra.mxu0 0
  %3456 = vmatprep.subr.bf16.mxu0 0
  %3457 = vmatpush1.bf16.msra.mxu0 0
  %3458 = vmatprep.subr.bf16.mxu0 0
  %3459 = vmatpush1.bf16.msra.mxu0 0
  %3460 = vmatprep.subr.bf16.mxu0 0
  %3461 = vmatpush1.bf16.msra.mxu0 0
  %3462 = vmatprep.subr.bf16.mxu0 0
  %3463 = vmatpush1.bf16.msra.mxu0 0
  %3464 = vmatprep.subr.bf16.mxu0 0
  %3465 = vmatpush1.bf16.msra.mxu0 0
  %3466 = vmatprep.subr.bf16.mxu0 0
  %3467 = vmatpush1.bf16.msra.mxu0 0
  %3468 = vmatprep.mubr.bf16.mxu0 0
  %3469 = vmatmul.mubr.bf16.gmra.mrb[0].mxu0 %v3410
  %v3470 = vpop.f32.mrb[0].mxu0
  %v3471 = vadd.f32 0.0, %v3470
  %v3472 = vpop.f32.mrb[0].mxu0
  %v3473 = vpop.f32.mrb[0].mxu0
  %v3474 = vadd.f32 0.0, %v3473
  %v3475 = vpop.f32.mrb[0].mxu0
  %3476 = vmatprep.mubr.bf16.mxu0 0
  %3477 = vmatmul.mubr.bf16.gmra.mrb[0].mxu0 %v3413
  %v3478 = vpop.f32.mrb[0].mxu0
  %v3479 = vadd.f32 0.0, %v3478
  %v3480 = vpop.f32.mrb[0].mxu0
  %v3481 = vpop.f32.mrb[0].mxu0
  %v3482 = vadd.f32 0.0, %v3481
  %v3483 = vpop.f32.mrb[0].mxu0
  %3484 = vmatprep.mubr.bf16.mxu0 0
  %3485 = vmatmul.mubr.bf16.gmra.mrb[0].mxu0 %v3416
  %v3486 = vpop.f32.mrb[0].mxu0
  %v3487 = vadd.f32 0.0, %v3486
  %v3488 = vpop.f32.mrb[0].mxu0
  %v3489 = vpop.f32.mrb[0].mxu0
  %v3490 = vadd.f32 0.0, %v3489
  %v3491 = vpop.f32.mrb[0].mxu0
  %3492 = vmatprep.mubr.bf16.mxu0 0
  %3493 = vmatmul.mubr.bf16.gmra.mrb[0].mxu0 %v3419
  %v3494 = vpop.f32.mrb[0].mxu0
  %v3495 = vadd.f32 0.0, %v3494
  %v3496 = vpop.f32.mrb[0].mxu0
  %v3497 = vpop.f32.mrb[0].mxu0
  %v3498 = vadd.f32 0.0, %v3497
  %v3499 = vpop.f32.mrb[0].mxu0
  %3500 = vmatprep.mubr.bf16.mxu0 0
  %3501 = vmatmul.mubr.bf16.gmra.mrb[0].mxu0 %v3422
  %v3502 = vpop.f32.mrb[0].mxu0
  %v3503 = vadd.f32 0.0, %v3502
  %v3504 = vpop.f32.mrb[0].mxu0
  %v3505 = vpop.f32.mrb[0].mxu0
  %v3506 = vadd.f32 0.0, %v3505
  %v3507 = vpop.f32.mrb[0].mxu0
  %3508 = vmatprep.mubr.bf16.mxu0 0
  %3509 = vmatmul.mubr.bf16.gmra.mrb[0].mxu0 %v3425
  %v3510 = vpop.f32.mrb[0].mxu0
  %v3511 = vadd.f32 0.0, %v3510
  %v3512 = vpop.f32.mrb[0].mxu0
  %v3513 = vpop.f32.mrb[0].mxu0
  %v3514 = vadd.f32 0.0, %v3513
  %v3515 = vpop.f32.mrb[0].mxu0
  %3516 = vmatprep.mubr.bf16.mxu0 0
  %3517 = vmatmul.mubr.bf16.gmra.mrb[0].mxu0 %v3428
  %v3518 = vpop.f32.mrb[0].mxu0
  %v3519 = vadd.f32 0.0, %v3518
  %v3520 = vpop.f32.mrb[0].mxu0
  %v3521 = vpop.f32.mrb[0].mxu0
  %v3522 = vadd.f32 0.0, %v3521
  %v3523 = vpop.f32.mrb[0].mxu0
  %3524 = vmatprep.mubr.bf16.mxu0 0
  %3525 = vmatmul.mubr.bf16.gmra.mrb[0].mxu0 %v3431
  %v3526 = vpop.f32.mrb[0].mxu0
  %v3527 = vadd.f32 0.0, %v3526
  %v3528 = vpop.f32.mrb[0].mxu0
  %v3529 = vpop.f32.mrb[0].mxu0
  %v3530 = vadd.f32 0.0, %v3529
  %v3531 = vpop.f32.mrb[0].mxu0
  %3532 = vmatprep.mubr.bf16.mxu0 0
  %3533 = vmatmul.mubr.bf16.gmra.mrb[0].mxu0 %v3434
  %v3534 = vpop.f32.mrb[0].mxu0
  %v3535 = vadd.f32 0.0, %v3534
  %v3536 = vpop.f32.mrb[0].mxu0
  %v3537 = vpop.f32.mrb[0].mxu0
  %v3538 = vadd.f32 0.0, %v3537
  %v3539 = vpop.f32.mrb[0].mxu0
  %3540 = vdwg.mxu0
  %v3541 = vadd.f32 %v3331, %v3471
  %v3542 = vadd.f32 %v3332, %v3474
  %v3543 = vadd.f32 %v3333, %v3479
  %v3544 = vadd.f32 %v3334, %v3482
  %v3545 = vadd.f32 %v3335, %v3487
  %v3546 = vadd.f32 %v3336, %v3490
  %v3547 = vadd.f32 %v3337, %v3495
  %v3548 = vadd.f32 %v3338, %v3498
  %v3549 = vadd.f32 %v3339, %v3503
  %v3550 = vadd.f32 %v3340, %v3506
  %v3551 = vadd.f32 %v3341, %v3511
  %v3552 = vadd.f32 %v3342, %v3514
  %v3553 = vadd.f32 %v3343, %v3519
  %v3554 = vadd.f32 %v3344, %v3522
  %v3555 = vadd.f32 %v3345, %v3527
  %v3556 = vadd.f32 %v3346, %v3530
  %v3557 = vadd.f32 %v3347, %v3535
  %v3558 = vadd.f32 %v3348, %v3538
  %v3559 = vld [vmem:[#allocation3 + $0x14] sm:$0xff]
  %v3560 = vld [vmem:[#allocation3 + $0x1c] sm:$0xff]
  %v3561 = vld [vmem:[#allocation3 + $0x24] sm:$0xff]
  %v3562 = vld [vmem:[#allocation3 + $0x2c] sm:$0xff]
  %v3563 = vld [vmem:[#allocation3 + $0x34] sm:$0xff]
  %v3564 = vld [vmem:[#allocation3 + $0x3c] sm:$0xff]
  %v3565 = vld [vmem:[#allocation3 + $0x44] sm:$0xff]
  %v3566 = vld [vmem:[#allocation3 + $0x4c] sm:$0xff]
  %v3567 = vld [vmem:[#allocation3 + $0x54] sm:$0xff]
  %v3568 = vld [vmem:[#allocation3 + $0x74] sm:$0xff]
  %v3569 = vld [vmem:[#allocation3 + $0x7c] sm:$0xff]
  %v3570 = vld [vmem:[#allocation3 + $0x84] sm:$0xff]
  %v3571 = vld [vmem:[#allocation3 + $0x8c] sm:$0xff]
  %v3572 = vld [vmem:[#allocation3 + $0x94] sm:$0xff]
  %v3573 = vld [vmem:[#allocation3 + $0x9c] sm:$0xff]
  %v3574 = vld [vmem:[#allocation3 + $0xa4] sm:$0xff]
  %v3575 = vld [vmem:[#allocation3 + $0xac] sm:$0xff]
  %v3576 = vld [vmem:[#allocation3 + $0xb4] sm:$0xff]
  %v3577 = vpack.c.bf16 %v3560, %v3559
  %v3578 = vpack.c.bf16 %v3562, %v3561
  %v3579 = vpack.c.bf16 %v3564, %v3563
  %v3580 = vpack.c.bf16 %v3566, %v3565
  %v3581 = vpack.c.bf16 %v3568, %v3567
  %v3582 = vpack.c.bf16 %v3570, %v3569
  %v3583 = vpack.c.bf16 %v3572, %v3571
  %v3584 = vpack.c.bf16 %v3574, %v3573
  %v3585 = vpack.c.bf16 %v3576, %v3575
  %s3586 = scalar_lea.vmem %s5, 192
  %v3587 = vld [vmem:[%s3586] sm:$0xf]
  %v3588 = vld [vmem:[%s3586 + $0x4] sm:$0xf]
  %v3589 = vld [vmem:[%s3586 + $0x8] sm:$0xf]
  %v3590 = vld [vmem:[%s3586 + $0xc] sm:$0xf]
  %v3591 = vld [vmem:[%s3586 + $0x10] sm:$0xf]
  %v3592 = vld [vmem:[%s3586 + $0x14] sm:$0xf]
  %v3593 = vld [vmem:[%s3586 + $0x18] sm:$0xf]
  %v3594 = vld [vmem:[%s3586 + $0x1c] sm:$0xf]
  %v3603 = vunpack.c.l.b16 %v3587
  %v3604 = vunpack.c.l.b16 %v3588
  %v3605 = vunpack.c.l.b16 %v3589
  %v3606 = vunpack.c.l.b16 %v3590
  %v3607 = vunpack.c.l.b16 %v3591
  %v3608 = vunpack.c.l.b16 %v3592
  %v3609 = vunpack.c.l.b16 %v3593
  %v3610 = vunpack.c.l.b16 %v3594
  %v3611 = vpack.c.b16 %v3604, %v3603
  %v3612 = vpack.c.b16 %v3606, %v3605
  %v3613 = vpack.c.b16 %v3608, %v3607
  %v3614 = vpack.c.b16 %v3610, %v3609
  %v3620 = vsel %vm756, %v3577, 0
  %v3623 = vsel %vm756, %v3578, 0
  %v3626 = vsel %vm756, %v3579, 0
  %v3629 = vsel %vm756, %v3580, 0
  %v3632 = vsel %vm756, %v3581, 0
  %v3635 = vsel %vm756, %v3582, 0
  %v3638 = vsel %vm756, %v3583, 0
  %v3641 = vsel %vm756, %v3584, 0
  %v3644 = vsel %vm756, %v3585, 0
  %3646 = vmatprep.subr.bf16.mxu0 0
  %3647 = vmatpush1.bf16.msra.mxu0 %v3611
  %3648 = vmatprep.subr.bf16.mxu0 0
  %3649 = vmatpush1.bf16.msra.mxu0 %v3612
  %3650 = vmatprep.subr.bf16.mxu0 0
  %3651 = vmatpush1.bf16.msra.mxu0 %v3613
  %3652 = vmatprep.subr.bf16.mxu0 0
  %3653 = vmatpush1.bf16.msra.mxu0 %v3614
  %3654 = vmatprep.subr.bf16.mxu0 0
  %3655 = vmatpush1.bf16.msra.mxu0 0
  %3656 = vmatprep.subr.bf16.mxu0 0
  %3657 = vmatpush1.bf16.msra.mxu0 0
  %3658 = vmatprep.subr.bf16.mxu0 0
  %3659 = vmatpush1.bf16.msra.mxu0 0
  %3660 = vmatprep.subr.bf16.mxu0 0
  %3661 = vmatpush1.bf16.msra.mxu0 0
  %3662 = vmatprep.subr.bf16.mxu0 0
  %3663 = vmatpush1.bf16.msra.mxu0 0
  %3664 = vmatprep.subr.bf16.mxu0 0
  %3665 = vmatpush1.bf16.msra.mxu0 0
  %3666 = vmatprep.subr.bf16.mxu0 0
  %3667 = vmatpush1.bf16.msra.mxu0 0
  %3668 = vmatprep.subr.bf16.mxu0 0
  %3669 = vmatpush1.bf16.msra.mxu0 0
  %3670 = vmatprep.subr.bf16.mxu0 0
  %3671 = vmatpush1.bf16.msra.mxu0 0
  %3672 = vmatprep.subr.bf16.mxu0 0
  %3673 = vmatpush1.bf16.msra.mxu0 0
  %3674 = vmatprep.subr.bf16.mxu0 0
  %3675 = vmatpush1.bf16.msra.mxu0 0
  %3676 = vmatprep.subr.bf16.mxu0 0
  %3677 = vmatpush1.bf16.msra.mxu0 0
  %3678 = vmatprep.mubr.bf16.mxu0 0
  %3679 = vmatmul.mubr.bf16.gmra.mrb[0].mxu0 %v3620
  %v3680 = vpop.f32.mrb[0].mxu0
  %v3681 = vadd.f32 0.0, %v3680
  %v3682 = vpop.f32.mrb[0].mxu0
  %v3683 = vpop.f32.mrb[0].mxu0
  %v3684 = vadd.f32 0.0, %v3683
  %v3685 = vpop.f32.mrb[0].mxu0
  %3686 = vmatprep.mubr.bf16.mxu0 0
  %3687 = vmatmul.mubr.bf16.gmra.mrb[0].mxu0 %v3623
  %v3688 = vpop.f32.mrb[0].mxu0
  %v3689 = vadd.f32 0.0, %v3688
  %v3690 = vpop.f32.mrb[0].mxu0
  %v3691 = vpop.f32.mrb[0].mxu0
  %v3692 = vadd.f32 0.0, %v3691
  %v3693 = vpop.f32.mrb[0].mxu0
  %3694 = vmatprep.mubr.bf16.mxu0 0
  %3695 = vmatmul.mubr.bf16.gmra.mrb[0].mxu0 %v3626
  %v3696 = vpop.f32.mrb[0].mxu0
  %v3697 = vadd.f32 0.0, %v3696
  %v3698 = vpop.f32.mrb[0].mxu0
  %v3699 = vpop.f32.mrb[0].mxu0
  %v3700 = vadd.f32 0.0, %v3699
  %v3701 = vpop.f32.mrb[0].mxu0
  %3702 = vmatprep.mubr.bf16.mxu0 0
  %3703 = vmatmul.mubr.bf16.gmra.mrb[0].mxu0 %v3629
  %v3704 = vpop.f32.mrb[0].mxu0
  %v3705 = vadd.f32 0.0, %v3704
  %v3706 = vpop.f32.mrb[0].mxu0
  %v3707 = vpop.f32.mrb[0].mxu0
  %v3708 = vadd.f32 0.0, %v3707
  %v3709 = vpop.f32.mrb[0].mxu0
  %3710 = vmatprep.mubr.bf16.mxu0 0
  %3711 = vmatmul.mubr.bf16.gmra.mrb[0].mxu0 %v3632
  %v3712 = vpop.f32.mrb[0].mxu0
  %v3713 = vadd.f32 0.0, %v3712
  %v3714 = vpop.f32.mrb[0].mxu0
  %v3715 = vpop.f32.mrb[0].mxu0
  %v3716 = vadd.f32 0.0, %v3715
  %v3717 = vpop.f32.mrb[0].mxu0
  %3718 = vmatprep.mubr.bf16.mxu0 0
  %3719 = vmatmul.mubr.bf16.gmra.mrb[0].mxu0 %v3635
  %v3720 = vpop.f32.mrb[0].mxu0
  %v3721 = vadd.f32 0.0, %v3720
  %v3722 = vpop.f32.mrb[0].mxu0
  %v3723 = vpop.f32.mrb[0].mxu0
  %v3724 = vadd.f32 0.0, %v3723
  %v3725 = vpop.f32.mrb[0].mxu0
  %3726 = vmatprep.mubr.bf16.mxu0 0
  %3727 = vmatmul.mubr.bf16.gmra.mrb[0].mxu0 %v3638
  %v3728 = vpop.f32.mrb[0].mxu0
  %v3729 = vadd.f32 0.0, %v3728
  %v3730 = vpop.f32.mrb[0].mxu0
  %v3731 = vpop.f32.mrb[0].mxu0
  %v3732 = vadd.f32 0.0, %v3731
  %v3733 = vpop.f32.mrb[0].mxu0
  %3734 = vmatprep.mubr.bf16.mxu0 0
  %3735 = vmatmul.mubr.bf16.gmra.mrb[0].mxu0 %v3641
  %v3736 = vpop.f32.mrb[0].mxu0
  %v3737 = vadd.f32 0.0, %v3736
  %v3738 = vpop.f32.mrb[0].mxu0
  %v3739 = vpop.f32.mrb[0].mxu0
  %v3740 = vadd.f32 0.0, %v3739
  %v3741 = vpop.f32.mrb[0].mxu0
  %3742 = vmatprep.mubr.bf16.mxu0 0
  %3743 = vmatmul.mubr.bf16.gmra.mrb[0].mxu0 %v3644
  %v3744 = vpop.f32.mrb[0].mxu0
  %v3745 = vadd.f32 0.0, %v3744
  %v3746 = vpop.f32.mrb[0].mxu0
  %v3747 = vpop.f32.mrb[0].mxu0
  %v3748 = vadd.f32 0.0, %v3747
  %v3749 = vpop.f32.mrb[0].mxu0
  %3750 = vdwg.mxu0
  %v3751 = vadd.f32 %v3541, %v3681
  %v3752 = vadd.f32 %v3542, %v3684
  %v3753 = vadd.f32 %v3543, %v3689
  %v3754 = vadd.f32 %v3544, %v3692
  %v3755 = vadd.f32 %v3545, %v3697
  %v3756 = vadd.f32 %v3546, %v3700
  %v3757 = vadd.f32 %v3547, %v3705
  %v3758 = vadd.f32 %v3548, %v3708
  %v3759 = vadd.f32 %v3549, %v3713
  %v3760 = vadd.f32 %v3550, %v3716
  %v3761 = vadd.f32 %v3551, %v3721
  %v3762 = vadd.f32 %v3552, %v3724
  %v3763 = vadd.f32 %v3553, %v3729
  %v3764 = vadd.f32 %v3554, %v3732
  %v3765 = vadd.f32 %v3555, %v3737
  %v3766 = vadd.f32 %v3556, %v3740
  %v3767 = vadd.f32 %v3557, %v3745
  %v3768 = vadd.f32 %v3558, %v3748
  %v3769 = vld [vmem:[#allocation3 + $0x15] sm:$0xff]
  %v3770 = vld [vmem:[#allocation3 + $0x1d] sm:$0xff]
  %v3771 = vld [vmem:[#allocation3 + $0x25] sm:$0xff]
  %v3772 = vld [vmem:[#allocation3 + $0x2d] sm:$0xff]
  %v3773 = vld [vmem:[#allocation3 + $0x35] sm:$0xff]
  %v3774 = vld [vmem:[#allocation3 + $0x3d] sm:$0xff]
  %v3775 = vld [vmem:[#allocation3 + $0x45] sm:$0xff]
  %v3776 = vld [vmem:[#allocation3 + $0x4d] sm:$0xff]
  %v3777 = vld [vmem:[#allocation3 + $0x55] sm:$0xff]
  %v3778 = vld [vmem:[#allocation3 + $0x75] sm:$0xff]
  %v3779 = vld [vmem:[#allocation3 + $0x7d] sm:$0xff]
  %v3780 = vld [vmem:[#allocation3 + $0x85] sm:$0xff]
  %v3781 = vld [vmem:[#allocation3 + $0x8d] sm:$0xff]
  %v3782 = vld [vmem:[#allocation3 + $0x95] sm:$0xff]
  %v3783 = vld [vmem:[#allocation3 + $0x9d] sm:$0xff]
  %v3784 = vld [vmem:[#allocation3 + $0xa5] sm:$0xff]
  %v3785 = vld [vmem:[#allocation3 + $0xad] sm:$0xff]
  %v3786 = vld [vmem:[#allocation3 + $0xb5] sm:$0xff]
  %v3787 = vpack.c.bf16 %v3770, %v3769
  %v3788 = vpack.c.bf16 %v3772, %v3771
  %v3789 = vpack.c.bf16 %v3774, %v3773
  %v3790 = vpack.c.bf16 %v3776, %v3775
  %v3791 = vpack.c.bf16 %v3778, %v3777
  %v3792 = vpack.c.bf16 %v3780, %v3779
  %v3793 = vpack.c.bf16 %v3782, %v3781
  %v3794 = vpack.c.bf16 %v3784, %v3783
  %v3795 = vpack.c.bf16 %v3786, %v3785
  %s3796 = scalar_lea.vmem %s5, 224
  %v3797 = vld [vmem:[%s3796] sm:$0xf]
  %v3798 = vld [vmem:[%s3796 + $0x4] sm:$0xf]
  %v3799 = vld [vmem:[%s3796 + $0x8] sm:$0xf]
  %v3800 = vld [vmem:[%s3796 + $0xc] sm:$0xf]
  %v3801 = vld [vmem:[%s3796 + $0x10] sm:$0xf]
  %v3802 = vld [vmem:[%s3796 + $0x14] sm:$0xf]
  %v3803 = vld [vmem:[%s3796 + $0x18] sm:$0xf]
  %v3804 = vld [vmem:[%s3796 + $0x1c] sm:$0xf]
  %v3813 = vunpack.c.l.b16 %v3797
  %v3814 = vunpack.c.l.b16 %v3798
  %v3815 = vunpack.c.l.b16 %v3799
  %v3816 = vunpack.c.l.b16 %v3800
  %v3817 = vunpack.c.l.b16 %v3801
  %v3818 = vunpack.c.l.b16 %v3802
  %v3819 = vunpack.c.l.b16 %v3803
  %v3820 = vunpack.c.l.b16 %v3804
  %v3821 = vpack.c.b16 %v3814, %v3813
  %v3822 = vpack.c.b16 %v3816, %v3815
  %v3823 = vpack.c.b16 %v3818, %v3817
  %v3824 = vpack.c.b16 %v3820, %v3819
  %v3830 = vsel %vm756, %v3787, 0
  %v3833 = vsel %vm756, %v3788, 0
  %v3836 = vsel %vm756, %v3789, 0
  %v3839 = vsel %vm756, %v3790, 0
  %v3842 = vsel %vm756, %v3791, 0
  %v3845 = vsel %vm756, %v3792, 0
  %v3848 = vsel %vm756, %v3793, 0
  %v3851 = vsel %vm756, %v3794, 0
  %v3854 = vsel %vm756, %v3795, 0
  %3856 = vmatprep.subr.bf16.mxu0 0
  %3857 = vmatpush1.bf16.msra.mxu0 %v3821
  %3858 = vmatprep.subr.bf16.mxu0 0
  %3859 = vmatpush1.bf16.msra.mxu0 %v3822
  %3860 = vmatprep.subr.bf16.mxu0 0
  %3861 = vmatpush1.bf16.msra.mxu0 %v3823
  %3862 = vmatprep.subr.bf16.mxu0 0
  %3863 = vmatpush1.bf16.msra.mxu0 %v3824
  %3864 = vmatprep.subr.bf16.mxu0 0
  %3865 = vmatpush1.bf16.msra.mxu0 0
  %3866 = vmatprep.subr.bf16.mxu0 0
  %3867 = vmatpush1.bf16.msra.mxu0 0
  %3868 = vmatprep.subr.bf16.mxu0 0
  %3869 = vmatpush1.bf16.msra.mxu0 0
  %3870 = vmatprep.subr.bf16.mxu0 0
  %3871 = vmatpush1.bf16.msra.mxu0 0
  %3872 = vmatprep.subr.bf16.mxu0 0
  %3873 = vmatpush1.bf16.msra.mxu0 0
  %3874 = vmatprep.subr.bf16.mxu0 0
  %3875 = vmatpush1.bf16.msra.mxu0 0
  %3876 = vmatprep.subr.bf16.mxu0 0
  %3877 = vmatpush1.bf16.msra.mxu0 0
  %3878 = vmatprep.subr.bf16.mxu0 0
  %3879 = vmatpush1.bf16.msra.mxu0 0
  %3880 = vmatprep.subr.bf16.mxu0 0
  %3881 = vmatpush1.bf16.msra.mxu0 0
  %3882 = vmatprep.subr.bf16.mxu0 0
  %3883 = vmatpush1.bf16.msra.mxu0 0
  %3884 = vmatprep.subr.bf16.mxu0 0
  %3885 = vmatpush1.bf16.msra.mxu0 0
  %3886 = vmatprep.subr.bf16.mxu0 0
  %3887 = vmatpush1.bf16.msra.mxu0 0
  %3888 = vmatprep.mubr.bf16.mxu0 0
  %3889 = vmatmul.mubr.bf16.gmra.mrb[0].mxu0 %v3830
  %v3890 = vpop.f32.mrb[0].mxu0
  %v3891 = vadd.f32 0.0, %v3890
  %v3892 = vpop.f32.mrb[0].mxu0
  %v3893 = vpop.f32.mrb[0].mxu0
  %v3894 = vadd.f32 0.0, %v3893
  %v3895 = vpop.f32.mrb[0].mxu0
  %3896 = vmatprep.mubr.bf16.mxu0 0
  %3897 = vmatmul.mubr.bf16.gmra.mrb[0].mxu0 %v3833
  %v3898 = vpop.f32.mrb[0].mxu0
  %v3899 = vadd.f32 0.0, %v3898
  %v3900 = vpop.f32.mrb[0].mxu0
  %v3901 = vpop.f32.mrb[0].mxu0
  %v3902 = vadd.f32 0.0, %v3901
  %v3903 = vpop.f32.mrb[0].mxu0
  %3904 = vmatprep.mubr.bf16.mxu0 0
  %3905 = vmatmul.mubr.bf16.gmra.mrb[0].mxu0 %v3836
  %v3906 = vpop.f32.mrb[0].mxu0
  %v3907 = vadd.f32 0.0, %v3906
  %v3908 = vpop.f32.mrb[0].mxu0
  %v3909 = vpop.f32.mrb[0].mxu0
  %v3910 = vadd.f32 0.0, %v3909
  %v3911 = vpop.f32.mrb[0].mxu0
  %3912 = vmatprep.mubr.bf16.mxu0 0
  %3913 = vmatmul.mubr.bf16.gmra.mrb[0].mxu0 %v3839
  %v3914 = vpop.f32.mrb[0].mxu0
  %v3915 = vadd.f32 0.0, %v3914
  %v3916 = vpop.f32.mrb[0].mxu0
  %v3917 = vpop.f32.mrb[0].mxu0
  %v3918 = vadd.f32 0.0, %v3917
  %v3919 = vpop.f32.mrb[0].mxu0
  %3920 = vmatprep.mubr.bf16.mxu0 0
  %3921 = vmatmul.mubr.bf16.gmra.mrb[0].mxu0 %v3842
  %v3922 = vpop.f32.mrb[0].mxu0
  %v3923 = vadd.f32 0.0, %v3922
  %v3924 = vpop.f32.mrb[0].mxu0
  %v3925 = vpop.f32.mrb[0].mxu0
  %v3926 = vadd.f32 0.0, %v3925
  %v3927 = vpop.f32.mrb[0].mxu0
  %3928 = vmatprep.mubr.bf16.mxu0 0
  %3929 = vmatmul.mubr.bf16.gmra.mrb[0].mxu0 %v3845
  %v3930 = vpop.f32.mrb[0].mxu0
  %v3931 = vadd.f32 0.0, %v3930
  %v3932 = vpop.f32.mrb[0].mxu0
  %v3933 = vpop.f32.mrb[0].mxu0
  %v3934 = vadd.f32 0.0, %v3933
  %v3935 = vpop.f32.mrb[0].mxu0
  %3936 = vmatprep.mubr.bf16.mxu0 0
  %3937 = vmatmul.mubr.bf16.gmra.mrb[0].mxu0 %v3848
  %v3938 = vpop.f32.mrb[0].mxu0
  %v3939 = vadd.f32 0.0, %v3938
  %v3940 = vpop.f32.mrb[0].mxu0
  %v3941 = vpop.f32.mrb[0].mxu0
  %v3942 = vadd.f32 0.0, %v3941
  %v3943 = vpop.f32.mrb[0].mxu0
  %3944 = vmatprep.mubr.bf16.mxu0 0
  %3945 = vmatmul.mubr.bf16.gmra.mrb[0].mxu0 %v3851
  %v3946 = vpop.f32.mrb[0].mxu0
  %v3947 = vadd.f32 0.0, %v3946
  %v3948 = vpop.f32.mrb[0].mxu0
  %v3949 = vpop.f32.mrb[0].mxu0
  %v3950 = vadd.f32 0.0, %v3949
  %v3951 = vpop.f32.mrb[0].mxu0
  %3952 = vmatprep.mubr.bf16.mxu0 0
  %3953 = vmatmul.mubr.bf16.gmra.mrb[0].mxu0 %v3854
  %v3954 = vpop.f32.mrb[0].mxu0
  %v3955 = vadd.f32 0.0, %v3954
  %v3956 = vpop.f32.mrb[0].mxu0
  %v3957 = vpop.f32.mrb[0].mxu0
  %v3958 = vadd.f32 0.0, %v3957
  %v3959 = vpop.f32.mrb[0].mxu0
  %3960 = vdwg.mxu0
  %v3961 = vadd.f32 %v3751, %v3891
  %v3962 = vadd.f32 %v3752, %v3894
  %v3963 = vadd.f32 %v3753, %v3899
  %v3964 = vadd.f32 %v3754, %v3902
  %v3965 = vadd.f32 %v3755, %v3907
  %v3966 = vadd.f32 %v3756, %v3910
  %v3967 = vadd.f32 %v3757, %v3915
  %v3968 = vadd.f32 %v3758, %v3918
  %v3969 = vadd.f32 %v3759, %v3923
  %v3970 = vadd.f32 %v3760, %v3926
  %v3971 = vadd.f32 %v3761, %v3931
  %v3972 = vadd.f32 %v3762, %v3934
  %v3973 = vadd.f32 %v3763, %v3939
  %v3974 = vadd.f32 %v3764, %v3942
  %v3975 = vadd.f32 %v3765, %v3947
  %v3976 = vadd.f32 %v3766, %v3950
  %v3977 = vadd.f32 %v3767, %v3955
  %v3978 = vadd.f32 %v3768, %v3958
  %v3979 = vld [vmem:[#allocation3 + $0x16] sm:$0xff]
  %v3980 = vld [vmem:[#allocation3 + $0x1e] sm:$0xff]
  %v3981 = vld [vmem:[#allocation3 + $0x26] sm:$0xff]
  %v3982 = vld [vmem:[#allocation3 + $0x2e] sm:$0xff]
  %v3983 = vld [vmem:[#allocation3 + $0x36] sm:$0xff]
  %v3984 = vld [vmem:[#allocation3 + $0x3e] sm:$0xff]
  %v3985 = vld [vmem:[#allocation3 + $0x46] sm:$0xff]
  %v3986 = vld [vmem:[#allocation3 + $0x4e] sm:$0xff]
  %v3987 = vld [vmem:[#allocation3 + $0x56] sm:$0xff]
  %v3988 = vld [vmem:[#allocation3 + $0x76] sm:$0xff]
  %v3989 = vld [vmem:[#allocation3 + $0x7e] sm:$0xff]
  %v3990 = vld [vmem:[#allocation3 + $0x86] sm:$0xff]
  %v3991 = vld [vmem:[#allocation3 + $0x8e] sm:$0xff]
  %v3992 = vld [vmem:[#allocation3 + $0x96] sm:$0xff]
  %v3993 = vld [vmem:[#allocation3 + $0x9e] sm:$0xff]
  %v3994 = vld [vmem:[#allocation3 + $0xa6] sm:$0xff]
  %v3995 = vld [vmem:[#allocation3 + $0xae] sm:$0xff]
  %v3996 = vld [vmem:[#allocation3 + $0xb6] sm:$0xff]
  %v3997 = vpack.c.bf16 %v3980, %v3979
  %v3998 = vpack.c.bf16 %v3982, %v3981
  %v3999 = vpack.c.bf16 %v3984, %v3983
  %v4000 = vpack.c.bf16 %v3986, %v3985
  %v4001 = vpack.c.bf16 %v3988, %v3987
  %v4002 = vpack.c.bf16 %v3990, %v3989
  %v4003 = vpack.c.bf16 %v3992, %v3991
  %v4004 = vpack.c.bf16 %v3994, %v3993
  %v4005 = vpack.c.bf16 %v3996, %v3995
  %s4006 = scalar_lea.vmem %s5, 256
  %v4007 = vld [vmem:[%s4006] sm:$0xf]
  %v4008 = vld [vmem:[%s4006 + $0x4] sm:$0xf]
  %v4009 = vld [vmem:[%s4006 + $0x8] sm:$0xf]
  %v4010 = vld [vmem:[%s4006 + $0xc] sm:$0xf]
  %v4011 = vld [vmem:[%s4006 + $0x10] sm:$0xf]
  %v4012 = vld [vmem:[%s4006 + $0x14] sm:$0xf]
  %v4013 = vld [vmem:[%s4006 + $0x18] sm:$0xf]
  %v4014 = vld [vmem:[%s4006 + $0x1c] sm:$0xf]
  %v4023 = vunpack.c.l.b16 %v4007
  %v4024 = vunpack.c.l.b16 %v4008
  %v4025 = vunpack.c.l.b16 %v4009
  %v4026 = vunpack.c.l.b16 %v4010
  %v4027 = vunpack.c.l.b16 %v4011
  %v4028 = vunpack.c.l.b16 %v4012
  %v4029 = vunpack.c.l.b16 %v4013
  %v4030 = vunpack.c.l.b16 %v4014
  %v4031 = vpack.c.b16 %v4024, %v4023
  %v4032 = vpack.c.b16 %v4026, %v4025
  %v4033 = vpack.c.b16 %v4028, %v4027
  %v4034 = vpack.c.b16 %v4030, %v4029
  %v4040 = vsel %vm756, %v3997, 0
  %v4043 = vsel %vm756, %v3998, 0
  %v4046 = vsel %vm756, %v3999, 0
  %v4049 = vsel %vm756, %v4000, 0
  %v4052 = vsel %vm756, %v4001, 0
  %v4055 = vsel %vm756, %v4002, 0
  %v4058 = vsel %vm756, %v4003, 0
  %v4061 = vsel %vm756, %v4004, 0
  %v4064 = vsel %vm756, %v4005, 0
  %4066 = vmatprep.subr.bf16.mxu0 0
  %4067 = vmatpush1.bf16.msra.mxu0 %v4031
  %4068 = vmatprep.subr.bf16.mxu0 0
  %4069 = vmatpush1.bf16.msra.mxu0 %v4032
  %4070 = vmatprep.subr.bf16.mxu0 0
  %4071 = vmatpush1.bf16.msra.mxu0 %v4033
  %4072 = vmatprep.subr.bf16.mxu0 0
  %4073 = vmatpush1.bf16.msra.mxu0 %v4034
  %4074 = vmatprep.subr.bf16.mxu0 0
  %4075 = vmatpush1.bf16.msra.mxu0 0
  %4076 = vmatprep.subr.bf16.mxu0 0
  %4077 = vmatpush1.bf16.msra.mxu0 0
  %4078 = vmatprep.subr.bf16.mxu0 0
  %4079 = vmatpush1.bf16.msra.mxu0 0
  %4080 = vmatprep.subr.bf16.mxu0 0
  %4081 = vmatpush1.bf16.msra.mxu0 0
  %4082 = vmatprep.subr.bf16.mxu0 0
  %4083 = vmatpush1.bf16.msra.mxu0 0
  %4084 = vmatprep.subr.bf16.mxu0 0
  %4085 = vmatpush1.bf16.msra.mxu0 0
  %4086 = vmatprep.subr.bf16.mxu0 0
  %4087 = vmatpush1.bf16.msra.mxu0 0
  %4088 = vmatprep.subr.bf16.mxu0 0
  %4089 = vmatpush1.bf16.msra.mxu0 0
  %4090 = vmatprep.subr.bf16.mxu0 0
  %4091 = vmatpush1.bf16.msra.mxu0 0
  %4092 = vmatprep.subr.bf16.mxu0 0
  %4093 = vmatpush1.bf16.msra.mxu0 0
  %4094 = vmatprep.subr.bf16.mxu0 0
  %4095 = vmatpush1.bf16.msra.mxu0 0
  %4096 = vmatprep.subr.bf16.mxu0 0
  %4097 = vmatpush1.bf16.msra.mxu0 0
  %4098 = vmatprep.mubr.bf16.mxu0 0
  %4099 = vmatmul.mubr.bf16.gmra.mrb[0].mxu0 %v4040
  %v4100 = vpop.f32.mrb[0].mxu0
  %v4101 = vadd.f32 0.0, %v4100
  %v4102 = vpop.f32.mrb[0].mxu0
  %v4103 = vpop.f32.mrb[0].mxu0
  %v4104 = vadd.f32 0.0, %v4103
  %v4105 = vpop.f32.mrb[0].mxu0
  %4106 = vmatprep.mubr.bf16.mxu0 0
  %4107 = vmatmul.mubr.bf16.gmra.mrb[0].mxu0 %v4043
  %v4108 = vpop.f32.mrb[0].mxu0
  %v4109 = vadd.f32 0.0, %v4108
  %v4110 = vpop.f32.mrb[0].mxu0
  %v4111 = vpop.f32.mrb[0].mxu0
  %v4112 = vadd.f32 0.0, %v4111
  %v4113 = vpop.f32.mrb[0].mxu0
  %4114 = vmatprep.mubr.bf16.mxu0 0
  %4115 = vmatmul.mubr.bf16.gmra.mrb[0].mxu0 %v4046
  %v4116 = vpop.f32.mrb[0].mxu0
  %v4117 = vadd.f32 0.0, %v4116
  %v4118 = vpop.f32.mrb[0].mxu0
  %v4119 = vpop.f32.mrb[0].mxu0
  %v4120 = vadd.f32 0.0, %v4119
  %v4121 = vpop.f32.mrb[0].mxu0
  %4122 = vmatprep.mubr.bf16.mxu0 0
  %4123 = vmatmul.mubr.bf16.gmra.mrb[0].mxu0 %v4049
  %v4124 = vpop.f32.mrb[0].mxu0
  %v4125 = vadd.f32 0.0, %v4124
  %v4126 = vpop.f32.mrb[0].mxu0
  %v4127 = vpop.f32.mrb[0].mxu0
  %v4128 = vadd.f32 0.0, %v4127
  %v4129 = vpop.f32.mrb[0].mxu0
  %4130 = vmatprep.mubr.bf16.mxu0 0
  %4131 = vmatmul.mubr.bf16.gmra.mrb[0].mxu0 %v4052
  %v4132 = vpop.f32.mrb[0].mxu0
  %v4133 = vadd.f32 0.0, %v4132
  %v4134 = vpop.f32.mrb[0].mxu0
  %v4135 = vpop.f32.mrb[0].mxu0
  %v4136 = vadd.f32 0.0, %v4135
  %v4137 = vpop.f32.mrb[0].mxu0
  %4138 = vmatprep.mubr.bf16.mxu0 0
  %4139 = vmatmul.mubr.bf16.gmra.mrb[0].mxu0 %v4055
  %v4140 = vpop.f32.mrb[0].mxu0
  %v4141 = vadd.f32 0.0, %v4140
  %v4142 = vpop.f32.mrb[0].mxu0
  %v4143 = vpop.f32.mrb[0].mxu0
  %v4144 = vadd.f32 0.0, %v4143
  %v4145 = vpop.f32.mrb[0].mxu0
  %4146 = vmatprep.mubr.bf16.mxu0 0
  %4147 = vmatmul.mubr.bf16.gmra.mrb[0].mxu0 %v4058
  %v4148 = vpop.f32.mrb[0].mxu0
  %v4149 = vadd.f32 0.0, %v4148
  %v4150 = vpop.f32.mrb[0].mxu0
  %v4151 = vpop.f32.mrb[0].mxu0
  %v4152 = vadd.f32 0.0, %v4151
  %v4153 = vpop.f32.mrb[0].mxu0
  %4154 = vmatprep.mubr.bf16.mxu0 0
  %4155 = vmatmul.mubr.bf16.gmra.mrb[0].mxu0 %v4061
  %v4156 = vpop.f32.mrb[0].mxu0
  %v4157 = vadd.f32 0.0, %v4156
  %v4158 = vpop.f32.mrb[0].mxu0
  %v4159 = vpop.f32.mrb[0].mxu0
  %v4160 = vadd.f32 0.0, %v4159
  %v4161 = vpop.f32.mrb[0].mxu0
  %4162 = vmatprep.mubr.bf16.mxu0 0
  %4163 = vmatmul.mubr.bf16.gmra.mrb[0].mxu0 %v4064
  %v4164 = vpop.f32.mrb[0].mxu0
  %v4165 = vadd.f32 0.0, %v4164
  %v4166 = vpop.f32.mrb[0].mxu0
  %v4167 = vpop.f32.mrb[0].mxu0
  %v4168 = vadd.f32 0.0, %v4167
  %v4169 = vpop.f32.mrb[0].mxu0
  %4170 = vdwg.mxu0
  %v4171 = vadd.f32 %v3961, %v4101
  %v4172 = vadd.f32 %v3962, %v4104
  %v4173 = vadd.f32 %v3963, %v4109
  %v4174 = vadd.f32 %v3964, %v4112
  %v4175 = vadd.f32 %v3965, %v4117
  %v4176 = vadd.f32 %v3966, %v4120
  %v4177 = vadd.f32 %v3967, %v4125
  %v4178 = vadd.f32 %v3968, %v4128
  %v4179 = vadd.f32 %v3969, %v4133
  %v4180 = vadd.f32 %v3970, %v4136
  %v4181 = vadd.f32 %v3971, %v4141
  %v4182 = vadd.f32 %v3972, %v4144
  %v4183 = vadd.f32 %v3973, %v4149
  %v4184 = vadd.f32 %v3974, %v4152
  %v4185 = vadd.f32 %v3975, %v4157
  %v4186 = vadd.f32 %v3976, %v4160
  %v4187 = vadd.f32 %v3977, %v4165
  %v4188 = vadd.f32 %v3978, %v4168
  %v4189 = vld [vmem:[%s6] sm:$0x1]
  %v4191 = vlaneseq
  %v4192 = vshrl.u32 %v4191, 7
  %v4193 = vsub.s32 0, %v4192
  %v4194 = vrot.slane %v4189, %v4193
  %v4196 = vadd.f32 %v4171, %v4194
  %v4197 = vadd.f32 %v4172, %v4194
  %v4198 = vadd.f32 %v4173, %v4194
  %v4199 = vadd.f32 %v4174, %v4194
  %v4200 = vadd.f32 %v4175, %v4194
  %v4201 = vadd.f32 %v4176, %v4194
  %v4202 = vadd.f32 %v4177, %v4194
  %v4203 = vadd.f32 %v4178, %v4194
  %v4204 = vadd.f32 %v4179, %v4194
  %v4205 = vadd.f32 %v4180, %v4194
  %v4206 = vadd.f32 %v4181, %v4194
  %v4207 = vadd.f32 %v4182, %v4194
  %v4208 = vadd.f32 %v4183, %v4194
  %v4209 = vadd.f32 %v4184, %v4194
  %v4210 = vadd.f32 %v4185, %v4194
  %v4211 = vadd.f32 %v4186, %v4194
  %v4212 = vadd.f32 %v4187, %v4194
  %v4213 = vadd.f32 %v4188, %v4194
  %v4214 = vmax.f32 %v4196, 0.0
  %v4215 = vmax.f32 %v4197, 0.0
  %v4216 = vmax.f32 %v4198, 0.0
  %v4217 = vmax.f32 %v4199, 0.0
  %v4218 = vmax.f32 %v4200, 0.0
  %v4219 = vmax.f32 %v4201, 0.0
  %v4220 = vmax.f32 %v4202, 0.0
  %v4221 = vmax.f32 %v4203, 0.0
  %v4222 = vmax.f32 %v4204, 0.0
  %v4223 = vmax.f32 %v4205, 0.0
  %v4224 = vmax.f32 %v4206, 0.0
  %v4225 = vmax.f32 %v4207, 0.0
  %v4226 = vmax.f32 %v4208, 0.0
  %v4227 = vmax.f32 %v4209, 0.0
  %v4228 = vmax.f32 %v4210, 0.0
  %v4229 = vmax.f32 %v4211, 0.0
  %v4230 = vmax.f32 %v4212, 0.0
  %v4231 = vmax.f32 %v4213, 0.0
  %v4232 = vpack.c.bf16 %v4215, %v4214
  %v4233 = vpack.c.bf16 %v4217, %v4216
  %v4234 = vpack.c.bf16 %v4219, %v4218
  %v4235 = vpack.c.bf16 %v4221, %v4220
  %v4236 = vpack.c.bf16 %v4222, %v4222
  %v4237 = vpack.c.bf16 %v4224, %v4223
  %v4238 = vpack.c.bf16 %v4226, %v4225
  %v4239 = vpack.c.bf16 %v4228, %v4227
  %v4240 = vpack.c.bf16 %v4230, %v4229
  %v4241 = vpack.c.bf16 %v4231, %v4231
  %v4252 = vunpack.c.l.b16 %v4232
  %v4253 = vunpack.c.h.b16 %v4232
  %v4254 = vunpack.c.l.b16 %v4233
  %v4255 = vunpack.c.h.b16 %v4233
  %v4256 = vunpack.c.l.b16 %v4234
  %v4257 = vunpack.c.h.b16 %v4234
  %v4258 = vunpack.c.l.b16 %v4235
  %v4259 = vunpack.c.h.b16 %v4235
  %v4260 = vunpack.c.l.b16 %v4236
  %v4261 = vunpack.c.l.b16 %v4237
  %v4262 = vunpack.c.h.b16 %v4237
  %v4263 = vunpack.c.l.b16 %v4238
  %v4264 = vunpack.c.h.b16 %v4238
  %v4265 = vunpack.c.l.b16 %v4239
  %v4266 = vunpack.c.h.b16 %v4239
  %v4267 = vunpack.c.l.b16 %v4240
  %v4268 = vunpack.c.h.b16 %v4240
  %v4269 = vunpack.c.l.b16 %v4241
  %v4270 = vpack.c.b16 %v4252, %v4252
  %v4271 = vpack.c.b16 %v4253, %v4253
  %v4272 = vpack.c.b16 %v4254, %v4254
  %v4273 = vpack.c.b16 %v4255, %v4255
  %v4274 = vpack.c.b16 %v4256, %v4256
  %v4275 = vpack.c.b16 %v4257, %v4257
  %v4276 = vpack.c.b16 %v4258, %v4258
  %v4277 = vpack.c.b16 %v4259, %v4259
  %v4278 = vpack.c.b16 %v4260, %v4260
  %v4279 = vpack.c.b16 %v4261, %v4261
  %v4280 = vpack.c.b16 %v4262, %v4262
  %v4281 = vpack.c.b16 %v4263, %v4263
  %v4282 = vpack.c.b16 %v4264, %v4264
  %v4283 = vpack.c.b16 %v4265, %v4265
  %v4284 = vpack.c.b16 %v4266, %v4266
  %v4285 = vpack.c.b16 %v4267, %v4267
  %v4286 = vpack.c.b16 %v4268, %v4268
  %v4287 = vpack.c.b16 %v4269, %v4269
  %vm4306 = vcmask 519168
  %4307 = vst.msk [vmem:[%s7] sm:$0xf] %vm4306, %v4270
  %4308 = vst.msk [vmem:[%s7 + $0x4] sm:$0xf] %vm4306, %v4271
  %4309 = vst.msk [vmem:[%s7 + $0x8] sm:$0xf] %vm4306, %v4272
  %4310 = vst.msk [vmem:[%s7 + $0xc] sm:$0xf] %vm4306, %v4273
  %4311 = vst.msk [vmem:[%s7 + $0x10] sm:$0xf] %vm4306, %v4274
  %4312 = vst.msk [vmem:[%s7 + $0x14] sm:$0xf] %vm4306, %v4275
  %4313 = vst.msk [vmem:[%s7 + $0x18] sm:$0xf] %vm4306, %v4276
  %4314 = vst.msk [vmem:[%s7 + $0x1c] sm:$0xf] %vm4306, %v4277
  %4315 = vst.msk [vmem:[%s7 + $0x20] sm:$0xf] %vm4306, %v4278
  %4316 = vst.msk [vmem:[%s7 + $0x24] sm:$0xf] %vm4306, %v4279
  %4317 = vst.msk [vmem:[%s7 + $0x28] sm:$0xf] %vm4306, %v4280
  %4318 = vst.msk [vmem:[%s7 + $0x2c] sm:$0xf] %vm4306, %v4281
  %4319 = vst.msk [vmem:[%s7 + $0x30] sm:$0xf] %vm4306, %v4282
  %4320 = vst.msk [vmem:[%s7 + $0x34] sm:$0xf] %vm4306, %v4283
  %4321 = vst.msk [vmem:[%s7 + $0x38] sm:$0xf] %vm4306, %v4284
  %4322 = vst.msk [vmem:[%s7 + $0x3c] sm:$0xf] %vm4306, %v4285
  %4323 = vst.msk [vmem:[%s7 + $0x40] sm:$0xf] %vm4306, %v4286
  %4324 = vst.msk [vmem:[%s7 + $0x44] sm:$0xf] %vm4306, %v4287
  // Predicated region
  $region30: #{nature_conv_body_forward.2} parent=0 // pred_check
    _
  $region31: #{nature_conv_body_forward.2} parent=0 // pred_check_branch
    %4326 = sbr.rel (0) target = $region33
  $region32: #{nature_conv_body_forward.2} parent=0 // pred_region
    _
  $region33: #{nature_conv_body_forward.2} parent=0 // pred_fallthru
    _
  // Predicated region
  $region34: #{nature_conv_body_forward.2} parent=0 // pred_check
    _
  $region35: #{nature_conv_body_forward.2} parent=0 // pred_check_branch
    %4328 = sbr.rel (0) target = $region37
  $region36: #{nature_conv_body_forward.2} parent=0 // pred_region
    _
  $region37: #{nature_conv_body_forward.2} parent=0 // pred_fallthru
    _

// kernel: nature_conv_body_forward.3
$region0: #{nature_conv_body_forward.3}
  #allocation0 [shape = 'u32[]', space=smem, size = 0x4, offset = 0x4, fixed_abs, tag = 'smem constant byte address 0x4 - core index']
  #allocation1 [shape = 'u32[144,128]{1,0:T(1,128)}', space=vmem, size = 0x12000, scoped, tag = 'internal scratch']
  %s0 = inlined_call_operand.vmem [shape: bf16[2,3136], index: 0, kind: input, shape index: {}]
  %s1 = inlined_call_operand.vmem [shape: bf16[3136,512], index: 1, kind: input, shape index: {}]
  %s2 = inlined_call_operand.vmem [shape: f32[1,512], index: 2, kind: input, shape index: {}]
  %s3 = inlined_call_operand.hbm [shape: f32[2,512], index: 3, kind: output, shape index: {}]
  %s4 = sld [smem:[#allocation0]]
  $region22: #{nature_conv_body_forward.3} parent=0
    _
  %s6 = ssub.s32 1, %s4
  %s7 = scalar_select 0, %s6, %s4
  $region1: #{nature_conv_body_forward.3} parent=0
    #allocation2 [shape = 'u8[4096]{0}', space=vmem, size = 0x1000, scoped, tag = 'output window, operand 0, single buffered']
    #allocation3 [shape = 's32[1]{0}', space=sflag, size = 0x4, scoped, tag = 'scoped memory for nature_conv_body_forward.3']
    %8 = vsyncpa [#allocation3], 0
    // Predicated region
    $region2: #{nature_conv_body_forward.3} parent=1 // pred_check
      _
    $region3: #{nature_conv_body_forward.3} parent=1 // pred_check_branch
      %10 = sbr.rel (0) target = $region5
    $region4: #{nature_conv_body_forward.3} parent=1 // pred_region
      _
    $region5: #{nature_conv_body_forward.3} parent=1 // pred_fallthru
      _
    // Predicated region
    $region6: #{nature_conv_body_forward.3} parent=1 // pred_check
      _
    $region7: #{nature_conv_body_forward.3} parent=1 // pred_check_branch
      %12 = sbr.rel (0) target = $region9
    $region8: #{nature_conv_body_forward.3} parent=1 // pred_region
      _
    $region9: #{nature_conv_body_forward.3} parent=1 // pred_fallthru
      _
    // Predicated region
    $region10: #{nature_conv_body_forward.3} parent=1 // pred_check
      _
    $region11: #{nature_conv_body_forward.3} parent=1 // pred_check_branch
      %14 = sbr.rel (0) target = $region13
    $region12: #{nature_conv_body_forward.3} parent=1 // pred_region
      _
    $region13: #{nature_conv_body_forward.3} parent=1 // pred_fallthru
      _
    %v16 = vld [vmem:[%s0] sm:$0xff]
    %v17 = vld [vmem:[%s0 + $0x8] sm:$0xff]
    %v18 = vld [vmem:[%s0 + $0x10] sm:$0xff]
    %v19 = vld [vmem:[%s0 + $0x18] sm:$0x1]
    %v20 = vld [vmem:[%s1] sm:$0xff]
    %v21 = vld [vmem:[%s1 + $0x8] sm:$0xff]
    %v22 = vld [vmem:[%s1 + $0x10] sm:$0xff]
    %v23 = vld [vmem:[%s1 + $0x18] sm:$0xff]
    %v24 = vld [vmem:[%s1 + $0x20] sm:$0xff]
    %v25 = vld [vmem:[%s1 + $0x28] sm:$0xff]
    %v26 = vld [vmem:[%s1 + $0x30] sm:$0xff]
    %v27 = vld [vmem:[%s1 + $0x38] sm:$0xff]
    %v28 = vld [vmem:[%s1 + $0x40] sm:$0xff]
    %v29 = vld [vmem:[%s1 + $0x48] sm:$0xff]
    %v30 = vld [vmem:[%s1 + $0x50] sm:$0xff]
    %v31 = vld [vmem:[%s1 + $0x58] sm:$0xff]
    %v32 = vld [vmem:[%s1 + $0x60] sm:$0xff]
    %v33 = vld [vmem:[%s1 + $0x68] sm:$0xff]
    %v34 = vld [vmem:[%s1 + $0x70] sm:$0xff]
    %v35 = vld [vmem:[%s1 + $0x78] sm:$0xff]
    %v36 = vld [vmem:[%s1 + $0x80] sm:$0xff]
    %v37 = vld [vmem:[%s1 + $0x88] sm:$0xff]
    %v38 = vld [vmem:[%s1 + $0x90] sm:$0xff]
    %v39 = vld [vmem:[%s1 + $0x98] sm:$0xff]
    %v40 = vld [vmem:[%s1 + $0xa0] sm:$0xff]
    %v41 = vld [vmem:[%s1 + $0xa8] sm:$0xff]
    %v42 = vld [vmem:[%s1 + $0xb0] sm:$0xff]
    %v43 = vld [vmem:[%s1 + $0xb8] sm:$0xff]
    %v44 = vld [vmem:[%s1 + $0xc0] sm:$0xff]
    %v45 = vld [vmem:[%s1 + $0xc8] sm:$0xff]
    %v46 = vld [vmem:[%s1 + $0xd0] sm:$0xff]
    %v47 = vld [vmem:[%s1 + $0xd8] sm:$0xff]
    %v48 = vld [vmem:[%s1 + $0xe0] sm:$0xff]
    %v49 = vld [vmem:[%s1 + $0xe8] sm:$0xff]
    %v50 = vld [vmem:[%s1 + $0xf0] sm:$0xff]
    %v51 = vld [vmem:[%s1 + $0xf8] sm:$0xff]
    %v52 = vld [vmem:[%s1 + $0x100] sm:$0xff]
    %v53 = vld [vmem:[%s1 + $0x108] sm:$0xff]
    %v54 = vld [vmem:[%s1 + $0x110] sm:$0xff]
    %v55 = vld [vmem:[%s1 + $0x118] sm:$0xff]
    %v56 = vld [vmem:[%s1 + $0x120] sm:$0xff]
    %v57 = vld [vmem:[%s1 + $0x128] sm:$0xff]
    %v58 = vld [vmem:[%s1 + $0x130] sm:$0xff]
    %v59 = vld [vmem:[%s1 + $0x138] sm:$0xff]
    %v60 = vld [vmem:[%s1 + $0x140] sm:$0xff]
    %v61 = vld [vmem:[%s1 + $0x148] sm:$0xff]
    %v62 = vld [vmem:[%s1 + $0x150] sm:$0xff]
    %v63 = vld [vmem:[%s1 + $0x158] sm:$0xff]
    %v64 = vld [vmem:[%s1 + $0x160] sm:$0xff]
    %v65 = vld [vmem:[%s1 + $0x168] sm:$0xff]
    %v66 = vld [vmem:[%s1 + $0x170] sm:$0xff]
    %v67 = vld [vmem:[%s1 + $0x178] sm:$0xff]
    %v68 = vld [vmem:[%s1 + $0x180] sm:$0xff]
    %v69 = vld [vmem:[%s1 + $0x188] sm:$0xff]
    %v70 = vld [vmem:[%s1 + $0x190] sm:$0xff]
    %v71 = vld [vmem:[%s1 + $0x198] sm:$0xff]
    %v72 = vld [vmem:[%s1 + $0x1a0] sm:$0xff]
    %v73 = vld [vmem:[%s1 + $0x1a8] sm:$0xff]
    %v74 = vld [vmem:[%s1 + $0x1b0] sm:$0xff]
    %v75 = vld [vmem:[%s1 + $0x1b8] sm:$0xff]
    %v76 = vld [vmem:[%s1 + $0x1c0] sm:$0xff]
    %v77 = vld [vmem:[%s1 + $0x1c8] sm:$0xff]
    %v78 = vld [vmem:[%s1 + $0x1d0] sm:$0xff]
    %v79 = vld [vmem:[%s1 + $0x1d8] sm:$0xff]
    %v80 = vld [vmem:[%s1 + $0x1e0] sm:$0xff]
    %v81 = vld [vmem:[%s1 + $0x1e8] sm:$0xff]
    %v82 = vld [vmem:[%s1 + $0x1f0] sm:$0xff]
    %v83 = vld [vmem:[%s1 + $0x1f8] sm:$0xff]
    %v84 = vld [vmem:[%s1 + $0x200] sm:$0xff]
    %v85 = vld [vmem:[%s1 + $0x208] sm:$0xff]
    %v86 = vld [vmem:[%s1 + $0x210] sm:$0xff]
    %v87 = vld [vmem:[%s1 + $0x218] sm:$0xff]
    %v88 = vld [vmem:[%s1 + $0x220] sm:$0xff]
    %v89 = vld [vmem:[%s1 + $0x228] sm:$0xff]
    %v90 = vld [vmem:[%s1 + $0x230] sm:$0xff]
    %v91 = vld [vmem:[%s1 + $0x238] sm:$0xff]
    %v92 = vld [vmem:[%s1 + $0x240] sm:$0xff]
    %v93 = vld [vmem:[%s1 + $0x248] sm:$0xff]
    %v94 = vld [vmem:[%s1 + $0x250] sm:$0xff]
    %v95 = vld [vmem:[%s1 + $0x258] sm:$0xff]
    %v96 = vld [vmem:[%s1 + $0x260] sm:$0xff]
    %v97 = vld [vmem:[%s1 + $0x268] sm:$0xff]
    %v98 = vld [vmem:[%s1 + $0x270] sm:$0xff]
    %v99 = vld [vmem:[%s1 + $0x278] sm:$0xff]
    %v100 = vld [vmem:[%s1 + $0x280] sm:$0xff]
    %v101 = vld [vmem:[%s1 + $0x288] sm:$0xff]
    %v102 = vld [vmem:[%s1 + $0x290] sm:$0xff]
    %v103 = vld [vmem:[%s1 + $0x298] sm:$0xff]
    %v104 = vld [vmem:[%s1 + $0x2a0] sm:$0xff]
    %v105 = vld [vmem:[%s1 + $0x2a8] sm:$0xff]
    %v106 = vld [vmem:[%s1 + $0x2b0] sm:$0xff]
    %v107 = vld [vmem:[%s1 + $0x2b8] sm:$0xff]
    %v108 = vld [vmem:[%s1 + $0x2c0] sm:$0xff]
    %v109 = vld [vmem:[%s1 + $0x2c8] sm:$0xff]
    %v110 = vld [vmem:[%s1 + $0x2d0] sm:$0xff]
    %v111 = vld [vmem:[%s1 + $0x2d8] sm:$0xff]
    %v112 = vld [vmem:[%s1 + $0x2e0] sm:$0xff]
    %v113 = vld [vmem:[%s1 + $0x2e8] sm:$0xff]
    %v114 = vld [vmem:[%s1 + $0x2f0] sm:$0xff]
    %v115 = vld [vmem:[%s1 + $0x2f8] sm:$0xff]
    %v116 = vld [vmem:[%s1 + $0x300] sm:$0xff]
    %v117 = vld [vmem:[%s1 + $0x308] sm:$0xff]
    %v118 = vld [vmem:[%s1 + $0x310] sm:$0xff]
    %v119 = vld [vmem:[%s1 + $0x318] sm:$0xff]
    %v120 = vld [vmem:[%s1 + $0x320] sm:$0xff]
    %v121 = vld [vmem:[%s1 + $0x328] sm:$0xff]
    %v122 = vld [vmem:[%s1 + $0x330] sm:$0xff]
    %v123 = vld [vmem:[%s1 + $0x338] sm:$0xff]
    %v124 = vld [vmem:[%s1 + $0x340] sm:$0xff]
    %v125 = vld [vmem:[%s1 + $0x348] sm:$0xff]
    %v126 = vld [vmem:[%s1 + $0x350] sm:$0xff]
    %v127 = vld [vmem:[%s1 + $0x358] sm:$0xff]
    %v128 = vld [vmem:[%s1 + $0x360] sm:$0xff]
    %v129 = vld [vmem:[%s1 + $0x368] sm:$0xff]
    %v130 = vld [vmem:[%s1 + $0x370] sm:$0xff]
    %v131 = vld [vmem:[%s1 + $0x378] sm:$0xff]
    %v132 = vld [vmem:[%s1 + $0x380] sm:$0xff]
    %v133 = vld [vmem:[%s1 + $0x388] sm:$0xff]
    %v134 = vld [vmem:[%s1 + $0x390] sm:$0xff]
    %v135 = vld [vmem:[%s1 + $0x398] sm:$0xff]
    %v136 = vld [vmem:[%s1 + $0x3a0] sm:$0xff]
    %v137 = vld [vmem:[%s1 + $0x3a8] sm:$0xff]
    %v138 = vld [vmem:[%s1 + $0x3b0] sm:$0xff]
    %v139 = vld [vmem:[%s1 + $0x3b8] sm:$0xff]
    %v140 = vld [vmem:[%s1 + $0x3c0] sm:$0xff]
    %v141 = vld [vmem:[%s1 + $0x3c8] sm:$0xff]
    %v142 = vld [vmem:[%s1 + $0x3d0] sm:$0xff]
    %v143 = vld [vmem:[%s1 + $0x3d8] sm:$0xff]
    %v144 = vld [vmem:[%s1 + $0x3e0] sm:$0xff]
    %v145 = vld [vmem:[%s1 + $0x3e8] sm:$0xff]
    %v146 = vld [vmem:[%s1 + $0x3f0] sm:$0xff]
    %v147 = vld [vmem:[%s1 + $0x3f8] sm:$0xff]
    %v148 = vld [vmem:[%s1 + $0x400] sm:$0xff]
    %v149 = vld [vmem:[%s1 + $0x408] sm:$0xff]
    %v150 = vld [vmem:[%s1 + $0x410] sm:$0xff]
    %v151 = vld [vmem:[%s1 + $0x418] sm:$0xff]
    %v152 = vld [vmem:[%s1 + $0x420] sm:$0xff]
    %v153 = vld [vmem:[%s1 + $0x428] sm:$0xff]
    %v154 = vld [vmem:[%s1 + $0x430] sm:$0xff]
    %v155 = vld [vmem:[%s1 + $0x438] sm:$0xff]
    %v156 = vld [vmem:[%s1 + $0x440] sm:$0xff]
    %v157 = vld [vmem:[%s1 + $0x448] sm:$0xff]
    %v158 = vld [vmem:[%s1 + $0x450] sm:$0xff]
    %v159 = vld [vmem:[%s1 + $0x458] sm:$0xff]
    %v160 = vld [vmem:[%s1 + $0x460] sm:$0xff]
    %v161 = vld [vmem:[%s1 + $0x468] sm:$0xff]
    %v162 = vld [vmem:[%s1 + $0x470] sm:$0xff]
    %v163 = vld [vmem:[%s1 + $0x478] sm:$0xff]
    %v164 = vld [vmem:[%s1 + $0x480] sm:$0xff]
    %v165 = vld [vmem:[%s1 + $0x488] sm:$0xff]
    %v166 = vld [vmem:[%s1 + $0x490] sm:$0xff]
    %v167 = vld [vmem:[%s1 + $0x498] sm:$0xff]
    %v168 = vld [vmem:[%s1 + $0x4a0] sm:$0xff]
    %v169 = vld [vmem:[%s1 + $0x4a8] sm:$0xff]
    %v170 = vld [vmem:[%s1 + $0x4b0] sm:$0xff]
    %v171 = vld [vmem:[%s1 + $0x4b8] sm:$0xff]
    %v172 = vld [vmem:[%s1 + $0x4c0] sm:$0xff]
    %v173 = vld [vmem:[%s1 + $0x4c8] sm:$0xff]
    %v174 = vld [vmem:[%s1 + $0x4d0] sm:$0xff]
    %v175 = vld [vmem:[%s1 + $0x4d8] sm:$0xff]
    %v176 = vld [vmem:[%s1 + $0x4e0] sm:$0xff]
    %v177 = vld [vmem:[%s1 + $0x4e8] sm:$0xff]
    %v178 = vld [vmem:[%s1 + $0x4f0] sm:$0xff]
    %v179 = vld [vmem:[%s1 + $0x4f8] sm:$0xff]
    %v180 = vld [vmem:[%s1 + $0x500] sm:$0xff]
    %v181 = vld [vmem:[%s1 + $0x508] sm:$0xff]
    %v182 = vld [vmem:[%s1 + $0x510] sm:$0xff]
    %v183 = vld [vmem:[%s1 + $0x518] sm:$0xff]
    %v184 = vld [vmem:[%s1 + $0x520] sm:$0xff]
    %v185 = vld [vmem:[%s1 + $0x528] sm:$0xff]
    %v186 = vld [vmem:[%s1 + $0x530] sm:$0xff]
    %v187 = vld [vmem:[%s1 + $0x538] sm:$0xff]
    %v188 = vld [vmem:[%s1 + $0x540] sm:$0xff]
    %v189 = vld [vmem:[%s1 + $0x548] sm:$0xff]
    %v190 = vld [vmem:[%s1 + $0x550] sm:$0xff]
    %v191 = vld [vmem:[%s1 + $0x558] sm:$0xff]
    %v192 = vld [vmem:[%s1 + $0x560] sm:$0xff]
    %v193 = vld [vmem:[%s1 + $0x568] sm:$0xff]
    %v194 = vld [vmem:[%s1 + $0x570] sm:$0xff]
    %v195 = vld [vmem:[%s1 + $0x578] sm:$0xff]
    %v196 = vld [vmem:[%s1 + $0x580] sm:$0xff]
    %v197 = vld [vmem:[%s1 + $0x588] sm:$0xff]
    %v198 = vld [vmem:[%s1 + $0x590] sm:$0xff]
    %v199 = vld [vmem:[%s1 + $0x598] sm:$0xff]
    %v200 = vld [vmem:[%s1 + $0x5a0] sm:$0xff]
    %v201 = vld [vmem:[%s1 + $0x5a8] sm:$0xff]
    %v202 = vld [vmem:[%s1 + $0x5b0] sm:$0xff]
    %v203 = vld [vmem:[%s1 + $0x5b8] sm:$0xff]
    %v204 = vld [vmem:[%s1 + $0x5c0] sm:$0xff]
    %v205 = vld [vmem:[%s1 + $0x5c8] sm:$0xff]
    %v206 = vld [vmem:[%s1 + $0x5d0] sm:$0xff]
    %v207 = vld [vmem:[%s1 + $0x5d8] sm:$0xff]
    %v208 = vld [vmem:[%s1 + $0x5e0] sm:$0xff]
    %v209 = vld [vmem:[%s1 + $0x5e8] sm:$0xff]
    %v210 = vld [vmem:[%s1 + $0x5f0] sm:$0xff]
    %v211 = vld [vmem:[%s1 + $0x5f8] sm:$0xff]
    %v212 = vld [vmem:[%s1 + $0x600] sm:$0xff]
    %v213 = vld [vmem:[%s1 + $0x608] sm:$0xff]
    %v214 = vld [vmem:[%s1 + $0x610] sm:$0xff]
    %v215 = vld [vmem:[%s1 + $0x618] sm:$0xff]
    %v216 = vld [vmem:[%s1 + $0x620] sm:$0xff]
    %v217 = vld [vmem:[%s1 + $0x628] sm:$0xff]
    %v218 = vld [vmem:[%s1 + $0x630] sm:$0xff]
    %v219 = vld [vmem:[%s1 + $0x638] sm:$0xff]
    %v220 = vld [vmem:[%s1 + $0x640] sm:$0xff]
    %v221 = vld [vmem:[%s1 + $0x648] sm:$0xff]
    %v222 = vld [vmem:[%s1 + $0x650] sm:$0xff]
    %v223 = vld [vmem:[%s1 + $0x658] sm:$0xff]
    %v224 = vld [vmem:[%s1 + $0x660] sm:$0xff]
    %v225 = vld [vmem:[%s1 + $0x668] sm:$0xff]
    %v226 = vld [vmem:[%s1 + $0x670] sm:$0xff]
    %v227 = vld [vmem:[%s1 + $0x678] sm:$0xff]
    %v228 = vld [vmem:[%s1 + $0x680] sm:$0xff]
    %v229 = vld [vmem:[%s1 + $0x688] sm:$0xff]
    %v230 = vld [vmem:[%s1 + $0x690] sm:$0xff]
    %v231 = vld [vmem:[%s1 + $0x698] sm:$0xff]
    %v232 = vld [vmem:[%s1 + $0x6a0] sm:$0xff]
    %v233 = vld [vmem:[%s1 + $0x6a8] sm:$0xff]
    %v234 = vld [vmem:[%s1 + $0x6b0] sm:$0xff]
    %v235 = vld [vmem:[%s1 + $0x6b8] sm:$0xff]
    %v236 = vld [vmem:[%s1 + $0x6c0] sm:$0xff]
    %v237 = vld [vmem:[%s1 + $0x6c8] sm:$0xff]
    %v238 = vld [vmem:[%s1 + $0x6d0] sm:$0xff]
    %v239 = vld [vmem:[%s1 + $0x6d8] sm:$0xff]
    %v240 = vld [vmem:[%s1 + $0x6e0] sm:$0xff]
    %v241 = vld [vmem:[%s1 + $0x6e8] sm:$0xff]
    %v242 = vld [vmem:[%s1 + $0x6f0] sm:$0xff]
    %v243 = vld [vmem:[%s1 + $0x6f8] sm:$0xff]
    %v244 = vld [vmem:[%s1 + $0x700] sm:$0xff]
    %v245 = vld [vmem:[%s1 + $0x708] sm:$0xff]
    %v246 = vld [vmem:[%s1 + $0x710] sm:$0xff]
    %v247 = vld [vmem:[%s1 + $0x718] sm:$0xff]
    %v248 = vld [vmem:[%s1 + $0x720] sm:$0xff]
    %v249 = vld [vmem:[%s1 + $0x728] sm:$0xff]
    %v250 = vld [vmem:[%s1 + $0x730] sm:$0xff]
    %v251 = vld [vmem:[%s1 + $0x738] sm:$0xff]
    %v252 = vld [vmem:[%s1 + $0x740] sm:$0xff]
    %v253 = vld [vmem:[%s1 + $0x748] sm:$0xff]
    %v254 = vld [vmem:[%s1 + $0x750] sm:$0xff]
    %v255 = vld [vmem:[%s1 + $0x758] sm:$0xff]
    %v256 = vld [vmem:[%s1 + $0x760] sm:$0xff]
    %v257 = vld [vmem:[%s1 + $0x768] sm:$0xff]
    %v258 = vld [vmem:[%s1 + $0x770] sm:$0xff]
    %v259 = vld [vmem:[%s1 + $0x778] sm:$0xff]
    %v260 = vld [vmem:[%s1 + $0x780] sm:$0xff]
    %v261 = vld [vmem:[%s1 + $0x788] sm:$0xff]
    %v262 = vld [vmem:[%s1 + $0x790] sm:$0xff]
    %v263 = vld [vmem:[%s1 + $0x798] sm:$0xff]
    %v264 = vld [vmem:[%s1 + $0x7a0] sm:$0xff]
    %v265 = vld [vmem:[%s1 + $0x7a8] sm:$0xff]
    %v266 = vld [vmem:[%s1 + $0x7b0] sm:$0xff]
    %v267 = vld [vmem:[%s1 + $0x7b8] sm:$0xff]
    %v268 = vld [vmem:[%s1 + $0x7c0] sm:$0xff]
    %v269 = vld [vmem:[%s1 + $0x7c8] sm:$0xff]
    %v270 = vld [vmem:[%s1 + $0x7d0] sm:$0xff]
    %v271 = vld [vmem:[%s1 + $0x7d8] sm:$0xff]
    %v272 = vld [vmem:[%s1 + $0x7e0] sm:$0xff]
    %v273 = vld [vmem:[%s1 + $0x7e8] sm:$0xff]
    %v274 = vld [vmem:[%s1 + $0x7f0] sm:$0xff]
    %v275 = vld [vmem:[%s1 + $0x7f8] sm:$0xff]
    %v276 = vld [vmem:[%s1 + $0x800] sm:$0xff]
    %v277 = vld [vmem:[%s1 + $0x808] sm:$0xff]
    %v278 = vld [vmem:[%s1 + $0x810] sm:$0xff]
    %v279 = vld [vmem:[%s1 + $0x818] sm:$0xff]
    %v280 = vld [vmem:[%s1 + $0x820] sm:$0xff]
    %v281 = vld [vmem:[%s1 + $0x828] sm:$0xff]
    %v282 = vld [vmem:[%s1 + $0x830] sm:$0xff]
    %v283 = vld [vmem:[%s1 + $0x838] sm:$0xff]
    %v284 = vld [vmem:[%s1 + $0x840] sm:$0xff]
    %v285 = vld [vmem:[%s1 + $0x848] sm:$0xff]
    %v286 = vld [vmem:[%s1 + $0x850] sm:$0xff]
    %v287 = vld [vmem:[%s1 + $0x858] sm:$0xff]
    %v288 = vld [vmem:[%s1 + $0x860] sm:$0xff]
    %v289 = vld [vmem:[%s1 + $0x868] sm:$0xff]
    %v290 = vld [vmem:[%s1 + $0x870] sm:$0xff]
    %v291 = vld [vmem:[%s1 + $0x878] sm:$0xff]
    %v292 = vld [vmem:[%s1 + $0x880] sm:$0xff]
    %v293 = vld [vmem:[%s1 + $0x888] sm:$0xff]
    %v294 = vld [vmem:[%s1 + $0x890] sm:$0xff]
    %v295 = vld [vmem:[%s1 + $0x898] sm:$0xff]
    %v296 = vld [vmem:[%s1 + $0x8a0] sm:$0xff]
    %v297 = vld [vmem:[%s1 + $0x8a8] sm:$0xff]
    %v298 = vld [vmem:[%s1 + $0x8b0] sm:$0xff]
    %v299 = vld [vmem:[%s1 + $0x8b8] sm:$0xff]
    %v300 = vld [vmem:[%s1 + $0x8c0] sm:$0xff]
    %v301 = vld [vmem:[%s1 + $0x8c8] sm:$0xff]
    %v302 = vld [vmem:[%s1 + $0x8d0] sm:$0xff]
    %v303 = vld [vmem:[%s1 + $0x8d8] sm:$0xff]
    %v304 = vld [vmem:[%s1 + $0x8e0] sm:$0xff]
    %v305 = vld [vmem:[%s1 + $0x8e8] sm:$0xff]
    %v306 = vld [vmem:[%s1 + $0x8f0] sm:$0xff]
    %v307 = vld [vmem:[%s1 + $0x8f8] sm:$0xff]
    %v308 = vld [vmem:[%s1 + $0x900] sm:$0xff]
    %v309 = vld [vmem:[%s1 + $0x908] sm:$0xff]
    %v310 = vld [vmem:[%s1 + $0x910] sm:$0xff]
    %v311 = vld [vmem:[%s1 + $0x918] sm:$0xff]
    %v312 = vld [vmem:[%s1 + $0x920] sm:$0xff]
    %v313 = vld [vmem:[%s1 + $0x928] sm:$0xff]
    %v314 = vld [vmem:[%s1 + $0x930] sm:$0xff]
    %v315 = vld [vmem:[%s1 + $0x938] sm:$0xff]
    %v316 = vld [vmem:[%s1 + $0x940] sm:$0xff]
    %v317 = vld [vmem:[%s1 + $0x948] sm:$0xff]
    %v318 = vld [vmem:[%s1 + $0x950] sm:$0xff]
    %v319 = vld [vmem:[%s1 + $0x958] sm:$0xff]
    %v320 = vld [vmem:[%s1 + $0x960] sm:$0xff]
    %v321 = vld [vmem:[%s1 + $0x968] sm:$0xff]
    %v322 = vld [vmem:[%s1 + $0x970] sm:$0xff]
    %v323 = vld [vmem:[%s1 + $0x978] sm:$0xff]
    %v324 = vld [vmem:[%s1 + $0x980] sm:$0xff]
    %v325 = vld [vmem:[%s1 + $0x988] sm:$0xff]
    %v326 = vld [vmem:[%s1 + $0x990] sm:$0xff]
    %v327 = vld [vmem:[%s1 + $0x998] sm:$0xff]
    %v328 = vld [vmem:[%s1 + $0x9a0] sm:$0xff]
    %v329 = vld [vmem:[%s1 + $0x9a8] sm:$0xff]
    %v330 = vld [vmem:[%s1 + $0x9b0] sm:$0xff]
    %v331 = vld [vmem:[%s1 + $0x9b8] sm:$0xff]
    %v332 = vld [vmem:[%s1 + $0x9c0] sm:$0xff]
    %v333 = vld [vmem:[%s1 + $0x9c8] sm:$0xff]
    %v334 = vld [vmem:[%s1 + $0x9d0] sm:$0xff]
    %v335 = vld [vmem:[%s1 + $0x9d8] sm:$0xff]
    %v336 = vld [vmem:[%s1 + $0x9e0] sm:$0xff]
    %v337 = vld [vmem:[%s1 + $0x9e8] sm:$0xff]
    %v338 = vld [vmem:[%s1 + $0x9f0] sm:$0xff]
    %v339 = vld [vmem:[%s1 + $0x9f8] sm:$0xff]
    %v340 = vld [vmem:[%s1 + $0xa00] sm:$0xff]
    %v341 = vld [vmem:[%s1 + $0xa08] sm:$0xff]
    %v342 = vld [vmem:[%s1 + $0xa10] sm:$0xff]
    %v343 = vld [vmem:[%s1 + $0xa18] sm:$0xff]
    %v344 = vld [vmem:[%s1 + $0xa20] sm:$0xff]
    %v345 = vld [vmem:[%s1 + $0xa28] sm:$0xff]
    %v346 = vld [vmem:[%s1 + $0xa30] sm:$0xff]
    %v347 = vld [vmem:[%s1 + $0xa38] sm:$0xff]
    %v348 = vld [vmem:[%s1 + $0xa40] sm:$0xff]
    %v349 = vld [vmem:[%s1 + $0xa48] sm:$0xff]
    %v350 = vld [vmem:[%s1 + $0xa50] sm:$0xff]
    %v351 = vld [vmem:[%s1 + $0xa58] sm:$0xff]
    %v352 = vld [vmem:[%s1 + $0xa60] sm:$0xff]
    %v353 = vld [vmem:[%s1 + $0xa68] sm:$0xff]
    %v354 = vld [vmem:[%s1 + $0xa70] sm:$0xff]
    %v355 = vld [vmem:[%s1 + $0xa78] sm:$0xff]
    %v356 = vld [vmem:[%s1 + $0xa80] sm:$0xff]
    %v357 = vld [vmem:[%s1 + $0xa88] sm:$0xff]
    %v358 = vld [vmem:[%s1 + $0xa90] sm:$0xff]
    %v359 = vld [vmem:[%s1 + $0xa98] sm:$0xff]
    %v360 = vld [vmem:[%s1 + $0xaa0] sm:$0xff]
    %v361 = vld [vmem:[%s1 + $0xaa8] sm:$0xff]
    %v362 = vld [vmem:[%s1 + $0xab0] sm:$0xff]
    %v363 = vld [vmem:[%s1 + $0xab8] sm:$0xff]
    %v364 = vld [vmem:[%s1 + $0xac0] sm:$0xff]
    %v365 = vld [vmem:[%s1 + $0xac8] sm:$0xff]
    %v366 = vld [vmem:[%s1 + $0xad0] sm:$0xff]
    %v367 = vld [vmem:[%s1 + $0xad8] sm:$0xff]
    %v368 = vld [vmem:[%s1 + $0xae0] sm:$0xff]
    %v369 = vld [vmem:[%s1 + $0xae8] sm:$0xff]
    %v370 = vld [vmem:[%s1 + $0xaf0] sm:$0xff]
    %v371 = vld [vmem:[%s1 + $0xaf8] sm:$0xff]
    %v372 = vld [vmem:[%s1 + $0xb00] sm:$0xff]
    %v373 = vld [vmem:[%s1 + $0xb08] sm:$0xff]
    %v374 = vld [vmem:[%s1 + $0xb10] sm:$0xff]
    %v375 = vld [vmem:[%s1 + $0xb18] sm:$0xff]
    %v376 = vld [vmem:[%s1 + $0xb20] sm:$0xff]
    %v377 = vld [vmem:[%s1 + $0xb28] sm:$0xff]
    %v378 = vld [vmem:[%s1 + $0xb30] sm:$0xff]
    %v379 = vld [vmem:[%s1 + $0xb38] sm:$0xff]
    %v380 = vld [vmem:[%s1 + $0xb40] sm:$0xff]
    %v381 = vld [vmem:[%s1 + $0xb48] sm:$0xff]
    %v382 = vld [vmem:[%s1 + $0xb50] sm:$0xff]
    %v383 = vld [vmem:[%s1 + $0xb58] sm:$0xff]
    %v384 = vld [vmem:[%s1 + $0xb60] sm:$0xff]
    %v385 = vld [vmem:[%s1 + $0xb68] sm:$0xff]
    %v386 = vld [vmem:[%s1 + $0xb70] sm:$0xff]
    %v387 = vld [vmem:[%s1 + $0xb78] sm:$0xff]
    %v388 = vld [vmem:[%s1 + $0xb80] sm:$0xff]
    %v389 = vld [vmem:[%s1 + $0xb88] sm:$0xff]
    %v390 = vld [vmem:[%s1 + $0xb90] sm:$0xff]
    %v391 = vld [vmem:[%s1 + $0xb98] sm:$0xff]
    %v392 = vld [vmem:[%s1 + $0xba0] sm:$0xff]
    %v393 = vld [vmem:[%s1 + $0xba8] sm:$0xff]
    %v394 = vld [vmem:[%s1 + $0xbb0] sm:$0xff]
    %v395 = vld [vmem:[%s1 + $0xbb8] sm:$0xff]
    %v396 = vld [vmem:[%s1 + $0xbc0] sm:$0xff]
    %v397 = vld [vmem:[%s1 + $0xbc8] sm:$0xff]
    %v398 = vld [vmem:[%s1 + $0xbd0] sm:$0xff]
    %v399 = vld [vmem:[%s1 + $0xbd8] sm:$0xff]
    %v400 = vld [vmem:[%s1 + $0xbe0] sm:$0xff]
    %v401 = vld [vmem:[%s1 + $0xbe8] sm:$0xff]
    %v402 = vld [vmem:[%s1 + $0xbf0] sm:$0xff]
    %v403 = vld [vmem:[%s1 + $0xbf8] sm:$0xff]
    %v404 = vld [vmem:[%s1 + $0xc00] sm:$0xff]
    %v405 = vld [vmem:[%s1 + $0xc08] sm:$0xff]
    %v406 = vld [vmem:[%s1 + $0xc10] sm:$0xff]
    %v407 = vld [vmem:[%s1 + $0xc18] sm:$0xff]
    %v408 = vld [vmem:[%s1 + $0xc20] sm:$0xff]
    %v409 = vld [vmem:[%s1 + $0xc28] sm:$0xff]
    %v410 = vld [vmem:[%s1 + $0xc30] sm:$0xff]
    %v411 = vld [vmem:[%s1 + $0xc38] sm:$0xff]
    %v412 = vld [vmem:[%s1 + $0xc40] sm:$0xff]
    %v413 = vld [vmem:[%s1 + $0xc48] sm:$0xff]
    %v414 = vld [vmem:[%s1 + $0xc50] sm:$0xff]
    %v415 = vld [vmem:[%s1 + $0xc58] sm:$0xff]
    %v416 = vld [vmem:[%s1 + $0xc60] sm:$0xff]
    %v417 = vld [vmem:[%s1 + $0xc68] sm:$0xff]
    %v418 = vld [vmem:[%s1 + $0xc70] sm:$0xff]
    %v419 = vld [vmem:[%s1 + $0xc78] sm:$0xff]
    %v420 = vld [vmem:[%s1 + $0xc80] sm:$0xff]
    %v421 = vld [vmem:[%s1 + $0xc88] sm:$0xff]
    %v422 = vld [vmem:[%s1 + $0xc90] sm:$0xff]
    %v423 = vld [vmem:[%s1 + $0xc98] sm:$0xff]
    %v424 = vld [vmem:[%s1 + $0xca0] sm:$0xff]
    %v425 = vld [vmem:[%s1 + $0xca8] sm:$0xff]
    %v426 = vld [vmem:[%s1 + $0xcb0] sm:$0xff]
    %v427 = vld [vmem:[%s1 + $0xcb8] sm:$0xff]
    %v428 = vld [vmem:[%s1 + $0xcc0] sm:$0xff]
    %v429 = vld [vmem:[%s1 + $0xcc8] sm:$0xff]
    %v430 = vld [vmem:[%s1 + $0xcd0] sm:$0xff]
    %v431 = vld [vmem:[%s1 + $0xcd8] sm:$0xff]
    %v432 = vld [vmem:[%s1 + $0xce0] sm:$0xff]
    %v433 = vld [vmem:[%s1 + $0xce8] sm:$0xff]
    %v434 = vld [vmem:[%s1 + $0xcf0] sm:$0xff]
    %v435 = vld [vmem:[%s1 + $0xcf8] sm:$0xff]
    %v436 = vld [vmem:[%s1 + $0xd00] sm:$0xff]
    %v437 = vld [vmem:[%s1 + $0xd08] sm:$0xff]
    %v438 = vld [vmem:[%s1 + $0xd10] sm:$0xff]
    %v439 = vld [vmem:[%s1 + $0xd18] sm:$0xff]
    %v440 = vld [vmem:[%s1 + $0xd20] sm:$0xff]
    %v441 = vld [vmem:[%s1 + $0xd28] sm:$0xff]
    %v442 = vld [vmem:[%s1 + $0xd30] sm:$0xff]
    %v443 = vld [vmem:[%s1 + $0xd38] sm:$0xff]
    %v444 = vld [vmem:[%s1 + $0xd40] sm:$0xff]
    %v445 = vld [vmem:[%s1 + $0xd48] sm:$0xff]
    %v446 = vld [vmem:[%s1 + $0xd50] sm:$0xff]
    %v447 = vld [vmem:[%s1 + $0xd58] sm:$0xff]
    %v448 = vld [vmem:[%s1 + $0xd60] sm:$0xff]
    %v449 = vld [vmem:[%s1 + $0xd68] sm:$0xff]
    %v450 = vld [vmem:[%s1 + $0xd70] sm:$0xff]
    %v451 = vld [vmem:[%s1 + $0xd78] sm:$0xff]
    %v452 = vld [vmem:[%s1 + $0xd80] sm:$0xff]
    %v453 = vld [vmem:[%s1 + $0xd88] sm:$0xff]
    %v454 = vld [vmem:[%s1 + $0xd90] sm:$0xff]
    %v455 = vld [vmem:[%s1 + $0xd98] sm:$0xff]
    %v456 = vld [vmem:[%s1 + $0xda0] sm:$0xff]
    %v457 = vld [vmem:[%s1 + $0xda8] sm:$0xff]
    %v458 = vld [vmem:[%s1 + $0xdb0] sm:$0xff]
    %v459 = vld [vmem:[%s1 + $0xdb8] sm:$0xff]
    %v460 = vld [vmem:[%s1 + $0xdc0] sm:$0xff]
    %v461 = vld [vmem:[%s1 + $0xdc8] sm:$0xff]
    %v462 = vld [vmem:[%s1 + $0xdd0] sm:$0xff]
    %v463 = vld [vmem:[%s1 + $0xdd8] sm:$0xff]
    %v464 = vld [vmem:[%s1 + $0xde0] sm:$0xff]
    %v465 = vld [vmem:[%s1 + $0xde8] sm:$0xff]
    %v466 = vld [vmem:[%s1 + $0xdf0] sm:$0xff]
    %v467 = vld [vmem:[%s1 + $0xdf8] sm:$0xff]
    %v468 = vld [vmem:[%s1 + $0xe00] sm:$0xff]
    %v469 = vld [vmem:[%s1 + $0xe08] sm:$0xff]
    %v470 = vld [vmem:[%s1 + $0xe10] sm:$0xff]
    %v471 = vld [vmem:[%s1 + $0xe18] sm:$0xff]
    %v472 = vld [vmem:[%s1 + $0xe20] sm:$0xff]
    %v473 = vld [vmem:[%s1 + $0xe28] sm:$0xff]
    %v474 = vld [vmem:[%s1 + $0xe30] sm:$0xff]
    %v475 = vld [vmem:[%s1 + $0xe38] sm:$0xff]
    %v476 = vld [vmem:[%s1 + $0xe40] sm:$0xff]
    %v477 = vld [vmem:[%s1 + $0xe48] sm:$0xff]
    %v478 = vld [vmem:[%s1 + $0xe50] sm:$0xff]
    %v479 = vld [vmem:[%s1 + $0xe58] sm:$0xff]
    %v480 = vld [vmem:[%s1 + $0xe60] sm:$0xff]
    %v481 = vld [vmem:[%s1 + $0xe68] sm:$0xff]
    %v482 = vld [vmem:[%s1 + $0xe70] sm:$0xff]
    %v483 = vld [vmem:[%s1 + $0xe78] sm:$0xff]
    %v484 = vld [vmem:[%s1 + $0xe80] sm:$0xff]
    %v485 = vld [vmem:[%s1 + $0xe88] sm:$0xff]
    %v486 = vld [vmem:[%s1 + $0xe90] sm:$0xff]
    %v487 = vld [vmem:[%s1 + $0xe98] sm:$0xff]
    %v488 = vld [vmem:[%s1 + $0xea0] sm:$0xff]
    %v489 = vld [vmem:[%s1 + $0xea8] sm:$0xff]
    %v490 = vld [vmem:[%s1 + $0xeb0] sm:$0xff]
    %v491 = vld [vmem:[%s1 + $0xeb8] sm:$0xff]
    %v492 = vld [vmem:[%s1 + $0xec0] sm:$0xff]
    %v493 = vld [vmem:[%s1 + $0xec8] sm:$0xff]
    %v494 = vld [vmem:[%s1 + $0xed0] sm:$0xff]
    %v495 = vld [vmem:[%s1 + $0xed8] sm:$0xff]
    %v496 = vld [vmem:[%s1 + $0xee0] sm:$0xff]
    %v497 = vld [vmem:[%s1 + $0xee8] sm:$0xff]
    %v498 = vld [vmem:[%s1 + $0xef0] sm:$0xff]
    %v499 = vld [vmem:[%s1 + $0xef8] sm:$0xff]
    %v500 = vld [vmem:[%s1 + $0xf00] sm:$0xff]
    %v501 = vld [vmem:[%s1 + $0xf08] sm:$0xff]
    %v502 = vld [vmem:[%s1 + $0xf10] sm:$0xff]
    %v503 = vld [vmem:[%s1 + $0xf18] sm:$0xff]
    %v504 = vld [vmem:[%s1 + $0xf20] sm:$0xff]
    %v505 = vld [vmem:[%s1 + $0xf28] sm:$0xff]
    %v506 = vld [vmem:[%s1 + $0xf30] sm:$0xff]
    %v507 = vld [vmem:[%s1 + $0xf38] sm:$0xff]
    %v508 = vld [vmem:[%s1 + $0xf40] sm:$0xff]
    %v509 = vld [vmem:[%s1 + $0xf48] sm:$0xff]
    %v510 = vld [vmem:[%s1 + $0xf50] sm:$0xff]
    %v511 = vld [vmem:[%s1 + $0xf58] sm:$0xff]
    %v512 = vld [vmem:[%s1 + $0xf60] sm:$0xff]
    %v513 = vld [vmem:[%s1 + $0xf68] sm:$0xff]
    %v514 = vld [vmem:[%s1 + $0xf70] sm:$0xff]
    %v515 = vld [vmem:[%s1 + $0xf78] sm:$0xff]
    %v516 = vld [vmem:[%s1 + $0xf80] sm:$0xff]
    %v517 = vld [vmem:[%s1 + $0xf88] sm:$0xff]
    %v518 = vld [vmem:[%s1 + $0xf90] sm:$0xff]
    %v519 = vld [vmem:[%s1 + $0xf98] sm:$0xff]
    %v520 = vld [vmem:[%s1 + $0xfa0] sm:$0xff]
    %v521 = vld [vmem:[%s1 + $0xfa8] sm:$0xff]
    %v522 = vld [vmem:[%s1 + $0xfb0] sm:$0xff]
    %v523 = vld [vmem:[%s1 + $0xfb8] sm:$0xff]
    %v524 = vld [vmem:[%s1 + $0xfc0] sm:$0xff]
    %v525 = vld [vmem:[%s1 + $0xfc8] sm:$0xff]
    %v526 = vld [vmem:[%s1 + $0xfd0] sm:$0xff]
    %v527 = vld [vmem:[%s1 + $0xfd8] sm:$0xff]
    %v528 = vld [vmem:[%s1 + $0xfe0] sm:$0xff]
    %v529 = vld [vmem:[%s1 + $0xfe8] sm:$0xff]
    %v530 = vld [vmem:[%s1 + $0xff0] sm:$0xff]
    %v531 = vld [vmem:[%s1 + $0xff8] sm:$0xff]
    %v532 = vld [vmem:[%s1 + $0x1000] sm:$0xff]
    %v533 = vld [vmem:[%s1 + $0x1008] sm:$0xff]
    %v534 = vld [vmem:[%s1 + $0x1010] sm:$0xff]
    %v535 = vld [vmem:[%s1 + $0x1018] sm:$0xff]
    %v536 = vld [vmem:[%s1 + $0x1020] sm:$0xff]
    %v537 = vld [vmem:[%s1 + $0x1028] sm:$0xff]
    %v538 = vld [vmem:[%s1 + $0x1030] sm:$0xff]
    %v539 = vld [vmem:[%s1 + $0x1038] sm:$0xff]
    %v540 = vld [vmem:[%s1 + $0x1040] sm:$0xff]
    %v541 = vld [vmem:[%s1 + $0x1048] sm:$0xff]
    %v542 = vld [vmem:[%s1 + $0x1050] sm:$0xff]
    %v543 = vld [vmem:[%s1 + $0x1058] sm:$0xff]
    %v544 = vld [vmem:[%s1 + $0x1060] sm:$0xff]
    %v545 = vld [vmem:[%s1 + $0x1068] sm:$0xff]
    %v546 = vld [vmem:[%s1 + $0x1070] sm:$0xff]
    %v547 = vld [vmem:[%s1 + $0x1078] sm:$0xff]
    %v548 = vld [vmem:[%s1 + $0x1080] sm:$0xff]
    %v549 = vld [vmem:[%s1 + $0x1088] sm:$0xff]
    %v550 = vld [vmem:[%s1 + $0x1090] sm:$0xff]
    %v551 = vld [vmem:[%s1 + $0x1098] sm:$0xff]
    %v552 = vld [vmem:[%s1 + $0x10a0] sm:$0xff]
    %v553 = vld [vmem:[%s1 + $0x10a8] sm:$0xff]
    %v554 = vld [vmem:[%s1 + $0x10b0] sm:$0xff]
    %v555 = vld [vmem:[%s1 + $0x10b8] sm:$0xff]
    %v556 = vld [vmem:[%s1 + $0x10c0] sm:$0xff]
    %v557 = vld [vmem:[%s1 + $0x10c8] sm:$0xff]
    %v558 = vld [vmem:[%s1 + $0x10d0] sm:$0xff]
    %v559 = vld [vmem:[%s1 + $0x10d8] sm:$0xff]
    %v560 = vld [vmem:[%s1 + $0x10e0] sm:$0xff]
    %v561 = vld [vmem:[%s1 + $0x10e8] sm:$0xff]
    %v562 = vld [vmem:[%s1 + $0x10f0] sm:$0xff]
    %v563 = vld [vmem:[%s1 + $0x10f8] sm:$0xff]
    %v564 = vld [vmem:[%s1 + $0x1100] sm:$0xff]
    %v565 = vld [vmem:[%s1 + $0x1108] sm:$0xff]
    %v566 = vld [vmem:[%s1 + $0x1110] sm:$0xff]
    %v567 = vld [vmem:[%s1 + $0x1118] sm:$0xff]
    %v568 = vld [vmem:[%s1 + $0x1120] sm:$0xff]
    %v569 = vld [vmem:[%s1 + $0x1128] sm:$0xff]
    %v570 = vld [vmem:[%s1 + $0x1130] sm:$0xff]
    %v571 = vld [vmem:[%s1 + $0x1138] sm:$0xff]
    %v572 = vld [vmem:[%s1 + $0x1140] sm:$0xff]
    %v573 = vld [vmem:[%s1 + $0x1148] sm:$0xff]
    %v574 = vld [vmem:[%s1 + $0x1150] sm:$0xff]
    %v575 = vld [vmem:[%s1 + $0x1158] sm:$0xff]
    %v576 = vld [vmem:[%s1 + $0x1160] sm:$0xff]
    %v577 = vld [vmem:[%s1 + $0x1168] sm:$0xff]
    %v578 = vld [vmem:[%s1 + $0x1170] sm:$0xff]
    %v579 = vld [vmem:[%s1 + $0x1178] sm:$0xff]
    %v580 = vld [vmem:[%s1 + $0x1180] sm:$0xff]
    %v581 = vld [vmem:[%s1 + $0x1188] sm:$0xff]
    %v582 = vld [vmem:[%s1 + $0x1190] sm:$0xff]
    %v583 = vld [vmem:[%s1 + $0x1198] sm:$0xff]
    %v584 = vld [vmem:[%s1 + $0x11a0] sm:$0xff]
    %v585 = vld [vmem:[%s1 + $0x11a8] sm:$0xff]
    %v586 = vld [vmem:[%s1 + $0x11b0] sm:$0xff]
    %v587 = vld [vmem:[%s1 + $0x11b8] sm:$0xff]
    %v588 = vld [vmem:[%s1 + $0x11c0] sm:$0xff]
    %v589 = vld [vmem:[%s1 + $0x11c8] sm:$0xff]
    %v590 = vld [vmem:[%s1 + $0x11d0] sm:$0xff]
    %v591 = vld [vmem:[%s1 + $0x11d8] sm:$0xff]
    %v592 = vld [vmem:[%s1 + $0x11e0] sm:$0xff]
    %v593 = vld [vmem:[%s1 + $0x11e8] sm:$0xff]
    %v594 = vld [vmem:[%s1 + $0x11f0] sm:$0xff]
    %v595 = vld [vmem:[%s1 + $0x11f8] sm:$0xff]
    %v596 = vld [vmem:[%s1 + $0x1200] sm:$0xff]
    %v597 = vld [vmem:[%s1 + $0x1208] sm:$0xff]
    %v598 = vld [vmem:[%s1 + $0x1210] sm:$0xff]
    %v599 = vld [vmem:[%s1 + $0x1218] sm:$0xff]
    %v600 = vld [vmem:[%s1 + $0x1220] sm:$0xff]
    %v601 = vld [vmem:[%s1 + $0x1228] sm:$0xff]
    %v602 = vld [vmem:[%s1 + $0x1230] sm:$0xff]
    %v603 = vld [vmem:[%s1 + $0x1238] sm:$0xff]
    %v604 = vld [vmem:[%s1 + $0x1240] sm:$0xff]
    %v605 = vld [vmem:[%s1 + $0x1248] sm:$0xff]
    %v606 = vld [vmem:[%s1 + $0x1250] sm:$0xff]
    %v607 = vld [vmem:[%s1 + $0x1258] sm:$0xff]
    %v608 = vld [vmem:[%s1 + $0x1260] sm:$0xff]
    %v609 = vld [vmem:[%s1 + $0x1268] sm:$0xff]
    %v610 = vld [vmem:[%s1 + $0x1270] sm:$0xff]
    %v611 = vld [vmem:[%s1 + $0x1278] sm:$0xff]
    %v612 = vld [vmem:[%s1 + $0x1280] sm:$0xff]
    %v613 = vld [vmem:[%s1 + $0x1288] sm:$0xff]
    %v614 = vld [vmem:[%s1 + $0x1290] sm:$0xff]
    %v615 = vld [vmem:[%s1 + $0x1298] sm:$0xff]
    %v616 = vld [vmem:[%s1 + $0x12a0] sm:$0xff]
    %v617 = vld [vmem:[%s1 + $0x12a8] sm:$0xff]
    %v618 = vld [vmem:[%s1 + $0x12b0] sm:$0xff]
    %v619 = vld [vmem:[%s1 + $0x12b8] sm:$0xff]
    %v620 = vld [vmem:[%s1 + $0x12c0] sm:$0xff]
    %v621 = vld [vmem:[%s1 + $0x12c8] sm:$0xff]
    %v622 = vld [vmem:[%s1 + $0x12d0] sm:$0xff]
    %v623 = vld [vmem:[%s1 + $0x12d8] sm:$0xff]
    %v624 = vld [vmem:[%s1 + $0x12e0] sm:$0xff]
    %v625 = vld [vmem:[%s1 + $0x12e8] sm:$0xff]
    %v626 = vld [vmem:[%s1 + $0x12f0] sm:$0xff]
    %v627 = vld [vmem:[%s1 + $0x12f8] sm:$0xff]
    %v628 = vld [vmem:[%s1 + $0x1300] sm:$0xff]
    %v629 = vld [vmem:[%s1 + $0x1308] sm:$0xff]
    %v630 = vld [vmem:[%s1 + $0x1310] sm:$0xff]
    %v631 = vld [vmem:[%s1 + $0x1318] sm:$0xff]
    %v632 = vld [vmem:[%s1 + $0x1320] sm:$0xff]
    %v633 = vld [vmem:[%s1 + $0x1328] sm:$0xff]
    %v634 = vld [vmem:[%s1 + $0x1330] sm:$0xff]
    %v635 = vld [vmem:[%s1 + $0x1338] sm:$0xff]
    %v636 = vld [vmem:[%s1 + $0x1340] sm:$0xff]
    %v637 = vld [vmem:[%s1 + $0x1348] sm:$0xff]
    %v638 = vld [vmem:[%s1 + $0x1350] sm:$0xff]
    %v639 = vld [vmem:[%s1 + $0x1358] sm:$0xff]
    %v640 = vld [vmem:[%s1 + $0x1360] sm:$0xff]
    %v641 = vld [vmem:[%s1 + $0x1368] sm:$0xff]
    %v642 = vld [vmem:[%s1 + $0x1370] sm:$0xff]
    %v643 = vld [vmem:[%s1 + $0x1378] sm:$0xff]
    %v644 = vld [vmem:[%s1 + $0x1380] sm:$0xff]
    %v645 = vld [vmem:[%s1 + $0x1388] sm:$0xff]
    %v646 = vld [vmem:[%s1 + $0x1390] sm:$0xff]
    %v647 = vld [vmem:[%s1 + $0x1398] sm:$0xff]
    %v648 = vld [vmem:[%s1 + $0x13a0] sm:$0xff]
    %v649 = vld [vmem:[%s1 + $0x13a8] sm:$0xff]
    %v650 = vld [vmem:[%s1 + $0x13b0] sm:$0xff]
    %v651 = vld [vmem:[%s1 + $0x13b8] sm:$0xff]
    %v652 = vld [vmem:[%s1 + $0x13c0] sm:$0xff]
    %v653 = vld [vmem:[%s1 + $0x13c8] sm:$0xff]
    %v654 = vld [vmem:[%s1 + $0x13d0] sm:$0xff]
    %v655 = vld [vmem:[%s1 + $0x13d8] sm:$0xff]
    %v656 = vld [vmem:[%s1 + $0x13e0] sm:$0xff]
    %v657 = vld [vmem:[%s1 + $0x13e8] sm:$0xff]
    %v658 = vld [vmem:[%s1 + $0x13f0] sm:$0xff]
    %v659 = vld [vmem:[%s1 + $0x13f8] sm:$0xff]
    %v660 = vld [vmem:[%s1 + $0x1400] sm:$0xff]
    %v661 = vld [vmem:[%s1 + $0x1408] sm:$0xff]
    %v662 = vld [vmem:[%s1 + $0x1410] sm:$0xff]
    %v663 = vld [vmem:[%s1 + $0x1418] sm:$0xff]
    %v664 = vld [vmem:[%s1 + $0x1420] sm:$0xff]
    %v665 = vld [vmem:[%s1 + $0x1428] sm:$0xff]
    %v666 = vld [vmem:[%s1 + $0x1430] sm:$0xff]
    %v667 = vld [vmem:[%s1 + $0x1438] sm:$0xff]
    %v668 = vld [vmem:[%s1 + $0x1440] sm:$0xff]
    %v669 = vld [vmem:[%s1 + $0x1448] sm:$0xff]
    %v670 = vld [vmem:[%s1 + $0x1450] sm:$0xff]
    %v671 = vld [vmem:[%s1 + $0x1458] sm:$0xff]
    %v672 = vld [vmem:[%s1 + $0x1460] sm:$0xff]
    %v673 = vld [vmem:[%s1 + $0x1468] sm:$0xff]
    %v674 = vld [vmem:[%s1 + $0x1470] sm:$0xff]
    %v675 = vld [vmem:[%s1 + $0x1478] sm:$0xff]
    %v676 = vld [vmem:[%s1 + $0x1480] sm:$0xff]
    %v677 = vld [vmem:[%s1 + $0x1488] sm:$0xff]
    %v678 = vld [vmem:[%s1 + $0x1490] sm:$0xff]
    %v679 = vld [vmem:[%s1 + $0x1498] sm:$0xff]
    %v680 = vld [vmem:[%s1 + $0x14a0] sm:$0xff]
    %v681 = vld [vmem:[%s1 + $0x14a8] sm:$0xff]
    %v682 = vld [vmem:[%s1 + $0x14b0] sm:$0xff]
    %v683 = vld [vmem:[%s1 + $0x14b8] sm:$0xff]
    %v684 = vld [vmem:[%s1 + $0x14c0] sm:$0xff]
    %v685 = vld [vmem:[%s1 + $0x14c8] sm:$0xff]
    %v686 = vld [vmem:[%s1 + $0x14d0] sm:$0xff]
    %v687 = vld [vmem:[%s1 + $0x14d8] sm:$0xff]
    %v688 = vld [vmem:[%s1 + $0x14e0] sm:$0xff]
    %v689 = vld [vmem:[%s1 + $0x14e8] sm:$0xff]
    %v690 = vld [vmem:[%s1 + $0x14f0] sm:$0xff]
    %v691 = vld [vmem:[%s1 + $0x14f8] sm:$0xff]
    %v692 = vld [vmem:[%s1 + $0x1500] sm:$0xff]
    %v693 = vld [vmem:[%s1 + $0x1508] sm:$0xff]
    %v694 = vld [vmem:[%s1 + $0x1510] sm:$0xff]
    %v695 = vld [vmem:[%s1 + $0x1518] sm:$0xff]
    %v696 = vld [vmem:[%s1 + $0x1520] sm:$0xff]
    %v697 = vld [vmem:[%s1 + $0x1528] sm:$0xff]
    %v698 = vld [vmem:[%s1 + $0x1530] sm:$0xff]
    %v699 = vld [vmem:[%s1 + $0x1538] sm:$0xff]
    %v700 = vld [vmem:[%s1 + $0x1540] sm:$0xff]
    %v701 = vld [vmem:[%s1 + $0x1548] sm:$0xff]
    %v702 = vld [vmem:[%s1 + $0x1550] sm:$0xff]
    %v703 = vld [vmem:[%s1 + $0x1558] sm:$0xff]
    %v704 = vld [vmem:[%s1 + $0x1560] sm:$0xff]
    %v705 = vld [vmem:[%s1 + $0x1568] sm:$0xff]
    %v706 = vld [vmem:[%s1 + $0x1570] sm:$0xff]
    %v707 = vld [vmem:[%s1 + $0x1578] sm:$0xff]
    %v708 = vld [vmem:[%s1 + $0x1580] sm:$0xff]
    %v709 = vld [vmem:[%s1 + $0x1588] sm:$0xff]
    %v710 = vld [vmem:[%s1 + $0x1590] sm:$0xff]
    %v711 = vld [vmem:[%s1 + $0x1598] sm:$0xff]
    %v712 = vld [vmem:[%s1 + $0x15a0] sm:$0xff]
    %v713 = vld [vmem:[%s1 + $0x15a8] sm:$0xff]
    %v714 = vld [vmem:[%s1 + $0x15b0] sm:$0xff]
    %v715 = vld [vmem:[%s1 + $0x15b8] sm:$0xff]
    %v716 = vld [vmem:[%s1 + $0x15c0] sm:$0xff]
    %v717 = vld [vmem:[%s1 + $0x15c8] sm:$0xff]
    %v718 = vld [vmem:[%s1 + $0x15d0] sm:$0xff]
    %v719 = vld [vmem:[%s1 + $0x15d8] sm:$0xff]
    %v720 = vld [vmem:[%s1 + $0x15e0] sm:$0xff]
    %v721 = vld [vmem:[%s1 + $0x15e8] sm:$0xff]
    %v722 = vld [vmem:[%s1 + $0x15f0] sm:$0xff]
    %v723 = vld [vmem:[%s1 + $0x15f8] sm:$0xff]
    %v724 = vld [vmem:[%s1 + $0x1600] sm:$0xff]
    %v725 = vld [vmem:[%s1 + $0x1608] sm:$0xff]
    %v726 = vld [vmem:[%s1 + $0x1610] sm:$0xff]
    %v727 = vld [vmem:[%s1 + $0x1618] sm:$0xff]
    %v728 = vld [vmem:[%s1 + $0x1620] sm:$0xff]
    %v729 = vld [vmem:[%s1 + $0x1628] sm:$0xff]
    %v730 = vld [vmem:[%s1 + $0x1630] sm:$0xff]
    %v731 = vld [vmem:[%s1 + $0x1638] sm:$0xff]
    %v732 = vld [vmem:[%s1 + $0x1640] sm:$0xff]
    %v733 = vld [vmem:[%s1 + $0x1648] sm:$0xff]
    %v734 = vld [vmem:[%s1 + $0x1650] sm:$0xff]
    %v735 = vld [vmem:[%s1 + $0x1658] sm:$0xff]
    %v736 = vld [vmem:[%s1 + $0x1660] sm:$0xff]
    %v737 = vld [vmem:[%s1 + $0x1668] sm:$0xff]
    %v738 = vld [vmem:[%s1 + $0x1670] sm:$0xff]
    %v739 = vld [vmem:[%s1 + $0x1678] sm:$0xff]
    %v740 = vld [vmem:[%s1 + $0x1680] sm:$0xff]
    %v741 = vld [vmem:[%s1 + $0x1688] sm:$0xff]
    %v742 = vld [vmem:[%s1 + $0x1690] sm:$0xff]
    %v743 = vld [vmem:[%s1 + $0x1698] sm:$0xff]
    %v744 = vld [vmem:[%s1 + $0x16a0] sm:$0xff]
    %v745 = vld [vmem:[%s1 + $0x16a8] sm:$0xff]
    %v746 = vld [vmem:[%s1 + $0x16b0] sm:$0xff]
    %v747 = vld [vmem:[%s1 + $0x16b8] sm:$0xff]
    %v748 = vld [vmem:[%s1 + $0x16c0] sm:$0xff]
    %v749 = vld [vmem:[%s1 + $0x16c8] sm:$0xff]
    %v750 = vld [vmem:[%s1 + $0x16d0] sm:$0xff]
    %v751 = vld [vmem:[%s1 + $0x16d8] sm:$0xff]
    %v752 = vld [vmem:[%s1 + $0x16e0] sm:$0xff]
    %v753 = vld [vmem:[%s1 + $0x16e8] sm:$0xff]
    %v754 = vld [vmem:[%s1 + $0x16f0] sm:$0xff]
    %v755 = vld [vmem:[%s1 + $0x16f8] sm:$0xff]
    %v756 = vld [vmem:[%s1 + $0x1700] sm:$0xff]
    %v757 = vld [vmem:[%s1 + $0x1708] sm:$0xff]
    %v758 = vld [vmem:[%s1 + $0x1710] sm:$0xff]
    %v759 = vld [vmem:[%s1 + $0x1718] sm:$0xff]
    %v760 = vld [vmem:[%s1 + $0x1720] sm:$0xff]
    %v761 = vld [vmem:[%s1 + $0x1728] sm:$0xff]
    %v762 = vld [vmem:[%s1 + $0x1730] sm:$0xff]
    %v763 = vld [vmem:[%s1 + $0x1738] sm:$0xff]
    %v764 = vld [vmem:[%s1 + $0x1740] sm:$0xff]
    %v765 = vld [vmem:[%s1 + $0x1748] sm:$0xff]
    %v766 = vld [vmem:[%s1 + $0x1750] sm:$0xff]
    %v767 = vld [vmem:[%s1 + $0x1758] sm:$0xff]
    %v768 = vld [vmem:[%s1 + $0x1760] sm:$0xff]
    %v769 = vld [vmem:[%s1 + $0x1768] sm:$0xff]
    %v770 = vld [vmem:[%s1 + $0x1770] sm:$0xff]
    %v771 = vld [vmem:[%s1 + $0x1778] sm:$0xff]
    %v772 = vld [vmem:[%s1 + $0x1780] sm:$0xff]
    %v773 = vld [vmem:[%s1 + $0x1788] sm:$0xff]
    %v774 = vld [vmem:[%s1 + $0x1790] sm:$0xff]
    %v775 = vld [vmem:[%s1 + $0x1798] sm:$0xff]
    %v776 = vld [vmem:[%s1 + $0x17a0] sm:$0xff]
    %v777 = vld [vmem:[%s1 + $0x17a8] sm:$0xff]
    %v778 = vld [vmem:[%s1 + $0x17b0] sm:$0xff]
    %v779 = vld [vmem:[%s1 + $0x17b8] sm:$0xff]
    %v780 = vld [vmem:[%s1 + $0x17c0] sm:$0xff]
    %v781 = vld [vmem:[%s1 + $0x17c8] sm:$0xff]
    %v782 = vld [vmem:[%s1 + $0x17d0] sm:$0xff]
    %v783 = vld [vmem:[%s1 + $0x17d8] sm:$0xff]
    %v784 = vld [vmem:[%s1 + $0x17e0] sm:$0xff]
    %v785 = vld [vmem:[%s1 + $0x17e8] sm:$0xff]
    %v786 = vld [vmem:[%s1 + $0x17f0] sm:$0xff]
    %v787 = vld [vmem:[%s1 + $0x17f8] sm:$0xff]
    %v788 = vld [vmem:[%s1 + $0x1800] sm:$0xff]
    %v789 = vld [vmem:[%s1 + $0x1808] sm:$0xff]
    %v790 = vld [vmem:[%s1 + $0x1810] sm:$0xff]
    %v791 = vld [vmem:[%s1 + $0x1818] sm:$0xff]
    %v792 = vld [vmem:[%s1 + $0x1820] sm:$0xff]
    %v793 = vld [vmem:[%s1 + $0x1828] sm:$0xff]
    %v794 = vld [vmem:[%s1 + $0x1830] sm:$0xff]
    %v795 = vld [vmem:[%s1 + $0x1838] sm:$0xff]
    %v796 = vld [vmem:[%s1 + $0x1840] sm:$0xff]
    %v797 = vld [vmem:[%s1 + $0x1848] sm:$0xff]
    %v798 = vld [vmem:[%s1 + $0x1850] sm:$0xff]
    %v799 = vld [vmem:[%s1 + $0x1858] sm:$0xff]
    %v800 = vld [vmem:[%s1 + $0x1860] sm:$0xff]
    %v801 = vld [vmem:[%s1 + $0x1868] sm:$0xff]
    %v802 = vld [vmem:[%s1 + $0x1870] sm:$0xff]
    %v803 = vld [vmem:[%s1 + $0x1878] sm:$0xff]
    %v804 = vld [vmem:[%s2] sm:$0xf]
    %v806 = vlaneseq
    %v807 = vshrl.u32 %v806, 7
    %v808 = vsub.s32 0, %v807
    %v809 = vrot.slane %v804, %v808
    %v810 = vlaneseq
    %v811 = vshrl.u32 %v810, 7
    %v812 = vsub.s32 1, %v811
    %v813 = vrot.slane %v804, %v812
    %v814 = vlaneseq
    %v815 = vshrl.u32 %v814, 7
    %v816 = vsub.s32 2, %v815
    %v817 = vrot.slane %v804, %v816
    %v818 = vlaneseq
    %v819 = vshrl.u32 %v818, 7
    %v820 = vsub.s32 3, %v819
    %v821 = vrot.slane %v804, %v820
    %v830 = vcombine.high %v16, %v16
    %v832 = vunpack.c.l.s4 1966171168
    %v833 = vunpack.c.0.s8 %v832
    %v834 = vlaneseq
    %v835 = vshrl.u32 %v834, 7
    %v836 = vsub.s32 %v833, %v835
    %v837 = vrot.slane %v16, %v836
    %v839 = vunpack.c.l.s4 1966171168
    %v840 = vunpack.c.0.s8 %v839
    %v841 = vlaneseq
    %v842 = vshrl.u32 %v841, 7
    %v843 = vsub.s32 %v840, %v842
    %v844 = vrot.slane %v830, %v843
    %v845 = vcombine.high %v837, %v837
    %v846 = vcombine.high %v844, %v844
    %v848 = vunpack.c.l.s4 1966171168
    %v849 = vunpack.c.0.s8 %v848
    %v850 = vlaneseq
    %v851 = vshrl.u32 %v850, 7
    %v852 = vsub.s32 %v849, %v851
    %v853 = vrot.slane %v837, %v852
    %v855 = vunpack.c.l.s4 1966171168
    %v856 = vunpack.c.0.s8 %v855
    %v857 = vlaneseq
    %v858 = vshrl.u32 %v857, 7
    %v859 = vsub.s32 %v856, %v858
    %v860 = vrot.slane %v844, %v859
    %v862 = vunpack.c.l.s4 1966171168
    %v863 = vunpack.c.0.s8 %v862
    %v864 = vlaneseq
    %v865 = vshrl.u32 %v864, 7
    %v866 = vsub.s32 %v863, %v865
    %v867 = vrot.slane %v845, %v866
    %v869 = vunpack.c.l.s4 1966171168
    %v870 = vunpack.c.0.s8 %v869
    %v871 = vlaneseq
    %v872 = vshrl.u32 %v871, 7
    %v873 = vsub.s32 %v870, %v872
    %v874 = vrot.slane %v846, %v873
    %v875 = vcombine.high %v853, %v853
    %v876 = vcombine.high %v860, %v860
    %v877 = vcombine.high %v867, %v867
    %v878 = vcombine.high %v874, %v874
    %v879 = vcombine.high %v17, %v17
    %v881 = vunpack.c.l.s4 1966171168
    %v882 = vunpack.c.0.s8 %v881
    %v883 = vlaneseq
    %v884 = vshrl.u32 %v883, 7
    %v885 = vsub.s32 %v882, %v884
    %v886 = vrot.slane %v17, %v885
    %v888 = vunpack.c.l.s4 1966171168
    %v889 = vunpack.c.0.s8 %v888
    %v890 = vlaneseq
    %v891 = vshrl.u32 %v890, 7
    %v892 = vsub.s32 %v889, %v891
    %v893 = vrot.slane %v879, %v892
    %v894 = vcombine.high %v886, %v886
    %v895 = vcombine.high %v893, %v893
    %v897 = vunpack.c.l.s4 1966171168
    %v898 = vunpack.c.0.s8 %v897
    %v899 = vlaneseq
    %v900 = vshrl.u32 %v899, 7
    %v901 = vsub.s32 %v898, %v900
    %v902 = vrot.slane %v886, %v901
    %v904 = vunpack.c.l.s4 1966171168
    %v905 = vunpack.c.0.s8 %v904
    %v906 = vlaneseq
    %v907 = vshrl.u32 %v906, 7
    %v908 = vsub.s32 %v905, %v907
    %v909 = vrot.slane %v893, %v908
    %v911 = vunpack.c.l.s4 1966171168
    %v912 = vunpack.c.0.s8 %v911
    %v913 = vlaneseq
    %v914 = vshrl.u32 %v913, 7
    %v915 = vsub.s32 %v912, %v914
    %v916 = vrot.slane %v894, %v915
    %v918 = vunpack.c.l.s4 1966171168
    %v919 = vunpack.c.0.s8 %v918
    %v920 = vlaneseq
    %v921 = vshrl.u32 %v920, 7
    %v922 = vsub.s32 %v919, %v921
    %v923 = vrot.slane %v895, %v922
    %v924 = vcombine.high %v902, %v902
    %v925 = vcombine.high %v909, %v909
    %v926 = vcombine.high %v916, %v916
    %v927 = vcombine.high %v923, %v923
    %v928 = vcombine.high %v18, %v18
    %v930 = vunpack.c.l.s4 1966171168
    %v931 = vunpack.c.0.s8 %v930
    %v932 = vlaneseq
    %v933 = vshrl.u32 %v932, 7
    %v934 = vsub.s32 %v931, %v933
    %v935 = vrot.slane %v18, %v934
    %v937 = vunpack.c.l.s4 1966171168
    %v938 = vunpack.c.0.s8 %v937
    %v939 = vlaneseq
    %v940 = vshrl.u32 %v939, 7
    %v941 = vsub.s32 %v938, %v940
    %v942 = vrot.slane %v928, %v941
    %v943 = vcombine.high %v935, %v935
    %v944 = vcombine.high %v942, %v942
    %v946 = vunpack.c.l.s4 1966171168
    %v947 = vunpack.c.0.s8 %v946
    %v948 = vlaneseq
    %v949 = vshrl.u32 %v948, 7
    %v950 = vsub.s32 %v947, %v949
    %v951 = vrot.slane %v935, %v950
    %v953 = vunpack.c.l.s4 1966171168
    %v954 = vunpack.c.0.s8 %v953
    %v955 = vlaneseq
    %v956 = vshrl.u32 %v955, 7
    %v957 = vsub.s32 %v954, %v956
    %v958 = vrot.slane %v942, %v957
    %v960 = vunpack.c.l.s4 1966171168
    %v961 = vunpack.c.0.s8 %v960
    %v962 = vlaneseq
    %v963 = vshrl.u32 %v962, 7
    %v964 = vsub.s32 %v961, %v963
    %v965 = vrot.slane %v943, %v964
    %v967 = vunpack.c.l.s4 1966171168
    %v968 = vunpack.c.0.s8 %v967
    %v969 = vlaneseq
    %v970 = vshrl.u32 %v969, 7
    %v971 = vsub.s32 %v968, %v970
    %v972 = vrot.slane %v944, %v971
    %v973 = vcombine.high %v951, %v951
    %v974 = vcombine.high %v958, %v958
    %v975 = vcombine.high %v965, %v965
    %v976 = vcombine.high %v972, %v972
    %v978 = vunpack.c.l.s4 1966171168
    %v979 = vunpack.c.0.s8 %v978
    %v980 = vlaneseq
    %v981 = vshrl.u32 %v980, 7
    %v982 = vsub.s32 %v979, %v981
    %v983 = vrot.slane %v19, %v982
    %v985 = vunpack.c.l.s4 1966171168
    %v986 = vunpack.c.0.s8 %v985
    %v987 = vlaneseq
    %v988 = vshrl.u32 %v987, 7
    %v989 = vsub.s32 %v986, %v988
    %v990 = vrot.slane %v983, %v989
    %v1799 = vunpack.c.l.b16 %v20
    %v1800 = vunpack.c.h.b16 %v20
    %v1801 = vunpack.c.l.b16 %v21
    %v1802 = vunpack.c.h.b16 %v21
    %v1803 = vunpack.c.l.b16 %v22
    %v1804 = vunpack.c.h.b16 %v22
    %v1805 = vunpack.c.l.b16 %v23
    %v1806 = vunpack.c.h.b16 %v23
    %v1807 = vunpack.c.l.b16 %v24
    %v1808 = vunpack.c.h.b16 %v24
    %v1809 = vunpack.c.l.b16 %v25
    %v1810 = vunpack.c.h.b16 %v25
    %v1811 = vunpack.c.l.b16 %v26
    %v1812 = vunpack.c.h.b16 %v26
    %v1813 = vunpack.c.l.b16 %v27
    %v1814 = vunpack.c.h.b16 %v27
    %v1815 = vunpack.c.l.b16 %v28
    %v1816 = vunpack.c.h.b16 %v28
    %v1817 = vunpack.c.l.b16 %v29
    %v1818 = vunpack.c.h.b16 %v29
    %v1819 = vunpack.c.l.b16 %v30
    %v1820 = vunpack.c.h.b16 %v30
    %v1821 = vunpack.c.l.b16 %v31
    %v1822 = vunpack.c.h.b16 %v31
    %v1823 = vunpack.c.l.b16 %v32
    %v1824 = vunpack.c.h.b16 %v32
    %v1825 = vunpack.c.l.b16 %v33
    %v1826 = vunpack.c.h.b16 %v33
    %v1827 = vunpack.c.l.b16 %v34
    %v1828 = vunpack.c.h.b16 %v34
    %v1829 = vunpack.c.l.b16 %v35
    %v1830 = vunpack.c.h.b16 %v35
    %v1831 = vunpack.c.l.b16 %v36
    %v1832 = vunpack.c.h.b16 %v36
    %v1833 = vunpack.c.l.b16 %v37
    %v1834 = vunpack.c.h.b16 %v37
    %v1835 = vunpack.c.l.b16 %v38
    %v1836 = vunpack.c.h.b16 %v38
    %v1837 = vunpack.c.l.b16 %v39
    %v1838 = vunpack.c.h.b16 %v39
    %v1839 = vunpack.c.l.b16 %v40
    %v1840 = vunpack.c.h.b16 %v40
    %v1841 = vunpack.c.l.b16 %v41
    %v1842 = vunpack.c.h.b16 %v41
    %v1843 = vunpack.c.l.b16 %v42
    %v1844 = vunpack.c.h.b16 %v42
    %v1845 = vunpack.c.l.b16 %v43
    %v1846 = vunpack.c.h.b16 %v43
    %v1847 = vunpack.c.l.b16 %v44
    %v1848 = vunpack.c.h.b16 %v44
    %v1849 = vunpack.c.l.b16 %v45
    %v1850 = vunpack.c.h.b16 %v45
    %v1851 = vunpack.c.l.b16 %v46
    %v1852 = vunpack.c.h.b16 %v46
    %v1853 = vunpack.c.l.b16 %v47
    %v1854 = vunpack.c.h.b16 %v47
    %v1855 = vunpack.c.l.b16 %v48
    %v1856 = vunpack.c.h.b16 %v48
    %v1857 = vunpack.c.l.b16 %v49
    %v1858 = vunpack.c.h.b16 %v49
    %v1859 = vunpack.c.l.b16 %v50
    %v1860 = vunpack.c.h.b16 %v50
    %v1861 = vunpack.c.l.b16 %v51
    %v1862 = vunpack.c.h.b16 %v51
    %v1863 = vunpack.c.l.b16 %v52
    %v1864 = vunpack.c.h.b16 %v52
    %v1865 = vunpack.c.l.b16 %v53
    %v1866 = vunpack.c.h.b16 %v53
    %v1867 = vunpack.c.l.b16 %v54
    %v1868 = vunpack.c.h.b16 %v54
    %v1869 = vunpack.c.l.b16 %v55
    %v1870 = vunpack.c.h.b16 %v55
    %v1871 = vunpack.c.l.b16 %v56
    %v1872 = vunpack.c.h.b16 %v56
    %v1873 = vunpack.c.l.b16 %v57
    %v1874 = vunpack.c.h.b16 %v57
    %v1875 = vunpack.c.l.b16 %v58
    %v1876 = vunpack.c.h.b16 %v58
    %v1877 = vunpack.c.l.b16 %v59
    %v1878 = vunpack.c.h.b16 %v59
    %v1879 = vunpack.c.l.b16 %v60
    %v1880 = vunpack.c.h.b16 %v60
    %v1881 = vunpack.c.l.b16 %v61
    %v1882 = vunpack.c.h.b16 %v61
    %v1883 = vunpack.c.l.b16 %v62
    %v1884 = vunpack.c.h.b16 %v62
    %v1885 = vunpack.c.l.b16 %v63
    %v1886 = vunpack.c.h.b16 %v63
    %v1887 = vunpack.c.l.b16 %v64
    %v1888 = vunpack.c.h.b16 %v64
    %v1889 = vunpack.c.l.b16 %v65
    %v1890 = vunpack.c.h.b16 %v65
    %v1891 = vunpack.c.l.b16 %v66
    %v1892 = vunpack.c.h.b16 %v66
    %v1893 = vunpack.c.l.b16 %v67
    %v1894 = vunpack.c.h.b16 %v67
    %v1895 = vunpack.c.l.b16 %v68
    %v1896 = vunpack.c.h.b16 %v68
    %v1897 = vunpack.c.l.b16 %v69
    %v1898 = vunpack.c.h.b16 %v69
    %v1899 = vunpack.c.l.b16 %v70
    %v1900 = vunpack.c.h.b16 %v70
    %v1901 = vunpack.c.l.b16 %v71
    %v1902 = vunpack.c.h.b16 %v71
    %v1903 = vunpack.c.l.b16 %v72
    %v1904 = vunpack.c.h.b16 %v72
    %v1905 = vunpack.c.l.b16 %v73
    %v1906 = vunpack.c.h.b16 %v73
    %v1907 = vunpack.c.l.b16 %v74
    %v1908 = vunpack.c.h.b16 %v74
    %v1909 = vunpack.c.l.b16 %v75
    %v1910 = vunpack.c.h.b16 %v75
    %v1911 = vunpack.c.l.b16 %v76
    %v1912 = vunpack.c.h.b16 %v76
    %v1913 = vunpack.c.l.b16 %v77
    %v1914 = vunpack.c.h.b16 %v77
    %v1915 = vunpack.c.l.b16 %v78
    %v1916 = vunpack.c.h.b16 %v78
    %v1917 = vunpack.c.l.b16 %v79
    %v1918 = vunpack.c.h.b16 %v79
    %v1919 = vunpack.c.l.b16 %v80
    %v1920 = vunpack.c.h.b16 %v80
    %v1921 = vunpack.c.l.b16 %v81
    %v1922 = vunpack.c.h.b16 %v81
    %v1923 = vunpack.c.l.b16 %v82
    %v1924 = vunpack.c.h.b16 %v82
    %v1925 = vunpack.c.l.b16 %v83
    %v1926 = vunpack.c.h.b16 %v83
    %v1927 = vunpack.c.l.b16 %v84
    %v1928 = vunpack.c.h.b16 %v84
    %v1929 = vunpack.c.l.b16 %v85
    %v1930 = vunpack.c.h.b16 %v85
    %v1931 = vunpack.c.l.b16 %v86
    %v1932 = vunpack.c.h.b16 %v86
    %v1933 = vunpack.c.l.b16 %v87
    %v1934 = vunpack.c.h.b16 %v87
    %v1935 = vunpack.c.l.b16 %v88
    %v1936 = vunpack.c.h.b16 %v88
    %v1937 = vunpack.c.l.b16 %v89
    %v1938 = vunpack.c.h.b16 %v89
    %v1939 = vunpack.c.l.b16 %v90
    %v1940 = vunpack.c.h.b16 %v90
    %v1941 = vunpack.c.l.b16 %v91
    %v1942 = vunpack.c.h.b16 %v91
    %v1943 = vunpack.c.l.b16 %v92
    %v1944 = vunpack.c.h.b16 %v92
    %v1945 = vunpack.c.l.b16 %v93
    %v1946 = vunpack.c.h.b16 %v93
    %v1947 = vunpack.c.l.b16 %v94
    %v1948 = vunpack.c.h.b16 %v94
    %v1949 = vunpack.c.l.b16 %v95
    %v1950 = vunpack.c.h.b16 %v95
    %v1951 = vunpack.c.l.b16 %v96
    %v1952 = vunpack.c.h.b16 %v96
    %v1953 = vunpack.c.l.b16 %v97
    %v1954 = vunpack.c.h.b16 %v97
    %v1955 = vunpack.c.l.b16 %v98
    %v1956 = vunpack.c.h.b16 %v98
    %v1957 = vunpack.c.l.b16 %v99
    %v1958 = vunpack.c.h.b16 %v99
    %v1959 = vunpack.c.l.b16 %v100
    %v1960 = vunpack.c.h.b16 %v100
    %v1961 = vunpack.c.l.b16 %v101
    %v1962 = vunpack.c.h.b16 %v101
    %v1963 = vunpack.c.l.b16 %v102
    %v1964 = vunpack.c.h.b16 %v102
    %v1965 = vunpack.c.l.b16 %v103
    %v1966 = vunpack.c.h.b16 %v103
    %v1967 = vunpack.c.l.b16 %v104
    %v1968 = vunpack.c.h.b16 %v104
    %v1969 = vunpack.c.l.b16 %v105
    %v1970 = vunpack.c.h.b16 %v105
    %v1971 = vunpack.c.l.b16 %v106
    %v1972 = vunpack.c.h.b16 %v106
    %v1973 = vunpack.c.l.b16 %v107
    %v1974 = vunpack.c.h.b16 %v107
    %v1975 = vunpack.c.l.b16 %v108
    %v1976 = vunpack.c.h.b16 %v108
    %v1977 = vunpack.c.l.b16 %v109
    %v1978 = vunpack.c.h.b16 %v109
    %v1979 = vunpack.c.l.b16 %v110
    %v1980 = vunpack.c.h.b16 %v110
    %v1981 = vunpack.c.l.b16 %v111
    %v1982 = vunpack.c.h.b16 %v111
    %v1983 = vunpack.c.l.b16 %v112
    %v1984 = vunpack.c.h.b16 %v112
    %v1985 = vunpack.c.l.b16 %v113
    %v1986 = vunpack.c.h.b16 %v113
    %v1987 = vunpack.c.l.b16 %v114
    %v1988 = vunpack.c.h.b16 %v114
    %v1989 = vunpack.c.l.b16 %v115
    %v1990 = vunpack.c.h.b16 %v115
    %v1991 = vunpack.c.l.b16 %v116
    %v1992 = vunpack.c.h.b16 %v116
    %v1993 = vunpack.c.l.b16 %v117
    %v1994 = vunpack.c.h.b16 %v117
    %v1995 = vunpack.c.l.b16 %v118
    %v1996 = vunpack.c.h.b16 %v118
    %v1997 = vunpack.c.l.b16 %v119
    %v1998 = vunpack.c.h.b16 %v119
    %v1999 = vunpack.c.l.b16 %v120
    %v2000 = vunpack.c.h.b16 %v120
    %v2001 = vunpack.c.l.b16 %v121
    %v2002 = vunpack.c.h.b16 %v121
    %v2003 = vunpack.c.l.b16 %v122
    %v2004 = vunpack.c.h.b16 %v122
    %v2005 = vunpack.c.l.b16 %v123
    %v2006 = vunpack.c.h.b16 %v123
    %v2007 = vunpack.c.l.b16 %v124
    %v2008 = vunpack.c.h.b16 %v124
    %v2009 = vunpack.c.l.b16 %v125
    %v2010 = vunpack.c.h.b16 %v125
    %v2011 = vunpack.c.l.b16 %v126
    %v2012 = vunpack.c.h.b16 %v126
    %v2013 = vunpack.c.l.b16 %v127
    %v2014 = vunpack.c.h.b16 %v127
    %v2015 = vunpack.c.l.b16 %v128
    %v2016 = vunpack.c.h.b16 %v128
    %v2017 = vunpack.c.l.b16 %v129
    %v2018 = vunpack.c.h.b16 %v129
    %v2019 = vunpack.c.l.b16 %v130
    %v2020 = vunpack.c.h.b16 %v130
    %v2021 = vunpack.c.l.b16 %v131
    %v2022 = vunpack.c.h.b16 %v131
    %v2023 = vunpack.c.l.b16 %v132
    %v2024 = vunpack.c.h.b16 %v132
    %v2025 = vunpack.c.l.b16 %v133
    %v2026 = vunpack.c.h.b16 %v133
    %v2027 = vunpack.c.l.b16 %v134
    %v2028 = vunpack.c.h.b16 %v134
    %v2029 = vunpack.c.l.b16 %v135
    %v2030 = vunpack.c.h.b16 %v135
    %v2031 = vunpack.c.l.b16 %v136
    %v2032 = vunpack.c.h.b16 %v136
    %v2033 = vunpack.c.l.b16 %v137
    %v2034 = vunpack.c.h.b16 %v137
    %v2035 = vunpack.c.l.b16 %v138
    %v2036 = vunpack.c.h.b16 %v138
    %v2037 = vunpack.c.l.b16 %v139
    %v2038 = vunpack.c.h.b16 %v139
    %v2039 = vunpack.c.l.b16 %v140
    %v2040 = vunpack.c.h.b16 %v140
    %v2041 = vunpack.c.l.b16 %v141
    %v2042 = vunpack.c.h.b16 %v141
    %v2043 = vunpack.c.l.b16 %v142
    %v2044 = vunpack.c.h.b16 %v142
    %v2045 = vunpack.c.l.b16 %v143
    %v2046 = vunpack.c.h.b16 %v143
    %v2047 = vunpack.c.l.b16 %v144
    %v2048 = vunpack.c.h.b16 %v144
    %v2049 = vunpack.c.l.b16 %v145
    %v2050 = vunpack.c.h.b16 %v145
    %v2051 = vunpack.c.l.b16 %v146
    %v2052 = vunpack.c.h.b16 %v146
    %v2053 = vunpack.c.l.b16 %v147
    %v2054 = vunpack.c.h.b16 %v147
    %v2055 = vunpack.c.l.b16 %v148
    %v2056 = vunpack.c.h.b16 %v148
    %v2057 = vunpack.c.l.b16 %v149
    %v2058 = vunpack.c.h.b16 %v149
    %v2059 = vunpack.c.l.b16 %v150
    %v2060 = vunpack.c.h.b16 %v150
    %v2061 = vunpack.c.l.b16 %v151
    %v2062 = vunpack.c.h.b16 %v151
    %v2063 = vunpack.c.l.b16 %v152
    %v2064 = vunpack.c.h.b16 %v152
    %v2065 = vunpack.c.l.b16 %v153
    %v2066 = vunpack.c.h.b16 %v153
    %v2067 = vunpack.c.l.b16 %v154
    %v2068 = vunpack.c.h.b16 %v154
    %v2069 = vunpack.c.l.b16 %v155
    %v2070 = vunpack.c.h.b16 %v155
    %v2071 = vunpack.c.l.b16 %v156
    %v2072 = vunpack.c.h.b16 %v156
    %v2073 = vunpack.c.l.b16 %v157
    %v2074 = vunpack.c.h.b16 %v157
    %v2075 = vunpack.c.l.b16 %v158
    %v2076 = vunpack.c.h.b16 %v158
    %v2077 = vunpack.c.l.b16 %v159
    %v2078 = vunpack.c.h.b16 %v159
    %v2079 = vunpack.c.l.b16 %v160
    %v2080 = vunpack.c.h.b16 %v160
    %v2081 = vunpack.c.l.b16 %v161
    %v2082 = vunpack.c.h.b16 %v161
    %v2083 = vunpack.c.l.b16 %v162
    %v2084 = vunpack.c.h.b16 %v162
    %v2085 = vunpack.c.l.b16 %v163
    %v2086 = vunpack.c.h.b16 %v163
    %v2087 = vunpack.c.l.b16 %v164
    %v2088 = vunpack.c.h.b16 %v164
    %v2089 = vunpack.c.l.b16 %v165
    %v2090 = vunpack.c.h.b16 %v165
    %v2091 = vunpack.c.l.b16 %v166
    %v2092 = vunpack.c.h.b16 %v166
    %v2093 = vunpack.c.l.b16 %v167
    %v2094 = vunpack.c.h.b16 %v167
    %v2095 = vunpack.c.l.b16 %v168
    %v2096 = vunpack.c.h.b16 %v168
    %v2097 = vunpack.c.l.b16 %v169
    %v2098 = vunpack.c.h.b16 %v169
    %v2099 = vunpack.c.l.b16 %v170
    %v2100 = vunpack.c.h.b16 %v170
    %v2101 = vunpack.c.l.b16 %v171
    %v2102 = vunpack.c.h.b16 %v171
    %v2103 = vunpack.c.l.b16 %v172
    %v2104 = vunpack.c.h.b16 %v172
    %v2105 = vunpack.c.l.b16 %v173
    %v2106 = vunpack.c.h.b16 %v173
    %v2107 = vunpack.c.l.b16 %v174
    %v2108 = vunpack.c.h.b16 %v174
    %v2109 = vunpack.c.l.b16 %v175
    %v2110 = vunpack.c.h.b16 %v175
    %v2111 = vunpack.c.l.b16 %v176
    %v2112 = vunpack.c.h.b16 %v176
    %v2113 = vunpack.c.l.b16 %v177
    %v2114 = vunpack.c.h.b16 %v177
    %v2115 = vunpack.c.l.b16 %v178
    %v2116 = vunpack.c.h.b16 %v178
    %v2117 = vunpack.c.l.b16 %v179
    %v2118 = vunpack.c.h.b16 %v179
    %v2119 = vunpack.c.l.b16 %v180
    %v2120 = vunpack.c.h.b16 %v180
    %v2121 = vunpack.c.l.b16 %v181
    %v2122 = vunpack.c.h.b16 %v181
    %v2123 = vunpack.c.l.b16 %v182
    %v2124 = vunpack.c.h.b16 %v182
    %v2125 = vunpack.c.l.b16 %v183
    %v2126 = vunpack.c.h.b16 %v183
    %v2127 = vunpack.c.l.b16 %v184
    %v2128 = vunpack.c.h.b16 %v184
    %v2129 = vunpack.c.l.b16 %v185
    %v2130 = vunpack.c.h.b16 %v185
    %v2131 = vunpack.c.l.b16 %v186
    %v2132 = vunpack.c.h.b16 %v186
    %v2133 = vunpack.c.l.b16 %v187
    %v2134 = vunpack.c.h.b16 %v187
    %v2135 = vunpack.c.l.b16 %v188
    %v2136 = vunpack.c.h.b16 %v188
    %v2137 = vunpack.c.l.b16 %v189
    %v2138 = vunpack.c.h.b16 %v189
    %v2139 = vunpack.c.l.b16 %v190
    %v2140 = vunpack.c.h.b16 %v190
    %v2141 = vunpack.c.l.b16 %v191
    %v2142 = vunpack.c.h.b16 %v191
    %v2143 = vunpack.c.l.b16 %v192
    %v2144 = vunpack.c.h.b16 %v192
    %v2145 = vunpack.c.l.b16 %v193
    %v2146 = vunpack.c.h.b16 %v193
    %v2147 = vunpack.c.l.b16 %v194
    %v2148 = vunpack.c.h.b16 %v194
    %v2149 = vunpack.c.l.b16 %v195
    %v2150 = vunpack.c.h.b16 %v195
    %v2151 = vunpack.c.l.b16 %v196
    %v2152 = vunpack.c.h.b16 %v196
    %v2153 = vunpack.c.l.b16 %v197
    %v2154 = vunpack.c.h.b16 %v197
    %v2155 = vunpack.c.l.b16 %v198
    %v2156 = vunpack.c.h.b16 %v198
    %v2157 = vunpack.c.l.b16 %v199
    %v2158 = vunpack.c.h.b16 %v199
    %v2159 = vunpack.c.l.b16 %v200
    %v2160 = vunpack.c.h.b16 %v200
    %v2161 = vunpack.c.l.b16 %v201
    %v2162 = vunpack.c.h.b16 %v201
    %v2163 = vunpack.c.l.b16 %v202
    %v2164 = vunpack.c.h.b16 %v202
    %v2165 = vunpack.c.l.b16 %v203
    %v2166 = vunpack.c.h.b16 %v203
    %v2167 = vunpack.c.l.b16 %v204
    %v2168 = vunpack.c.h.b16 %v204
    %v2169 = vunpack.c.l.b16 %v205
    %v2170 = vunpack.c.h.b16 %v205
    %v2171 = vunpack.c.l.b16 %v206
    %v2172 = vunpack.c.h.b16 %v206
    %v2173 = vunpack.c.l.b16 %v207
    %v2174 = vunpack.c.h.b16 %v207
    %v2175 = vunpack.c.l.b16 %v208
    %v2176 = vunpack.c.h.b16 %v208
    %v2177 = vunpack.c.l.b16 %v209
    %v2178 = vunpack.c.h.b16 %v209
    %v2179 = vunpack.c.l.b16 %v210
    %v2180 = vunpack.c.h.b16 %v210
    %v2181 = vunpack.c.l.b16 %v211
    %v2182 = vunpack.c.h.b16 %v211
    %v2183 = vunpack.c.l.b16 %v212
    %v2184 = vunpack.c.h.b16 %v212
    %v2185 = vunpack.c.l.b16 %v213
    %v2186 = vunpack.c.h.b16 %v213
    %v2187 = vunpack.c.l.b16 %v214
    %v2188 = vunpack.c.h.b16 %v214
    %v2189 = vunpack.c.l.b16 %v215
    %v2190 = vunpack.c.h.b16 %v215
    %v2191 = vunpack.c.l.b16 %v216
    %v2192 = vunpack.c.h.b16 %v216
    %v2193 = vunpack.c.l.b16 %v217
    %v2194 = vunpack.c.h.b16 %v217
    %v2195 = vunpack.c.l.b16 %v218
    %v2196 = vunpack.c.h.b16 %v218
    %v2197 = vunpack.c.l.b16 %v219
    %v2198 = vunpack.c.h.b16 %v219
    %v2199 = vunpack.c.l.b16 %v220
    %v2200 = vunpack.c.h.b16 %v220
    %v2201 = vunpack.c.l.b16 %v221
    %v2202 = vunpack.c.h.b16 %v221
    %v2203 = vunpack.c.l.b16 %v222
    %v2204 = vunpack.c.h.b16 %v222
    %v2205 = vunpack.c.l.b16 %v223
    %v2206 = vunpack.c.h.b16 %v223
    %v2207 = vunpack.c.l.b16 %v224
    %v2208 = vunpack.c.h.b16 %v224
    %v2209 = vunpack.c.l.b16 %v225
    %v2210 = vunpack.c.h.b16 %v225
    %v2211 = vunpack.c.l.b16 %v226
    %v2212 = vunpack.c.h.b16 %v226
    %v2213 = vunpack.c.l.b16 %v227
    %v2214 = vunpack.c.h.b16 %v227
    %v2215 = vunpack.c.l.b16 %v228
    %v2216 = vunpack.c.h.b16 %v228
    %v2217 = vunpack.c.l.b16 %v229
    %v2218 = vunpack.c.h.b16 %v229
    %v2219 = vunpack.c.l.b16 %v230
    %v2220 = vunpack.c.h.b16 %v230
    %v2221 = vunpack.c.l.b16 %v231
    %v2222 = vunpack.c.h.b16 %v231
    %v2223 = vunpack.c.l.b16 %v232
    %v2224 = vunpack.c.h.b16 %v232
    %v2225 = vunpack.c.l.b16 %v233
    %v2226 = vunpack.c.h.b16 %v233
    %v2227 = vunpack.c.l.b16 %v234
    %v2228 = vunpack.c.h.b16 %v234
    %v2229 = vunpack.c.l.b16 %v235
    %v2230 = vunpack.c.h.b16 %v235
    %v2231 = vunpack.c.l.b16 %v236
    %v2232 = vunpack.c.h.b16 %v236
    %v2233 = vunpack.c.l.b16 %v237
    %v2234 = vunpack.c.h.b16 %v237
    %v2235 = vunpack.c.l.b16 %v238
    %v2236 = vunpack.c.h.b16 %v238
    %v2237 = vunpack.c.l.b16 %v239
    %v2238 = vunpack.c.h.b16 %v239
    %v2239 = vunpack.c.l.b16 %v240
    %v2240 = vunpack.c.h.b16 %v240
    %v2241 = vunpack.c.l.b16 %v241
    %v2242 = vunpack.c.h.b16 %v241
    %v2243 = vunpack.c.l.b16 %v242
    %v2244 = vunpack.c.h.b16 %v242
    %v2245 = vunpack.c.l.b16 %v243
    %v2246 = vunpack.c.h.b16 %v243
    %v2247 = vunpack.c.l.b16 %v244
    %v2248 = vunpack.c.h.b16 %v244
    %v2249 = vunpack.c.l.b16 %v245
    %v2250 = vunpack.c.h.b16 %v245
    %v2251 = vunpack.c.l.b16 %v246
    %v2252 = vunpack.c.h.b16 %v246
    %v2253 = vunpack.c.l.b16 %v247
    %v2254 = vunpack.c.h.b16 %v247
    %v2255 = vunpack.c.l.b16 %v248
    %v2256 = vunpack.c.h.b16 %v248
    %v2257 = vunpack.c.l.b16 %v249
    %v2258 = vunpack.c.h.b16 %v249
    %v2259 = vunpack.c.l.b16 %v250
    %v2260 = vunpack.c.h.b16 %v250
    %v2261 = vunpack.c.l.b16 %v251
    %v2262 = vunpack.c.h.b16 %v251
    %v2263 = vunpack.c.l.b16 %v252
    %v2264 = vunpack.c.h.b16 %v252
    %v2265 = vunpack.c.l.b16 %v253
    %v2266 = vunpack.c.h.b16 %v253
    %v2267 = vunpack.c.l.b16 %v254
    %v2268 = vunpack.c.h.b16 %v254
    %v2269 = vunpack.c.l.b16 %v255
    %v2270 = vunpack.c.h.b16 %v255
    %v2271 = vunpack.c.l.b16 %v256
    %v2272 = vunpack.c.h.b16 %v256
    %v2273 = vunpack.c.l.b16 %v257
    %v2274 = vunpack.c.h.b16 %v257
    %v2275 = vunpack.c.l.b16 %v258
    %v2276 = vunpack.c.h.b16 %v258
    %v2277 = vunpack.c.l.b16 %v259
    %v2278 = vunpack.c.h.b16 %v259
    %v2279 = vunpack.c.l.b16 %v260
    %v2280 = vunpack.c.h.b16 %v260
    %v2281 = vunpack.c.l.b16 %v261
    %v2282 = vunpack.c.h.b16 %v261
    %v2283 = vunpack.c.l.b16 %v262
    %v2284 = vunpack.c.h.b16 %v262
    %v2285 = vunpack.c.l.b16 %v263
    %v2286 = vunpack.c.h.b16 %v263
    %v2287 = vunpack.c.l.b16 %v264
    %v2288 = vunpack.c.h.b16 %v264
    %v2289 = vunpack.c.l.b16 %v265
    %v2290 = vunpack.c.h.b16 %v265
    %v2291 = vunpack.c.l.b16 %v266
    %v2292 = vunpack.c.h.b16 %v266
    %v2293 = vunpack.c.l.b16 %v267
    %v2294 = vunpack.c.h.b16 %v267
    %v2295 = vunpack.c.l.b16 %v268
    %v2296 = vunpack.c.h.b16 %v268
    %v2297 = vunpack.c.l.b16 %v269
    %v2298 = vunpack.c.h.b16 %v269
    %v2299 = vunpack.c.l.b16 %v270
    %v2300 = vunpack.c.h.b16 %v270
    %v2301 = vunpack.c.l.b16 %v271
    %v2302 = vunpack.c.h.b16 %v271
    %v2303 = vunpack.c.l.b16 %v272
    %v2304 = vunpack.c.h.b16 %v272
    %v2305 = vunpack.c.l.b16 %v273
    %v2306 = vunpack.c.h.b16 %v273
    %v2307 = vunpack.c.l.b16 %v274
    %v2308 = vunpack.c.h.b16 %v274
    %v2309 = vunpack.c.l.b16 %v275
    %v2310 = vunpack.c.h.b16 %v275
    %v2311 = vunpack.c.l.b16 %v276
    %v2312 = vunpack.c.h.b16 %v276
    %v2313 = vunpack.c.l.b16 %v277
    %v2314 = vunpack.c.h.b16 %v277
    %v2315 = vunpack.c.l.b16 %v278
    %v2316 = vunpack.c.h.b16 %v278
    %v2317 = vunpack.c.l.b16 %v279
    %v2318 = vunpack.c.h.b16 %v279
    %v2319 = vunpack.c.l.b16 %v280
    %v2320 = vunpack.c.h.b16 %v280
    %v2321 = vunpack.c.l.b16 %v281
    %v2322 = vunpack.c.h.b16 %v281
    %v2323 = vunpack.c.l.b16 %v282
    %v2324 = vunpack.c.h.b16 %v282
    %v2325 = vunpack.c.l.b16 %v283
    %v2326 = vunpack.c.h.b16 %v283
    %v2327 = vunpack.c.l.b16 %v284
    %v2328 = vunpack.c.h.b16 %v284
    %v2329 = vunpack.c.l.b16 %v285
    %v2330 = vunpack.c.h.b16 %v285
    %v2331 = vunpack.c.l.b16 %v286
    %v2332 = vunpack.c.h.b16 %v286
    %v2333 = vunpack.c.l.b16 %v287
    %v2334 = vunpack.c.h.b16 %v287
    %v2335 = vunpack.c.l.b16 %v288
    %v2336 = vunpack.c.h.b16 %v288
    %v2337 = vunpack.c.l.b16 %v289
    %v2338 = vunpack.c.h.b16 %v289
    %v2339 = vunpack.c.l.b16 %v290
    %v2340 = vunpack.c.h.b16 %v290
    %v2341 = vunpack.c.l.b16 %v291
    %v2342 = vunpack.c.h.b16 %v291
    %v2343 = vunpack.c.l.b16 %v292
    %v2344 = vunpack.c.h.b16 %v292
    %v2345 = vunpack.c.l.b16 %v293
    %v2346 = vunpack.c.h.b16 %v293
    %v2347 = vunpack.c.l.b16 %v294
    %v2348 = vunpack.c.h.b16 %v294
    %v2349 = vunpack.c.l.b16 %v295
    %v2350 = vunpack.c.h.b16 %v295
    %v2351 = vunpack.c.l.b16 %v296
    %v2352 = vunpack.c.h.b16 %v296
    %v2353 = vunpack.c.l.b16 %v297
    %v2354 = vunpack.c.h.b16 %v297
    %v2355 = vunpack.c.l.b16 %v298
    %v2356 = vunpack.c.h.b16 %v298
    %v2357 = vunpack.c.l.b16 %v299
    %v2358 = vunpack.c.h.b16 %v299
    %v2359 = vunpack.c.l.b16 %v300
    %v2360 = vunpack.c.h.b16 %v300
    %v2361 = vunpack.c.l.b16 %v301
    %v2362 = vunpack.c.h.b16 %v301
    %v2363 = vunpack.c.l.b16 %v302
    %v2364 = vunpack.c.h.b16 %v302
    %v2365 = vunpack.c.l.b16 %v303
    %v2366 = vunpack.c.h.b16 %v303
    %v2367 = vunpack.c.l.b16 %v304
    %v2368 = vunpack.c.h.b16 %v304
    %v2369 = vunpack.c.l.b16 %v305
    %v2370 = vunpack.c.h.b16 %v305
    %v2371 = vunpack.c.l.b16 %v306
    %v2372 = vunpack.c.h.b16 %v306
    %v2373 = vunpack.c.l.b16 %v307
    %v2374 = vunpack.c.h.b16 %v307
    %v2375 = vunpack.c.l.b16 %v308
    %v2376 = vunpack.c.h.b16 %v308
    %v2377 = vunpack.c.l.b16 %v309
    %v2378 = vunpack.c.h.b16 %v309
    %v2379 = vunpack.c.l.b16 %v310
    %v2380 = vunpack.c.h.b16 %v310
    %v2381 = vunpack.c.l.b16 %v311
    %v2382 = vunpack.c.h.b16 %v311
    %v2383 = vunpack.c.l.b16 %v312
    %v2384 = vunpack.c.h.b16 %v312
    %v2385 = vunpack.c.l.b16 %v313
    %v2386 = vunpack.c.h.b16 %v313
    %v2387 = vunpack.c.l.b16 %v314
    %v2388 = vunpack.c.h.b16 %v314
    %v2389 = vunpack.c.l.b16 %v315
    %v2390 = vunpack.c.h.b16 %v315
    %v2391 = vunpack.c.l.b16 %v316
    %v2392 = vunpack.c.h.b16 %v316
    %v2393 = vunpack.c.l.b16 %v317
    %v2394 = vunpack.c.h.b16 %v317
    %v2395 = vunpack.c.l.b16 %v318
    %v2396 = vunpack.c.h.b16 %v318
    %v2397 = vunpack.c.l.b16 %v319
    %v2398 = vunpack.c.h.b16 %v319
    %v2399 = vunpack.c.l.b16 %v320
    %v2400 = vunpack.c.h.b16 %v320
    %v2401 = vunpack.c.l.b16 %v321
    %v2402 = vunpack.c.h.b16 %v321
    %v2403 = vunpack.c.l.b16 %v322
    %v2404 = vunpack.c.h.b16 %v322
    %v2405 = vunpack.c.l.b16 %v323
    %v2406 = vunpack.c.h.b16 %v323
    %v2407 = vunpack.c.l.b16 %v324
    %v2408 = vunpack.c.h.b16 %v324
    %v2409 = vunpack.c.l.b16 %v325
    %v2410 = vunpack.c.h.b16 %v325
    %v2411 = vunpack.c.l.b16 %v326
    %v2412 = vunpack.c.h.b16 %v326
    %v2413 = vunpack.c.l.b16 %v327
    %v2414 = vunpack.c.h.b16 %v327
    %v2415 = vunpack.c.l.b16 %v328
    %v2416 = vunpack.c.h.b16 %v328
    %v2417 = vunpack.c.l.b16 %v329
    %v2418 = vunpack.c.h.b16 %v329
    %v2419 = vunpack.c.l.b16 %v330
    %v2420 = vunpack.c.h.b16 %v330
    %v2421 = vunpack.c.l.b16 %v331
    %v2422 = vunpack.c.h.b16 %v331
    %v2423 = vunpack.c.l.b16 %v332
    %v2424 = vunpack.c.h.b16 %v332
    %v2425 = vunpack.c.l.b16 %v333
    %v2426 = vunpack.c.h.b16 %v333
    %v2427 = vunpack.c.l.b16 %v334
    %v2428 = vunpack.c.h.b16 %v334
    %v2429 = vunpack.c.l.b16 %v335
    %v2430 = vunpack.c.h.b16 %v335
    %v2431 = vunpack.c.l.b16 %v336
    %v2432 = vunpack.c.h.b16 %v336
    %v2433 = vunpack.c.l.b16 %v337
    %v2434 = vunpack.c.h.b16 %v337
    %v2435 = vunpack.c.l.b16 %v338
    %v2436 = vunpack.c.h.b16 %v338
    %v2437 = vunpack.c.l.b16 %v339
    %v2438 = vunpack.c.h.b16 %v339
    %v2439 = vunpack.c.l.b16 %v340
    %v2440 = vunpack.c.h.b16 %v340
    %v2441 = vunpack.c.l.b16 %v341
    %v2442 = vunpack.c.h.b16 %v341
    %v2443 = vunpack.c.l.b16 %v342
    %v2444 = vunpack.c.h.b16 %v342
    %v2445 = vunpack.c.l.b16 %v343
    %v2446 = vunpack.c.h.b16 %v343
    %v2447 = vunpack.c.l.b16 %v344
    %v2448 = vunpack.c.h.b16 %v344
    %v2449 = vunpack.c.l.b16 %v345
    %v2450 = vunpack.c.h.b16 %v345
    %v2451 = vunpack.c.l.b16 %v346
    %v2452 = vunpack.c.h.b16 %v346
    %v2453 = vunpack.c.l.b16 %v347
    %v2454 = vunpack.c.h.b16 %v347
    %v2455 = vunpack.c.l.b16 %v348
    %v2456 = vunpack.c.h.b16 %v348
    %v2457 = vunpack.c.l.b16 %v349
    %v2458 = vunpack.c.h.b16 %v349
    %v2459 = vunpack.c.l.b16 %v350
    %v2460 = vunpack.c.h.b16 %v350
    %v2461 = vunpack.c.l.b16 %v351
    %v2462 = vunpack.c.h.b16 %v351
    %v2463 = vunpack.c.l.b16 %v352
    %v2464 = vunpack.c.h.b16 %v352
    %v2465 = vunpack.c.l.b16 %v353
    %v2466 = vunpack.c.h.b16 %v353
    %v2467 = vunpack.c.l.b16 %v354
    %v2468 = vunpack.c.h.b16 %v354
    %v2469 = vunpack.c.l.b16 %v355
    %v2470 = vunpack.c.h.b16 %v355
    %v2471 = vunpack.c.l.b16 %v356
    %v2472 = vunpack.c.h.b16 %v356
    %v2473 = vunpack.c.l.b16 %v357
    %v2474 = vunpack.c.h.b16 %v357
    %v2475 = vunpack.c.l.b16 %v358
    %v2476 = vunpack.c.h.b16 %v358
    %v2477 = vunpack.c.l.b16 %v359
    %v2478 = vunpack.c.h.b16 %v359
    %v2479 = vunpack.c.l.b16 %v360
    %v2480 = vunpack.c.h.b16 %v360
    %v2481 = vunpack.c.l.b16 %v361
    %v2482 = vunpack.c.h.b16 %v361
    %v2483 = vunpack.c.l.b16 %v362
    %v2484 = vunpack.c.h.b16 %v362
    %v2485 = vunpack.c.l.b16 %v363
    %v2486 = vunpack.c.h.b16 %v363
    %v2487 = vunpack.c.l.b16 %v364
    %v2488 = vunpack.c.h.b16 %v364
    %v2489 = vunpack.c.l.b16 %v365
    %v2490 = vunpack.c.h.b16 %v365
    %v2491 = vunpack.c.l.b16 %v366
    %v2492 = vunpack.c.h.b16 %v366
    %v2493 = vunpack.c.l.b16 %v367
    %v2494 = vunpack.c.h.b16 %v367
    %v2495 = vunpack.c.l.b16 %v368
    %v2496 = vunpack.c.h.b16 %v368
    %v2497 = vunpack.c.l.b16 %v369
    %v2498 = vunpack.c.h.b16 %v369
    %v2499 = vunpack.c.l.b16 %v370
    %v2500 = vunpack.c.h.b16 %v370
    %v2501 = vunpack.c.l.b16 %v371
    %v2502 = vunpack.c.h.b16 %v371
    %v2503 = vunpack.c.l.b16 %v372
    %v2504 = vunpack.c.h.b16 %v372
    %v2505 = vunpack.c.l.b16 %v373
    %v2506 = vunpack.c.h.b16 %v373
    %v2507 = vunpack.c.l.b16 %v374
    %v2508 = vunpack.c.h.b16 %v374
    %v2509 = vunpack.c.l.b16 %v375
    %v2510 = vunpack.c.h.b16 %v375
    %v2511 = vunpack.c.l.b16 %v376
    %v2512 = vunpack.c.h.b16 %v376
    %v2513 = vunpack.c.l.b16 %v377
    %v2514 = vunpack.c.h.b16 %v377
    %v2515 = vunpack.c.l.b16 %v378
    %v2516 = vunpack.c.h.b16 %v378
    %v2517 = vunpack.c.l.b16 %v379
    %v2518 = vunpack.c.h.b16 %v379
    %v2519 = vunpack.c.l.b16 %v380
    %v2520 = vunpack.c.h.b16 %v380
    %v2521 = vunpack.c.l.b16 %v381
    %v2522 = vunpack.c.h.b16 %v381
    %v2523 = vunpack.c.l.b16 %v382
    %v2524 = vunpack.c.h.b16 %v382
    %v2525 = vunpack.c.l.b16 %v383
    %v2526 = vunpack.c.h.b16 %v383
    %v2527 = vunpack.c.l.b16 %v384
    %v2528 = vunpack.c.h.b16 %v384
    %v2529 = vunpack.c.l.b16 %v385
    %v2530 = vunpack.c.h.b16 %v385
    %v2531 = vunpack.c.l.b16 %v386
    %v2532 = vunpack.c.h.b16 %v386
    %v2533 = vunpack.c.l.b16 %v387
    %v2534 = vunpack.c.h.b16 %v387
    %v2535 = vunpack.c.l.b16 %v388
    %v2536 = vunpack.c.h.b16 %v388
    %v2537 = vunpack.c.l.b16 %v389
    %v2538 = vunpack.c.h.b16 %v389
    %v2539 = vunpack.c.l.b16 %v390
    %v2540 = vunpack.c.h.b16 %v390
    %v2541 = vunpack.c.l.b16 %v391
    %v2542 = vunpack.c.h.b16 %v391
    %v2543 = vunpack.c.l.b16 %v392
    %v2544 = vunpack.c.h.b16 %v392
    %v2545 = vunpack.c.l.b16 %v393
    %v2546 = vunpack.c.h.b16 %v393
    %v2547 = vunpack.c.l.b16 %v394
    %v2548 = vunpack.c.h.b16 %v394
    %v2549 = vunpack.c.l.b16 %v395
    %v2550 = vunpack.c.h.b16 %v395
    %v2551 = vunpack.c.l.b16 %v396
    %v2552 = vunpack.c.h.b16 %v396
    %v2553 = vunpack.c.l.b16 %v397
    %v2554 = vunpack.c.h.b16 %v397
    %v2555 = vunpack.c.l.b16 %v398
    %v2556 = vunpack.c.h.b16 %v398
    %v2557 = vunpack.c.l.b16 %v399
    %v2558 = vunpack.c.h.b16 %v399
    %v2559 = vunpack.c.l.b16 %v400
    %v2560 = vunpack.c.h.b16 %v400
    %v2561 = vunpack.c.l.b16 %v401
    %v2562 = vunpack.c.h.b16 %v401
    %v2563 = vunpack.c.l.b16 %v402
    %v2564 = vunpack.c.h.b16 %v402
    %v2565 = vunpack.c.l.b16 %v403
    %v2566 = vunpack.c.h.b16 %v403
    %v2567 = vunpack.c.l.b16 %v404
    %v2568 = vunpack.c.h.b16 %v404
    %v2569 = vunpack.c.l.b16 %v405
    %v2570 = vunpack.c.h.b16 %v405
    %v2571 = vunpack.c.l.b16 %v406
    %v2572 = vunpack.c.h.b16 %v406
    %v2573 = vunpack.c.l.b16 %v407
    %v2574 = vunpack.c.h.b16 %v407
    %v2575 = vunpack.c.l.b16 %v408
    %v2576 = vunpack.c.h.b16 %v408
    %v2577 = vunpack.c.l.b16 %v409
    %v2578 = vunpack.c.h.b16 %v409
    %v2579 = vunpack.c.l.b16 %v410
    %v2580 = vunpack.c.h.b16 %v410
    %v2581 = vunpack.c.l.b16 %v411
    %v2582 = vunpack.c.h.b16 %v411
    %v2583 = vunpack.c.l.b16 %v412
    %v2584 = vunpack.c.h.b16 %v412
    %v2585 = vunpack.c.l.b16 %v413
    %v2586 = vunpack.c.h.b16 %v413
    %v2587 = vunpack.c.l.b16 %v414
    %v2588 = vunpack.c.h.b16 %v414
    %v2589 = vunpack.c.l.b16 %v415
    %v2590 = vunpack.c.h.b16 %v415
    %v2591 = vunpack.c.l.b16 %v416
    %v2592 = vunpack.c.h.b16 %v416
    %v2593 = vunpack.c.l.b16 %v417
    %v2594 = vunpack.c.h.b16 %v417
    %v2595 = vunpack.c.l.b16 %v418
    %v2596 = vunpack.c.h.b16 %v418
    %v2597 = vunpack.c.l.b16 %v419
    %v2598 = vunpack.c.h.b16 %v419
    %v2599 = vunpack.c.l.b16 %v420
    %v2600 = vunpack.c.h.b16 %v420
    %v2601 = vunpack.c.l.b16 %v421
    %v2602 = vunpack.c.h.b16 %v421
    %v2603 = vunpack.c.l.b16 %v422
    %v2604 = vunpack.c.h.b16 %v422
    %v2605 = vunpack.c.l.b16 %v423
    %v2606 = vunpack.c.h.b16 %v423
    %v2607 = vunpack.c.l.b16 %v424
    %v2608 = vunpack.c.h.b16 %v424
    %v2609 = vunpack.c.l.b16 %v425
    %v2610 = vunpack.c.h.b16 %v425
    %v2611 = vunpack.c.l.b16 %v426
    %v2612 = vunpack.c.h.b16 %v426
    %v2613 = vunpack.c.l.b16 %v427
    %v2614 = vunpack.c.h.b16 %v427
    %v2615 = vunpack.c.l.b16 %v428
    %v2616 = vunpack.c.h.b16 %v428
    %v2617 = vunpack.c.l.b16 %v429
    %v2618 = vunpack.c.h.b16 %v429
    %v2619 = vunpack.c.l.b16 %v430
    %v2620 = vunpack.c.h.b16 %v430
    %v2621 = vunpack.c.l.b16 %v431
    %v2622 = vunpack.c.h.b16 %v431
    %v2623 = vunpack.c.l.b16 %v432
    %v2624 = vunpack.c.h.b16 %v432
    %v2625 = vunpack.c.l.b16 %v433
    %v2626 = vunpack.c.h.b16 %v433
    %v2627 = vunpack.c.l.b16 %v434
    %v2628 = vunpack.c.h.b16 %v434
    %v2629 = vunpack.c.l.b16 %v435
    %v2630 = vunpack.c.h.b16 %v435
    %v2631 = vunpack.c.l.b16 %v436
    %v2632 = vunpack.c.h.b16 %v436
    %v2633 = vunpack.c.l.b16 %v437
    %v2634 = vunpack.c.h.b16 %v437
    %v2635 = vunpack.c.l.b16 %v438
    %v2636 = vunpack.c.h.b16 %v438
    %v2637 = vunpack.c.l.b16 %v439
    %v2638 = vunpack.c.h.b16 %v439
    %v2639 = vunpack.c.l.b16 %v440
    %v2640 = vunpack.c.h.b16 %v440
    %v2641 = vunpack.c.l.b16 %v441
    %v2642 = vunpack.c.h.b16 %v441
    %v2643 = vunpack.c.l.b16 %v442
    %v2644 = vunpack.c.h.b16 %v442
    %v2645 = vunpack.c.l.b16 %v443
    %v2646 = vunpack.c.h.b16 %v443
    %v2647 = vunpack.c.l.b16 %v444
    %v2648 = vunpack.c.h.b16 %v444
    %v2649 = vunpack.c.l.b16 %v445
    %v2650 = vunpack.c.h.b16 %v445
    %v2651 = vunpack.c.l.b16 %v446
    %v2652 = vunpack.c.h.b16 %v446
    %v2653 = vunpack.c.l.b16 %v447
    %v2654 = vunpack.c.h.b16 %v447
    %v2655 = vunpack.c.l.b16 %v448
    %v2656 = vunpack.c.h.b16 %v448
    %v2657 = vunpack.c.l.b16 %v449
    %v2658 = vunpack.c.h.b16 %v449
    %v2659 = vunpack.c.l.b16 %v450
    %v2660 = vunpack.c.h.b16 %v450
    %v2661 = vunpack.c.l.b16 %v451
    %v2662 = vunpack.c.h.b16 %v451
    %v2663 = vunpack.c.l.b16 %v452
    %v2664 = vunpack.c.h.b16 %v452
    %v2665 = vunpack.c.l.b16 %v453
    %v2666 = vunpack.c.h.b16 %v453
    %v2667 = vunpack.c.l.b16 %v454
    %v2668 = vunpack.c.h.b16 %v454
    %v2669 = vunpack.c.l.b16 %v455
    %v2670 = vunpack.c.h.b16 %v455
    %v2671 = vunpack.c.l.b16 %v456
    %v2672 = vunpack.c.h.b16 %v456
    %v2673 = vunpack.c.l.b16 %v457
    %v2674 = vunpack.c.h.b16 %v457
    %v2675 = vunpack.c.l.b16 %v458
    %v2676 = vunpack.c.h.b16 %v458
    %v2677 = vunpack.c.l.b16 %v459
    %v2678 = vunpack.c.h.b16 %v459
    %v2679 = vunpack.c.l.b16 %v460
    %v2680 = vunpack.c.h.b16 %v460
    %v2681 = vunpack.c.l.b16 %v461
    %v2682 = vunpack.c.h.b16 %v461
    %v2683 = vunpack.c.l.b16 %v462
    %v2684 = vunpack.c.h.b16 %v462
    %v2685 = vunpack.c.l.b16 %v463
    %v2686 = vunpack.c.h.b16 %v463
    %v2687 = vunpack.c.l.b16 %v464
    %v2688 = vunpack.c.h.b16 %v464
    %v2689 = vunpack.c.l.b16 %v465
    %v2690 = vunpack.c.h.b16 %v465
    %v2691 = vunpack.c.l.b16 %v466
    %v2692 = vunpack.c.h.b16 %v466
    %v2693 = vunpack.c.l.b16 %v467
    %v2694 = vunpack.c.h.b16 %v467
    %v2695 = vunpack.c.l.b16 %v468
    %v2696 = vunpack.c.h.b16 %v468
    %v2697 = vunpack.c.l.b16 %v469
    %v2698 = vunpack.c.h.b16 %v469
    %v2699 = vunpack.c.l.b16 %v470
    %v2700 = vunpack.c.h.b16 %v470
    %v2701 = vunpack.c.l.b16 %v471
    %v2702 = vunpack.c.h.b16 %v471
    %v2703 = vunpack.c.l.b16 %v472
    %v2704 = vunpack.c.h.b16 %v472
    %v2705 = vunpack.c.l.b16 %v473
    %v2706 = vunpack.c.h.b16 %v473
    %v2707 = vunpack.c.l.b16 %v474
    %v2708 = vunpack.c.h.b16 %v474
    %v2709 = vunpack.c.l.b16 %v475
    %v2710 = vunpack.c.h.b16 %v475
    %v2711 = vunpack.c.l.b16 %v476
    %v2712 = vunpack.c.h.b16 %v476
    %v2713 = vunpack.c.l.b16 %v477
    %v2714 = vunpack.c.h.b16 %v477
    %v2715 = vunpack.c.l.b16 %v478
    %v2716 = vunpack.c.h.b16 %v478
    %v2717 = vunpack.c.l.b16 %v479
    %v2718 = vunpack.c.h.b16 %v479
    %v2719 = vunpack.c.l.b16 %v480
    %v2720 = vunpack.c.h.b16 %v480
    %v2721 = vunpack.c.l.b16 %v481
    %v2722 = vunpack.c.h.b16 %v481
    %v2723 = vunpack.c.l.b16 %v482
    %v2724 = vunpack.c.h.b16 %v482
    %v2725 = vunpack.c.l.b16 %v483
    %v2726 = vunpack.c.h.b16 %v483
    %v2727 = vunpack.c.l.b16 %v484
    %v2728 = vunpack.c.h.b16 %v484
    %v2729 = vunpack.c.l.b16 %v485
    %v2730 = vunpack.c.h.b16 %v485
    %v2731 = vunpack.c.l.b16 %v486
    %v2732 = vunpack.c.h.b16 %v486
    %v2733 = vunpack.c.l.b16 %v487
    %v2734 = vunpack.c.h.b16 %v487
    %v2735 = vunpack.c.l.b16 %v488
    %v2736 = vunpack.c.h.b16 %v488
    %v2737 = vunpack.c.l.b16 %v489
    %v2738 = vunpack.c.h.b16 %v489
    %v2739 = vunpack.c.l.b16 %v490
    %v2740 = vunpack.c.h.b16 %v490
    %v2741 = vunpack.c.l.b16 %v491
    %v2742 = vunpack.c.h.b16 %v491
    %v2743 = vunpack.c.l.b16 %v492
    %v2744 = vunpack.c.h.b16 %v492
    %v2745 = vunpack.c.l.b16 %v493
    %v2746 = vunpack.c.h.b16 %v493
    %v2747 = vunpack.c.l.b16 %v494
    %v2748 = vunpack.c.h.b16 %v494
    %v2749 = vunpack.c.l.b16 %v495
    %v2750 = vunpack.c.h.b16 %v495
    %v2751 = vunpack.c.l.b16 %v496
    %v2752 = vunpack.c.h.b16 %v496
    %v2753 = vunpack.c.l.b16 %v497
    %v2754 = vunpack.c.h.b16 %v497
    %v2755 = vunpack.c.l.b16 %v498
    %v2756 = vunpack.c.h.b16 %v498
    %v2757 = vunpack.c.l.b16 %v499
    %v2758 = vunpack.c.h.b16 %v499
    %v2759 = vunpack.c.l.b16 %v500
    %v2760 = vunpack.c.h.b16 %v500
    %v2761 = vunpack.c.l.b16 %v501
    %v2762 = vunpack.c.h.b16 %v501
    %v2763 = vunpack.c.l.b16 %v502
    %v2764 = vunpack.c.h.b16 %v502
    %v2765 = vunpack.c.l.b16 %v503
    %v2766 = vunpack.c.h.b16 %v503
    %v2767 = vunpack.c.l.b16 %v504
    %v2768 = vunpack.c.h.b16 %v504
    %v2769 = vunpack.c.l.b16 %v505
    %v2770 = vunpack.c.h.b16 %v505
    %v2771 = vunpack.c.l.b16 %v506
    %v2772 = vunpack.c.h.b16 %v506
    %v2773 = vunpack.c.l.b16 %v507
    %v2774 = vunpack.c.h.b16 %v507
    %v2775 = vunpack.c.l.b16 %v508
    %v2776 = vunpack.c.h.b16 %v508
    %v2777 = vunpack.c.l.b16 %v509
    %v2778 = vunpack.c.h.b16 %v509
    %v2779 = vunpack.c.l.b16 %v510
    %v2780 = vunpack.c.h.b16 %v510
    %v2781 = vunpack.c.l.b16 %v511
    %v2782 = vunpack.c.h.b16 %v511
    %v2783 = vunpack.c.l.b16 %v512
    %v2784 = vunpack.c.h.b16 %v512
    %v2785 = vunpack.c.l.b16 %v513
    %v2786 = vunpack.c.h.b16 %v513
    %v2787 = vunpack.c.l.b16 %v514
    %v2788 = vunpack.c.h.b16 %v514
    %v2789 = vunpack.c.l.b16 %v515
    %v2790 = vunpack.c.h.b16 %v515
    %v2791 = vunpack.c.l.b16 %v516
    %v2792 = vunpack.c.h.b16 %v516
    %v2793 = vunpack.c.l.b16 %v517
    %v2794 = vunpack.c.h.b16 %v517
    %v2795 = vunpack.c.l.b16 %v518
    %v2796 = vunpack.c.h.b16 %v518
    %v2797 = vunpack.c.l.b16 %v519
    %v2798 = vunpack.c.h.b16 %v519
    %v2799 = vunpack.c.l.b16 %v520
    %v2800 = vunpack.c.h.b16 %v520
    %v2801 = vunpack.c.l.b16 %v521
    %v2802 = vunpack.c.h.b16 %v521
    %v2803 = vunpack.c.l.b16 %v522
    %v2804 = vunpack.c.h.b16 %v522
    %v2805 = vunpack.c.l.b16 %v523
    %v2806 = vunpack.c.h.b16 %v523
    %v2807 = vunpack.c.l.b16 %v524
    %v2808 = vunpack.c.h.b16 %v524
    %v2809 = vunpack.c.l.b16 %v525
    %v2810 = vunpack.c.h.b16 %v525
    %v2811 = vunpack.c.l.b16 %v526
    %v2812 = vunpack.c.h.b16 %v526
    %v2813 = vunpack.c.l.b16 %v527
    %v2814 = vunpack.c.h.b16 %v527
    %v2815 = vunpack.c.l.b16 %v528
    %v2816 = vunpack.c.h.b16 %v528
    %v2817 = vunpack.c.l.b16 %v529
    %v2818 = vunpack.c.h.b16 %v529
    %v2819 = vunpack.c.l.b16 %v530
    %v2820 = vunpack.c.h.b16 %v530
    %v2821 = vunpack.c.l.b16 %v531
    %v2822 = vunpack.c.h.b16 %v531
    %v2823 = vunpack.c.l.b16 %v532
    %v2824 = vunpack.c.h.b16 %v532
    %v2825 = vunpack.c.l.b16 %v533
    %v2826 = vunpack.c.h.b16 %v533
    %v2827 = vunpack.c.l.b16 %v534
    %v2828 = vunpack.c.h.b16 %v534
    %v2829 = vunpack.c.l.b16 %v535
    %v2830 = vunpack.c.h.b16 %v535
    %v2831 = vunpack.c.l.b16 %v536
    %v2832 = vunpack.c.h.b16 %v536
    %v2833 = vunpack.c.l.b16 %v537
    %v2834 = vunpack.c.h.b16 %v537
    %v2835 = vunpack.c.l.b16 %v538
    %v2836 = vunpack.c.h.b16 %v538
    %v2837 = vunpack.c.l.b16 %v539
    %v2838 = vunpack.c.h.b16 %v539
    %v2839 = vunpack.c.l.b16 %v540
    %v2840 = vunpack.c.h.b16 %v540
    %v2841 = vunpack.c.l.b16 %v541
    %v2842 = vunpack.c.h.b16 %v541
    %v2843 = vunpack.c.l.b16 %v542
    %v2844 = vunpack.c.h.b16 %v542
    %v2845 = vunpack.c.l.b16 %v543
    %v2846 = vunpack.c.h.b16 %v543
    %v2847 = vunpack.c.l.b16 %v544
    %v2848 = vunpack.c.h.b16 %v544
    %v2849 = vunpack.c.l.b16 %v545
    %v2850 = vunpack.c.h.b16 %v545
    %v2851 = vunpack.c.l.b16 %v546
    %v2852 = vunpack.c.h.b16 %v546
    %v2853 = vunpack.c.l.b16 %v547
    %v2854 = vunpack.c.h.b16 %v547
    %v2855 = vunpack.c.l.b16 %v548
    %v2856 = vunpack.c.h.b16 %v548
    %v2857 = vunpack.c.l.b16 %v549
    %v2858 = vunpack.c.h.b16 %v549
    %v2859 = vunpack.c.l.b16 %v550
    %v2860 = vunpack.c.h.b16 %v550
    %v2861 = vunpack.c.l.b16 %v551
    %v2862 = vunpack.c.h.b16 %v551
    %v2863 = vunpack.c.l.b16 %v552
    %v2864 = vunpack.c.h.b16 %v552
    %v2865 = vunpack.c.l.b16 %v553
    %v2866 = vunpack.c.h.b16 %v553
    %v2867 = vunpack.c.l.b16 %v554
    %v2868 = vunpack.c.h.b16 %v554
    %v2869 = vunpack.c.l.b16 %v555
    %v2870 = vunpack.c.h.b16 %v555
    %v2871 = vunpack.c.l.b16 %v556
    %v2872 = vunpack.c.h.b16 %v556
    %v2873 = vunpack.c.l.b16 %v557
    %v2874 = vunpack.c.h.b16 %v557
    %v2875 = vunpack.c.l.b16 %v558
    %v2876 = vunpack.c.h.b16 %v558
    %v2877 = vunpack.c.l.b16 %v559
    %v2878 = vunpack.c.h.b16 %v559
    %v2879 = vunpack.c.l.b16 %v560
    %v2880 = vunpack.c.h.b16 %v560
    %v2881 = vunpack.c.l.b16 %v561
    %v2882 = vunpack.c.h.b16 %v561
    %v2883 = vunpack.c.l.b16 %v562
    %v2884 = vunpack.c.h.b16 %v562
    %v2885 = vunpack.c.l.b16 %v563
    %v2886 = vunpack.c.h.b16 %v563
    %v2887 = vunpack.c.l.b16 %v564
    %v2888 = vunpack.c.h.b16 %v564
    %v2889 = vunpack.c.l.b16 %v565
    %v2890 = vunpack.c.h.b16 %v565
    %v2891 = vunpack.c.l.b16 %v566
    %v2892 = vunpack.c.h.b16 %v566
    %v2893 = vunpack.c.l.b16 %v567
    %v2894 = vunpack.c.h.b16 %v567
    %v2895 = vunpack.c.l.b16 %v568
    %v2896 = vunpack.c.h.b16 %v568
    %v2897 = vunpack.c.l.b16 %v569
    %v2898 = vunpack.c.h.b16 %v569
    %v2899 = vunpack.c.l.b16 %v570
    %v2900 = vunpack.c.h.b16 %v570
    %v2901 = vunpack.c.l.b16 %v571
    %v2902 = vunpack.c.h.b16 %v571
    %v2903 = vunpack.c.l.b16 %v572
    %v2904 = vunpack.c.h.b16 %v572
    %v2905 = vunpack.c.l.b16 %v573
    %v2906 = vunpack.c.h.b16 %v573
    %v2907 = vunpack.c.l.b16 %v574
    %v2908 = vunpack.c.h.b16 %v574
    %v2909 = vunpack.c.l.b16 %v575
    %v2910 = vunpack.c.h.b16 %v575
    %v2911 = vunpack.c.l.b16 %v576
    %v2912 = vunpack.c.h.b16 %v576
    %v2913 = vunpack.c.l.b16 %v577
    %v2914 = vunpack.c.h.b16 %v577
    %v2915 = vunpack.c.l.b16 %v578
    %v2916 = vunpack.c.h.b16 %v578
    %v2917 = vunpack.c.l.b16 %v579
    %v2918 = vunpack.c.h.b16 %v579
    %v2919 = vunpack.c.l.b16 %v580
    %v2920 = vunpack.c.h.b16 %v580
    %v2921 = vunpack.c.l.b16 %v581
    %v2922 = vunpack.c.h.b16 %v581
    %v2923 = vunpack.c.l.b16 %v582
    %v2924 = vunpack.c.h.b16 %v582
    %v2925 = vunpack.c.l.b16 %v583
    %v2926 = vunpack.c.h.b16 %v583
    %v2927 = vunpack.c.l.b16 %v584
    %v2928 = vunpack.c.h.b16 %v584
    %v2929 = vunpack.c.l.b16 %v585
    %v2930 = vunpack.c.h.b16 %v585
    %v2931 = vunpack.c.l.b16 %v586
    %v2932 = vunpack.c.h.b16 %v586
    %v2933 = vunpack.c.l.b16 %v587
    %v2934 = vunpack.c.h.b16 %v587
    %v2935 = vunpack.c.l.b16 %v588
    %v2936 = vunpack.c.h.b16 %v588
    %v2937 = vunpack.c.l.b16 %v589
    %v2938 = vunpack.c.h.b16 %v589
    %v2939 = vunpack.c.l.b16 %v590
    %v2940 = vunpack.c.h.b16 %v590
    %v2941 = vunpack.c.l.b16 %v591
    %v2942 = vunpack.c.h.b16 %v591
    %v2943 = vunpack.c.l.b16 %v592
    %v2944 = vunpack.c.h.b16 %v592
    %v2945 = vunpack.c.l.b16 %v593
    %v2946 = vunpack.c.h.b16 %v593
    %v2947 = vunpack.c.l.b16 %v594
    %v2948 = vunpack.c.h.b16 %v594
    %v2949 = vunpack.c.l.b16 %v595
    %v2950 = vunpack.c.h.b16 %v595
    %v2951 = vunpack.c.l.b16 %v596
    %v2952 = vunpack.c.h.b16 %v596
    %v2953 = vunpack.c.l.b16 %v597
    %v2954 = vunpack.c.h.b16 %v597
    %v2955 = vunpack.c.l.b16 %v598
    %v2956 = vunpack.c.h.b16 %v598
    %v2957 = vunpack.c.l.b16 %v599
    %v2958 = vunpack.c.h.b16 %v599
    %v2959 = vunpack.c.l.b16 %v600
    %v2960 = vunpack.c.h.b16 %v600
    %v2961 = vunpack.c.l.b16 %v601
    %v2962 = vunpack.c.h.b16 %v601
    %v2963 = vunpack.c.l.b16 %v602
    %v2964 = vunpack.c.h.b16 %v602
    %v2965 = vunpack.c.l.b16 %v603
    %v2966 = vunpack.c.h.b16 %v603
    %v2967 = vunpack.c.l.b16 %v604
    %v2968 = vunpack.c.h.b16 %v604
    %v2969 = vunpack.c.l.b16 %v605
    %v2970 = vunpack.c.h.b16 %v605
    %v2971 = vunpack.c.l.b16 %v606
    %v2972 = vunpack.c.h.b16 %v606
    %v2973 = vunpack.c.l.b16 %v607
    %v2974 = vunpack.c.h.b16 %v607
    %v2975 = vunpack.c.l.b16 %v608
    %v2976 = vunpack.c.h.b16 %v608
    %v2977 = vunpack.c.l.b16 %v609
    %v2978 = vunpack.c.h.b16 %v609
    %v2979 = vunpack.c.l.b16 %v610
    %v2980 = vunpack.c.h.b16 %v610
    %v2981 = vunpack.c.l.b16 %v611
    %v2982 = vunpack.c.h.b16 %v611
    %v2983 = vunpack.c.l.b16 %v612
    %v2984 = vunpack.c.h.b16 %v612
    %v2985 = vunpack.c.l.b16 %v613
    %v2986 = vunpack.c.h.b16 %v613
    %v2987 = vunpack.c.l.b16 %v614
    %v2988 = vunpack.c.h.b16 %v614
    %v2989 = vunpack.c.l.b16 %v615
    %v2990 = vunpack.c.h.b16 %v615
    %v2991 = vunpack.c.l.b16 %v616
    %v2992 = vunpack.c.h.b16 %v616
    %v2993 = vunpack.c.l.b16 %v617
    %v2994 = vunpack.c.h.b16 %v617
    %v2995 = vunpack.c.l.b16 %v618
    %v2996 = vunpack.c.h.b16 %v618
    %v2997 = vunpack.c.l.b16 %v619
    %v2998 = vunpack.c.h.b16 %v619
    %v2999 = vunpack.c.l.b16 %v620
    %v3000 = vunpack.c.h.b16 %v620
    %v3001 = vunpack.c.l.b16 %v621
    %v3002 = vunpack.c.h.b16 %v621
    %v3003 = vunpack.c.l.b16 %v622
    %v3004 = vunpack.c.h.b16 %v622
    %v3005 = vunpack.c.l.b16 %v623
    %v3006 = vunpack.c.h.b16 %v623
    %v3007 = vunpack.c.l.b16 %v624
    %v3008 = vunpack.c.h.b16 %v624
    %v3009 = vunpack.c.l.b16 %v625
    %v3010 = vunpack.c.h.b16 %v625
    %v3011 = vunpack.c.l.b16 %v626
    %v3012 = vunpack.c.h.b16 %v626
    %v3013 = vunpack.c.l.b16 %v627
    %v3014 = vunpack.c.h.b16 %v627
    %v3015 = vunpack.c.l.b16 %v628
    %v3016 = vunpack.c.h.b16 %v628
    %v3017 = vunpack.c.l.b16 %v629
    %v3018 = vunpack.c.h.b16 %v629
    %v3019 = vunpack.c.l.b16 %v630
    %v3020 = vunpack.c.h.b16 %v630
    %v3021 = vunpack.c.l.b16 %v631
    %v3022 = vunpack.c.h.b16 %v631
    %v3023 = vunpack.c.l.b16 %v632
    %v3024 = vunpack.c.h.b16 %v632
    %v3025 = vunpack.c.l.b16 %v633
    %v3026 = vunpack.c.h.b16 %v633
    %v3027 = vunpack.c.l.b16 %v634
    %v3028 = vunpack.c.h.b16 %v634
    %v3029 = vunpack.c.l.b16 %v635
    %v3030 = vunpack.c.h.b16 %v635
    %v3031 = vunpack.c.l.b16 %v636
    %v3032 = vunpack.c.h.b16 %v636
    %v3033 = vunpack.c.l.b16 %v637
    %v3034 = vunpack.c.h.b16 %v637
    %v3035 = vunpack.c.l.b16 %v638
    %v3036 = vunpack.c.h.b16 %v638
    %v3037 = vunpack.c.l.b16 %v639
    %v3038 = vunpack.c.h.b16 %v639
    %v3039 = vunpack.c.l.b16 %v640
    %v3040 = vunpack.c.h.b16 %v640
    %v3041 = vunpack.c.l.b16 %v641
    %v3042 = vunpack.c.h.b16 %v641
    %v3043 = vunpack.c.l.b16 %v642
    %v3044 = vunpack.c.h.b16 %v642
    %v3045 = vunpack.c.l.b16 %v643
    %v3046 = vunpack.c.h.b16 %v643
    %v3047 = vunpack.c.l.b16 %v644
    %v3048 = vunpack.c.h.b16 %v644
    %v3049 = vunpack.c.l.b16 %v645
    %v3050 = vunpack.c.h.b16 %v645
    %v3051 = vunpack.c.l.b16 %v646
    %v3052 = vunpack.c.h.b16 %v646
    %v3053 = vunpack.c.l.b16 %v647
    %v3054 = vunpack.c.h.b16 %v647
    %v3055 = vunpack.c.l.b16 %v648
    %v3056 = vunpack.c.h.b16 %v648
    %v3057 = vunpack.c.l.b16 %v649
    %v3058 = vunpack.c.h.b16 %v649
    %v3059 = vunpack.c.l.b16 %v650
    %v3060 = vunpack.c.h.b16 %v650
    %v3061 = vunpack.c.l.b16 %v651
    %v3062 = vunpack.c.h.b16 %v651
    %v3063 = vunpack.c.l.b16 %v652
    %v3064 = vunpack.c.h.b16 %v652
    %v3065 = vunpack.c.l.b16 %v653
    %v3066 = vunpack.c.h.b16 %v653
    %v3067 = vunpack.c.l.b16 %v654
    %v3068 = vunpack.c.h.b16 %v654
    %v3069 = vunpack.c.l.b16 %v655
    %v3070 = vunpack.c.h.b16 %v655
    %v3071 = vunpack.c.l.b16 %v656
    %v3072 = vunpack.c.h.b16 %v656
    %v3073 = vunpack.c.l.b16 %v657
    %v3074 = vunpack.c.h.b16 %v657
    %v3075 = vunpack.c.l.b16 %v658
    %v3076 = vunpack.c.h.b16 %v658
    %v3077 = vunpack.c.l.b16 %v659
    %v3078 = vunpack.c.h.b16 %v659
    %v3079 = vunpack.c.l.b16 %v660
    %v3080 = vunpack.c.h.b16 %v660
    %v3081 = vunpack.c.l.b16 %v661
    %v3082 = vunpack.c.h.b16 %v661
    %v3083 = vunpack.c.l.b16 %v662
    %v3084 = vunpack.c.h.b16 %v662
    %v3085 = vunpack.c.l.b16 %v663
    %v3086 = vunpack.c.h.b16 %v663
    %v3087 = vunpack.c.l.b16 %v664
    %v3088 = vunpack.c.h.b16 %v664
    %v3089 = vunpack.c.l.b16 %v665
    %v3090 = vunpack.c.h.b16 %v665
    %v3091 = vunpack.c.l.b16 %v666
    %v3092 = vunpack.c.h.b16 %v666
    %v3093 = vunpack.c.l.b16 %v667
    %v3094 = vunpack.c.h.b16 %v667
    %v3095 = vunpack.c.l.b16 %v668
    %v3096 = vunpack.c.h.b16 %v668
    %v3097 = vunpack.c.l.b16 %v669
    %v3098 = vunpack.c.h.b16 %v669
    %v3099 = vunpack.c.l.b16 %v670
    %v3100 = vunpack.c.h.b16 %v670
    %v3101 = vunpack.c.l.b16 %v671
    %v3102 = vunpack.c.h.b16 %v671
    %v3103 = vunpack.c.l.b16 %v672
    %v3104 = vunpack.c.h.b16 %v672
    %v3105 = vunpack.c.l.b16 %v673
    %v3106 = vunpack.c.h.b16 %v673
    %v3107 = vunpack.c.l.b16 %v674
    %v3108 = vunpack.c.h.b16 %v674
    %v3109 = vunpack.c.l.b16 %v675
    %v3110 = vunpack.c.h.b16 %v675
    %v3111 = vunpack.c.l.b16 %v676
    %v3112 = vunpack.c.h.b16 %v676
    %v3113 = vunpack.c.l.b16 %v677
    %v3114 = vunpack.c.h.b16 %v677
    %v3115 = vunpack.c.l.b16 %v678
    %v3116 = vunpack.c.h.b16 %v678
    %v3117 = vunpack.c.l.b16 %v679
    %v3118 = vunpack.c.h.b16 %v679
    %v3119 = vunpack.c.l.b16 %v680
    %v3120 = vunpack.c.h.b16 %v680
    %v3121 = vunpack.c.l.b16 %v681
    %v3122 = vunpack.c.h.b16 %v681
    %v3123 = vunpack.c.l.b16 %v682
    %v3124 = vunpack.c.h.b16 %v682
    %v3125 = vunpack.c.l.b16 %v683
    %v3126 = vunpack.c.h.b16 %v683
    %v3127 = vunpack.c.l.b16 %v684
    %v3128 = vunpack.c.h.b16 %v684
    %v3129 = vunpack.c.l.b16 %v685
    %v3130 = vunpack.c.h.b16 %v685
    %v3131 = vunpack.c.l.b16 %v686
    %v3132 = vunpack.c.h.b16 %v686
    %v3133 = vunpack.c.l.b16 %v687
    %v3134 = vunpack.c.h.b16 %v687
    %v3135 = vunpack.c.l.b16 %v688
    %v3136 = vunpack.c.h.b16 %v688
    %v3137 = vunpack.c.l.b16 %v689
    %v3138 = vunpack.c.h.b16 %v689
    %v3139 = vunpack.c.l.b16 %v690
    %v3140 = vunpack.c.h.b16 %v690
    %v3141 = vunpack.c.l.b16 %v691
    %v3142 = vunpack.c.h.b16 %v691
    %v3143 = vunpack.c.l.b16 %v692
    %v3144 = vunpack.c.h.b16 %v692
    %v3145 = vunpack.c.l.b16 %v693
    %v3146 = vunpack.c.h.b16 %v693
    %v3147 = vunpack.c.l.b16 %v694
    %v3148 = vunpack.c.h.b16 %v694
    %v3149 = vunpack.c.l.b16 %v695
    %v3150 = vunpack.c.h.b16 %v695
    %v3151 = vunpack.c.l.b16 %v696
    %v3152 = vunpack.c.h.b16 %v696
    %v3153 = vunpack.c.l.b16 %v697
    %v3154 = vunpack.c.h.b16 %v697
    %v3155 = vunpack.c.l.b16 %v698
    %v3156 = vunpack.c.h.b16 %v698
    %v3157 = vunpack.c.l.b16 %v699
    %v3158 = vunpack.c.h.b16 %v699
    %v3159 = vunpack.c.l.b16 %v700
    %v3160 = vunpack.c.h.b16 %v700
    %v3161 = vunpack.c.l.b16 %v701
    %v3162 = vunpack.c.h.b16 %v701
    %v3163 = vunpack.c.l.b16 %v702
    %v3164 = vunpack.c.h.b16 %v702
    %v3165 = vunpack.c.l.b16 %v703
    %v3166 = vunpack.c.h.b16 %v703
    %v3167 = vunpack.c.l.b16 %v704
    %v3168 = vunpack.c.h.b16 %v704
    %v3169 = vunpack.c.l.b16 %v705
    %v3170 = vunpack.c.h.b16 %v705
    %v3171 = vunpack.c.l.b16 %v706
    %v3172 = vunpack.c.h.b16 %v706
    %v3173 = vunpack.c.l.b16 %v707
    %v3174 = vunpack.c.h.b16 %v707
    %v3175 = vunpack.c.l.b16 %v708
    %v3176 = vunpack.c.h.b16 %v708
    %v3177 = vunpack.c.l.b16 %v709
    %v3178 = vunpack.c.h.b16 %v709
    %v3179 = vunpack.c.l.b16 %v710
    %v3180 = vunpack.c.h.b16 %v710
    %v3181 = vunpack.c.l.b16 %v711
    %v3182 = vunpack.c.h.b16 %v711
    %v3183 = vunpack.c.l.b16 %v712
    %v3184 = vunpack.c.h.b16 %v712
    %v3185 = vunpack.c.l.b16 %v713
    %v3186 = vunpack.c.h.b16 %v713
    %v3187 = vunpack.c.l.b16 %v714
    %v3188 = vunpack.c.h.b16 %v714
    %v3189 = vunpack.c.l.b16 %v715
    %v3190 = vunpack.c.h.b16 %v715
    %v3191 = vunpack.c.l.b16 %v716
    %v3192 = vunpack.c.h.b16 %v716
    %v3193 = vunpack.c.l.b16 %v717
    %v3194 = vunpack.c.h.b16 %v717
    %v3195 = vunpack.c.l.b16 %v718
    %v3196 = vunpack.c.h.b16 %v718
    %v3197 = vunpack.c.l.b16 %v719
    %v3198 = vunpack.c.h.b16 %v719
    %v3199 = vunpack.c.l.b16 %v720
    %v3200 = vunpack.c.h.b16 %v720
    %v3201 = vunpack.c.l.b16 %v721
    %v3202 = vunpack.c.h.b16 %v721
    %v3203 = vunpack.c.l.b16 %v722
    %v3204 = vunpack.c.h.b16 %v722
    %v3205 = vunpack.c.l.b16 %v723
    %v3206 = vunpack.c.h.b16 %v723
    %v3207 = vunpack.c.l.b16 %v724
    %v3208 = vunpack.c.h.b16 %v724
    %v3209 = vunpack.c.l.b16 %v725
    %v3210 = vunpack.c.h.b16 %v725
    %v3211 = vunpack.c.l.b16 %v726
    %v3212 = vunpack.c.h.b16 %v726
    %v3213 = vunpack.c.l.b16 %v727
    %v3214 = vunpack.c.h.b16 %v727
    %v3215 = vunpack.c.l.b16 %v728
    %v3216 = vunpack.c.h.b16 %v728
    %v3217 = vunpack.c.l.b16 %v729
    %v3218 = vunpack.c.h.b16 %v729
    %v3219 = vunpack.c.l.b16 %v730
    %v3220 = vunpack.c.h.b16 %v730
    %v3221 = vunpack.c.l.b16 %v731
    %v3222 = vunpack.c.h.b16 %v731
    %v3223 = vunpack.c.l.b16 %v732
    %v3224 = vunpack.c.h.b16 %v732
    %v3225 = vunpack.c.l.b16 %v733
    %v3226 = vunpack.c.h.b16 %v733
    %v3227 = vunpack.c.l.b16 %v734
    %v3228 = vunpack.c.h.b16 %v734
    %v3229 = vunpack.c.l.b16 %v735
    %v3230 = vunpack.c.h.b16 %v735
    %v3231 = vunpack.c.l.b16 %v736
    %v3232 = vunpack.c.h.b16 %v736
    %v3233 = vunpack.c.l.b16 %v737
    %v3234 = vunpack.c.h.b16 %v737
    %v3235 = vunpack.c.l.b16 %v738
    %v3236 = vunpack.c.h.b16 %v738
    %v3237 = vunpack.c.l.b16 %v739
    %v3238 = vunpack.c.h.b16 %v739
    %v3239 = vunpack.c.l.b16 %v740
    %v3240 = vunpack.c.h.b16 %v740
    %v3241 = vunpack.c.l.b16 %v741
    %v3242 = vunpack.c.h.b16 %v741
    %v3243 = vunpack.c.l.b16 %v742
    %v3244 = vunpack.c.h.b16 %v742
    %v3245 = vunpack.c.l.b16 %v743
    %v3246 = vunpack.c.h.b16 %v743
    %v3247 = vunpack.c.l.b16 %v744
    %v3248 = vunpack.c.h.b16 %v744
    %v3249 = vunpack.c.l.b16 %v745
    %v3250 = vunpack.c.h.b16 %v745
    %v3251 = vunpack.c.l.b16 %v746
    %v3252 = vunpack.c.h.b16 %v746
    %v3253 = vunpack.c.l.b16 %v747
    %v3254 = vunpack.c.h.b16 %v747
    %v3255 = vunpack.c.l.b16 %v748
    %v3256 = vunpack.c.h.b16 %v748
    %v3257 = vunpack.c.l.b16 %v749
    %v3258 = vunpack.c.h.b16 %v749
    %v3259 = vunpack.c.l.b16 %v750
    %v3260 = vunpack.c.h.b16 %v750
    %v3261 = vunpack.c.l.b16 %v751
    %v3262 = vunpack.c.h.b16 %v751
    %v3263 = vunpack.c.l.b16 %v752
    %v3264 = vunpack.c.h.b16 %v752
    %v3265 = vunpack.c.l.b16 %v753
    %v3266 = vunpack.c.h.b16 %v753
    %v3267 = vunpack.c.l.b16 %v754
    %v3268 = vunpack.c.h.b16 %v754
    %v3269 = vunpack.c.l.b16 %v755
    %v3270 = vunpack.c.h.b16 %v755
    %v3271 = vunpack.c.l.b16 %v756
    %v3272 = vunpack.c.h.b16 %v756
    %v3273 = vunpack.c.l.b16 %v757
    %v3274 = vunpack.c.h.b16 %v757
    %v3275 = vunpack.c.l.b16 %v758
    %v3276 = vunpack.c.h.b16 %v758
    %v3277 = vunpack.c.l.b16 %v759
    %v3278 = vunpack.c.h.b16 %v759
    %v3279 = vunpack.c.l.b16 %v760
    %v3280 = vunpack.c.h.b16 %v760
    %v3281 = vunpack.c.l.b16 %v761
    %v3282 = vunpack.c.h.b16 %v761
    %v3283 = vunpack.c.l.b16 %v762
    %v3284 = vunpack.c.h.b16 %v762
    %v3285 = vunpack.c.l.b16 %v763
    %v3286 = vunpack.c.h.b16 %v763
    %v3287 = vunpack.c.l.b16 %v764
    %v3288 = vunpack.c.h.b16 %v764
    %v3289 = vunpack.c.l.b16 %v765
    %v3290 = vunpack.c.h.b16 %v765
    %v3291 = vunpack.c.l.b16 %v766
    %v3292 = vunpack.c.h.b16 %v766
    %v3293 = vunpack.c.l.b16 %v767
    %v3294 = vunpack.c.h.b16 %v767
    %v3295 = vunpack.c.l.b16 %v768
    %v3296 = vunpack.c.h.b16 %v768
    %v3297 = vunpack.c.l.b16 %v769
    %v3298 = vunpack.c.h.b16 %v769
    %v3299 = vunpack.c.l.b16 %v770
    %v3300 = vunpack.c.h.b16 %v770
    %v3301 = vunpack.c.l.b16 %v771
    %v3302 = vunpack.c.h.b16 %v771
    %v3303 = vunpack.c.l.b16 %v772
    %v3304 = vunpack.c.h.b16 %v772
    %v3305 = vunpack.c.l.b16 %v773
    %v3306 = vunpack.c.h.b16 %v773
    %v3307 = vunpack.c.l.b16 %v774
    %v3308 = vunpack.c.h.b16 %v774
    %v3309 = vunpack.c.l.b16 %v775
    %v3310 = vunpack.c.h.b16 %v775
    %v3311 = vunpack.c.l.b16 %v776
    %v3312 = vunpack.c.h.b16 %v776
    %v3313 = vunpack.c.l.b16 %v777
    %v3314 = vunpack.c.h.b16 %v777
    %v3315 = vunpack.c.l.b16 %v778
    %v3316 = vunpack.c.h.b16 %v778
    %v3317 = vunpack.c.l.b16 %v779
    %v3318 = vunpack.c.h.b16 %v779
    %v3319 = vunpack.c.l.b16 %v780
    %v3320 = vunpack.c.h.b16 %v780
    %v3321 = vunpack.c.l.b16 %v781
    %v3322 = vunpack.c.h.b16 %v781
    %v3323 = vunpack.c.l.b16 %v782
    %v3324 = vunpack.c.h.b16 %v782
    %v3325 = vunpack.c.l.b16 %v783
    %v3326 = vunpack.c.h.b16 %v783
    %v3327 = vunpack.c.l.b16 %v784
    %v3328 = vunpack.c.h.b16 %v784
    %v3329 = vunpack.c.l.b16 %v785
    %v3330 = vunpack.c.h.b16 %v785
    %v3331 = vunpack.c.l.b16 %v786
    %v3332 = vunpack.c.h.b16 %v786
    %v3333 = vunpack.c.l.b16 %v787
    %v3334 = vunpack.c.h.b16 %v787
    %v3335 = vunpack.c.l.b16 %v788
    %v3336 = vunpack.c.h.b16 %v788
    %v3337 = vunpack.c.l.b16 %v789
    %v3338 = vunpack.c.h.b16 %v789
    %v3339 = vunpack.c.l.b16 %v790
    %v3340 = vunpack.c.h.b16 %v790
    %v3341 = vunpack.c.l.b16 %v791
    %v3342 = vunpack.c.h.b16 %v791
    %v3343 = vunpack.c.l.b16 %v792
    %v3344 = vunpack.c.h.b16 %v792
    %v3345 = vunpack.c.l.b16 %v793
    %v3346 = vunpack.c.h.b16 %v793
    %v3347 = vunpack.c.l.b16 %v794
    %v3348 = vunpack.c.h.b16 %v794
    %v3349 = vunpack.c.l.b16 %v795
    %v3350 = vunpack.c.h.b16 %v795
    %v3351 = vunpack.c.l.b16 %v796
    %v3352 = vunpack.c.h.b16 %v796
    %v3353 = vunpack.c.l.b16 %v797
    %v3354 = vunpack.c.h.b16 %v797
    %v3355 = vunpack.c.l.b16 %v798
    %v3356 = vunpack.c.h.b16 %v798
    %v3357 = vunpack.c.l.b16 %v799
    %v3358 = vunpack.c.h.b16 %v799
    %v3359 = vunpack.c.l.b16 %v800
    %v3360 = vunpack.c.h.b16 %v800
    %v3361 = vunpack.c.l.b16 %v801
    %v3362 = vunpack.c.h.b16 %v801
    %v3363 = vunpack.c.l.b16 %v802
    %v3364 = vunpack.c.h.b16 %v802
    %v3365 = vunpack.c.l.b16 %v803
    %v3366 = vunpack.c.h.b16 %v803
    %v3367 = vpack.c.b16 %v1803, %v1799
    %v3368 = vpack.c.b16 %v1804, %v1800
    %v3369 = vpack.c.b16 %v1805, %v1801
    %v3370 = vpack.c.b16 %v1806, %v1802
    %v3371 = vpack.c.b16 %v1811, %v1807
    %v3372 = vpack.c.b16 %v1812, %v1808
    %v3373 = vpack.c.b16 %v1813, %v1809
    %v3374 = vpack.c.b16 %v1814, %v1810
    %v3375 = vpack.c.b16 %v1819, %v1815
    %v3376 = vpack.c.b16 %v1820, %v1816
    %v3377 = vpack.c.b16 %v1821, %v1817
    %v3378 = vpack.c.b16 %v1822, %v1818
    %v3379 = vpack.c.b16 %v1827, %v1823
    %v3380 = vpack.c.b16 %v1828, %v1824
    %v3381 = vpack.c.b16 %v1829, %v1825
    %v3382 = vpack.c.b16 %v1830, %v1826
    %v3383 = vpack.c.b16 %v1835, %v1831
    %v3384 = vpack.c.b16 %v1836, %v1832
    %v3385 = vpack.c.b16 %v1837, %v1833
    %v3386 = vpack.c.b16 %v1838, %v1834
    %v3387 = vpack.c.b16 %v1843, %v1839
    %v3388 = vpack.c.b16 %v1844, %v1840
    %v3389 = vpack.c.b16 %v1845, %v1841
    %v3390 = vpack.c.b16 %v1846, %v1842
    %v3391 = vpack.c.b16 %v1851, %v1847
    %v3392 = vpack.c.b16 %v1852, %v1848
    %v3393 = vpack.c.b16 %v1853, %v1849
    %v3394 = vpack.c.b16 %v1854, %v1850
    %v3395 = vpack.c.b16 %v1859, %v1855
    %v3396 = vpack.c.b16 %v1860, %v1856
    %v3397 = vpack.c.b16 %v1861, %v1857
    %v3398 = vpack.c.b16 %v1862, %v1858
    %v3399 = vpack.c.b16 %v1867, %v1863
    %v3400 = vpack.c.b16 %v1868, %v1864
    %v3401 = vpack.c.b16 %v1869, %v1865
    %v3402 = vpack.c.b16 %v1870, %v1866
    %v3403 = vpack.c.b16 %v1875, %v1871
    %v3404 = vpack.c.b16 %v1876, %v1872
    %v3405 = vpack.c.b16 %v1877, %v1873
    %v3406 = vpack.c.b16 %v1878, %v1874
    %v3407 = vpack.c.b16 %v1883, %v1879
    %v3408 = vpack.c.b16 %v1884, %v1880
    %v3409 = vpack.c.b16 %v1885, %v1881
    %v3410 = vpack.c.b16 %v1886, %v1882
    %v3411 = vpack.c.b16 %v1891, %v1887
    %v3412 = vpack.c.b16 %v1892, %v1888
    %v3413 = vpack.c.b16 %v1893, %v1889
    %v3414 = vpack.c.b16 %v1894, %v1890
    %v3415 = vpack.c.b16 %v1899, %v1895
    %v3416 = vpack.c.b16 %v1900, %v1896
    %v3417 = vpack.c.b16 %v1901, %v1897
    %v3418 = vpack.c.b16 %v1902, %v1898
    %v3419 = vpack.c.b16 %v1907, %v1903
    %v3420 = vpack.c.b16 %v1908, %v1904
    %v3421 = vpack.c.b16 %v1909, %v1905
    %v3422 = vpack.c.b16 %v1910, %v1906
    %v3423 = vpack.c.b16 %v1915, %v1911
    %v3424 = vpack.c.b16 %v1916, %v1912
    %v3425 = vpack.c.b16 %v1917, %v1913
    %v3426 = vpack.c.b16 %v1918, %v1914
    %v3427 = vpack.c.b16 %v1923, %v1919
    %v3428 = vpack.c.b16 %v1924, %v1920
    %v3429 = vpack.c.b16 %v1925, %v1921
    %v3430 = vpack.c.b16 %v1926, %v1922
    %v3431 = vpack.c.b16 %v1931, %v1927
    %v3432 = vpack.c.b16 %v1932, %v1928
    %v3433 = vpack.c.b16 %v1933, %v1929
    %v3434 = vpack.c.b16 %v1934, %v1930
    %v3435 = vpack.c.b16 %v1939, %v1935
    %v3436 = vpack.c.b16 %v1940, %v1936
    %v3437 = vpack.c.b16 %v1941, %v1937
    %v3438 = vpack.c.b16 %v1942, %v1938
    %v3439 = vpack.c.b16 %v1947, %v1943
    %v3440 = vpack.c.b16 %v1948, %v1944
    %v3441 = vpack.c.b16 %v1949, %v1945
    %v3442 = vpack.c.b16 %v1950, %v1946
    %v3443 = vpack.c.b16 %v1955, %v1951
    %v3444 = vpack.c.b16 %v1956, %v1952
    %v3445 = vpack.c.b16 %v1957, %v1953
    %v3446 = vpack.c.b16 %v1958, %v1954
    %v3447 = vpack.c.b16 %v1963, %v1959
    %v3448 = vpack.c.b16 %v1964, %v1960
    %v3449 = vpack.c.b16 %v1965, %v1961
    %v3450 = vpack.c.b16 %v1966, %v1962
    %v3451 = vpack.c.b16 %v1971, %v1967
    %v3452 = vpack.c.b16 %v1972, %v1968
    %v3453 = vpack.c.b16 %v1973, %v1969
    %v3454 = vpack.c.b16 %v1974, %v1970
    %v3455 = vpack.c.b16 %v1979, %v1975
    %v3456 = vpack.c.b16 %v1980, %v1976
    %v3457 = vpack.c.b16 %v1981, %v1977
    %v3458 = vpack.c.b16 %v1982, %v1978
    %v3459 = vpack.c.b16 %v1987, %v1983
    %v3460 = vpack.c.b16 %v1988, %v1984
    %v3461 = vpack.c.b16 %v1989, %v1985
    %v3462 = vpack.c.b16 %v1990, %v1986
    %v3463 = vpack.c.b16 %v1995, %v1991
    %v3464 = vpack.c.b16 %v1996, %v1992
    %v3465 = vpack.c.b16 %v1997, %v1993
    %v3466 = vpack.c.b16 %v1998, %v1994
    %v3467 = vpack.c.b16 %v2003, %v1999
    %v3468 = vpack.c.b16 %v2004, %v2000
    %v3469 = vpack.c.b16 %v2005, %v2001
    %v3470 = vpack.c.b16 %v2006, %v2002
    %v3471 = vpack.c.b16 %v2011, %v2007
    %v3472 = vpack.c.b16 %v2012, %v2008
    %v3473 = vpack.c.b16 %v2013, %v2009
    %v3474 = vpack.c.b16 %v2014, %v2010
    %v3475 = vpack.c.b16 %v2019, %v2015
    %v3476 = vpack.c.b16 %v2020, %v2016
    %v3477 = vpack.c.b16 %v2021, %v2017
    %v3478 = vpack.c.b16 %v2022, %v2018
    %v3479 = vpack.c.b16 %v2027, %v2023
    %v3480 = vpack.c.b16 %v2028, %v2024
    %v3481 = vpack.c.b16 %v2029, %v2025
    %v3482 = vpack.c.b16 %v2030, %v2026
    %v3483 = vpack.c.b16 %v2035, %v2031
    %v3484 = vpack.c.b16 %v2036, %v2032
    %v3485 = vpack.c.b16 %v2037, %v2033
    %v3486 = vpack.c.b16 %v2038, %v2034
    %v3487 = vpack.c.b16 %v2043, %v2039
    %v3488 = vpack.c.b16 %v2044, %v2040
    %v3489 = vpack.c.b16 %v2045, %v2041
    %v3490 = vpack.c.b16 %v2046, %v2042
    %v3491 = vpack.c.b16 %v2051, %v2047
    %v3492 = vpack.c.b16 %v2052, %v2048
    %v3493 = vpack.c.b16 %v2053, %v2049
    %v3494 = vpack.c.b16 %v2054, %v2050
    %v3495 = vpack.c.b16 %v2059, %v2055
    %v3496 = vpack.c.b16 %v2060, %v2056
    %v3497 = vpack.c.b16 %v2061, %v2057
    %v3498 = vpack.c.b16 %v2062, %v2058
    %v3499 = vpack.c.b16 %v2067, %v2063
    %v3500 = vpack.c.b16 %v2068, %v2064
    %v3501 = vpack.c.b16 %v2069, %v2065
    %v3502 = vpack.c.b16 %v2070, %v2066
    %v3503 = vpack.c.b16 %v2075, %v2071
    %v3504 = vpack.c.b16 %v2076, %v2072
    %v3505 = vpack.c.b16 %v2077, %v2073
    %v3506 = vpack.c.b16 %v2078, %v2074
    %v3507 = vpack.c.b16 %v2083, %v2079
    %v3508 = vpack.c.b16 %v2084, %v2080
    %v3509 = vpack.c.b16 %v2085, %v2081
    %v3510 = vpack.c.b16 %v2086, %v2082
    %v3511 = vpack.c.b16 %v2091, %v2087
    %v3512 = vpack.c.b16 %v2092, %v2088
    %v3513 = vpack.c.b16 %v2093, %v2089
    %v3514 = vpack.c.b16 %v2094, %v2090
    %v3515 = vpack.c.b16 %v2099, %v2095
    %v3516 = vpack.c.b16 %v2100, %v2096
    %v3517 = vpack.c.b16 %v2101, %v2097
    %v3518 = vpack.c.b16 %v2102, %v2098
    %v3519 = vpack.c.b16 %v2107, %v2103
    %v3520 = vpack.c.b16 %v2108, %v2104
    %v3521 = vpack.c.b16 %v2109, %v2105
    %v3522 = vpack.c.b16 %v2110, %v2106
    %v3523 = vpack.c.b16 %v2115, %v2111
    %v3524 = vpack.c.b16 %v2116, %v2112
    %v3525 = vpack.c.b16 %v2117, %v2113
    %v3526 = vpack.c.b16 %v2118, %v2114
    %v3527 = vpack.c.b16 %v2123, %v2119
    %v3528 = vpack.c.b16 %v2124, %v2120
    %v3529 = vpack.c.b16 %v2125, %v2121
    %v3530 = vpack.c.b16 %v2126, %v2122
    %v3531 = vpack.c.b16 %v2131, %v2127
    %v3532 = vpack.c.b16 %v2132, %v2128
    %v3533 = vpack.c.b16 %v2133, %v2129
    %v3534 = vpack.c.b16 %v2134, %v2130
    %v3535 = vpack.c.b16 %v2139, %v2135
    %v3536 = vpack.c.b16 %v2140, %v2136
    %v3537 = vpack.c.b16 %v2141, %v2137
    %v3538 = vpack.c.b16 %v2142, %v2138
    %v3539 = vpack.c.b16 %v2147, %v2143
    %v3540 = vpack.c.b16 %v2148, %v2144
    %v3541 = vpack.c.b16 %v2149, %v2145
    %v3542 = vpack.c.b16 %v2150, %v2146
    %v3543 = vpack.c.b16 %v2155, %v2151
    %v3544 = vpack.c.b16 %v2156, %v2152
    %v3545 = vpack.c.b16 %v2157, %v2153
    %v3546 = vpack.c.b16 %v2158, %v2154
    %v3547 = vpack.c.b16 %v2163, %v2159
    %v3548 = vpack.c.b16 %v2164, %v2160
    %v3549 = vpack.c.b16 %v2165, %v2161
    %v3550 = vpack.c.b16 %v2166, %v2162
    %v3551 = vpack.c.b16 %v2171, %v2167
    %v3552 = vpack.c.b16 %v2172, %v2168
    %v3553 = vpack.c.b16 %v2173, %v2169
    %v3554 = vpack.c.b16 %v2174, %v2170
    %v3555 = vpack.c.b16 %v2179, %v2175
    %v3556 = vpack.c.b16 %v2180, %v2176
    %v3557 = vpack.c.b16 %v2181, %v2177
    %v3558 = vpack.c.b16 %v2182, %v2178
    %v3559 = vpack.c.b16 %v2187, %v2183
    %v3560 = vpack.c.b16 %v2188, %v2184
    %v3561 = vpack.c.b16 %v2189, %v2185
    %v3562 = vpack.c.b16 %v2190, %v2186
    %v3563 = vpack.c.b16 %v2195, %v2191
    %v3564 = vpack.c.b16 %v2196, %v2192
    %v3565 = vpack.c.b16 %v2197, %v2193
    %v3566 = vpack.c.b16 %v2198, %v2194
    %v3567 = vpack.c.b16 %v2203, %v2199
    %v3568 = vpack.c.b16 %v2204, %v2200
    %v3569 = vpack.c.b16 %v2205, %v2201
    %v3570 = vpack.c.b16 %v2206, %v2202
    %v3571 = vpack.c.b16 %v2211, %v2207
    %v3572 = vpack.c.b16 %v2212, %v2208
    %v3573 = vpack.c.b16 %v2213, %v2209
    %v3574 = vpack.c.b16 %v2214, %v2210
    %v3575 = vpack.c.b16 %v2219, %v2215
    %v3576 = vpack.c.b16 %v2220, %v2216
    %v3577 = vpack.c.b16 %v2221, %v2217
    %v3578 = vpack.c.b16 %v2222, %v2218
    %v3579 = vpack.c.b16 %v2227, %v2223
    %v3580 = vpack.c.b16 %v2228, %v2224
    %v3581 = vpack.c.b16 %v2229, %v2225
    %v3582 = vpack.c.b16 %v2230, %v2226
    %v3583 = vpack.c.b16 %v2235, %v2231
    %v3584 = vpack.c.b16 %v2236, %v2232
    %v3585 = vpack.c.b16 %v2237, %v2233
    %v3586 = vpack.c.b16 %v2238, %v2234
    %v3587 = vpack.c.b16 %v2243, %v2239
    %v3588 = vpack.c.b16 %v2244, %v2240
    %v3589 = vpack.c.b16 %v2245, %v2241
    %v3590 = vpack.c.b16 %v2246, %v2242
    %v3591 = vpack.c.b16 %v2251, %v2247
    %v3592 = vpack.c.b16 %v2252, %v2248
    %v3593 = vpack.c.b16 %v2253, %v2249
    %v3594 = vpack.c.b16 %v2254, %v2250
    %v3595 = vpack.c.b16 %v2259, %v2255
    %v3596 = vpack.c.b16 %v2260, %v2256
    %v3597 = vpack.c.b16 %v2261, %v2257
    %v3598 = vpack.c.b16 %v2262, %v2258
    %v3599 = vpack.c.b16 %v2267, %v2263
    %v3600 = vpack.c.b16 %v2268, %v2264
    %v3601 = vpack.c.b16 %v2269, %v2265
    %v3602 = vpack.c.b16 %v2270, %v2266
    %v3603 = vpack.c.b16 %v2275, %v2271
    %v3604 = vpack.c.b16 %v2276, %v2272
    %v3605 = vpack.c.b16 %v2277, %v2273
    %v3606 = vpack.c.b16 %v2278, %v2274
    %v3607 = vpack.c.b16 %v2283, %v2279
    %v3608 = vpack.c.b16 %v2284, %v2280
    %v3609 = vpack.c.b16 %v2285, %v2281
    %v3610 = vpack.c.b16 %v2286, %v2282
    %v3611 = vpack.c.b16 %v2291, %v2287
    %v3612 = vpack.c.b16 %v2292, %v2288
    %v3613 = vpack.c.b16 %v2293, %v2289
    %v3614 = vpack.c.b16 %v2294, %v2290
    %v3615 = vpack.c.b16 %v2299, %v2295
    %v3616 = vpack.c.b16 %v2300, %v2296
    %v3617 = vpack.c.b16 %v2301, %v2297
    %v3618 = vpack.c.b16 %v2302, %v2298
    %v3619 = vpack.c.b16 %v2307, %v2303
    %v3620 = vpack.c.b16 %v2308, %v2304
    %v3621 = vpack.c.b16 %v2309, %v2305
    %v3622 = vpack.c.b16 %v2310, %v2306
    %v3623 = vpack.c.b16 %v2315, %v2311
    %v3624 = vpack.c.b16 %v2316, %v2312
    %v3625 = vpack.c.b16 %v2317, %v2313
    %v3626 = vpack.c.b16 %v2318, %v2314
    %v3627 = vpack.c.b16 %v2323, %v2319
    %v3628 = vpack.c.b16 %v2324, %v2320
    %v3629 = vpack.c.b16 %v2325, %v2321
    %v3630 = vpack.c.b16 %v2326, %v2322
    %v3631 = vpack.c.b16 %v2331, %v2327
    %v3632 = vpack.c.b16 %v2332, %v2328
    %v3633 = vpack.c.b16 %v2333, %v2329
    %v3634 = vpack.c.b16 %v2334, %v2330
    %v3635 = vpack.c.b16 %v2339, %v2335
    %v3636 = vpack.c.b16 %v2340, %v2336
    %v3637 = vpack.c.b16 %v2341, %v2337
    %v3638 = vpack.c.b16 %v2342, %v2338
    %v3639 = vpack.c.b16 %v2347, %v2343
    %v3640 = vpack.c.b16 %v2348, %v2344
    %v3641 = vpack.c.b16 %v2349, %v2345
    %v3642 = vpack.c.b16 %v2350, %v2346
    %v3643 = vpack.c.b16 %v2355, %v2351
    %v3644 = vpack.c.b16 %v2356, %v2352
    %v3645 = vpack.c.b16 %v2357, %v2353
    %v3646 = vpack.c.b16 %v2358, %v2354
    %v3647 = vpack.c.b16 %v2363, %v2359
    %v3648 = vpack.c.b16 %v2364, %v2360
    %v3649 = vpack.c.b16 %v2365, %v2361
    %v3650 = vpack.c.b16 %v2366, %v2362
    %v3651 = vpack.c.b16 %v2371, %v2367
    %v3652 = vpack.c.b16 %v2372, %v2368
    %v3653 = vpack.c.b16 %v2373, %v2369
    %v3654 = vpack.c.b16 %v2374, %v2370
    %v3655 = vpack.c.b16 %v2379, %v2375
    %v3656 = vpack.c.b16 %v2380, %v2376
    %v3657 = vpack.c.b16 %v2381, %v2377
    %v3658 = vpack.c.b16 %v2382, %v2378
    %v3659 = vpack.c.b16 %v2387, %v2383
    %v3660 = vpack.c.b16 %v2388, %v2384
    %v3661 = vpack.c.b16 %v2389, %v2385
    %v3662 = vpack.c.b16 %v2390, %v2386
    %v3663 = vpack.c.b16 %v2395, %v2391
    %v3664 = vpack.c.b16 %v2396, %v2392
    %v3665 = vpack.c.b16 %v2397, %v2393
    %v3666 = vpack.c.b16 %v2398, %v2394
    %v3667 = vpack.c.b16 %v2403, %v2399
    %v3668 = vpack.c.b16 %v2404, %v2400
    %v3669 = vpack.c.b16 %v2405, %v2401
    %v3670 = vpack.c.b16 %v2406, %v2402
    %v3671 = vpack.c.b16 %v2411, %v2407
    %v3672 = vpack.c.b16 %v2412, %v2408
    %v3673 = vpack.c.b16 %v2413, %v2409
    %v3674 = vpack.c.b16 %v2414, %v2410
    %v3675 = vpack.c.b16 %v2419, %v2415
    %v3676 = vpack.c.b16 %v2420, %v2416
    %v3677 = vpack.c.b16 %v2421, %v2417
    %v3678 = vpack.c.b16 %v2422, %v2418
    %v3679 = vpack.c.b16 %v2427, %v2423
    %v3680 = vpack.c.b16 %v2428, %v2424
    %v3681 = vpack.c.b16 %v2429, %v2425
    %v3682 = vpack.c.b16 %v2430, %v2426
    %v3683 = vpack.c.b16 %v2435, %v2431
    %v3684 = vpack.c.b16 %v2436, %v2432
    %v3685 = vpack.c.b16 %v2437, %v2433
    %v3686 = vpack.c.b16 %v2438, %v2434
    %v3687 = vpack.c.b16 %v2443, %v2439
    %v3688 = vpack.c.b16 %v2444, %v2440
    %v3689 = vpack.c.b16 %v2445, %v2441
    %v3690 = vpack.c.b16 %v2446, %v2442
    %v3691 = vpack.c.b16 %v2451, %v2447
    %v3692 = vpack.c.b16 %v2452, %v2448
    %v3693 = vpack.c.b16 %v2453, %v2449
    %v3694 = vpack.c.b16 %v2454, %v2450
    %v3695 = vpack.c.b16 %v2459, %v2455
    %v3696 = vpack.c.b16 %v2460, %v2456
    %v3697 = vpack.c.b16 %v2461, %v2457
    %v3698 = vpack.c.b16 %v2462, %v2458
    %v3699 = vpack.c.b16 %v2467, %v2463
    %v3700 = vpack.c.b16 %v2468, %v2464
    %v3701 = vpack.c.b16 %v2469, %v2465
    %v3702 = vpack.c.b16 %v2470, %v2466
    %v3703 = vpack.c.b16 %v2475, %v2471
    %v3704 = vpack.c.b16 %v2476, %v2472
    %v3705 = vpack.c.b16 %v2477, %v2473
    %v3706 = vpack.c.b16 %v2478, %v2474
    %v3707 = vpack.c.b16 %v2483, %v2479
    %v3708 = vpack.c.b16 %v2484, %v2480
    %v3709 = vpack.c.b16 %v2485, %v2481
    %v3710 = vpack.c.b16 %v2486, %v2482
    %v3711 = vpack.c.b16 %v2491, %v2487
    %v3712 = vpack.c.b16 %v2492, %v2488
    %v3713 = vpack.c.b16 %v2493, %v2489
    %v3714 = vpack.c.b16 %v2494, %v2490
    %v3715 = vpack.c.b16 %v2499, %v2495
    %v3716 = vpack.c.b16 %v2500, %v2496
    %v3717 = vpack.c.b16 %v2501, %v2497
    %v3718 = vpack.c.b16 %v2502, %v2498
    %v3719 = vpack.c.b16 %v2507, %v2503
    %v3720 = vpack.c.b16 %v2508, %v2504
    %v3721 = vpack.c.b16 %v2509, %v2505
    %v3722 = vpack.c.b16 %v2510, %v2506
    %v3723 = vpack.c.b16 %v2515, %v2511
    %v3724 = vpack.c.b16 %v2516, %v2512
    %v3725 = vpack.c.b16 %v2517, %v2513
    %v3726 = vpack.c.b16 %v2518, %v2514
    %v3727 = vpack.c.b16 %v2523, %v2519
    %v3728 = vpack.c.b16 %v2524, %v2520
    %v3729 = vpack.c.b16 %v2525, %v2521
    %v3730 = vpack.c.b16 %v2526, %v2522
    %v3731 = vpack.c.b16 %v2531, %v2527
    %v3732 = vpack.c.b16 %v2532, %v2528
    %v3733 = vpack.c.b16 %v2533, %v2529
    %v3734 = vpack.c.b16 %v2534, %v2530
    %v3735 = vpack.c.b16 %v2539, %v2535
    %v3736 = vpack.c.b16 %v2540, %v2536
    %v3737 = vpack.c.b16 %v2541, %v2537
    %v3738 = vpack.c.b16 %v2542, %v2538
    %v3739 = vpack.c.b16 %v2547, %v2543
    %v3740 = vpack.c.b16 %v2548, %v2544
    %v3741 = vpack.c.b16 %v2549, %v2545
    %v3742 = vpack.c.b16 %v2550, %v2546
    %v3743 = vpack.c.b16 %v2555, %v2551
    %v3744 = vpack.c.b16 %v2556, %v2552
    %v3745 = vpack.c.b16 %v2557, %v2553
    %v3746 = vpack.c.b16 %v2558, %v2554
    %v3747 = vpack.c.b16 %v2563, %v2559
    %v3748 = vpack.c.b16 %v2564, %v2560
    %v3749 = vpack.c.b16 %v2565, %v2561
    %v3750 = vpack.c.b16 %v2566, %v2562
    %v3751 = vpack.c.b16 %v2571, %v2567
    %v3752 = vpack.c.b16 %v2572, %v2568
    %v3753 = vpack.c.b16 %v2573, %v2569
    %v3754 = vpack.c.b16 %v2574, %v2570
    %v3755 = vpack.c.b16 %v2579, %v2575
    %v3756 = vpack.c.b16 %v2580, %v2576
    %v3757 = vpack.c.b16 %v2581, %v2577
    %v3758 = vpack.c.b16 %v2582, %v2578
    %v3759 = vpack.c.b16 %v2587, %v2583
    %v3760 = vpack.c.b16 %v2588, %v2584
    %v3761 = vpack.c.b16 %v2589, %v2585
    %v3762 = vpack.c.b16 %v2590, %v2586
    %v3763 = vpack.c.b16 %v2595, %v2591
    %v3764 = vpack.c.b16 %v2596, %v2592
    %v3765 = vpack.c.b16 %v2597, %v2593
    %v3766 = vpack.c.b16 %v2598, %v2594
    %v3767 = vpack.c.b16 %v2603, %v2599
    %v3768 = vpack.c.b16 %v2604, %v2600
    %v3769 = vpack.c.b16 %v2605, %v2601
    %v3770 = vpack.c.b16 %v2606, %v2602
    %v3771 = vpack.c.b16 %v2611, %v2607
    %v3772 = vpack.c.b16 %v2612, %v2608
    %v3773 = vpack.c.b16 %v2613, %v2609
    %v3774 = vpack.c.b16 %v2614, %v2610
    %v3775 = vpack.c.b16 %v2619, %v2615
    %v3776 = vpack.c.b16 %v2620, %v2616
    %v3777 = vpack.c.b16 %v2621, %v2617
    %v3778 = vpack.c.b16 %v2622, %v2618
    %v3779 = vpack.c.b16 %v2627, %v2623
    %v3780 = vpack.c.b16 %v2628, %v2624
    %v3781 = vpack.c.b16 %v2629, %v2625
    %v3782 = vpack.c.b16 %v2630, %v2626
    %v3783 = vpack.c.b16 %v2635, %v2631
    %v3784 = vpack.c.b16 %v2636, %v2632
    %v3785 = vpack.c.b16 %v2637, %v2633
    %v3786 = vpack.c.b16 %v2638, %v2634
    %v3787 = vpack.c.b16 %v2643, %v2639
    %v3788 = vpack.c.b16 %v2644, %v2640
    %v3789 = vpack.c.b16 %v2645, %v2641
    %v3790 = vpack.c.b16 %v2646, %v2642
    %v3791 = vpack.c.b16 %v2651, %v2647
    %v3792 = vpack.c.b16 %v2652, %v2648
    %v3793 = vpack.c.b16 %v2653, %v2649
    %v3794 = vpack.c.b16 %v2654, %v2650
    %v3795 = vpack.c.b16 %v2659, %v2655
    %v3796 = vpack.c.b16 %v2660, %v2656
    %v3797 = vpack.c.b16 %v2661, %v2657
    %v3798 = vpack.c.b16 %v2662, %v2658
    %v3799 = vpack.c.b16 %v2667, %v2663
    %v3800 = vpack.c.b16 %v2668, %v2664
    %v3801 = vpack.c.b16 %v2669, %v2665
    %v3802 = vpack.c.b16 %v2670, %v2666
    %v3803 = vpack.c.b16 %v2675, %v2671
    %v3804 = vpack.c.b16 %v2676, %v2672
    %v3805 = vpack.c.b16 %v2677, %v2673
    %v3806 = vpack.c.b16 %v2678, %v2674
    %v3807 = vpack.c.b16 %v2683, %v2679
    %v3808 = vpack.c.b16 %v2684, %v2680
    %v3809 = vpack.c.b16 %v2685, %v2681
    %v3810 = vpack.c.b16 %v2686, %v2682
    %v3811 = vpack.c.b16 %v2691, %v2687
    %v3812 = vpack.c.b16 %v2692, %v2688
    %v3813 = vpack.c.b16 %v2693, %v2689
    %v3814 = vpack.c.b16 %v2694, %v2690
    %v3815 = vpack.c.b16 %v2699, %v2695
    %v3816 = vpack.c.b16 %v2700, %v2696
    %v3817 = vpack.c.b16 %v2701, %v2697
    %v3818 = vpack.c.b16 %v2702, %v2698
    %v3819 = vpack.c.b16 %v2707, %v2703
    %v3820 = vpack.c.b16 %v2708, %v2704
    %v3821 = vpack.c.b16 %v2709, %v2705
    %v3822 = vpack.c.b16 %v2710, %v2706
    %v3823 = vpack.c.b16 %v2715, %v2711
    %v3824 = vpack.c.b16 %v2716, %v2712
    %v3825 = vpack.c.b16 %v2717, %v2713
    %v3826 = vpack.c.b16 %v2718, %v2714
    %v3827 = vpack.c.b16 %v2723, %v2719
    %v3828 = vpack.c.b16 %v2724, %v2720
    %v3829 = vpack.c.b16 %v2725, %v2721
    %v3830 = vpack.c.b16 %v2726, %v2722
    %v3831 = vpack.c.b16 %v2731, %v2727
    %v3832 = vpack.c.b16 %v2732, %v2728
    %v3833 = vpack.c.b16 %v2733, %v2729
    %v3834 = vpack.c.b16 %v2734, %v2730
    %v3835 = vpack.c.b16 %v2739, %v2735
    %v3836 = vpack.c.b16 %v2740, %v2736
    %v3837 = vpack.c.b16 %v2741, %v2737
    %v3838 = vpack.c.b16 %v2742, %v2738
    %v3839 = vpack.c.b16 %v2747, %v2743
    %v3840 = vpack.c.b16 %v2748, %v2744
    %v3841 = vpack.c.b16 %v2749, %v2745
    %v3842 = vpack.c.b16 %v2750, %v2746
    %v3843 = vpack.c.b16 %v2755, %v2751
    %v3844 = vpack.c.b16 %v2756, %v2752
    %v3845 = vpack.c.b16 %v2757, %v2753
    %v3846 = vpack.c.b16 %v2758, %v2754
    %v3847 = vpack.c.b16 %v2763, %v2759
    %v3848 = vpack.c.b16 %v2764, %v2760
    %v3849 = vpack.c.b16 %v2765, %v2761
    %v3850 = vpack.c.b16 %v2766, %v2762
    %v3851 = vpack.c.b16 %v2771, %v2767
    %v3852 = vpack.c.b16 %v2772, %v2768
    %v3853 = vpack.c.b16 %v2773, %v2769
    %v3854 = vpack.c.b16 %v2774, %v2770
    %v3855 = vpack.c.b16 %v2779, %v2775
    %v3856 = vpack.c.b16 %v2780, %v2776
    %v3857 = vpack.c.b16 %v2781, %v2777
    %v3858 = vpack.c.b16 %v2782, %v2778
    %v3859 = vpack.c.b16 %v2787, %v2783
    %v3860 = vpack.c.b16 %v2788, %v2784
    %v3861 = vpack.c.b16 %v2789, %v2785
    %v3862 = vpack.c.b16 %v2790, %v2786
    %v3863 = vpack.c.b16 %v2795, %v2791
    %v3864 = vpack.c.b16 %v2796, %v2792
    %v3865 = vpack.c.b16 %v2797, %v2793
    %v3866 = vpack.c.b16 %v2798, %v2794
    %v3867 = vpack.c.b16 %v2803, %v2799
    %v3868 = vpack.c.b16 %v2804, %v2800
    %v3869 = vpack.c.b16 %v2805, %v2801
    %v3870 = vpack.c.b16 %v2806, %v2802
    %v3871 = vpack.c.b16 %v2811, %v2807
    %v3872 = vpack.c.b16 %v2812, %v2808
    %v3873 = vpack.c.b16 %v2813, %v2809
    %v3874 = vpack.c.b16 %v2814, %v2810
    %v3875 = vpack.c.b16 %v2819, %v2815
    %v3876 = vpack.c.b16 %v2820, %v2816
    %v3877 = vpack.c.b16 %v2821, %v2817
    %v3878 = vpack.c.b16 %v2822, %v2818
    %v3879 = vpack.c.b16 %v2827, %v2823
    %v3880 = vpack.c.b16 %v2828, %v2824
    %v3881 = vpack.c.b16 %v2829, %v2825
    %v3882 = vpack.c.b16 %v2830, %v2826
    %v3883 = vpack.c.b16 %v2835, %v2831
    %v3884 = vpack.c.b16 %v2836, %v2832
    %v3885 = vpack.c.b16 %v2837, %v2833
    %v3886 = vpack.c.b16 %v2838, %v2834
    %v3887 = vpack.c.b16 %v2843, %v2839
    %v3888 = vpack.c.b16 %v2844, %v2840
    %v3889 = vpack.c.b16 %v2845, %v2841
    %v3890 = vpack.c.b16 %v2846, %v2842
    %v3891 = vpack.c.b16 %v2851, %v2847
    %v3892 = vpack.c.b16 %v2852, %v2848
    %v3893 = vpack.c.b16 %v2853, %v2849
    %v3894 = vpack.c.b16 %v2854, %v2850
    %v3895 = vpack.c.b16 %v2859, %v2855
    %v3896 = vpack.c.b16 %v2860, %v2856
    %v3897 = vpack.c.b16 %v2861, %v2857
    %v3898 = vpack.c.b16 %v2862, %v2858
    %v3899 = vpack.c.b16 %v2867, %v2863
    %v3900 = vpack.c.b16 %v2868, %v2864
    %v3901 = vpack.c.b16 %v2869, %v2865
    %v3902 = vpack.c.b16 %v2870, %v2866
    %v3903 = vpack.c.b16 %v2875, %v2871
    %v3904 = vpack.c.b16 %v2876, %v2872
    %v3905 = vpack.c.b16 %v2877, %v2873
    %v3906 = vpack.c.b16 %v2878, %v2874
    %v3907 = vpack.c.b16 %v2883, %v2879
    %v3908 = vpack.c.b16 %v2884, %v2880
    %v3909 = vpack.c.b16 %v2885, %v2881
    %v3910 = vpack.c.b16 %v2886, %v2882
    %v3911 = vpack.c.b16 %v2891, %v2887
    %v3912 = vpack.c.b16 %v2892, %v2888
    %v3913 = vpack.c.b16 %v2893, %v2889
    %v3914 = vpack.c.b16 %v2894, %v2890
    %v3915 = vpack.c.b16 %v2899, %v2895
    %v3916 = vpack.c.b16 %v2900, %v2896
    %v3917 = vpack.c.b16 %v2901, %v2897
    %v3918 = vpack.c.b16 %v2902, %v2898
    %v3919 = vpack.c.b16 %v2907, %v2903
    %v3920 = vpack.c.b16 %v2908, %v2904
    %v3921 = vpack.c.b16 %v2909, %v2905
    %v3922 = vpack.c.b16 %v2910, %v2906
    %v3923 = vpack.c.b16 %v2915, %v2911
    %v3924 = vpack.c.b16 %v2916, %v2912
    %v3925 = vpack.c.b16 %v2917, %v2913
    %v3926 = vpack.c.b16 %v2918, %v2914
    %v3927 = vpack.c.b16 %v2923, %v2919
    %v3928 = vpack.c.b16 %v2924, %v2920
    %v3929 = vpack.c.b16 %v2925, %v2921
    %v3930 = vpack.c.b16 %v2926, %v2922
    %v3931 = vpack.c.b16 %v2931, %v2927
    %v3932 = vpack.c.b16 %v2932, %v2928
    %v3933 = vpack.c.b16 %v2933, %v2929
    %v3934 = vpack.c.b16 %v2934, %v2930
    %v3935 = vpack.c.b16 %v2939, %v2935
    %v3936 = vpack.c.b16 %v2940, %v2936
    %v3937 = vpack.c.b16 %v2941, %v2937
    %v3938 = vpack.c.b16 %v2942, %v2938
    %v3939 = vpack.c.b16 %v2947, %v2943
    %v3940 = vpack.c.b16 %v2948, %v2944
    %v3941 = vpack.c.b16 %v2949, %v2945
    %v3942 = vpack.c.b16 %v2950, %v2946
    %v3943 = vpack.c.b16 %v2955, %v2951
    %v3944 = vpack.c.b16 %v2956, %v2952
    %v3945 = vpack.c.b16 %v2957, %v2953
    %v3946 = vpack.c.b16 %v2958, %v2954
    %v3947 = vpack.c.b16 %v2963, %v2959
    %v3948 = vpack.c.b16 %v2964, %v2960
    %v3949 = vpack.c.b16 %v2965, %v2961
    %v3950 = vpack.c.b16 %v2966, %v2962
    %v3951 = vpack.c.b16 %v2971, %v2967
    %v3952 = vpack.c.b16 %v2972, %v2968
    %v3953 = vpack.c.b16 %v2973, %v2969
    %v3954 = vpack.c.b16 %v2974, %v2970
    %v3955 = vpack.c.b16 %v2979, %v2975
    %v3956 = vpack.c.b16 %v2980, %v2976
    %v3957 = vpack.c.b16 %v2981, %v2977
    %v3958 = vpack.c.b16 %v2982, %v2978
    %v3959 = vpack.c.b16 %v2987, %v2983
    %v3960 = vpack.c.b16 %v2988, %v2984
    %v3961 = vpack.c.b16 %v2989, %v2985
    %v3962 = vpack.c.b16 %v2990, %v2986
    %v3963 = vpack.c.b16 %v2995, %v2991
    %v3964 = vpack.c.b16 %v2996, %v2992
    %v3965 = vpack.c.b16 %v2997, %v2993
    %v3966 = vpack.c.b16 %v2998, %v2994
    %v3967 = vpack.c.b16 %v3003, %v2999
    %v3968 = vpack.c.b16 %v3004, %v3000
    %v3969 = vpack.c.b16 %v3005, %v3001
    %v3970 = vpack.c.b16 %v3006, %v3002
    %v3971 = vpack.c.b16 %v3011, %v3007
    %v3972 = vpack.c.b16 %v3012, %v3008
    %v3973 = vpack.c.b16 %v3013, %v3009
    %v3974 = vpack.c.b16 %v3014, %v3010
    %v3975 = vpack.c.b16 %v3019, %v3015
    %v3976 = vpack.c.b16 %v3020, %v3016
    %v3977 = vpack.c.b16 %v3021, %v3017
    %v3978 = vpack.c.b16 %v3022, %v3018
    %v3979 = vpack.c.b16 %v3027, %v3023
    %v3980 = vpack.c.b16 %v3028, %v3024
    %v3981 = vpack.c.b16 %v3029, %v3025
    %v3982 = vpack.c.b16 %v3030, %v3026
    %v3983 = vpack.c.b16 %v3035, %v3031
    %v3984 = vpack.c.b16 %v3036, %v3032
    %v3985 = vpack.c.b16 %v3037, %v3033
    %v3986 = vpack.c.b16 %v3038, %v3034
    %v3987 = vpack.c.b16 %v3043, %v3039
    %v3988 = vpack.c.b16 %v3044, %v3040
    %v3989 = vpack.c.b16 %v3045, %v3041
    %v3990 = vpack.c.b16 %v3046, %v3042
    %v3991 = vpack.c.b16 %v3051, %v3047
    %v3992 = vpack.c.b16 %v3052, %v3048
    %v3993 = vpack.c.b16 %v3053, %v3049
    %v3994 = vpack.c.b16 %v3054, %v3050
    %v3995 = vpack.c.b16 %v3059, %v3055
    %v3996 = vpack.c.b16 %v3060, %v3056
    %v3997 = vpack.c.b16 %v3061, %v3057
    %v3998 = vpack.c.b16 %v3062, %v3058
    %v3999 = vpack.c.b16 %v3067, %v3063
    %v4000 = vpack.c.b16 %v3068, %v3064
    %v4001 = vpack.c.b16 %v3069, %v3065
    %v4002 = vpack.c.b16 %v3070, %v3066
    %v4003 = vpack.c.b16 %v3075, %v3071
    %v4004 = vpack.c.b16 %v3076, %v3072
    %v4005 = vpack.c.b16 %v3077, %v3073
    %v4006 = vpack.c.b16 %v3078, %v3074
    %v4007 = vpack.c.b16 %v3083, %v3079
    %v4008 = vpack.c.b16 %v3084, %v3080
    %v4009 = vpack.c.b16 %v3085, %v3081
    %v4010 = vpack.c.b16 %v3086, %v3082
    %v4011 = vpack.c.b16 %v3091, %v3087
    %v4012 = vpack.c.b16 %v3092, %v3088
    %v4013 = vpack.c.b16 %v3093, %v3089
    %v4014 = vpack.c.b16 %v3094, %v3090
    %v4015 = vpack.c.b16 %v3099, %v3095
    %v4016 = vpack.c.b16 %v3100, %v3096
    %v4017 = vpack.c.b16 %v3101, %v3097
    %v4018 = vpack.c.b16 %v3102, %v3098
    %v4019 = vpack.c.b16 %v3107, %v3103
    %v4020 = vpack.c.b16 %v3108, %v3104
    %v4021 = vpack.c.b16 %v3109, %v3105
    %v4022 = vpack.c.b16 %v3110, %v3106
    %v4023 = vpack.c.b16 %v3115, %v3111
    %v4024 = vpack.c.b16 %v3116, %v3112
    %v4025 = vpack.c.b16 %v3117, %v3113
    %v4026 = vpack.c.b16 %v3118, %v3114
    %v4027 = vpack.c.b16 %v3123, %v3119
    %v4028 = vpack.c.b16 %v3124, %v3120
    %v4029 = vpack.c.b16 %v3125, %v3121
    %v4030 = vpack.c.b16 %v3126, %v3122
    %v4031 = vpack.c.b16 %v3131, %v3127
    %v4032 = vpack.c.b16 %v3132, %v3128
    %v4033 = vpack.c.b16 %v3133, %v3129
    %v4034 = vpack.c.b16 %v3134, %v3130
    %v4035 = vpack.c.b16 %v3139, %v3135
    %v4036 = vpack.c.b16 %v3140, %v3136
    %v4037 = vpack.c.b16 %v3141, %v3137
    %v4038 = vpack.c.b16 %v3142, %v3138
    %v4039 = vpack.c.b16 %v3147, %v3143
    %v4040 = vpack.c.b16 %v3148, %v3144
    %v4041 = vpack.c.b16 %v3149, %v3145
    %v4042 = vpack.c.b16 %v3150, %v3146
    %v4043 = vpack.c.b16 %v3155, %v3151
    %v4044 = vpack.c.b16 %v3156, %v3152
    %v4045 = vpack.c.b16 %v3157, %v3153
    %v4046 = vpack.c.b16 %v3158, %v3154
    %v4047 = vpack.c.b16 %v3163, %v3159
    %v4048 = vpack.c.b16 %v3164, %v3160
    %v4049 = vpack.c.b16 %v3165, %v3161
    %v4050 = vpack.c.b16 %v3166, %v3162
    %v4051 = vpack.c.b16 %v3171, %v3167
    %v4052 = vpack.c.b16 %v3172, %v3168
    %v4053 = vpack.c.b16 %v3173, %v3169
    %v4054 = vpack.c.b16 %v3174, %v3170
    %v4055 = vpack.c.b16 %v3179, %v3175
    %v4056 = vpack.c.b16 %v3180, %v3176
    %v4057 = vpack.c.b16 %v3181, %v3177
    %v4058 = vpack.c.b16 %v3182, %v3178
    %v4059 = vpack.c.b16 %v3187, %v3183
    %v4060 = vpack.c.b16 %v3188, %v3184
    %v4061 = vpack.c.b16 %v3189, %v3185
    %v4062 = vpack.c.b16 %v3190, %v3186
    %v4063 = vpack.c.b16 %v3195, %v3191
    %v4064 = vpack.c.b16 %v3196, %v3192
    %v4065 = vpack.c.b16 %v3197, %v3193
    %v4066 = vpack.c.b16 %v3198, %v3194
    %v4067 = vpack.c.b16 %v3203, %v3199
    %v4068 = vpack.c.b16 %v3204, %v3200
    %v4069 = vpack.c.b16 %v3205, %v3201
    %v4070 = vpack.c.b16 %v3206, %v3202
    %v4071 = vpack.c.b16 %v3211, %v3207
    %v4072 = vpack.c.b16 %v3212, %v3208
    %v4073 = vpack.c.b16 %v3213, %v3209
    %v4074 = vpack.c.b16 %v3214, %v3210
    %v4075 = vpack.c.b16 %v3219, %v3215
    %v4076 = vpack.c.b16 %v3220, %v3216
    %v4077 = vpack.c.b16 %v3221, %v3217
    %v4078 = vpack.c.b16 %v3222, %v3218
    %v4079 = vpack.c.b16 %v3227, %v3223
    %v4080 = vpack.c.b16 %v3228, %v3224
    %v4081 = vpack.c.b16 %v3229, %v3225
    %v4082 = vpack.c.b16 %v3230, %v3226
    %v4083 = vpack.c.b16 %v3235, %v3231
    %v4084 = vpack.c.b16 %v3236, %v3232
    %v4085 = vpack.c.b16 %v3237, %v3233
    %v4086 = vpack.c.b16 %v3238, %v3234
    %v4087 = vpack.c.b16 %v3243, %v3239
    %v4088 = vpack.c.b16 %v3244, %v3240
    %v4089 = vpack.c.b16 %v3245, %v3241
    %v4090 = vpack.c.b16 %v3246, %v3242
    %v4091 = vpack.c.b16 %v3251, %v3247
    %v4092 = vpack.c.b16 %v3252, %v3248
    %v4093 = vpack.c.b16 %v3253, %v3249
    %v4094 = vpack.c.b16 %v3254, %v3250
    %v4095 = vpack.c.b16 %v3259, %v3255
    %v4096 = vpack.c.b16 %v3260, %v3256
    %v4097 = vpack.c.b16 %v3261, %v3257
    %v4098 = vpack.c.b16 %v3262, %v3258
    %v4099 = vpack.c.b16 %v3267, %v3263
    %v4100 = vpack.c.b16 %v3268, %v3264
    %v4101 = vpack.c.b16 %v3269, %v3265
    %v4102 = vpack.c.b16 %v3270, %v3266
    %v4103 = vpack.c.b16 %v3275, %v3271
    %v4104 = vpack.c.b16 %v3276, %v3272
    %v4105 = vpack.c.b16 %v3277, %v3273
    %v4106 = vpack.c.b16 %v3278, %v3274
    %v4107 = vpack.c.b16 %v3283, %v3279
    %v4108 = vpack.c.b16 %v3284, %v3280
    %v4109 = vpack.c.b16 %v3285, %v3281
    %v4110 = vpack.c.b16 %v3286, %v3282
    %v4111 = vpack.c.b16 %v3291, %v3287
    %v4112 = vpack.c.b16 %v3292, %v3288
    %v4113 = vpack.c.b16 %v3293, %v3289
    %v4114 = vpack.c.b16 %v3294, %v3290
    %v4115 = vpack.c.b16 %v3299, %v3295
    %v4116 = vpack.c.b16 %v3300, %v3296
    %v4117 = vpack.c.b16 %v3301, %v3297
    %v4118 = vpack.c.b16 %v3302, %v3298
    %v4119 = vpack.c.b16 %v3307, %v3303
    %v4120 = vpack.c.b16 %v3308, %v3304
    %v4121 = vpack.c.b16 %v3309, %v3305
    %v4122 = vpack.c.b16 %v3310, %v3306
    %v4123 = vpack.c.b16 %v3315, %v3311
    %v4124 = vpack.c.b16 %v3316, %v3312
    %v4125 = vpack.c.b16 %v3317, %v3313
    %v4126 = vpack.c.b16 %v3318, %v3314
    %v4127 = vpack.c.b16 %v3323, %v3319
    %v4128 = vpack.c.b16 %v3324, %v3320
    %v4129 = vpack.c.b16 %v3325, %v3321
    %v4130 = vpack.c.b16 %v3326, %v3322
    %v4131 = vpack.c.b16 %v3331, %v3327
    %v4132 = vpack.c.b16 %v3332, %v3328
    %v4133 = vpack.c.b16 %v3333, %v3329
    %v4134 = vpack.c.b16 %v3334, %v3330
    %v4135 = vpack.c.b16 %v3339, %v3335
    %v4136 = vpack.c.b16 %v3340, %v3336
    %v4137 = vpack.c.b16 %v3341, %v3337
    %v4138 = vpack.c.b16 %v3342, %v3338
    %v4139 = vpack.c.b16 %v3347, %v3343
    %v4140 = vpack.c.b16 %v3348, %v3344
    %v4141 = vpack.c.b16 %v3349, %v3345
    %v4142 = vpack.c.b16 %v3350, %v3346
    %v4143 = vpack.c.b16 %v3355, %v3351
    %v4144 = vpack.c.b16 %v3356, %v3352
    %v4145 = vpack.c.b16 %v3357, %v3353
    %v4146 = vpack.c.b16 %v3358, %v3354
    %v4147 = vpack.c.b16 %v3363, %v3359
    %v4148 = vpack.c.b16 %v3364, %v3360
    %v4149 = vpack.c.b16 %v3365, %v3361
    %v4150 = vpack.c.b16 %v3366, %v3362
    %vm4935 = vcmask 523264
    %v4937 = vsel %vm4935, %v990, 0
    %4939 = vmatprep.subr.bf16.mxu0 %v3368
    %4940 = vmatpush1.bf16.msra.mxu0 %v3367
    %4941 = vmatprep.subr.bf16.mxu0 %v3372
    %4942 = vmatpush1.bf16.msra.mxu0 %v3371
    %4943 = vmatprep.subr.bf16.mxu0 %v3376
    %4944 = vmatpush1.bf16.msra.mxu0 %v3375
    %4945 = vmatprep.subr.bf16.mxu0 %v3380
    %4946 = vmatpush1.bf16.msra.mxu0 %v3379
    %4947 = vmatprep.subr.bf16.mxu0 %v3384
    %4948 = vmatpush1.bf16.msra.mxu0 %v3383
    %4949 = vmatprep.subr.bf16.mxu0 %v3388
    %4950 = vmatpush1.bf16.msra.mxu0 %v3387
    %4951 = vmatprep.subr.bf16.mxu0 %v3392
    %4952 = vmatpush1.bf16.msra.mxu0 %v3391
    %4953 = vmatprep.subr.bf16.mxu0 %v3396
    %4954 = vmatpush1.bf16.msra.mxu0 %v3395
    %4955 = vmatprep.subr.bf16.mxu0 %v3400
    %4956 = vmatpush1.bf16.msra.mxu0 %v3399
    %4957 = vmatprep.subr.bf16.mxu0 %v3404
    %4958 = vmatpush1.bf16.msra.mxu0 %v3403
    %4959 = vmatprep.subr.bf16.mxu0 %v3408
    %4960 = vmatpush1.bf16.msra.mxu0 %v3407
    %4961 = vmatprep.subr.bf16.mxu0 %v3412
    %4962 = vmatpush1.bf16.msra.mxu0 %v3411
    %4963 = vmatprep.subr.bf16.mxu0 %v3416
    %4964 = vmatpush1.bf16.msra.mxu0 %v3415
    %4965 = vmatprep.subr.bf16.mxu0 %v3420
    %4966 = vmatpush1.bf16.msra.mxu0 %v3419
    %4967 = vmatprep.subr.bf16.mxu0 %v3424
    %4968 = vmatpush1.bf16.msra.mxu0 %v3423
    %4969 = vmatprep.subr.bf16.mxu0 %v3428
    %4970 = vmatpush1.bf16.msra.mxu0 %v3427
    %4971 = vmatprep.mubr.bf16.mxu0 %v867
    %4972 = vmatmul.mubr.bf16.gmra.mrb[0].mxu0 %v853
    %v4973 = vpop.f32.mrb[0].mxu0
    %v4974 = vadd.f32 %v809, %v4973
    %v4975 = vpop.f32.mrb[0].mxu0
    %v4976 = vadd.f32 %v813, %v4975
    %v4977 = vpop.f32.mrb[0].mxu0
    %v4978 = vpop.f32.mrb[0].mxu0
    %4979 = vdwg.mxu0
    %4980 = vmatprep.subr.bf16.mxu0 %v3432
    %4981 = vmatpush1.bf16.msra.mxu0 %v3431
    %4982 = vmatprep.subr.bf16.mxu0 %v3436
    %4983 = vmatpush1.bf16.msra.mxu0 %v3435
    %4984 = vmatprep.subr.bf16.mxu0 %v3440
    %4985 = vmatpush1.bf16.msra.mxu0 %v3439
    %4986 = vmatprep.subr.bf16.mxu0 %v3444
    %4987 = vmatpush1.bf16.msra.mxu0 %v3443
    %4988 = vmatprep.subr.bf16.mxu0 %v3448
    %4989 = vmatpush1.bf16.msra.mxu0 %v3447
    %4990 = vmatprep.subr.bf16.mxu0 %v3452
    %4991 = vmatpush1.bf16.msra.mxu0 %v3451
    %4992 = vmatprep.subr.bf16.mxu0 %v3456
    %4993 = vmatpush1.bf16.msra.mxu0 %v3455
    %4994 = vmatprep.subr.bf16.mxu0 %v3460
    %4995 = vmatpush1.bf16.msra.mxu0 %v3459
    %4996 = vmatprep.subr.bf16.mxu0 %v3464
    %4997 = vmatpush1.bf16.msra.mxu0 %v3463
    %4998 = vmatprep.subr.bf16.mxu0 %v3468
    %4999 = vmatpush1.bf16.msra.mxu0 %v3467
    %5000 = vmatprep.subr.bf16.mxu0 %v3472
    %5001 = vmatpush1.bf16.msra.mxu0 %v3471
    %5002 = vmatprep.subr.bf16.mxu0 %v3476
    %5003 = vmatpush1.bf16.msra.mxu0 %v3475
    %5004 = vmatprep.subr.bf16.mxu0 %v3480
    %5005 = vmatpush1.bf16.msra.mxu0 %v3479
    %5006 = vmatprep.subr.bf16.mxu0 %v3484
    %5007 = vmatpush1.bf16.msra.mxu0 %v3483
    %5008 = vmatprep.subr.bf16.mxu0 %v3488
    %5009 = vmatpush1.bf16.msra.mxu0 %v3487
    %5010 = vmatprep.subr.bf16.mxu0 %v3492
    %5011 = vmatpush1.bf16.msra.mxu0 %v3491
    %5012 = vmatprep.mubr.bf16.mxu0 %v877
    %5013 = vmatmul.mubr.bf16.gmra.mrb[0].mxu0 %v875
    %v5014 = vpop.f32.mrb[0].mxu0
    %v5015 = vadd.f32 %v4974, %v5014
    %v5016 = vpop.f32.mrb[0].mxu0
    %v5017 = vadd.f32 %v4976, %v5016
    %v5018 = vpop.f32.mrb[0].mxu0
    %v5019 = vpop.f32.mrb[0].mxu0
    %5020 = vdwg.mxu0
    %5021 = vmatprep.subr.bf16.mxu0 %v3496
    %5022 = vmatpush1.bf16.msra.mxu0 %v3495
    %5023 = vmatprep.subr.bf16.mxu0 %v3500
    %5024 = vmatpush1.bf16.msra.mxu0 %v3499
    %5025 = vmatprep.subr.bf16.mxu0 %v3504
    %5026 = vmatpush1.bf16.msra.mxu0 %v3503
    %5027 = vmatprep.subr.bf16.mxu0 %v3508
    %5028 = vmatpush1.bf16.msra.mxu0 %v3507
    %5029 = vmatprep.subr.bf16.mxu0 %v3512
    %5030 = vmatpush1.bf16.msra.mxu0 %v3511
    %5031 = vmatprep.subr.bf16.mxu0 %v3516
    %5032 = vmatpush1.bf16.msra.mxu0 %v3515
    %5033 = vmatprep.subr.bf16.mxu0 %v3520
    %5034 = vmatpush1.bf16.msra.mxu0 %v3519
    %5035 = vmatprep.subr.bf16.mxu0 %v3524
    %5036 = vmatpush1.bf16.msra.mxu0 %v3523
    %5037 = vmatprep.subr.bf16.mxu0 %v3528
    %5038 = vmatpush1.bf16.msra.mxu0 %v3527
    %5039 = vmatprep.subr.bf16.mxu0 %v3532
    %5040 = vmatpush1.bf16.msra.mxu0 %v3531
    %5041 = vmatprep.subr.bf16.mxu0 %v3536
    %5042 = vmatpush1.bf16.msra.mxu0 %v3535
    %5043 = vmatprep.subr.bf16.mxu0 %v3540
    %5044 = vmatpush1.bf16.msra.mxu0 %v3539
    %5045 = vmatprep.subr.bf16.mxu0 %v3544
    %5046 = vmatpush1.bf16.msra.mxu0 %v3543
    %5047 = vmatprep.subr.bf16.mxu0 %v3548
    %5048 = vmatpush1.bf16.msra.mxu0 %v3547
    %5049 = vmatprep.subr.bf16.mxu0 %v3552
    %5050 = vmatpush1.bf16.msra.mxu0 %v3551
    %5051 = vmatprep.subr.bf16.mxu0 %v3556
    %5052 = vmatpush1.bf16.msra.mxu0 %v3555
    %5053 = vmatprep.mubr.bf16.mxu0 %v874
    %5054 = vmatmul.mubr.bf16.gmra.mrb[0].mxu0 %v860
    %v5055 = vpop.f32.mrb[0].mxu0
    %v5056 = vadd.f32 %v5015, %v5055
    %v5057 = vpop.f32.mrb[0].mxu0
    %v5058 = vadd.f32 %v5017, %v5057
    %v5059 = vpop.f32.mrb[0].mxu0
    %v5060 = vpop.f32.mrb[0].mxu0
    %5061 = vdwg.mxu0
    %5062 = vmatprep.subr.bf16.mxu0 %v3560
    %5063 = vmatpush1.bf16.msra.mxu0 %v3559
    %5064 = vmatprep.subr.bf16.mxu0 %v3564
    %5065 = vmatpush1.bf16.msra.mxu0 %v3563
    %5066 = vmatprep.subr.bf16.mxu0 %v3568
    %5067 = vmatpush1.bf16.msra.mxu0 %v3567
    %5068 = vmatprep.subr.bf16.mxu0 %v3572
    %5069 = vmatpush1.bf16.msra.mxu0 %v3571
    %5070 = vmatprep.subr.bf16.mxu0 %v3576
    %5071 = vmatpush1.bf16.msra.mxu0 %v3575
    %5072 = vmatprep.subr.bf16.mxu0 %v3580
    %5073 = vmatpush1.bf16.msra.mxu0 %v3579
    %5074 = vmatprep.subr.bf16.mxu0 %v3584
    %5075 = vmatpush1.bf16.msra.mxu0 %v3583
    %5076 = vmatprep.subr.bf16.mxu0 %v3588
    %5077 = vmatpush1.bf16.msra.mxu0 %v3587
    %5078 = vmatprep.subr.bf16.mxu0 %v3592
    %5079 = vmatpush1.bf16.msra.mxu0 %v3591
    %5080 = vmatprep.subr.bf16.mxu0 %v3596
    %5081 = vmatpush1.bf16.msra.mxu0 %v3595
    %5082 = vmatprep.subr.bf16.mxu0 %v3600
    %5083 = vmatpush1.bf16.msra.mxu0 %v3599
    %5084 = vmatprep.subr.bf16.mxu0 %v3604
    %5085 = vmatpush1.bf16.msra.mxu0 %v3603
    %5086 = vmatprep.subr.bf16.mxu0 %v3608
    %5087 = vmatpush1.bf16.msra.mxu0 %v3607
    %5088 = vmatprep.subr.bf16.mxu0 %v3612
    %5089 = vmatpush1.bf16.msra.mxu0 %v3611
    %5090 = vmatprep.subr.bf16.mxu0 %v3616
    %5091 = vmatpush1.bf16.msra.mxu0 %v3615
    %5092 = vmatprep.subr.bf16.mxu0 %v3620
    %5093 = vmatpush1.bf16.msra.mxu0 %v3619
    %5094 = vmatprep.mubr.bf16.mxu0 %v878
    %5095 = vmatmul.mubr.bf16.gmra.mrb[0].mxu0 %v876
    %v5096 = vpop.f32.mrb[0].mxu0
    %v5097 = vadd.f32 %v5056, %v5096
    %v5098 = vpop.f32.mrb[0].mxu0
    %v5099 = vadd.f32 %v5058, %v5098
    %v5100 = vpop.f32.mrb[0].mxu0
    %v5101 = vpop.f32.mrb[0].mxu0
    %5102 = vdwg.mxu0
    %5103 = vmatprep.subr.bf16.mxu0 %v3624
    %5104 = vmatpush1.bf16.msra.mxu0 %v3623
    %5105 = vmatprep.subr.bf16.mxu0 %v3628
    %5106 = vmatpush1.bf16.msra.mxu0 %v3627
    %5107 = vmatprep.subr.bf16.mxu0 %v3632
    %5108 = vmatpush1.bf16.msra.mxu0 %v3631
    %5109 = vmatprep.subr.bf16.mxu0 %v3636
    %5110 = vmatpush1.bf16.msra.mxu0 %v3635
    %5111 = vmatprep.subr.bf16.mxu0 %v3640
    %5112 = vmatpush1.bf16.msra.mxu0 %v3639
    %5113 = vmatprep.subr.bf16.mxu0 %v3644
    %5114 = vmatpush1.bf16.msra.mxu0 %v3643
    %5115 = vmatprep.subr.bf16.mxu0 %v3648
    %5116 = vmatpush1.bf16.msra.mxu0 %v3647
    %5117 = vmatprep.subr.bf16.mxu0 %v3652
    %5118 = vmatpush1.bf16.msra.mxu0 %v3651
    %5119 = vmatprep.subr.bf16.mxu0 %v3656
    %5120 = vmatpush1.bf16.msra.mxu0 %v3655
    %5121 = vmatprep.subr.bf16.mxu0 %v3660
    %5122 = vmatpush1.bf16.msra.mxu0 %v3659
    %5123 = vmatprep.subr.bf16.mxu0 %v3664
    %5124 = vmatpush1.bf16.msra.mxu0 %v3663
    %5125 = vmatprep.subr.bf16.mxu0 %v3668
    %5126 = vmatpush1.bf16.msra.mxu0 %v3667
    %5127 = vmatprep.subr.bf16.mxu0 %v3672
    %5128 = vmatpush1.bf16.msra.mxu0 %v3671
    %5129 = vmatprep.subr.bf16.mxu0 %v3676
    %5130 = vmatpush1.bf16.msra.mxu0 %v3675
    %5131 = vmatprep.subr.bf16.mxu0 %v3680
    %5132 = vmatpush1.bf16.msra.mxu0 %v3679
    %5133 = vmatprep.subr.bf16.mxu0 %v3684
    %5134 = vmatpush1.bf16.msra.mxu0 %v3683
    %5135 = vmatprep.mubr.bf16.mxu0 %v916
    %5136 = vmatmul.mubr.bf16.gmra.mrb[0].mxu0 %v902
    %v5137 = vpop.f32.mrb[0].mxu0
    %v5138 = vadd.f32 %v5097, %v5137
    %v5139 = vpop.f32.mrb[0].mxu0
    %v5140 = vadd.f32 %v5099, %v5139
    %v5141 = vpop.f32.mrb[0].mxu0
    %v5142 = vpop.f32.mrb[0].mxu0
    %5143 = vdwg.mxu0
    %5144 = vmatprep.subr.bf16.mxu0 %v3688
    %5145 = vmatpush1.bf16.msra.mxu0 %v3687
    %5146 = vmatprep.subr.bf16.mxu0 %v3692
    %5147 = vmatpush1.bf16.msra.mxu0 %v3691
    %5148 = vmatprep.subr.bf16.mxu0 %v3696
    %5149 = vmatpush1.bf16.msra.mxu0 %v3695
    %5150 = vmatprep.subr.bf16.mxu0 %v3700
    %5151 = vmatpush1.bf16.msra.mxu0 %v3699
    %5152 = vmatprep.subr.bf16.mxu0 %v3704
    %5153 = vmatpush1.bf16.msra.mxu0 %v3703
    %5154 = vmatprep.subr.bf16.mxu0 %v3708
    %5155 = vmatpush1.bf16.msra.mxu0 %v3707
    %5156 = vmatprep.subr.bf16.mxu0 %v3712
    %5157 = vmatpush1.bf16.msra.mxu0 %v3711
    %5158 = vmatprep.subr.bf16.mxu0 %v3716
    %5159 = vmatpush1.bf16.msra.mxu0 %v3715
    %5160 = vmatprep.subr.bf16.mxu0 %v3720
    %5161 = vmatpush1.bf16.msra.mxu0 %v3719
    %5162 = vmatprep.subr.bf16.mxu0 %v3724
    %5163 = vmatpush1.bf16.msra.mxu0 %v3723
    %5164 = vmatprep.subr.bf16.mxu0 %v3728
    %5165 = vmatpush1.bf16.msra.mxu0 %v3727
    %5166 = vmatprep.subr.bf16.mxu0 %v3732
    %5167 = vmatpush1.bf16.msra.mxu0 %v3731
    %5168 = vmatprep.subr.bf16.mxu0 %v3736
    %5169 = vmatpush1.bf16.msra.mxu0 %v3735
    %5170 = vmatprep.subr.bf16.mxu0 %v3740
    %5171 = vmatpush1.bf16.msra.mxu0 %v3739
    %5172 = vmatprep.subr.bf16.mxu0 %v3744
    %5173 = vmatpush1.bf16.msra.mxu0 %v3743
    %5174 = vmatprep.subr.bf16.mxu0 %v3748
    %5175 = vmatpush1.bf16.msra.mxu0 %v3747
    %5176 = vmatprep.mubr.bf16.mxu0 %v926
    %5177 = vmatmul.mubr.bf16.gmra.mrb[0].mxu0 %v924
    %v5178 = vpop.f32.mrb[0].mxu0
    %v5179 = vadd.f32 %v5138, %v5178
    %v5180 = vpop.f32.mrb[0].mxu0
    %v5181 = vadd.f32 %v5140, %v5180
    %v5182 = vpop.f32.mrb[0].mxu0
    %v5183 = vpop.f32.mrb[0].mxu0
    %5184 = vdwg.mxu0
    %5185 = vmatprep.subr.bf16.mxu0 %v3752
    %5186 = vmatpush1.bf16.msra.mxu0 %v3751
    %5187 = vmatprep.subr.bf16.mxu0 %v3756
    %5188 = vmatpush1.bf16.msra.mxu0 %v3755
    %5189 = vmatprep.subr.bf16.mxu0 %v3760
    %5190 = vmatpush1.bf16.msra.mxu0 %v3759
    %5191 = vmatprep.subr.bf16.mxu0 %v3764
    %5192 = vmatpush1.bf16.msra.mxu0 %v3763
    %5193 = vmatprep.subr.bf16.mxu0 %v3768
    %5194 = vmatpush1.bf16.msra.mxu0 %v3767
    %5195 = vmatprep.subr.bf16.mxu0 %v3772
    %5196 = vmatpush1.bf16.msra.mxu0 %v3771
    %5197 = vmatprep.subr.bf16.mxu0 %v3776
    %5198 = vmatpush1.bf16.msra.mxu0 %v3775
    %5199 = vmatprep.subr.bf16.mxu0 %v3780
    %5200 = vmatpush1.bf16.msra.mxu0 %v3779
    %5201 = vmatprep.subr.bf16.mxu0 %v3784
    %5202 = vmatpush1.bf16.msra.mxu0 %v3783
    %5203 = vmatprep.subr.bf16.mxu0 %v3788
    %5204 = vmatpush1.bf16.msra.mxu0 %v3787
    %5205 = vmatprep.subr.bf16.mxu0 %v3792
    %5206 = vmatpush1.bf16.msra.mxu0 %v3791
    %5207 = vmatprep.subr.bf16.mxu0 %v3796
    %5208 = vmatpush1.bf16.msra.mxu0 %v3795
    %5209 = vmatprep.subr.bf16.mxu0 %v3800
    %5210 = vmatpush1.bf16.msra.mxu0 %v3799
    %5211 = vmatprep.subr.bf16.mxu0 %v3804
    %5212 = vmatpush1.bf16.msra.mxu0 %v3803
    %5213 = vmatprep.subr.bf16.mxu0 %v3808
    %5214 = vmatpush1.bf16.msra.mxu0 %v3807
    %5215 = vmatprep.subr.bf16.mxu0 %v3812
    %5216 = vmatpush1.bf16.msra.mxu0 %v3811
    %5217 = vmatprep.mubr.bf16.mxu0 %v923
    %5218 = vmatmul.mubr.bf16.gmra.mrb[0].mxu0 %v909
    %v5219 = vpop.f32.mrb[0].mxu0
    %v5220 = vadd.f32 %v5179, %v5219
    %v5221 = vpop.f32.mrb[0].mxu0
    %v5222 = vadd.f32 %v5181, %v5221
    %v5223 = vpop.f32.mrb[0].mxu0
    %v5224 = vpop.f32.mrb[0].mxu0
    %5225 = vdwg.mxu0
    %5226 = vmatprep.subr.bf16.mxu0 %v3816
    %5227 = vmatpush1.bf16.msra.mxu0 %v3815
    %5228 = vmatprep.subr.bf16.mxu0 %v3820
    %5229 = vmatpush1.bf16.msra.mxu0 %v3819
    %5230 = vmatprep.subr.bf16.mxu0 %v3824
    %5231 = vmatpush1.bf16.msra.mxu0 %v3823
    %5232 = vmatprep.subr.bf16.mxu0 %v3828
    %5233 = vmatpush1.bf16.msra.mxu0 %v3827
    %5234 = vmatprep.subr.bf16.mxu0 %v3832
    %5235 = vmatpush1.bf16.msra.mxu0 %v3831
    %5236 = vmatprep.subr.bf16.mxu0 %v3836
    %5237 = vmatpush1.bf16.msra.mxu0 %v3835
    %5238 = vmatprep.subr.bf16.mxu0 %v3840
    %5239 = vmatpush1.bf16.msra.mxu0 %v3839
    %5240 = vmatprep.subr.bf16.mxu0 %v3844
    %5241 = vmatpush1.bf16.msra.mxu0 %v3843
    %5242 = vmatprep.subr.bf16.mxu0 %v3848
    %5243 = vmatpush1.bf16.msra.mxu0 %v3847
    %5244 = vmatprep.subr.bf16.mxu0 %v3852
    %5245 = vmatpush1.bf16.msra.mxu0 %v3851
    %5246 = vmatprep.subr.bf16.mxu0 %v3856
    %5247 = vmatpush1.bf16.msra.mxu0 %v3855
    %5248 = vmatprep.subr.bf16.mxu0 %v3860
    %5249 = vmatpush1.bf16.msra.mxu0 %v3859
    %5250 = vmatprep.subr.bf16.mxu0 %v3864
    %5251 = vmatpush1.bf16.msra.mxu0 %v3863
    %5252 = vmatprep.subr.bf16.mxu0 %v3868
    %5253 = vmatpush1.bf16.msra.mxu0 %v3867
    %5254 = vmatprep.subr.bf16.mxu0 %v3872
    %5255 = vmatpush1.bf16.msra.mxu0 %v3871
    %5256 = vmatprep.subr.bf16.mxu0 %v3876
    %5257 = vmatpush1.bf16.msra.mxu0 %v3875
    %5258 = vmatprep.mubr.bf16.mxu0 %v927
    %5259 = vmatmul.mubr.bf16.gmra.mrb[0].mxu0 %v925
    %v5260 = vpop.f32.mrb[0].mxu0
    %v5261 = vadd.f32 %v5220, %v5260
    %v5262 = vpop.f32.mrb[0].mxu0
    %v5263 = vadd.f32 %v5222, %v5262
    %v5264 = vpop.f32.mrb[0].mxu0
    %v5265 = vpop.f32.mrb[0].mxu0
    %5266 = vdwg.mxu0
    %5267 = vmatprep.subr.bf16.mxu0 %v3880
    %5268 = vmatpush1.bf16.msra.mxu0 %v3879
    %5269 = vmatprep.subr.bf16.mxu0 %v3884
    %5270 = vmatpush1.bf16.msra.mxu0 %v3883
    %5271 = vmatprep.subr.bf16.mxu0 %v3888
    %5272 = vmatpush1.bf16.msra.mxu0 %v3887
    %5273 = vmatprep.subr.bf16.mxu0 %v3892
    %5274 = vmatpush1.bf16.msra.mxu0 %v3891
    %5275 = vmatprep.subr.bf16.mxu0 %v3896
    %5276 = vmatpush1.bf16.msra.mxu0 %v3895
    %5277 = vmatprep.subr.bf16.mxu0 %v3900
    %5278 = vmatpush1.bf16.msra.mxu0 %v3899
    %5279 = vmatprep.subr.bf16.mxu0 %v3904
    %5280 = vmatpush1.bf16.msra.mxu0 %v3903
    %5281 = vmatprep.subr.bf16.mxu0 %v3908
    %5282 = vmatpush1.bf16.msra.mxu0 %v3907
    %5283 = vmatprep.subr.bf16.mxu0 %v3912
    %5284 = vmatpush1.bf16.msra.mxu0 %v3911
    %5285 = vmatprep.subr.bf16.mxu0 %v3916
    %5286 = vmatpush1.bf16.msra.mxu0 %v3915
    %5287 = vmatprep.subr.bf16.mxu0 %v3920
    %5288 = vmatpush1.bf16.msra.mxu0 %v3919
    %5289 = vmatprep.subr.bf16.mxu0 %v3924
    %5290 = vmatpush1.bf16.msra.mxu0 %v3923
    %5291 = vmatprep.subr.bf16.mxu0 %v3928
    %5292 = vmatpush1.bf16.msra.mxu0 %v3927
    %5293 = vmatprep.subr.bf16.mxu0 %v3932
    %5294 = vmatpush1.bf16.msra.mxu0 %v3931
    %5295 = vmatprep.subr.bf16.mxu0 %v3936
    %5296 = vmatpush1.bf16.msra.mxu0 %v3935
    %5297 = vmatprep.subr.bf16.mxu0 %v3940
    %5298 = vmatpush1.bf16.msra.mxu0 %v3939
    %5299 = vmatprep.mubr.bf16.mxu0 %v965
    %5300 = vmatmul.mubr.bf16.gmra.mrb[0].mxu0 %v951
    %v5301 = vpop.f32.mrb[0].mxu0
    %v5302 = vadd.f32 %v5261, %v5301
    %v5303 = vpop.f32.mrb[0].mxu0
    %v5304 = vadd.f32 %v5263, %v5303
    %v5305 = vpop.f32.mrb[0].mxu0
    %v5306 = vpop.f32.mrb[0].mxu0
    %5307 = vdwg.mxu0
    %5308 = vmatprep.subr.bf16.mxu0 %v3944
    %5309 = vmatpush1.bf16.msra.mxu0 %v3943
    %5310 = vmatprep.subr.bf16.mxu0 %v3948
    %5311 = vmatpush1.bf16.msra.mxu0 %v3947
    %5312 = vmatprep.subr.bf16.mxu0 %v3952
    %5313 = vmatpush1.bf16.msra.mxu0 %v3951
    %5314 = vmatprep.subr.bf16.mxu0 %v3956
    %5315 = vmatpush1.bf16.msra.mxu0 %v3955
    %5316 = vmatprep.subr.bf16.mxu0 %v3960
    %5317 = vmatpush1.bf16.msra.mxu0 %v3959
    %5318 = vmatprep.subr.bf16.mxu0 %v3964
    %5319 = vmatpush1.bf16.msra.mxu0 %v3963
    %5320 = vmatprep.subr.bf16.mxu0 %v3968
    %5321 = vmatpush1.bf16.msra.mxu0 %v3967
    %5322 = vmatprep.subr.bf16.mxu0 %v3972
    %5323 = vmatpush1.bf16.msra.mxu0 %v3971
    %5324 = vmatprep.subr.bf16.mxu0 %v3976
    %5325 = vmatpush1.bf16.msra.mxu0 %v3975
    %5326 = vmatprep.subr.bf16.mxu0 %v3980
    %5327 = vmatpush1.bf16.msra.mxu0 %v3979
    %5328 = vmatprep.subr.bf16.mxu0 %v3984
    %5329 = vmatpush1.bf16.msra.mxu0 %v3983
    %5330 = vmatprep.subr.bf16.mxu0 %v3988
    %5331 = vmatpush1.bf16.msra.mxu0 %v3987
    %5332 = vmatprep.subr.bf16.mxu0 %v3992
    %5333 = vmatpush1.bf16.msra.mxu0 %v3991
    %5334 = vmatprep.subr.bf16.mxu0 %v3996
    %5335 = vmatpush1.bf16.msra.mxu0 %v3995
    %5336 = vmatprep.subr.bf16.mxu0 %v4000
    %5337 = vmatpush1.bf16.msra.mxu0 %v3999
    %5338 = vmatprep.subr.bf16.mxu0 %v4004
    %5339 = vmatpush1.bf16.msra.mxu0 %v4003
    %5340 = vmatprep.mubr.bf16.mxu0 %v975
    %5341 = vmatmul.mubr.bf16.gmra.mrb[0].mxu0 %v973
    %v5342 = vpop.f32.mrb[0].mxu0
    %v5343 = vadd.f32 %v5302, %v5342
    %v5344 = vpop.f32.mrb[0].mxu0
    %v5345 = vadd.f32 %v5304, %v5344
    %v5346 = vpop.f32.mrb[0].mxu0
    %v5347 = vpop.f32.mrb[0].mxu0
    %5348 = vdwg.mxu0
    %5349 = vmatprep.subr.bf16.mxu0 %v4008
    %5350 = vmatpush1.bf16.msra.mxu0 %v4007
    %5351 = vmatprep.subr.bf16.mxu0 %v4012
    %5352 = vmatpush1.bf16.msra.mxu0 %v4011
    %5353 = vmatprep.subr.bf16.mxu0 %v4016
    %5354 = vmatpush1.bf16.msra.mxu0 %v4015
    %5355 = vmatprep.subr.bf16.mxu0 %v4020
    %5356 = vmatpush1.bf16.msra.mxu0 %v4019
    %5357 = vmatprep.subr.bf16.mxu0 %v4024
    %5358 = vmatpush1.bf16.msra.mxu0 %v4023
    %5359 = vmatprep.subr.bf16.mxu0 %v4028
    %5360 = vmatpush1.bf16.msra.mxu0 %v4027
    %5361 = vmatprep.subr.bf16.mxu0 %v4032
    %5362 = vmatpush1.bf16.msra.mxu0 %v4031
    %5363 = vmatprep.subr.bf16.mxu0 %v4036
    %5364 = vmatpush1.bf16.msra.mxu0 %v4035
    %5365 = vmatprep.subr.bf16.mxu0 %v4040
    %5366 = vmatpush1.bf16.msra.mxu0 %v4039
    %5367 = vmatprep.subr.bf16.mxu0 %v4044
    %5368 = vmatpush1.bf16.msra.mxu0 %v4043
    %5369 = vmatprep.subr.bf16.mxu0 %v4048
    %5370 = vmatpush1.bf16.msra.mxu0 %v4047
    %5371 = vmatprep.subr.bf16.mxu0 %v4052
    %5372 = vmatpush1.bf16.msra.mxu0 %v4051
    %5373 = vmatprep.subr.bf16.mxu0 %v4056
    %5374 = vmatpush1.bf16.msra.mxu0 %v4055
    %5375 = vmatprep.subr.bf16.mxu0 %v4060
    %5376 = vmatpush1.bf16.msra.mxu0 %v4059
    %5377 = vmatprep.subr.bf16.mxu0 %v4064
    %5378 = vmatpush1.bf16.msra.mxu0 %v4063
    %5379 = vmatprep.subr.bf16.mxu0 %v4068
    %5380 = vmatpush1.bf16.msra.mxu0 %v4067
    %5381 = vmatprep.mubr.bf16.mxu0 %v972
    %5382 = vmatmul.mubr.bf16.gmra.mrb[0].mxu0 %v958
    %v5383 = vpop.f32.mrb[0].mxu0
    %v5384 = vadd.f32 %v5343, %v5383
    %v5385 = vpop.f32.mrb[0].mxu0
    %v5386 = vadd.f32 %v5345, %v5385
    %v5387 = vpop.f32.mrb[0].mxu0
    %v5388 = vpop.f32.mrb[0].mxu0
    %5389 = vdwg.mxu0
    %5390 = vmatprep.subr.bf16.mxu0 %v4072
    %5391 = vmatpush1.bf16.msra.mxu0 %v4071
    %5392 = vmatprep.subr.bf16.mxu0 %v4076
    %5393 = vmatpush1.bf16.msra.mxu0 %v4075
    %5394 = vmatprep.subr.bf16.mxu0 %v4080
    %5395 = vmatpush1.bf16.msra.mxu0 %v4079
    %5396 = vmatprep.subr.bf16.mxu0 %v4084
    %5397 = vmatpush1.bf16.msra.mxu0 %v4083
    %5398 = vmatprep.subr.bf16.mxu0 %v4088
    %5399 = vmatpush1.bf16.msra.mxu0 %v4087
    %5400 = vmatprep.subr.bf16.mxu0 %v4092
    %5401 = vmatpush1.bf16.msra.mxu0 %v4091
    %5402 = vmatprep.subr.bf16.mxu0 %v4096
    %5403 = vmatpush1.bf16.msra.mxu0 %v4095
    %5404 = vmatprep.subr.bf16.mxu0 %v4100
    %5405 = vmatpush1.bf16.msra.mxu0 %v4099
    %5406 = vmatprep.subr.bf16.mxu0 %v4104
    %5407 = vmatpush1.bf16.msra.mxu0 %v4103
    %5408 = vmatprep.subr.bf16.mxu0 %v4108
    %5409 = vmatpush1.bf16.msra.mxu0 %v4107
    %5410 = vmatprep.subr.bf16.mxu0 %v4112
    %5411 = vmatpush1.bf16.msra.mxu0 %v4111
    %5412 = vmatprep.subr.bf16.mxu0 %v4116
    %5413 = vmatpush1.bf16.msra.mxu0 %v4115
    %5414 = vmatprep.subr.bf16.mxu0 %v4120
    %5415 = vmatpush1.bf16.msra.mxu0 %v4119
    %5416 = vmatprep.subr.bf16.mxu0 %v4124
    %5417 = vmatpush1.bf16.msra.mxu0 %v4123
    %5418 = vmatprep.subr.bf16.mxu0 %v4128
    %5419 = vmatpush1.bf16.msra.mxu0 %v4127
    %5420 = vmatprep.subr.bf16.mxu0 %v4132
    %5421 = vmatpush1.bf16.msra.mxu0 %v4131
    %5422 = vmatprep.mubr.bf16.mxu0 %v976
    %5423 = vmatmul.mubr.bf16.gmra.mrb[0].mxu0 %v974
    %v5424 = vpop.f32.mrb[0].mxu0
    %v5425 = vadd.f32 %v5384, %v5424
    %v5426 = vpop.f32.mrb[0].mxu0
    %v5427 = vadd.f32 %v5386, %v5426
    %v5428 = vpop.f32.mrb[0].mxu0
    %v5429 = vpop.f32.mrb[0].mxu0
    %5430 = vdwg.mxu0
    %5431 = vmatprep.subr.bf16.mxu0 %v4136
    %5432 = vmatpush1.bf16.msra.mxu0 %v4135
    %5433 = vmatprep.subr.bf16.mxu0 %v4140
    %5434 = vmatpush1.bf16.msra.mxu0 %v4139
    %5435 = vmatprep.subr.bf16.mxu0 %v4144
    %5436 = vmatpush1.bf16.msra.mxu0 %v4143
    %5437 = vmatprep.subr.bf16.mxu0 %v4148
    %5438 = vmatpush1.bf16.msra.mxu0 %v4147
    %5439 = vmatprep.subr.bf16.mxu0 0
    %5440 = vmatpush1.bf16.msra.mxu0 0
    %5441 = vmatprep.subr.bf16.mxu0 0
    %5442 = vmatpush1.bf16.msra.mxu0 0
    %5443 = vmatprep.subr.bf16.mxu0 0
    %5444 = vmatpush1.bf16.msra.mxu0 0
    %5445 = vmatprep.subr.bf16.mxu0 0
    %5446 = vmatpush1.bf16.msra.mxu0 0
    %5447 = vmatprep.subr.bf16.mxu0 0
    %5448 = vmatpush1.bf16.msra.mxu0 0
    %5449 = vmatprep.subr.bf16.mxu0 0
    %5450 = vmatpush1.bf16.msra.mxu0 0
    %5451 = vmatprep.subr.bf16.mxu0 0
    %5452 = vmatpush1.bf16.msra.mxu0 0
    %5453 = vmatprep.subr.bf16.mxu0 0
    %5454 = vmatpush1.bf16.msra.mxu0 0
    %5455 = vmatprep.subr.bf16.mxu0 0
    %5456 = vmatpush1.bf16.msra.mxu0 0
    %5457 = vmatprep.subr.bf16.mxu0 0
    %5458 = vmatpush1.bf16.msra.mxu0 0
    %5459 = vmatprep.subr.bf16.mxu0 0
    %5460 = vmatpush1.bf16.msra.mxu0 0
    %5461 = vmatprep.subr.bf16.mxu0 0
    %5462 = vmatpush1.bf16.msra.mxu0 0
    %5463 = vmatprep.mubr.bf16.mxu0 0
    %5464 = vmatmul.mubr.bf16.gmra.mrb[0].mxu0 %v4937
    %v5465 = vpop.f32.mrb[0].mxu0
    %v5466 = vadd.f32 %v5425, %v5465
    %v5467 = vpop.f32.mrb[0].mxu0
    %v5468 = vadd.f32 %v5427, %v5467
    %v5469 = vpop.f32.mrb[0].mxu0
    %v5470 = vpop.f32.mrb[0].mxu0
    %5471 = vdwg.mxu0
    %5472 = vmatprep.subr.bf16.mxu0 %v3370
    %5473 = vmatpush1.bf16.msra.mxu0 %v3369
    %5474 = vmatprep.subr.bf16.mxu0 %v3374
    %5475 = vmatpush1.bf16.msra.mxu0 %v3373
    %5476 = vmatprep.subr.bf16.mxu0 %v3378
    %5477 = vmatpush1.bf16.msra.mxu0 %v3377
    %5478 = vmatprep.subr.bf16.mxu0 %v3382
    %5479 = vmatpush1.bf16.msra.mxu0 %v3381
    %5480 = vmatprep.subr.bf16.mxu0 %v3386
    %5481 = vmatpush1.bf16.msra.mxu0 %v3385
    %5482 = vmatprep.subr.bf16.mxu0 %v3390
    %5483 = vmatpush1.bf16.msra.mxu0 %v3389
    %5484 = vmatprep.subr.bf16.mxu0 %v3394
    %5485 = vmatpush1.bf16.msra.mxu0 %v3393
    %5486 = vmatprep.subr.bf16.mxu0 %v3398
    %5487 = vmatpush1.bf16.msra.mxu0 %v3397
    %5488 = vmatprep.subr.bf16.mxu0 %v3402
    %5489 = vmatpush1.bf16.msra.mxu0 %v3401
    %5490 = vmatprep.subr.bf16.mxu0 %v3406
    %5491 = vmatpush1.bf16.msra.mxu0 %v3405
    %5492 = vmatprep.subr.bf16.mxu0 %v3410
    %5493 = vmatpush1.bf16.msra.mxu0 %v3409
    %5494 = vmatprep.subr.bf16.mxu0 %v3414
    %5495 = vmatpush1.bf16.msra.mxu0 %v3413
    %5496 = vmatprep.subr.bf16.mxu0 %v3418
    %5497 = vmatpush1.bf16.msra.mxu0 %v3417
    %5498 = vmatprep.subr.bf16.mxu0 %v3422
    %5499 = vmatpush1.bf16.msra.mxu0 %v3421
    %5500 = vmatprep.subr.bf16.mxu0 %v3426
    %5501 = vmatpush1.bf16.msra.mxu0 %v3425
    %5502 = vmatprep.subr.bf16.mxu0 %v3430
    %5503 = vmatpush1.bf16.msra.mxu0 %v3429
    %5504 = vmatprep.mubr.bf16.mxu0 %v867
    %5505 = vmatmul.mubr.bf16.gmra.mrb[0].mxu0 %v853
    %v5506 = vpop.f32.mrb[0].mxu0
    %v5507 = vadd.f32 %v817, %v5506
    %v5508 = vpop.f32.mrb[0].mxu0
    %v5509 = vadd.f32 %v821, %v5508
    %v5510 = vpop.f32.mrb[0].mxu0
    %v5511 = vpop.f32.mrb[0].mxu0
    %5512 = vdwg.mxu0
    %5513 = vmatprep.subr.bf16.mxu0 %v3434
    %5514 = vmatpush1.bf16.msra.mxu0 %v3433
    %5515 = vmatprep.subr.bf16.mxu0 %v3438
    %5516 = vmatpush1.bf16.msra.mxu0 %v3437
    %5517 = vmatprep.subr.bf16.mxu0 %v3442
    %5518 = vmatpush1.bf16.msra.mxu0 %v3441
    %5519 = vmatprep.subr.bf16.mxu0 %v3446
    %5520 = vmatpush1.bf16.msra.mxu0 %v3445
    %5521 = vmatprep.subr.bf16.mxu0 %v3450
    %5522 = vmatpush1.bf16.msra.mxu0 %v3449
    %5523 = vmatprep.subr.bf16.mxu0 %v3454
    %5524 = vmatpush1.bf16.msra.mxu0 %v3453
    %5525 = vmatprep.subr.bf16.mxu0 %v3458
    %5526 = vmatpush1.bf16.msra.mxu0 %v3457
    %5527 = vmatprep.subr.bf16.mxu0 %v3462
    %5528 = vmatpush1.bf16.msra.mxu0 %v3461
    %5529 = vmatprep.subr.bf16.mxu0 %v3466
    %5530 = vmatpush1.bf16.msra.mxu0 %v3465
    %5531 = vmatprep.subr.bf16.mxu0 %v3470
    %5532 = vmatpush1.bf16.msra.mxu0 %v3469
    %5533 = vmatprep.subr.bf16.mxu0 %v3474
    %5534 = vmatpush1.bf16.msra.mxu0 %v3473
    %5535 = vmatprep.subr.bf16.mxu0 %v3478
    %5536 = vmatpush1.bf16.msra.mxu0 %v3477
    %5537 = vmatprep.subr.bf16.mxu0 %v3482
    %5538 = vmatpush1.bf16.msra.mxu0 %v3481
    %5539 = vmatprep.subr.bf16.mxu0 %v3486
    %5540 = vmatpush1.bf16.msra.mxu0 %v3485
    %5541 = vmatprep.subr.bf16.mxu0 %v3490
    %5542 = vmatpush1.bf16.msra.mxu0 %v3489
    %5543 = vmatprep.subr.bf16.mxu0 %v3494
    %5544 = vmatpush1.bf16.msra.mxu0 %v3493
    %5545 = vmatprep.mubr.bf16.mxu0 %v877
    %5546 = vmatmul.mubr.bf16.gmra.mrb[0].mxu0 %v875
    %v5547 = vpop.f32.mrb[0].mxu0
    %v5548 = vadd.f32 %v5507, %v5547
    %v5549 = vpop.f32.mrb[0].mxu0
    %v5550 = vadd.f32 %v5509, %v5549
    %v5551 = vpop.f32.mrb[0].mxu0
    %v5552 = vpop.f32.mrb[0].mxu0
    %5553 = vdwg.mxu0
    %5554 = vmatprep.subr.bf16.mxu0 %v3498
    %5555 = vmatpush1.bf16.msra.mxu0 %v3497
    %5556 = vmatprep.subr.bf16.mxu0 %v3502
    %5557 = vmatpush1.bf16.msra.mxu0 %v3501
    %5558 = vmatprep.subr.bf16.mxu0 %v3506
    %5559 = vmatpush1.bf16.msra.mxu0 %v3505
    %5560 = vmatprep.subr.bf16.mxu0 %v3510
    %5561 = vmatpush1.bf16.msra.mxu0 %v3509
    %5562 = vmatprep.subr.bf16.mxu0 %v3514
    %5563 = vmatpush1.bf16.msra.mxu0 %v3513
    %5564 = vmatprep.subr.bf16.mxu0 %v3518
    %5565 = vmatpush1.bf16.msra.mxu0 %v3517
    %5566 = vmatprep.subr.bf16.mxu0 %v3522
    %5567 = vmatpush1.bf16.msra.mxu0 %v3521
    %5568 = vmatprep.subr.bf16.mxu0 %v3526
    %5569 = vmatpush1.bf16.msra.mxu0 %v3525
    %5570 = vmatprep.subr.bf16.mxu0 %v3530
    %5571 = vmatpush1.bf16.msra.mxu0 %v3529
    %5572 = vmatprep.subr.bf16.mxu0 %v3534
    %5573 = vmatpush1.bf16.msra.mxu0 %v3533
    %5574 = vmatprep.subr.bf16.mxu0 %v3538
    %5575 = vmatpush1.bf16.msra.mxu0 %v3537
    %5576 = vmatprep.subr.bf16.mxu0 %v3542
    %5577 = vmatpush1.bf16.msra.mxu0 %v3541
    %5578 = vmatprep.subr.bf16.mxu0 %v3546
    %5579 = vmatpush1.bf16.msra.mxu0 %v3545
    %5580 = vmatprep.subr.bf16.mxu0 %v3550
    %5581 = vmatpush1.bf16.msra.mxu0 %v3549
    %5582 = vmatprep.subr.bf16.mxu0 %v3554
    %5583 = vmatpush1.bf16.msra.mxu0 %v3553
    %5584 = vmatprep.subr.bf16.mxu0 %v3558
    %5585 = vmatpush1.bf16.msra.mxu0 %v3557
    %5586 = vmatprep.mubr.bf16.mxu0 %v874
    %5587 = vmatmul.mubr.bf16.gmra.mrb[0].mxu0 %v860
    %v5588 = vpop.f32.mrb[0].mxu0
    %v5589 = vadd.f32 %v5548, %v5588
    %v5590 = vpop.f32.mrb[0].mxu0
    %v5591 = vadd.f32 %v5550, %v5590
    %v5592 = vpop.f32.mrb[0].mxu0
    %v5593 = vpop.f32.mrb[0].mxu0
    %5594 = vdwg.mxu0
    %5595 = vmatprep.subr.bf16.mxu0 %v3562
    %5596 = vmatpush1.bf16.msra.mxu0 %v3561
    %5597 = vmatprep.subr.bf16.mxu0 %v3566
    %5598 = vmatpush1.bf16.msra.mxu0 %v3565
    %5599 = vmatprep.subr.bf16.mxu0 %v3570
    %5600 = vmatpush1.bf16.msra.mxu0 %v3569
    %5601 = vmatprep.subr.bf16.mxu0 %v3574
    %5602 = vmatpush1.bf16.msra.mxu0 %v3573
    %5603 = vmatprep.subr.bf16.mxu0 %v3578
    %5604 = vmatpush1.bf16.msra.mxu0 %v3577
    %5605 = vmatprep.subr.bf16.mxu0 %v3582
    %5606 = vmatpush1.bf16.msra.mxu0 %v3581
    %5607 = vmatprep.subr.bf16.mxu0 %v3586
    %5608 = vmatpush1.bf16.msra.mxu0 %v3585
    %5609 = vmatprep.subr.bf16.mxu0 %v3590
    %5610 = vmatpush1.bf16.msra.mxu0 %v3589
    %5611 = vmatprep.subr.bf16.mxu0 %v3594
    %5612 = vmatpush1.bf16.msra.mxu0 %v3593
    %5613 = vmatprep.subr.bf16.mxu0 %v3598
    %5614 = vmatpush1.bf16.msra.mxu0 %v3597
    %5615 = vmatprep.subr.bf16.mxu0 %v3602
    %5616 = vmatpush1.bf16.msra.mxu0 %v3601
    %5617 = vmatprep.subr.bf16.mxu0 %v3606
    %5618 = vmatpush1.bf16.msra.mxu0 %v3605
    %5619 = vmatprep.subr.bf16.mxu0 %v3610
    %5620 = vmatpush1.bf16.msra.mxu0 %v3609
    %5621 = vmatprep.subr.bf16.mxu0 %v3614
    %5622 = vmatpush1.bf16.msra.mxu0 %v3613
    %5623 = vmatprep.subr.bf16.mxu0 %v3618
    %5624 = vmatpush1.bf16.msra.mxu0 %v3617
    %5625 = vmatprep.subr.bf16.mxu0 %v3622
    %5626 = vmatpush1.bf16.msra.mxu0 %v3621
    %5627 = vmatprep.mubr.bf16.mxu0 %v878
    %5628 = vmatmul.mubr.bf16.gmra.mrb[0].mxu0 %v876
    %v5629 = vpop.f32.mrb[0].mxu0
    %v5630 = vadd.f32 %v5589, %v5629
    %v5631 = vpop.f32.mrb[0].mxu0
    %v5632 = vadd.f32 %v5591, %v5631
    %v5633 = vpop.f32.mrb[0].mxu0
    %v5634 = vpop.f32.mrb[0].mxu0
    %5635 = vdwg.mxu0
    %5636 = vmatprep.subr.bf16.mxu0 %v3626
    %5637 = vmatpush1.bf16.msra.mxu0 %v3625
    %5638 = vmatprep.subr.bf16.mxu0 %v3630
    %5639 = vmatpush1.bf16.msra.mxu0 %v3629
    %5640 = vmatprep.subr.bf16.mxu0 %v3634
    %5641 = vmatpush1.bf16.msra.mxu0 %v3633
    %5642 = vmatprep.subr.bf16.mxu0 %v3638
    %5643 = vmatpush1.bf16.msra.mxu0 %v3637
    %5644 = vmatprep.subr.bf16.mxu0 %v3642
    %5645 = vmatpush1.bf16.msra.mxu0 %v3641
    %5646 = vmatprep.subr.bf16.mxu0 %v3646
    %5647 = vmatpush1.bf16.msra.mxu0 %v3645
    %5648 = vmatprep.subr.bf16.mxu0 %v3650
    %5649 = vmatpush1.bf16.msra.mxu0 %v3649
    %5650 = vmatprep.subr.bf16.mxu0 %v3654
    %5651 = vmatpush1.bf16.msra.mxu0 %v3653
    %5652 = vmatprep.subr.bf16.mxu0 %v3658
    %5653 = vmatpush1.bf16.msra.mxu0 %v3657
    %5654 = vmatprep.subr.bf16.mxu0 %v3662
    %5655 = vmatpush1.bf16.msra.mxu0 %v3661
    %5656 = vmatprep.subr.bf16.mxu0 %v3666
    %5657 = vmatpush1.bf16.msra.mxu0 %v3665
    %5658 = vmatprep.subr.bf16.mxu0 %v3670
    %5659 = vmatpush1.bf16.msra.mxu0 %v3669
    %5660 = vmatprep.subr.bf16.mxu0 %v3674
    %5661 = vmatpush1.bf16.msra.mxu0 %v3673
    %5662 = vmatprep.subr.bf16.mxu0 %v3678
    %5663 = vmatpush1.bf16.msra.mxu0 %v3677
    %5664 = vmatprep.subr.bf16.mxu0 %v3682
    %5665 = vmatpush1.bf16.msra.mxu0 %v3681
    %5666 = vmatprep.subr.bf16.mxu0 %v3686
    %5667 = vmatpush1.bf16.msra.mxu0 %v3685
    %5668 = vmatprep.mubr.bf16.mxu0 %v916
    %5669 = vmatmul.mubr.bf16.gmra.mrb[0].mxu0 %v902
    %v5670 = vpop.f32.mrb[0].mxu0
    %v5671 = vadd.f32 %v5630, %v5670
    %v5672 = vpop.f32.mrb[0].mxu0
    %v5673 = vadd.f32 %v5632, %v5672
    %v5674 = vpop.f32.mrb[0].mxu0
    %v5675 = vpop.f32.mrb[0].mxu0
    %5676 = vdwg.mxu0
    %5677 = vmatprep.subr.bf16.mxu0 %v3690
    %5678 = vmatpush1.bf16.msra.mxu0 %v3689
    %5679 = vmatprep.subr.bf16.mxu0 %v3694
    %5680 = vmatpush1.bf16.msra.mxu0 %v3693
    %5681 = vmatprep.subr.bf16.mxu0 %v3698
    %5682 = vmatpush1.bf16.msra.mxu0 %v3697
    %5683 = vmatprep.subr.bf16.mxu0 %v3702
    %5684 = vmatpush1.bf16.msra.mxu0 %v3701
    %5685 = vmatprep.subr.bf16.mxu0 %v3706
    %5686 = vmatpush1.bf16.msra.mxu0 %v3705
    %5687 = vmatprep.subr.bf16.mxu0 %v3710
    %5688 = vmatpush1.bf16.msra.mxu0 %v3709
    %5689 = vmatprep.subr.bf16.mxu0 %v3714
    %5690 = vmatpush1.bf16.msra.mxu0 %v3713
    %5691 = vmatprep.subr.bf16.mxu0 %v3718
    %5692 = vmatpush1.bf16.msra.mxu0 %v3717
    %5693 = vmatprep.subr.bf16.mxu0 %v3722
    %5694 = vmatpush1.bf16.msra.mxu0 %v3721
    %5695 = vmatprep.subr.bf16.mxu0 %v3726
    %5696 = vmatpush1.bf16.msra.mxu0 %v3725
    %5697 = vmatprep.subr.bf16.mxu0 %v3730
    %5698 = vmatpush1.bf16.msra.mxu0 %v3729
    %5699 = vmatprep.subr.bf16.mxu0 %v3734
    %5700 = vmatpush1.bf16.msra.mxu0 %v3733
    %5701 = vmatprep.subr.bf16.mxu0 %v3738
    %5702 = vmatpush1.bf16.msra.mxu0 %v3737
    %5703 = vmatprep.subr.bf16.mxu0 %v3742
    %5704 = vmatpush1.bf16.msra.mxu0 %v3741
    %5705 = vmatprep.subr.bf16.mxu0 %v3746
    %5706 = vmatpush1.bf16.msra.mxu0 %v3745
    %5707 = vmatprep.subr.bf16.mxu0 %v3750
    %5708 = vmatpush1.bf16.msra.mxu0 %v3749
    %5709 = vmatprep.mubr.bf16.mxu0 %v926
    %5710 = vmatmul.mubr.bf16.gmra.mrb[0].mxu0 %v924
    %v5711 = vpop.f32.mrb[0].mxu0
    %v5712 = vadd.f32 %v5671, %v5711
    %v5713 = vpop.f32.mrb[0].mxu0
    %v5714 = vadd.f32 %v5673, %v5713
    %v5715 = vpop.f32.mrb[0].mxu0
    %v5716 = vpop.f32.mrb[0].mxu0
    %5717 = vdwg.mxu0
    %5718 = vmatprep.subr.bf16.mxu0 %v3754
    %5719 = vmatpush1.bf16.msra.mxu0 %v3753
    %5720 = vmatprep.subr.bf16.mxu0 %v3758
    %5721 = vmatpush1.bf16.msra.mxu0 %v3757
    %5722 = vmatprep.subr.bf16.mxu0 %v3762
    %5723 = vmatpush1.bf16.msra.mxu0 %v3761
    %5724 = vmatprep.subr.bf16.mxu0 %v3766
    %5725 = vmatpush1.bf16.msra.mxu0 %v3765
    %5726 = vmatprep.subr.bf16.mxu0 %v3770
    %5727 = vmatpush1.bf16.msra.mxu0 %v3769
    %5728 = vmatprep.subr.bf16.mxu0 %v3774
    %5729 = vmatpush1.bf16.msra.mxu0 %v3773
    %5730 = vmatprep.subr.bf16.mxu0 %v3778
    %5731 = vmatpush1.bf16.msra.mxu0 %v3777
    %5732 = vmatprep.subr.bf16.mxu0 %v3782
    %5733 = vmatpush1.bf16.msra.mxu0 %v3781
    %5734 = vmatprep.subr.bf16.mxu0 %v3786
    %5735 = vmatpush1.bf16.msra.mxu0 %v3785
    %5736 = vmatprep.subr.bf16.mxu0 %v3790
    %5737 = vmatpush1.bf16.msra.mxu0 %v3789
    %5738 = vmatprep.subr.bf16.mxu0 %v3794
    %5739 = vmatpush1.bf16.msra.mxu0 %v3793
    %5740 = vmatprep.subr.bf16.mxu0 %v3798
    %5741 = vmatpush1.bf16.msra.mxu0 %v3797
    %5742 = vmatprep.subr.bf16.mxu0 %v3802
    %5743 = vmatpush1.bf16.msra.mxu0 %v3801
    %5744 = vmatprep.subr.bf16.mxu0 %v3806
    %5745 = vmatpush1.bf16.msra.mxu0 %v3805
    %5746 = vmatprep.subr.bf16.mxu0 %v3810
    %5747 = vmatpush1.bf16.msra.mxu0 %v3809
    %5748 = vmatprep.subr.bf16.mxu0 %v3814
    %5749 = vmatpush1.bf16.msra.mxu0 %v3813
    %5750 = vmatprep.mubr.bf16.mxu0 %v923
    %5751 = vmatmul.mubr.bf16.gmra.mrb[0].mxu0 %v909
    %v5752 = vpop.f32.mrb[0].mxu0
    %v5753 = vadd.f32 %v5712, %v5752
    %v5754 = vpop.f32.mrb[0].mxu0
    %v5755 = vadd.f32 %v5714, %v5754
    %v5756 = vpop.f32.mrb[0].mxu0
    %v5757 = vpop.f32.mrb[0].mxu0
    %5758 = vdwg.mxu0
    %5759 = vmatprep.subr.bf16.mxu0 %v3818
    %5760 = vmatpush1.bf16.msra.mxu0 %v3817
    %5761 = vmatprep.subr.bf16.mxu0 %v3822
    %5762 = vmatpush1.bf16.msra.mxu0 %v3821
    %5763 = vmatprep.subr.bf16.mxu0 %v3826
    %5764 = vmatpush1.bf16.msra.mxu0 %v3825
    %5765 = vmatprep.subr.bf16.mxu0 %v3830
    %5766 = vmatpush1.bf16.msra.mxu0 %v3829
    %5767 = vmatprep.subr.bf16.mxu0 %v3834
    %5768 = vmatpush1.bf16.msra.mxu0 %v3833
    %5769 = vmatprep.subr.bf16.mxu0 %v3838
    %5770 = vmatpush1.bf16.msra.mxu0 %v3837
    %5771 = vmatprep.subr.bf16.mxu0 %v3842
    %5772 = vmatpush1.bf16.msra.mxu0 %v3841
    %5773 = vmatprep.subr.bf16.mxu0 %v3846
    %5774 = vmatpush1.bf16.msra.mxu0 %v3845
    %5775 = vmatprep.subr.bf16.mxu0 %v3850
    %5776 = vmatpush1.bf16.msra.mxu0 %v3849
    %5777 = vmatprep.subr.bf16.mxu0 %v3854
    %5778 = vmatpush1.bf16.msra.mxu0 %v3853
    %5779 = vmatprep.subr.bf16.mxu0 %v3858
    %5780 = vmatpush1.bf16.msra.mxu0 %v3857
    %5781 = vmatprep.subr.bf16.mxu0 %v3862
    %5782 = vmatpush1.bf16.msra.mxu0 %v3861
    %5783 = vmatprep.subr.bf16.mxu0 %v3866
    %5784 = vmatpush1.bf16.msra.mxu0 %v3865
    %5785 = vmatprep.subr.bf16.mxu0 %v3870
    %5786 = vmatpush1.bf16.msra.mxu0 %v3869
    %5787 = vmatprep.subr.bf16.mxu0 %v3874
    %5788 = vmatpush1.bf16.msra.mxu0 %v3873
    %5789 = vmatprep.subr.bf16.mxu0 %v3878
    %5790 = vmatpush1.bf16.msra.mxu0 %v3877
    %5791 = vmatprep.mubr.bf16.mxu0 %v927
    %5792 = vmatmul.mubr.bf16.gmra.mrb[0].mxu0 %v925
    %v5793 = vpop.f32.mrb[0].mxu0
    %v5794 = vadd.f32 %v5753, %v5793
    %v5795 = vpop.f32.mrb[0].mxu0
    %v5796 = vadd.f32 %v5755, %v5795
    %v5797 = vpop.f32.mrb[0].mxu0
    %v5798 = vpop.f32.mrb[0].mxu0
    %5799 = vdwg.mxu0
    %5800 = vmatprep.subr.bf16.mxu0 %v3882
    %5801 = vmatpush1.bf16.msra.mxu0 %v3881
    %5802 = vmatprep.subr.bf16.mxu0 %v3886
    %5803 = vmatpush1.bf16.msra.mxu0 %v3885
    %5804 = vmatprep.subr.bf16.mxu0 %v3890
    %5805 = vmatpush1.bf16.msra.mxu0 %v3889
    %5806 = vmatprep.subr.bf16.mxu0 %v3894
    %5807 = vmatpush1.bf16.msra.mxu0 %v3893
    %5808 = vmatprep.subr.bf16.mxu0 %v3898
    %5809 = vmatpush1.bf16.msra.mxu0 %v3897
    %5810 = vmatprep.subr.bf16.mxu0 %v3902
    %5811 = vmatpush1.bf16.msra.mxu0 %v3901
    %5812 = vmatprep.subr.bf16.mxu0 %v3906
    %5813 = vmatpush1.bf16.msra.mxu0 %v3905
    %5814 = vmatprep.subr.bf16.mxu0 %v3910
    %5815 = vmatpush1.bf16.msra.mxu0 %v3909
    %5816 = vmatprep.subr.bf16.mxu0 %v3914
    %5817 = vmatpush1.bf16.msra.mxu0 %v3913
    %5818 = vmatprep.subr.bf16.mxu0 %v3918
    %5819 = vmatpush1.bf16.msra.mxu0 %v3917
    %5820 = vmatprep.subr.bf16.mxu0 %v3922
    %5821 = vmatpush1.bf16.msra.mxu0 %v3921
    %5822 = vmatprep.subr.bf16.mxu0 %v3926
    %5823 = vmatpush1.bf16.msra.mxu0 %v3925
    %5824 = vmatprep.subr.bf16.mxu0 %v3930
    %5825 = vmatpush1.bf16.msra.mxu0 %v3929
    %5826 = vmatprep.subr.bf16.mxu0 %v3934
    %5827 = vmatpush1.bf16.msra.mxu0 %v3933
    %5828 = vmatprep.subr.bf16.mxu0 %v3938
    %5829 = vmatpush1.bf16.msra.mxu0 %v3937
    %5830 = vmatprep.subr.bf16.mxu0 %v3942
    %5831 = vmatpush1.bf16.msra.mxu0 %v3941
    %5832 = vmatprep.mubr.bf16.mxu0 %v965
    %5833 = vmatmul.mubr.bf16.gmra.mrb[0].mxu0 %v951
    %v5834 = vpop.f32.mrb[0].mxu0
    %v5835 = vadd.f32 %v5794, %v5834
    %v5836 = vpop.f32.mrb[0].mxu0
    %v5837 = vadd.f32 %v5796, %v5836
    %v5838 = vpop.f32.mrb[0].mxu0
    %v5839 = vpop.f32.mrb[0].mxu0
    %5840 = vdwg.mxu0
    %5841 = vmatprep.subr.bf16.mxu0 %v3946
    %5842 = vmatpush1.bf16.msra.mxu0 %v3945
    %5843 = vmatprep.subr.bf16.mxu0 %v3950
    %5844 = vmatpush1.bf16.msra.mxu0 %v3949
    %5845 = vmatprep.subr.bf16.mxu0 %v3954
    %5846 = vmatpush1.bf16.msra.mxu0 %v3953
    %5847 = vmatprep.subr.bf16.mxu0 %v3958
    %5848 = vmatpush1.bf16.msra.mxu0 %v3957
    %5849 = vmatprep.subr.bf16.mxu0 %v3962
    %5850 = vmatpush1.bf16.msra.mxu0 %v3961
    %5851 = vmatprep.subr.bf16.mxu0 %v3966
    %5852 = vmatpush1.bf16.msra.mxu0 %v3965
    %5853 = vmatprep.subr.bf16.mxu0 %v3970
    %5854 = vmatpush1.bf16.msra.mxu0 %v3969
    %5855 = vmatprep.subr.bf16.mxu0 %v3974
    %5856 = vmatpush1.bf16.msra.mxu0 %v3973
    %5857 = vmatprep.subr.bf16.mxu0 %v3978
    %5858 = vmatpush1.bf16.msra.mxu0 %v3977
    %5859 = vmatprep.subr.bf16.mxu0 %v3982
    %5860 = vmatpush1.bf16.msra.mxu0 %v3981
    %5861 = vmatprep.subr.bf16.mxu0 %v3986
    %5862 = vmatpush1.bf16.msra.mxu0 %v3985
    %5863 = vmatprep.subr.bf16.mxu0 %v3990
    %5864 = vmatpush1.bf16.msra.mxu0 %v3989
    %5865 = vmatprep.subr.bf16.mxu0 %v3994
    %5866 = vmatpush1.bf16.msra.mxu0 %v3993
    %5867 = vmatprep.subr.bf16.mxu0 %v3998
    %5868 = vmatpush1.bf16.msra.mxu0 %v3997
    %5869 = vmatprep.subr.bf16.mxu0 %v4002
    %5870 = vmatpush1.bf16.msra.mxu0 %v4001
    %5871 = vmatprep.subr.bf16.mxu0 %v4006
    %5872 = vmatpush1.bf16.msra.mxu0 %v4005
    %5873 = vmatprep.mubr.bf16.mxu0 %v975
    %5874 = vmatmul.mubr.bf16.gmra.mrb[0].mxu0 %v973
    %v5875 = vpop.f32.mrb[0].mxu0
    %v5876 = vadd.f32 %v5835, %v5875
    %v5877 = vpop.f32.mrb[0].mxu0
    %v5878 = vadd.f32 %v5837, %v5877
    %v5879 = vpop.f32.mrb[0].mxu0
    %v5880 = vpop.f32.mrb[0].mxu0
    %5881 = vdwg.mxu0
    %5882 = vmatprep.subr.bf16.mxu0 %v4010
    %5883 = vmatpush1.bf16.msra.mxu0 %v4009
    %5884 = vmatprep.subr.bf16.mxu0 %v4014
    %5885 = vmatpush1.bf16.msra.mxu0 %v4013
    %5886 = vmatprep.subr.bf16.mxu0 %v4018
    %5887 = vmatpush1.bf16.msra.mxu0 %v4017
    %5888 = vmatprep.subr.bf16.mxu0 %v4022
    %5889 = vmatpush1.bf16.msra.mxu0 %v4021
    %5890 = vmatprep.subr.bf16.mxu0 %v4026
    %5891 = vmatpush1.bf16.msra.mxu0 %v4025
    %5892 = vmatprep.subr.bf16.mxu0 %v4030
    %5893 = vmatpush1.bf16.msra.mxu0 %v4029
    %5894 = vmatprep.subr.bf16.mxu0 %v4034
    %5895 = vmatpush1.bf16.msra.mxu0 %v4033
    %5896 = vmatprep.subr.bf16.mxu0 %v4038
    %5897 = vmatpush1.bf16.msra.mxu0 %v4037
    %5898 = vmatprep.subr.bf16.mxu0 %v4042
    %5899 = vmatpush1.bf16.msra.mxu0 %v4041
    %5900 = vmatprep.subr.bf16.mxu0 %v4046
    %5901 = vmatpush1.bf16.msra.mxu0 %v4045
    %5902 = vmatprep.subr.bf16.mxu0 %v4050
    %5903 = vmatpush1.bf16.msra.mxu0 %v4049
    %5904 = vmatprep.subr.bf16.mxu0 %v4054
    %5905 = vmatpush1.bf16.msra.mxu0 %v4053
    %5906 = vmatprep.subr.bf16.mxu0 %v4058
    %5907 = vmatpush1.bf16.msra.mxu0 %v4057
    %5908 = vmatprep.subr.bf16.mxu0 %v4062
    %5909 = vmatpush1.bf16.msra.mxu0 %v4061
    %5910 = vmatprep.subr.bf16.mxu0 %v4066
    %5911 = vmatpush1.bf16.msra.mxu0 %v4065
    %5912 = vmatprep.subr.bf16.mxu0 %v4070
    %5913 = vmatpush1.bf16.msra.mxu0 %v4069
    %5914 = vmatprep.mubr.bf16.mxu0 %v972
    %5915 = vmatmul.mubr.bf16.gmra.mrb[0].mxu0 %v958
    %v5916 = vpop.f32.mrb[0].mxu0
    %v5917 = vadd.f32 %v5876, %v5916
    %v5918 = vpop.f32.mrb[0].mxu0
    %v5919 = vadd.f32 %v5878, %v5918
    %v5920 = vpop.f32.mrb[0].mxu0
    %v5921 = vpop.f32.mrb[0].mxu0
    %5922 = vdwg.mxu0
    %5923 = vmatprep.subr.bf16.mxu0 %v4074
    %5924 = vmatpush1.bf16.msra.mxu0 %v4073
    %5925 = vmatprep.subr.bf16.mxu0 %v4078
    %5926 = vmatpush1.bf16.msra.mxu0 %v4077
    %5927 = vmatprep.subr.bf16.mxu0 %v4082
    %5928 = vmatpush1.bf16.msra.mxu0 %v4081
    %5929 = vmatprep.subr.bf16.mxu0 %v4086
    %5930 = vmatpush1.bf16.msra.mxu0 %v4085
    %5931 = vmatprep.subr.bf16.mxu0 %v4090
    %5932 = vmatpush1.bf16.msra.mxu0 %v4089
    %5933 = vmatprep.subr.bf16.mxu0 %v4094
    %5934 = vmatpush1.bf16.msra.mxu0 %v4093
    %5935 = vmatprep.subr.bf16.mxu0 %v4098
    %5936 = vmatpush1.bf16.msra.mxu0 %v4097
    %5937 = vmatprep.subr.bf16.mxu0 %v4102
    %5938 = vmatpush1.bf16.msra.mxu0 %v4101
    %5939 = vmatprep.subr.bf16.mxu0 %v4106
    %5940 = vmatpush1.bf16.msra.mxu0 %v4105
    %5941 = vmatprep.subr.bf16.mxu0 %v4110
    %5942 = vmatpush1.bf16.msra.mxu0 %v4109
    %5943 = vmatprep.subr.bf16.mxu0 %v4114
    %5944 = vmatpush1.bf16.msra.mxu0 %v4113
    %5945 = vmatprep.subr.bf16.mxu0 %v4118
    %5946 = vmatpush1.bf16.msra.mxu0 %v4117
    %5947 = vmatprep.subr.bf16.mxu0 %v4122
    %5948 = vmatpush1.bf16.msra.mxu0 %v4121
    %5949 = vmatprep.subr.bf16.mxu0 %v4126
    %5950 = vmatpush1.bf16.msra.mxu0 %v4125
    %5951 = vmatprep.subr.bf16.mxu0 %v4130
    %5952 = vmatpush1.bf16.msra.mxu0 %v4129
    %5953 = vmatprep.subr.bf16.mxu0 %v4134
    %5954 = vmatpush1.bf16.msra.mxu0 %v4133
    %5955 = vmatprep.mubr.bf16.mxu0 %v976
    %5956 = vmatmul.mubr.bf16.gmra.mrb[0].mxu0 %v974
    %v5957 = vpop.f32.mrb[0].mxu0
    %v5958 = vadd.f32 %v5917, %v5957
    %v5959 = vpop.f32.mrb[0].mxu0
    %v5960 = vadd.f32 %v5919, %v5959
    %v5961 = vpop.f32.mrb[0].mxu0
    %v5962 = vpop.f32.mrb[0].mxu0
    %5963 = vdwg.mxu0
    %5964 = vmatprep.subr.bf16.mxu0 %v4138
    %5965 = vmatpush1.bf16.msra.mxu0 %v4137
    %5966 = vmatprep.subr.bf16.mxu0 %v4142
    %5967 = vmatpush1.bf16.msra.mxu0 %v4141
    %5968 = vmatprep.subr.bf16.mxu0 %v4146
    %5969 = vmatpush1.bf16.msra.mxu0 %v4145
    %5970 = vmatprep.subr.bf16.mxu0 %v4150
    %5971 = vmatpush1.bf16.msra.mxu0 %v4149
    %5972 = vmatprep.subr.bf16.mxu0 0
    %5973 = vmatpush1.bf16.msra.mxu0 0
    %5974 = vmatprep.subr.bf16.mxu0 0
    %5975 = vmatpush1.bf16.msra.mxu0 0
    %5976 = vmatprep.subr.bf16.mxu0 0
    %5977 = vmatpush1.bf16.msra.mxu0 0
    %5978 = vmatprep.subr.bf16.mxu0 0
    %5979 = vmatpush1.bf16.msra.mxu0 0
    %5980 = vmatprep.subr.bf16.mxu0 0
    %5981 = vmatpush1.bf16.msra.mxu0 0
    %5982 = vmatprep.subr.bf16.mxu0 0
    %5983 = vmatpush1.bf16.msra.mxu0 0
    %5984 = vmatprep.subr.bf16.mxu0 0
    %5985 = vmatpush1.bf16.msra.mxu0 0
    %5986 = vmatprep.subr.bf16.mxu0 0
    %5987 = vmatpush1.bf16.msra.mxu0 0
    %5988 = vmatprep.subr.bf16.mxu0 0
    %5989 = vmatpush1.bf16.msra.mxu0 0
    %5990 = vmatprep.subr.bf16.mxu0 0
    %5991 = vmatpush1.bf16.msra.mxu0 0
    %5992 = vmatprep.subr.bf16.mxu0 0
    %5993 = vmatpush1.bf16.msra.mxu0 0
    %5994 = vmatprep.subr.bf16.mxu0 0
    %5995 = vmatpush1.bf16.msra.mxu0 0
    %5996 = vmatprep.mubr.bf16.mxu0 0
    %5997 = vmatmul.mubr.bf16.gmra.mrb[0].mxu0 %v4937
    %v5998 = vpop.f32.mrb[0].mxu0
    %v5999 = vadd.f32 %v5958, %v5998
    %v6000 = vpop.f32.mrb[0].mxu0
    %v6001 = vadd.f32 %v5960, %v6000
    %v6002 = vpop.f32.mrb[0].mxu0
    %v6003 = vpop.f32.mrb[0].mxu0
    %6004 = vdwg.mxu0
    %v6005 = vmax.f32 %v5466, 0.0
    %v6006 = vmax.f32 %v5468, 0.0
    %v6007 = vmax.f32 %v5999, 0.0
    %v6008 = vmax.f32 %v6001, 0.0
    %v6013 = vcombine.low %v6005, %v6006
    %v6014 = vcombine.low %v6007, %v6008
    %v6016 = vunpack.c.l.s4 1983009808
    %v6017 = vunpack.c.0.s8 %v6016
    %v6018 = vlaneseq
    %v6019 = vshrl.u32 %v6018, 7
    %v6020 = vsub.s32 %v6017, %v6019
    %v6021 = vrot.slane %v6013, %v6020
    %v6023 = vunpack.c.l.s4 1983009808
    %v6024 = vunpack.c.0.s8 %v6023
    %v6025 = vlaneseq
    %v6026 = vshrl.u32 %v6025, 7
    %v6027 = vsub.s32 %v6024, %v6026
    %v6028 = vrot.slane %v6014, %v6027
    %v6029 = vcombine.low %v6021, %v6028
    %6031 = vst [vmem:[#allocation2] sm:$0xff] %v6029
    // Predicated region
    $region14: #{nature_conv_body_forward.3} parent=1 // pred_check
      _
    $region15: #{nature_conv_body_forward.3} parent=1 // pred_check_branch
      %6033 = sbr.rel (0) target = $region17
    $region16: #{nature_conv_body_forward.3} parent=1 // pred_region
      %s6035 = ssub.s32 128, 128
      %6036 = vsyncadd [#allocation3], %s6035
      %s6038 = sshll.u32 [#allocation2], 4
      %s6039 = int_to_ptr.vmem [resolvable:$true] %s6038
      %6041 = dma.vmem_to_hbm [thread:$0]  %s6039, 128, %s3, [#allocation3]
    $region17: #{nature_conv_body_forward.3} parent=1 // pred_fallthru
      _
    // Predicated region
    $region18: #{nature_conv_body_forward.3} parent=1 // pred_check
      _
    $region19: #{nature_conv_body_forward.3} parent=1 // pred_check_branch
      %6043 = sbr.rel (0) target = $region21
    $region20: #{nature_conv_body_forward.3} parent=1 // pred_region
      %6044 = dma.done [#allocation3], 128
    $region21: #{nature_conv_body_forward.3} parent=1 // pred_fallthru
      _
    %6045 = vsyncpa [#allocation3], 1

</llo_original>
